<compile_context>
chip_gen: v5e
topology: v5e:2x2
jax: 0.10.0
libtpu: 0.0.40
codegen_flags: <defaults>
</compile_context>

<pallas_src>
import numpy as np
import jax
import jax.numpy as jnp
from jax import lax
from jax.experimental import pallas as pl
from jax.experimental.pallas import tpu as pltpu

K_CLASSES = 10      # len(set(FashionMNIST targets))
NPAD = 128          # lane-dense padded width of the logits output
MAX_TB = 128        # max batch tile (VMEM per step stays well under 32 MiB)

# Activation lane widths: (output-W positions) x (channels), packed in lanes.
L1 = 13 * 32        # conv1 output lanes
L2 = 6 * 64         # conv2 output lanes
L3 = 2 * 128        # conv3 output lanes


# ----------------------------------------------------------------------------
# Fused kernel: conv1 -> conv2 -> conv3 -> flatten -> dense1 -> dense2 for one
# tile of TB images.  Activation layout: (H..., TB, lanes) with TB in sublanes
# and lanes = (out-W position, channel).  Stride-2 row taps (kh) are handled
# by unit-stride slices on the parity-split leading H dims; the column taps
# (kw) are folded into the expanded weight matrices, so every conv is just 3
# accumulated wide-K 2-D matmuls.
# ----------------------------------------------------------------------------
def _fused_cnn_kernel(x_ref, w1_ref, b1_ref, w2_ref, b2_ref, w3_ref, b3_ref,
                      wd1_ref, bd1_ref, wd2_ref, bd2_ref, o_ref):
    f32 = jnp.float32
    bf16 = jnp.bfloat16
    tb = x_ref.shape[2]

    x = x_ref[...]                                       # (15, 2, tb, 28) bf16

    # ---- conv1: 1 -> 32, 28x28 -> 13x13 ------------------------------------
    acc = None
    for kh in range(3):
        hs, hp = kh // 2, kh % 2
        lhs = x[hs:hs + 14, hp:hp + 1].reshape(14 * tb, 28)
        part = jnp.dot(lhs, w1_ref[kh], preferred_element_type=f32)
        acc = part if acc is None else acc + part
    a1 = jnp.maximum(acc + b1_ref[...], 0.0).astype(bf16)   # (14*tb, 416)
    # NOTE: output row oh=13 is garbage (computed from the zero-padded image
    # rows 28/29) but is never read: conv2 only touches oh1 = 2*oh2+kh <= 12.
    a1 = a1.reshape(7, 2, tb, L1)                            # parity-split H

    # ---- conv2: 32 -> 64, 13x13 -> 6x6 (K = 416 per matmul) ----------------
    acc = None
    for kh in range(3):
        hs, hp = kh // 2, kh % 2
        lhs = a1[hs:hs + 6, hp:hp + 1].reshape(6 * tb, L1)
        part = jnp.dot(lhs, w2_ref[kh], preferred_element_type=f32)
        acc = part if acc is None else acc + part
    a2 = jnp.maximum(acc + b2_ref[...], 0.0).astype(bf16)   # (6*tb, 384)
    a2 = a2.reshape(3, 2, tb, L2)

    # ---- conv3: 64 -> 128, 6x6 -> 2x2 (K = 384 per matmul) -----------------
    acc = None
    for kh in range(3):
        hs, hp = kh // 2, kh % 2
        lhs = a2[hs:hs + 2, hp:hp + 1].reshape(2 * tb, L2)
        part = jnp.dot(lhs, w3_ref[kh], preferred_element_type=f32)
        acc = part if acc is None else acc + part
    a3 = jnp.maximum(acc + b3_ref[...], 0.0).astype(bf16)   # (2*tb, 256)
    a3 = a3.reshape(2, tb, L3)

    # ---- dense1 (512 -> 512): single K=512 matmul --------------------------
    # (Dropout(0.2) before it is identity in eval mode.)  Lane-concat at
    # offset 256 is whole-vreg placement (no intra-vreg shifts).
    y = jnp.concatenate([a3[0], a3[1]], axis=-1)             # (tb, 512)
    y = jnp.dot(y, wd1_ref[...], preferred_element_type=f32)
    y = jnp.maximum(y + bd1_ref[...], 0.0).astype(bf16)

    # ---- dense2 (512 -> 10, zero-padded to 128 lanes for a dense store) ----
    logits = jnp.dot(y, wd2_ref[...], preferred_element_type=f32)
    o_ref[...] = logits + bd2_ref[...]


# ----------------------------------------------------------------------------
# Host-side weight expansion: fold the kw taps and output-W positions of each
# conv into a block-sparse matrix so the kernel only does wide-K matmuls.
# ----------------------------------------------------------------------------
def _sel(n_in, n_out):
    # sel[kw, w_in, w_out] = 1  iff  w_in == 2*w_out + kw   (stride-2, k=3)
    s = np.zeros((3, n_in, n_out), np.float32)
    o = np.arange(n_out)
    for kw in range(3):
        s[kw, 2 * o + kw, o] = 1.0
    return s


_SEL1 = _sel(28, 13)   # conv1: 28 input cols -> 13 output cols
_SEL2 = _sel(13, 6)    # conv2: 13 -> 6
_SEL3 = _sel(6, 2)     # conv3: 6 -> 2


def _prep_operands(params):
    bf16, f32 = jnp.bfloat16, jnp.float32

    # conv1: w1 (32,1,3,3) -> (3 kh, 28 w_in, 13*32)
    w1e = jnp.einsum('qwo,chq->hwoc', _SEL1, params["w1"][:, 0])
    w1e = w1e.reshape(3, 28, L1).astype(bf16)
    b1e = jnp.tile(params["b1"], 13).reshape(1, L1).astype(f32)

    # conv2: w2 (64,32,3,3) -> (3 kh, 13*32, 6*64)
    w2e = jnp.einsum('qpo,dchq->hpcod', _SEL2, params["w2"])
    w2e = w2e.reshape(3, L1, L2).astype(bf16)
    b2e = jnp.tile(params["b2"], 6).reshape(1, L2).astype(f32)

    # conv3: w3 (128,64,3,3) -> (3 kh, 6*64, 2*128)
    w3e = jnp.einsum('qpo,dchq->hpcod', _SEL3, params["w3"])
    w3e = w3e.reshape(3, L2, L3).astype(bf16)
    b3e = jnp.tile(params["b3"], 2).reshape(1, L3).astype(f32)

    # dense1: PyTorch flatten of (B,128,2,2) uses index c*4 + oh*2 + ow; the
    # kernel's concatenated lane index is oh*256 + ow*128 + c.  Regroup rows.
    wd1e = params["wd1"].reshape(128, 2, 2, 512)
    wd1e = jnp.transpose(wd1e, (1, 2, 0, 3)).reshape(512, 512).astype(bf16)
    bd1 = params["bd1"].reshape(1, 512).astype(f32)

    wd2 = jnp.pad(params["wd2"], ((0, 0), (0, NPAD - K_CLASSES))).astype(bf16)
    bd2 = jnp.pad(params["bd2"], (0, NPAD - K_CLASSES)).reshape(1, NPAD).astype(f32)
    return (w1e, b1e, w2e, b2e, w3e, b3e, wd1e, bd1, wd2, bd2)


# ----------------------------------------------------------------------------
# Batch tiling: multiple of 16 (bf16 sublane tile), capped at 128, and split
# into >= 2 grid steps for medium batches so both v7x TensorCores are fed.
# ----------------------------------------------------------------------------
def _choose_tile(batch):
    if batch >= 2 * MAX_TB:                        # large: full 128-image tiles
        padded = ((batch + MAX_TB - 1) // MAX_TB) * MAX_TB
        return MAX_TB, padded
    b16 = ((batch + 15) // 16) * 16
    if b16 <= 32:                                  # tiny: one small step
        return b16, b16
    tb = ((b16 // 2 + 15) // 16) * 16              # medium: two steps
    return tb, 2 * tb


# ----------------------------------------------------------------------------
# Full forward pass (inference / eval mode: Dropout is identity).
# ----------------------------------------------------------------------------
@jax.jit
def cnn_forward(params, x_nchw):
    B = x_nchw.shape[0]
    TB, Bp = _choose_tile(B)

    # Host prep: raw image only (no im2col) -> bf16, pad H 28->30 and the
    # batch to Bp, then parity-split H: (15, 2, Bp, 28), batch in sublanes.
    x = x_nchw.reshape(B, 28, 28).astype(jnp.bfloat16)     # C == 1: reshape
    x = jnp.pad(x, ((0, Bp - B), (0, 2), (0, 0)))
    x = jnp.transpose(x, (1, 0, 2)).reshape(15, 2, Bp, 28)

    operands = _prep_operands(params)

    out = pl.pallas_call(
        _fused_cnn_kernel,
        out_shape=jax.ShapeDtypeStruct((Bp, NPAD), jnp.float32),
        grid=(Bp // TB,),
        in_specs=[
            pl.BlockSpec((15, 2, TB, 28), lambda i: (0, 0, i, 0)),  # raw image
            pl.BlockSpec((3, 28, L1), lambda i: (0, 0, 0)),         # w1 (expanded)
            pl.BlockSpec((1, L1), lambda i: (0, 0)),                # b1 (tiled)
            pl.BlockSpec((3, L1, L2), lambda i: (0, 0, 0)),         # w2 (expanded)
            pl.BlockSpec((1, L2), lambda i: (0, 0)),                # b2 (tiled)
            pl.BlockSpec((3, L2, L3), lambda i: (0, 0, 0)),         # w3 (expanded)
            pl.BlockSpec((1, L3), lambda i: (0, 0)),                # b3 (tiled)
            pl.BlockSpec((512, 512), lambda i: (0, 0)),             # wd1 (permuted)
            pl.BlockSpec((1, 512), lambda i: (0, 0)),               # bd1
            pl.BlockSpec((512, NPAD), lambda i: (0, 0)),            # wd2 (padded)
            pl.BlockSpec((1, NPAD), lambda i: (0, 0)),              # bd2 (padded)
        ],
        out_specs=pl.BlockSpec((TB, NPAD), lambda i: (i, 0)),
        compiler_params=pltpu.CompilerParams(
            dimension_semantics=("parallel",),
            vmem_limit_bytes=48 * 1024 * 1024,
        ),
    )(x, *operands)

    # Padded batch rows compute garbage logits and are sliced off here.
    return out[:B, :K_CLASSES]


# ----------------------------------------------------------------------------
# Parameter init (deterministic, PyTorch-like uniform fan-in scaling).
# ----------------------------------------------------------------------------
def _uniform(key, shape, fan_in):
    bound = 1.0 / jnp.sqrt(jnp.float32(fan_in))
    return jax.random.uniform(key, shape, jnp.float32, -bound, bound)


def init_params(key):
    ks = jax.random.split(key, 10)
    params = {}
    params["w1"] = _uniform(ks[0], (32, 1, 3, 3), 1 * 3 * 3)
    params["b1"] = _uniform(ks[1], (32,), 1 * 3 * 3)
    params["w2"] = _uniform(ks[2], (64, 32, 3, 3), 32 * 3 * 3)
    params["b2"] = _uniform(ks[3], (64,), 32 * 3 * 3)
    params["w3"] = _uniform(ks[4], (128, 64, 3, 3), 64 * 3 * 3)
    params["b3"] = _uniform(ks[5], (128,), 64 * 3 * 3)
    params["wd1"] = _uniform(ks[6], (512, 512), 512)    # stored (in, out)
    params["bd1"] = _uniform(ks[7], (512,), 512)
    params["wd2"] = _uniform(ks[8], (512, K_CLASSES), 512)
    params["bd2"] = _uniform(ks[9], (K_CLASSES,), 512)
    return params


# ----------------------------------------------------------------------------
# Pure-JAX (XLA) reference, mirroring the PyTorch module, for validation.
# ----------------------------------------------------------------------------
@jax.jit
def reference_forward(params, x):
    dn = ("NCHW", "OIHW", "NCHW")
    y = lax.conv_general_dilated(x, params["w1"], (2, 2), "VALID",
                                 dimension_numbers=dn)
    y = jnp.maximum(y + params["b1"][None, :, None, None], 0.0)
    y = lax.conv_general_dilated(y, params["w2"], (2, 2), "VALID",
                                 dimension_numbers=dn)
    y = jnp.maximum(y + params["b2"][None, :, None, None], 0.0)
    y = lax.conv_general_dilated(y, params["w3"], (2, 2), "VALID",
                                 dimension_numbers=dn)
    y = jnp.maximum(y + params["b3"][None, :, None, None], 0.0)
    y = y.reshape(y.shape[0], -1)                     # PyTorch view(B, -1)
    y = jnp.maximum(y @ params["wd1"] + params["bd1"], 0.0)
    return y @ params["wd2"] + params["bd2"]


if __name__ == "__main__":
    key = jax.random.PRNGKey(0)
    pkey, xkey = jax.random.split(key)
    params = init_params(pkey)

    # FashionMNIST-shaped input (spatial size 28 is required to reach 128*2*2).
    batch = 2
    x = jax.random.normal(xkey, (batch, 1, 28, 28), jnp.float32)

    logits = cnn_forward(params, x)
    jax.block_until_ready(logits)
    assert logits.shape == (batch, K_CLASSES), logits.shape
    assert logits.dtype == jnp.float32

    ref = reference_forward(params, x)
    err = float(jnp.max(jnp.abs(logits - ref)))
    assert err < 3e-2, f"kernel/reference mismatch: max abs err = {err}"
    print("KERNEL_OK")
</pallas_src>

<mosaic_0001>
module attributes {stable_mosaic.version = 11 : i64} {
  func.func @_fused_cnn_kernel(%arg0: i32, %arg1: memref<15x2x16x28xbf16, #tpu.memory_space<vmem>>, %arg2: memref<3x28x416xbf16, #tpu.memory_space<vmem>>, %arg3: memref<1x416xf32, #tpu.memory_space<vmem>>, %arg4: memref<3x416x384xbf16, #tpu.memory_space<vmem>>, %arg5: memref<1x384xf32, #tpu.memory_space<vmem>>, %arg6: memref<3x384x256xbf16, #tpu.memory_space<vmem>>, %arg7: memref<1x256xf32, #tpu.memory_space<vmem>>, %arg8: memref<512x512xbf16, #tpu.memory_space<vmem>>, %arg9: memref<1x512xf32, #tpu.memory_space<vmem>>, %arg10: memref<512x128xbf16, #tpu.memory_space<vmem>>, %arg11: memref<1x128xf32, #tpu.memory_space<vmem>>, %arg12: memref<16x128xf32, #tpu.memory_space<vmem>>) attributes {dimension_semantics = [#tpu.dimension_semantics<parallel>], iteration_bounds = array<i64: 1>, scalar_prefetch = 0 : i64, scratch_operands = 0 : i64, tpu.core_type = #tpu.core_type<tc>, window_params = [{transform_indices = @transform_0, window_bounds = array<i64: 15, 2, 16, 28>}, {pipeline_mode = #tpu.pipeline_mode<synchronous>, transform_indices = @transform_1, window_bounds = array<i64: 3, 28, 416>}, {pipeline_mode = #tpu.pipeline_mode<synchronous>, transform_indices = @transform_2, window_bounds = array<i64: 1, 416>}, {pipeline_mode = #tpu.pipeline_mode<synchronous>, transform_indices = @transform_3, window_bounds = array<i64: 3, 416, 384>}, {pipeline_mode = #tpu.pipeline_mode<synchronous>, transform_indices = @transform_4, window_bounds = array<i64: 1, 384>}, {pipeline_mode = #tpu.pipeline_mode<synchronous>, transform_indices = @transform_5, window_bounds = array<i64: 3, 384, 256>}, {pipeline_mode = #tpu.pipeline_mode<synchronous>, transform_indices = @transform_6, window_bounds = array<i64: 1, 256>}, {pipeline_mode = #tpu.pipeline_mode<synchronous>, transform_indices = @transform_7, window_bounds = array<i64: 512, 512>}, {pipeline_mode = #tpu.pipeline_mode<synchronous>, transform_indices = @transform_8, window_bounds = array<i64: 1, 512>}, {pipeline_mode = #tpu.pipeline_mode<synchronous>, transform_indices = @transform_9, window_bounds = array<i64: 512, 128>}, {pipeline_mode = #tpu.pipeline_mode<synchronous>, transform_indices = @transform_10, window_bounds = array<i64: 1, 128>}, {transform_indices = @transform_11, window_bounds = array<i64: 16, 128>}]} {
    %c0 = arith.constant 0 : index
    %c0_0 = arith.constant 0 : index
    %c0_1 = arith.constant 0 : index
    %c0_2 = arith.constant 0 : index
    %0 = vector.load %arg1[%c0, %c0_0, %c0_1, %c0_2] : memref<15x2x16x28xbf16, #tpu.memory_space<vmem>>, vector<15x2x16x28xbf16>
    %1 = vector.extract_strided_slice %0 {offsets = [0, 0, 0, 0], sizes = [14, 1, 16, 28], strides = [1, 1, 1, 1]} : vector<15x2x16x28xbf16> to vector<14x1x16x28xbf16>
    %2 = vector.shape_cast %1 : vector<14x1x16x28xbf16> to vector<224x28xbf16>
    %c0_3 = arith.constant 0 : index
    %c0_4 = arith.constant 0 : index
    %c0_5 = arith.constant 0 : index
    %3 = vector.load %arg2[%c0_3, %c0_4, %c0_5] : memref<3x28x416xbf16, #tpu.memory_space<vmem>>, vector<1x28x416xbf16>
    %4 = vector.shape_cast %3 : vector<1x28x416xbf16> to vector<28x416xbf16>
    %cst = arith.constant dense<0.000000e+00> : vector<224x416xf32>
    %5 = tpu.matmul %2, %4, %cst {dimension_numbers = #tpu.dot_dimension_numbers<[1], [0], [0], [1], [0, 0, 1, 1], [], []>} : vector<224x28xbf16>, vector<28x416xbf16>, vector<224x416xf32> -> vector<224x416xf32>
    %6 = vector.extract_strided_slice %0 {offsets = [0, 1, 0, 0], sizes = [14, 1, 16, 28], strides = [1, 1, 1, 1]} : vector<15x2x16x28xbf16> to vector<14x1x16x28xbf16>
    %7 = vector.shape_cast %6 : vector<14x1x16x28xbf16> to vector<224x28xbf16>
    %c1 = arith.constant 1 : index
    %c0_6 = arith.constant 0 : index
    %c0_7 = arith.constant 0 : index
    %8 = vector.load %arg2[%c1, %c0_6, %c0_7] : memref<3x28x416xbf16, #tpu.memory_space<vmem>>, vector<1x28x416xbf16>
    %9 = vector.shape_cast %8 : vector<1x28x416xbf16> to vector<28x416xbf16>
    %cst_8 = arith.constant dense<0.000000e+00> : vector<224x416xf32>
    %10 = tpu.matmul %7, %9, %cst_8 {dimension_numbers = #tpu.dot_dimension_numbers<[1], [0], [0], [1], [0, 0, 1, 1], [], []>} : vector<224x28xbf16>, vector<28x416xbf16>, vector<224x416xf32> -> vector<224x416xf32>
    %11 = arith.addf %5, %10 : vector<224x416xf32>
    %12 = vector.extract_strided_slice %0 {offsets = [1, 0, 0, 0], sizes = [14, 1, 16, 28], strides = [1, 1, 1, 1]} : vector<15x2x16x28xbf16> to vector<14x1x16x28xbf16>
    %13 = vector.shape_cast %12 : vector<14x1x16x28xbf16> to vector<224x28xbf16>
    %c2 = arith.constant 2 : index
    %c0_9 = arith.constant 0 : index
    %c0_10 = arith.constant 0 : index
    %14 = vector.load %arg2[%c2, %c0_9, %c0_10] : memref<3x28x416xbf16, #tpu.memory_space<vmem>>, vector<1x28x416xbf16>
    %15 = vector.shape_cast %14 : vector<1x28x416xbf16> to vector<28x416xbf16>
    %cst_11 = arith.constant dense<0.000000e+00> : vector<224x416xf32>
    %16 = tpu.matmul %13, %15, %cst_11 {dimension_numbers = #tpu.dot_dimension_numbers<[1], [0], [0], [1], [0, 0, 1, 1], [], []>} : vector<224x28xbf16>, vector<28x416xbf16>, vector<224x416xf32> -> vector<224x416xf32>
    %17 = arith.addf %11, %16 : vector<224x416xf32>
    %c0_12 = arith.constant 0 : index
    %c0_13 = arith.constant 0 : index
    %18 = vector.load %arg3[%c0_12, %c0_13] : memref<1x416xf32, #tpu.memory_space<vmem>>, vector<1x416xf32>
    %19 = vector.broadcast %18 : vector<1x416xf32> to vector<224x416xf32>
    %20 = arith.addf %17, %19 : vector<224x416xf32>
    %cst_14 = arith.constant 0.000000e+00 : f32
    %21 = vector.broadcast %cst_14 : f32 to vector<224x416xf32>
    %22 = arith.maximumf %20, %21 : vector<224x416xf32>
    %23 = arith.truncf %22 : vector<224x416xf32> to vector<224x416xbf16>
    %24 = vector.shape_cast %23 : vector<224x416xbf16> to vector<7x2x16x416xbf16>
    %25 = vector.extract_strided_slice %24 {offsets = [0, 0, 0, 0], sizes = [6, 1, 16, 416], strides = [1, 1, 1, 1]} : vector<7x2x16x416xbf16> to vector<6x1x16x416xbf16>
    %26 = vector.shape_cast %25 : vector<6x1x16x416xbf16> to vector<96x416xbf16>
    %c0_15 = arith.constant 0 : index
    %c0_16 = arith.constant 0 : index
    %c0_17 = arith.constant 0 : index
    %27 = vector.load %arg4[%c0_15, %c0_16, %c0_17] : memref<3x416x384xbf16, #tpu.memory_space<vmem>>, vector<1x416x384xbf16>
    %28 = vector.shape_cast %27 : vector<1x416x384xbf16> to vector<416x384xbf16>
    %cst_18 = arith.constant dense<0.000000e+00> : vector<96x384xf32>
    %29 = tpu.matmul %26, %28, %cst_18 {dimension_numbers = #tpu.dot_dimension_numbers<[1], [0], [0], [1], [0, 0, 1, 1], [], []>} : vector<96x416xbf16>, vector<416x384xbf16>, vector<96x384xf32> -> vector<96x384xf32>
    %30 = vector.extract_strided_slice %24 {offsets = [0, 1, 0, 0], sizes = [6, 1, 16, 416], strides = [1, 1, 1, 1]} : vector<7x2x16x416xbf16> to vector<6x1x16x416xbf16>
    %31 = vector.shape_cast %30 : vector<6x1x16x416xbf16> to vector<96x416xbf16>
    %c1_19 = arith.constant 1 : index
    %c0_20 = arith.constant 0 : index
    %c0_21 = arith.constant 0 : index
    %32 = vector.load %arg4[%c1_19, %c0_20, %c0_21] : memref<3x416x384xbf16, #tpu.memory_space<vmem>>, vector<1x416x384xbf16>
    %33 = vector.shape_cast %32 : vector<1x416x384xbf16> to vector<416x384xbf16>
    %cst_22 = arith.constant dense<0.000000e+00> : vector<96x384xf32>
    %34 = tpu.matmul %31, %33, %cst_22 {dimension_numbers = #tpu.dot_dimension_numbers<[1], [0], [0], [1], [0, 0, 1, 1], [], []>} : vector<96x416xbf16>, vector<416x384xbf16>, vector<96x384xf32> -> vector<96x384xf32>
    %35 = arith.addf %29, %34 : vector<96x384xf32>
    %36 = vector.extract_strided_slice %24 {offsets = [1, 0, 0, 0], sizes = [6, 1, 16, 416], strides = [1, 1, 1, 1]} : vector<7x2x16x416xbf16> to vector<6x1x16x416xbf16>
    %37 = vector.shape_cast %36 : vector<6x1x16x416xbf16> to vector<96x416xbf16>
    %c2_23 = arith.constant 2 : index
    %c0_24 = arith.constant 0 : index
    %c0_25 = arith.constant 0 : index
    %38 = vector.load %arg4[%c2_23, %c0_24, %c0_25] : memref<3x416x384xbf16, #tpu.memory_space<vmem>>, vector<1x416x384xbf16>
    %39 = vector.shape_cast %38 : vector<1x416x384xbf16> to vector<416x384xbf16>
    %cst_26 = arith.constant dense<0.000000e+00> : vector<96x384xf32>
    %40 = tpu.matmul %37, %39, %cst_26 {dimension_numbers = #tpu.dot_dimension_numbers<[1], [0], [0], [1], [0, 0, 1, 1], [], []>} : vector<96x416xbf16>, vector<416x384xbf16>, vector<96x384xf32> -> vector<96x384xf32>
    %41 = arith.addf %35, %40 : vector<96x384xf32>
    %c0_27 = arith.constant 0 : index
    %c0_28 = arith.constant 0 : index
    %42 = vector.load %arg5[%c0_27, %c0_28] : memref<1x384xf32, #tpu.memory_space<vmem>>, vector<1x384xf32>
    %43 = vector.broadcast %42 : vector<1x384xf32> to vector<96x384xf32>
    %44 = arith.addf %41, %43 : vector<96x384xf32>
    %cst_29 = arith.constant 0.000000e+00 : f32
    %45 = vector.broadcast %cst_29 : f32 to vector<96x384xf32>
    %46 = arith.maximumf %44, %45 : vector<96x384xf32>
    %47 = arith.truncf %46 : vector<96x384xf32> to vector<96x384xbf16>
    %48 = vector.shape_cast %47 : vector<96x384xbf16> to vector<3x2x16x384xbf16>
    %49 = vector.extract_strided_slice %48 {offsets = [0, 0, 0, 0], sizes = [2, 1, 16, 384], strides = [1, 1, 1, 1]} : vector<3x2x16x384xbf16> to vector<2x1x16x384xbf16>
    %50 = vector.shape_cast %49 : vector<2x1x16x384xbf16> to vector<32x384xbf16>
    %c0_30 = arith.constant 0 : index
    %c0_31 = arith.constant 0 : index
    %c0_32 = arith.constant 0 : index
    %51 = vector.load %arg6[%c0_30, %c0_31, %c0_32] : memref<3x384x256xbf16, #tpu.memory_space<vmem>>, vector<1x384x256xbf16>
    %52 = vector.shape_cast %51 : vector<1x384x256xbf16> to vector<384x256xbf16>
    %cst_33 = arith.constant dense<0.000000e+00> : vector<32x256xf32>
    %53 = tpu.matmul %50, %52, %cst_33 {dimension_numbers = #tpu.dot_dimension_numbers<[1], [0], [0], [1], [0, 0, 1, 1], [], []>} : vector<32x384xbf16>, vector<384x256xbf16>, vector<32x256xf32> -> vector<32x256xf32>
    %54 = vector.extract_strided_slice %48 {offsets = [0, 1, 0, 0], sizes = [2, 1, 16, 384], strides = [1, 1, 1, 1]} : vector<3x2x16x384xbf16> to vector<2x1x16x384xbf16>
    %55 = vector.shape_cast %54 : vector<2x1x16x384xbf16> to vector<32x384xbf16>
    %c1_34 = arith.constant 1 : index
    %c0_35 = arith.constant 0 : index
    %c0_36 = arith.constant 0 : index
    %56 = vector.load %arg6[%c1_34, %c0_35, %c0_36] : memref<3x384x256xbf16, #tpu.memory_space<vmem>>, vector<1x384x256xbf16>
    %57 = vector.shape_cast %56 : vector<1x384x256xbf16> to vector<384x256xbf16>
    %cst_37 = arith.constant dense<0.000000e+00> : vector<32x256xf32>
    %58 = tpu.matmul %55, %57, %cst_37 {dimension_numbers = #tpu.dot_dimension_numbers<[1], [0], [0], [1], [0, 0, 1, 1], [], []>} : vector<32x384xbf16>, vector<384x256xbf16>, vector<32x256xf32> -> vector<32x256xf32>
    %59 = arith.addf %53, %58 : vector<32x256xf32>
    %60 = vector.extract_strided_slice %48 {offsets = [1, 0, 0, 0], sizes = [2, 1, 16, 384], strides = [1, 1, 1, 1]} : vector<3x2x16x384xbf16> to vector<2x1x16x384xbf16>
    %61 = vector.shape_cast %60 : vector<2x1x16x384xbf16> to vector<32x384xbf16>
    %c2_38 = arith.constant 2 : index
    %c0_39 = arith.constant 0 : index
    %c0_40 = arith.constant 0 : index
    %62 = vector.load %arg6[%c2_38, %c0_39, %c0_40] : memref<3x384x256xbf16, #tpu.memory_space<vmem>>, vector<1x384x256xbf16>
    %63 = vector.shape_cast %62 : vector<1x384x256xbf16> to vector<384x256xbf16>
    %cst_41 = arith.constant dense<0.000000e+00> : vector<32x256xf32>
    %64 = tpu.matmul %61, %63, %cst_41 {dimension_numbers = #tpu.dot_dimension_numbers<[1], [0], [0], [1], [0, 0, 1, 1], [], []>} : vector<32x384xbf16>, vector<384x256xbf16>, vector<32x256xf32> -> vector<32x256xf32>
    %65 = arith.addf %59, %64 : vector<32x256xf32>
    %c0_42 = arith.constant 0 : index
    %c0_43 = arith.constant 0 : index
    %66 = vector.load %arg7[%c0_42, %c0_43] : memref<1x256xf32, #tpu.memory_space<vmem>>, vector<1x256xf32>
    %67 = vector.broadcast %66 : vector<1x256xf32> to vector<32x256xf32>
    %68 = arith.addf %65, %67 : vector<32x256xf32>
    %cst_44 = arith.constant 0.000000e+00 : f32
    %69 = vector.broadcast %cst_44 : f32 to vector<32x256xf32>
    %70 = arith.maximumf %68, %69 : vector<32x256xf32>
    %71 = arith.truncf %70 : vector<32x256xf32> to vector<32x256xbf16>
    %72 = vector.shape_cast %71 : vector<32x256xbf16> to vector<2x16x256xbf16>
    %73 = vector.extract_strided_slice %72 {offsets = [0, 0, 0], sizes = [1, 16, 256], strides = [1, 1, 1]} : vector<2x16x256xbf16> to vector<1x16x256xbf16>
    %74 = vector.shape_cast %73 : vector<1x16x256xbf16> to vector<16x256xbf16>
    %75 = vector.extract_strided_slice %72 {offsets = [1, 0, 0], sizes = [1, 16, 256], strides = [1, 1, 1]} : vector<2x16x256xbf16> to vector<1x16x256xbf16>
    %76 = vector.shape_cast %75 : vector<1x16x256xbf16> to vector<16x256xbf16>
    %77 = tpu.concatenate %74, %76 in 1 : vector<16x256xbf16>, vector<16x256xbf16> -> vector<16x512xbf16>
    %c0_45 = arith.constant 0 : index
    %c0_46 = arith.constant 0 : index
    %78 = vector.load %arg8[%c0_45, %c0_46] : memref<512x512xbf16, #tpu.memory_space<vmem>>, vector<512x512xbf16>
    %cst_47 = arith.constant dense<0.000000e+00> : vector<16x512xf32>
    %79 = tpu.matmul %77, %78, %cst_47 {dimension_numbers = #tpu.dot_dimension_numbers<[1], [0], [0], [1], [0, 0, 1, 1], [], []>} : vector<16x512xbf16>, vector<512x512xbf16>, vector<16x512xf32> -> vector<16x512xf32>
    %c0_48 = arith.constant 0 : index
    %c0_49 = arith.constant 0 : index
    %80 = vector.load %arg9[%c0_48, %c0_49] : memref<1x512xf32, #tpu.memory_space<vmem>>, vector<1x512xf32>
    %81 = vector.broadcast %80 : vector<1x512xf32> to vector<16x512xf32>
    %82 = arith.addf %79, %81 : vector<16x512xf32>
    %cst_50 = arith.constant 0.000000e+00 : f32
    %83 = vector.broadcast %cst_50 : f32 to vector<16x512xf32>
    %84 = arith.maximumf %82, %83 : vector<16x512xf32>
    %85 = arith.truncf %84 : vector<16x512xf32> to vector<16x512xbf16>
    %c0_51 = arith.constant 0 : index
    %c0_52 = arith.constant 0 : index
    %86 = vector.load %arg10[%c0_51, %c0_52] : memref<512x128xbf16, #tpu.memory_space<vmem>>, vector<512x128xbf16>
    %cst_53 = arith.constant dense<0.000000e+00> : vector<16x128xf32>
    %87 = tpu.matmul %85, %86, %cst_53 {dimension_numbers = #tpu.dot_dimension_numbers<[1], [0], [0], [1], [0, 0, 1, 1], [], []>} : vector<16x512xbf16>, vector<512x128xbf16>, vector<16x128xf32> -> vector<16x128xf32>
    %c0_54 = arith.constant 0 : index
    %c0_55 = arith.constant 0 : index
    %88 = vector.load %arg11[%c0_54, %c0_55] : memref<1x128xf32, #tpu.memory_space<vmem>>, vector<1x128xf32>
    %89 = vector.broadcast %88 : vector<1x128xf32> to vector<16x128xf32>
    %90 = arith.addf %87, %89 : vector<16x128xf32>
    %c0_56 = arith.constant 0 : index
    %c0_57 = arith.constant 0 : index
    %91 = vector.load %arg12[%c0_56, %c0_57] : memref<16x128xf32, #tpu.memory_space<vmem>>, vector<16x128xf32>
    tpu.vector_store %arg12[%c0_56, %c0_57], %90 {strides = array<i32>} : memref<16x128xf32, #tpu.memory_space<vmem>>, vector<16x128xf32>,
    return
  }
  func.func @transform_0(%arg0: i32) -> (i32, i32, i32, i32) {
    %c0_i32 = arith.constant 0 : i32
    %c0_i32_0 = arith.constant 0 : i32
    %c0_i32_1 = arith.constant 0 : i32
    %c0_i32_2 = arith.constant 0 : i32
    return %c0_i32, %c0_i32_0, %arg0, %c0_i32_1 : i32, i32, i32, i32
  }
  func.func @transform_1(%arg0: i32) -> (i32, i32, i32) {
    %c0_i32 = arith.constant 0 : i32
    %c0_i32_0 = arith.constant 0 : i32
    %c0_i32_1 = arith.constant 0 : i32
    %c0_i32_2 = arith.constant 0 : i32
    return %c0_i32, %c0_i32_0, %c0_i32_1 : i32, i32, i32
  }
  func.func @transform_2(%arg0: i32) -> (i32, i32) {
    %c0_i32 = arith.constant 0 : i32
    %c0_i32_0 = arith.constant 0 : i32
    %c0_i32_1 = arith.constant 0 : i32
    return %c0_i32, %c0_i32_0 : i32, i32
  }
  func.func @transform_3(%arg0: i32) -> (i32, i32, i32) {
    %c0_i32 = arith.constant 0 : i32
    %c0_i32_0 = arith.constant 0 : i32
    %c0_i32_1 = arith.constant 0 : i32
    %c0_i32_2 = arith.constant 0 : i32
    return %c0_i32, %c0_i32_0, %c0_i32_1 : i32, i32, i32
  }
  func.func @transform_4(%arg0: i32) -> (i32, i32) {
    %c0_i32 = arith.constant 0 : i32
    %c0_i32_0 = arith.constant 0 : i32
    %c0_i32_1 = arith.constant 0 : i32
    return %c0_i32, %c0_i32_0 : i32, i32
  }
  func.func @transform_5(%arg0: i32) -> (i32, i32, i32) {
    %c0_i32 = arith.constant 0 : i32
    %c0_i32_0 = arith.constant 0 : i32
    %c0_i32_1 = arith.constant 0 : i32
    %c0_i32_2 = arith.constant 0 : i32
    return %c0_i32, %c0_i32_0, %c0_i32_1 : i32, i32, i32
  }
  func.func @transform_6(%arg0: i32) -> (i32, i32) {
    %c0_i32 = arith.constant 0 : i32
    %c0_i32_0 = arith.constant 0 : i32
    %c0_i32_1 = arith.constant 0 : i32
    return %c0_i32, %c0_i32_0 : i32, i32
  }
  func.func @transform_7(%arg0: i32) -> (i32, i32) {
    %c0_i32 = arith.constant 0 : i32
    %c0_i32_0 = arith.constant 0 : i32
    %c0_i32_1 = arith.constant 0 : i32
    return %c0_i32, %c0_i32_0 : i32, i32
  }
  func.func @transform_8(%arg0: i32) -> (i32, i32) {
    %c0_i32 = arith.constant 0 : i32
    %c0_i32_0 = arith.constant 0 : i32
    %c0_i32_1 = arith.constant 0 : i32
    return %c0_i32, %c0_i32_0 : i32, i32
  }
  func.func @transform_9(%arg0: i32) -> (i32, i32) {
    %c0_i32 = arith.constant 0 : i32
    %c0_i32_0 = arith.constant 0 : i32
    %c0_i32_1 = arith.constant 0 : i32
    return %c0_i32, %c0_i32_0 : i32, i32
  }
  func.func @transform_10(%arg0: i32) -> (i32, i32) {
    %c0_i32 = arith.constant 0 : i32
    %c0_i32_0 = arith.constant 0 : i32
    %c0_i32_1 = arith.constant 0 : i32
    return %c0_i32, %c0_i32_0 : i32, i32
  }
  func.func @transform_11(%arg0: i32) -> (i32, i32) {
    %c0_i32 = arith.constant 0 : i32
    %c0_i32_0 = arith.constant 0 : i32
    return %arg0, %c0_i32 : i32, i32
  }
}

</mosaic_0001>

<llo_original>
// kernel: tile.18
$region0: #{tile.18}
  #allocation0 [shape = 's32[1]{0}', space=sflag, size = 0x4, scoped, tag = 'scoped memory for tile.18']
  %s0 = inlined_call_operand.vmem [shape: f32[32], index: 0, kind: input, shape index: {}]
  %s1 = inlined_call_operand.vmem [shape: f32[13,32], index: 1, kind: output, shape index: {}]
  // Predicated region
  $region2: #{tile.18} parent=0 // pred_check
    _
  $region3: #{tile.18} parent=0 // pred_check_branch
    %3 = sbr.rel (0) target = $region5
  $region4: #{tile.18} parent=0 // pred_region
    _
  $region5: #{tile.18} parent=0 // pred_fallthru
    _
  %v4 = vld [vmem:[%s0] ss:$0 sm:$0xff]
  %5 = vst [vmem:[%s1] sm:$0xff] %v4
  %s6 = scalar_lea.vmem %s1, 8
  %7 = vst [vmem:[%s6] sm:$0xff] %v4

// kernel: tile.19
$region0: #{tile.19}
  %s0 = inlined_call_operand.vmem [shape: f32[13,32], index: 0, kind: input, shape index: {}]
  %s1 = inlined_call_operand.vmem [shape: f32[1,416], index: 1, kind: output, shape index: {}]
  $region1: #{tile.19} parent=0
    #allocation0 [shape = 'u8[16384]{0}', space=vmem, size = 0x4000, scoped, tag = 'scoped mem for output reshape']
    %v2 = vld [vmem:[%s0] ss:$4 sm:$0xf]
    %vm3 = vcmask 261120
    %4 = vst.msk [vmem:[#allocation0] ss:$8 sm:$0xf] %vm3, %v2
    %s5 = scalar_lea.vmem %s0, 3
    %v6 = vld [vmem:[%s5] ss:$4 sm:$0x7]
    %7 = vrot.lane.b32.xlu0 %v6, 96
    %v8 = vpop.permute.xlu0 %7
    %vm9 = vcmask 1048320
    %10 = vst.msk [vmem:[#allocation0] ss:$8 sm:$0x7] %vm9, %v8
    %s11 = scalar_lea.vmem %s0, 2
    %v12 = vld [vmem:[%s11] ss:$4 sm:$0x7]
    %13 = vrot.lane.b32.xlu0 %v12, 64
    %v14 = vpop.permute.xlu0 %13
    %vm15 = vcmask 785920
    %16 = vst.msk [vmem:[#allocation0] ss:$8 sm:$0x7] %vm15, %v14
    %s17 = scalar_lea.vmem %s0, 1
    %v18 = vld [vmem:[%s17] ss:$4 sm:$0x7]
    %19 = vrot.lane.b32.xlu0 %v18, 32
    %v20 = vpop.permute.xlu0 %19
    %vm21 = vcmask 523520
    %22 = vst.msk [vmem:[#allocation0] ss:$8 sm:$0x7] %vm21, %v20
    %s24 = ssub.s32 2, 1
    %v25 = vld [vmem:[#allocation0] sm:%s24]
    %s27 = ssub.s32 2, 1
    %28 = vst [vmem:[%s1] sm:%s27] %v25
    %s29 = scalar_lea.vmem [#allocation0], 8
    %v30 = vld [vmem:[%s29] sm:%s24]
    %s32 = ssub.s32 2, 1
    %s33 = scalar_lea.vmem %s1, 1
    %34 = vst [vmem:[%s33] sm:%s32] %v30
    %s35 = scalar_lea.vmem [#allocation0], 16
    %v36 = vld [vmem:[%s35] sm:%s24]
    %s38 = ssub.s32 2, 1
    %s39 = scalar_lea.vmem %s1, 2
    %40 = vst [vmem:[%s39] sm:%s38] %v36
    %s41 = scalar_lea.vmem [#allocation0], 24
    %v42 = vld [vmem:[%s41] sm:%s24]
    %s44 = ssub.s32 2, 1
    %s45 = scalar_lea.vmem %s1, 3
    %46 = vst [vmem:[%s45] sm:%s44] %v42

// kernel: tile.23
$region0: #{tile.23}
  #allocation0 [shape = 's32[1]{0}', space=sflag, size = 0x4, scoped, tag = 'scoped memory for tile.23']
  %s0 = inlined_call_operand.vmem [shape: f32[64], index: 0, kind: input, shape index: {}]
  %s1 = inlined_call_operand.vmem [shape: f32[6,64], index: 1, kind: output, shape index: {}]
  // Predicated region
  $region2: #{tile.23} parent=0 // pred_check
    _
  $region3: #{tile.23} parent=0 // pred_check_branch
    %3 = sbr.rel (0) target = $region5
  $region4: #{tile.23} parent=0 // pred_region
    _
  $region5: #{tile.23} parent=0 // pred_fallthru
    _
  %v4 = vld [vmem:[%s0] ss:$0 sm:$0xff]
  %5 = vst [vmem:[%s1] sm:$0xff] %v4

// kernel: tile.24
$region0: #{tile.24}
  %s0 = inlined_call_operand.vmem [shape: f32[6,64], index: 0, kind: input, shape index: {}]
  %s1 = inlined_call_operand.vmem [shape: f32[1,384], index: 1, kind: output, shape index: {}]
  $region1: #{tile.24} parent=0
    #allocation0 [shape = 'u8[12288]{0}', space=vmem, size = 0x3000, scoped, tag = 'scoped mem for output reshape']
    %v2 = vld [vmem:[%s0] ss:$2 sm:$0x7]
    %vm3 = vcmask 523264
    %4 = vst.msk [vmem:[#allocation0] ss:$8 sm:$0x7] %vm3, %v2
    %s5 = scalar_lea.vmem %s0, 1
    %v6 = vld [vmem:[%s5] ss:$2 sm:$0x7]
    %7 = vrot.lane.b32.xlu0 %v6, 64
    %v8 = vpop.permute.xlu0 %7
    %vm9 = vcmask 1048064
    %10 = vst.msk [vmem:[#allocation0] ss:$8 sm:$0x7] %vm9, %v8
    %s12 = ssub.s32 2, 1
    %v13 = vld [vmem:[#allocation0] sm:%s12]
    %s15 = ssub.s32 2, 1
    %16 = vst [vmem:[%s1] sm:%s15] %v13
    %s17 = scalar_lea.vmem [#allocation0], 8
    %v18 = vld [vmem:[%s17] sm:%s12]
    %s20 = ssub.s32 2, 1
    %s21 = scalar_lea.vmem %s1, 1
    %22 = vst [vmem:[%s21] sm:%s20] %v18
    %s23 = scalar_lea.vmem [#allocation0], 16
    %v24 = vld [vmem:[%s23] sm:%s12]
    %s26 = ssub.s32 2, 1
    %s27 = scalar_lea.vmem %s1, 2
    %28 = vst [vmem:[%s27] sm:%s26] %v24

// kernel: tile.28
$region0: #{tile.28}
  #allocation0 [shape = 's32[1]{0}', space=sflag, size = 0x4, scoped, tag = 'scoped memory for tile.28']
  %s0 = inlined_call_operand.vmem [shape: f32[128], index: 0, kind: input, shape index: {}]
  %s1 = inlined_call_operand.vmem [shape: f32[2,128], index: 1, kind: output, shape index: {}]
  // Predicated region
  $region2: #{tile.28} parent=0 // pred_check
    _
  $region3: #{tile.28} parent=0 // pred_check_branch
    %3 = sbr.rel (0) target = $region5
  $region4: #{tile.28} parent=0 // pred_region
    _
  $region5: #{tile.28} parent=0 // pred_fallthru
    _
  %v4 = vld [vmem:[%s0] ss:$0 sm:$0xff]
  %5 = vst [vmem:[%s1] sm:$0x3] %v4

// kernel: cnn_forward.1
$region0: #{cnn_forward.1}
  #allocation0 [shape = 'u32[]', space=smem, size = 0x4, offset = 0x4, fixed_abs, tag = 'smem constant byte address 0x4 - core index']
  #allocation1 [shape = 'u32[72,128]{1,0:T(1,128)}', space=vmem, size = 0x9000, scoped, tag = 'internal scratch']
  %s0 = inlined_call_operand.vmem [shape: bf16[15,2,16,28], index: 0, kind: input, shape index: {}]
  %s1 = inlined_call_operand.vmem [shape: bf16[3,28,416], index: 1, kind: input, shape index: {}]
  %s2 = inlined_call_operand.vmem [shape: f32[1,416], index: 2, kind: input, shape index: {}]
  %s3 = inlined_call_operand.vmem [shape: bf16[3,416,384], index: 3, kind: input, shape index: {}]
  %s4 = inlined_call_operand.vmem [shape: f32[1,384], index: 4, kind: input, shape index: {}]
  %s5 = inlined_call_operand.vmem [shape: bf16[3,384,256], index: 5, kind: input, shape index: {}]
  %s6 = inlined_call_operand.vmem [shape: f32[1,256], index: 6, kind: input, shape index: {}]
  %s7 = inlined_call_operand.vmem [shape: bf16[512,512], index: 7, kind: input, shape index: {}]
  %s8 = inlined_call_operand.vmem [shape: f32[1,512], index: 8, kind: input, shape index: {}]
  %s9 = inlined_call_operand.vmem [shape: bf16[512,128], index: 9, kind: input, shape index: {}]
  %s10 = inlined_call_operand.vmem [shape: f32[1,128], index: 10, kind: input, shape index: {}]
  %s11 = inlined_call_operand.vmem [shape: f32[16,128], index: 11, kind: output, shape index: {}]
  %s12 = sld [smem:[#allocation0]]
  $region54: #{cnn_forward.1} parent=0
    _
  %s14 = ssub.s32 1, %s12
  %s15 = scalar_select 0, %s14, %s12
  // Predicated region
  $region2: #{cnn_forward.1} parent=0 // pred_check
    _
  $region3: #{cnn_forward.1} parent=0 // pred_check_branch
    %17 = sbr.rel (0) target = $region5
  $region4: #{cnn_forward.1} parent=0 // pred_region
    _
  $region5: #{cnn_forward.1} parent=0 // pred_fallthru
    _
  // Predicated region
  $region6: #{cnn_forward.1} parent=0 // pred_check
    _
  $region7: #{cnn_forward.1} parent=0 // pred_check_branch
    %19 = sbr.rel (0) target = $region9
  $region8: #{cnn_forward.1} parent=0 // pred_region
    _
  $region9: #{cnn_forward.1} parent=0 // pred_fallthru
    _
  // Predicated region
  $region10: #{cnn_forward.1} parent=0 // pred_check
    _
  $region11: #{cnn_forward.1} parent=0 // pred_check_branch
    %21 = sbr.rel (0) target = $region13
  $region12: #{cnn_forward.1} parent=0 // pred_region
    _
  $region13: #{cnn_forward.1} parent=0 // pred_fallthru
    _
  // Predicated region
  $region14: #{cnn_forward.1} parent=0 // pred_check
    _
  $region15: #{cnn_forward.1} parent=0 // pred_check_branch
    %23 = sbr.rel (0) target = $region17
  $region16: #{cnn_forward.1} parent=0 // pred_region
    _
  $region17: #{cnn_forward.1} parent=0 // pred_fallthru
    _
  // Predicated region
  $region18: #{cnn_forward.1} parent=0 // pred_check
    _
  $region19: #{cnn_forward.1} parent=0 // pred_check_branch
    %25 = sbr.rel (0) target = $region21
  $region20: #{cnn_forward.1} parent=0 // pred_region
    _
  $region21: #{cnn_forward.1} parent=0 // pred_fallthru
    _
  // Predicated region
  $region22: #{cnn_forward.1} parent=0 // pred_check
    _
  $region23: #{cnn_forward.1} parent=0 // pred_check_branch
    %27 = sbr.rel (0) target = $region25
  $region24: #{cnn_forward.1} parent=0 // pred_region
    _
  $region25: #{cnn_forward.1} parent=0 // pred_fallthru
    _
  // Predicated region
  $region26: #{cnn_forward.1} parent=0 // pred_check
    _
  $region27: #{cnn_forward.1} parent=0 // pred_check_branch
    %29 = sbr.rel (0) target = $region29
  $region28: #{cnn_forward.1} parent=0 // pred_region
    _
  $region29: #{cnn_forward.1} parent=0 // pred_fallthru
    _
  // Predicated region
  $region30: #{cnn_forward.1} parent=0 // pred_check
    _
  $region31: #{cnn_forward.1} parent=0 // pred_check_branch
    %31 = sbr.rel (0) target = $region33
  $region32: #{cnn_forward.1} parent=0 // pred_region
    _
  $region33: #{cnn_forward.1} parent=0 // pred_fallthru
    _
  // Predicated region
  $region34: #{cnn_forward.1} parent=0 // pred_check
    _
  $region35: #{cnn_forward.1} parent=0 // pred_check_branch
    %33 = sbr.rel (0) target = $region37
  $region36: #{cnn_forward.1} parent=0 // pred_region
    _
  $region37: #{cnn_forward.1} parent=0 // pred_fallthru
    _
  // Predicated region
  $region38: #{cnn_forward.1} parent=0 // pred_check
    _
  $region39: #{cnn_forward.1} parent=0 // pred_check_branch
    %35 = sbr.rel (0) target = $region41
  $region40: #{cnn_forward.1} parent=0 // pred_region
    _
  $region41: #{cnn_forward.1} parent=0 // pred_fallthru
    _
  // Predicated region
  $region42: #{cnn_forward.1} parent=0 // pred_check
    _
  $region43: #{cnn_forward.1} parent=0 // pred_check_branch
    %37 = sbr.rel (0) target = $region45
  $region44: #{cnn_forward.1} parent=0 // pred_region
    _
  $region45: #{cnn_forward.1} parent=0 // pred_fallthru
    _
  %v39 = vld [vmem:[%s0] sm:$0xf]
  %v40 = vld [vmem:[%s0 + $0x4] sm:$0xf]
  %v41 = vld [vmem:[%s0 + $0x8] sm:$0xf]
  %v42 = vld [vmem:[%s0 + $0xc] sm:$0xf]
  %v43 = vld [vmem:[%s0 + $0x10] sm:$0xf]
  %v44 = vld [vmem:[%s0 + $0x14] sm:$0xf]
  %v45 = vld [vmem:[%s0 + $0x18] sm:$0xf]
  %v46 = vld [vmem:[%s0 + $0x1c] sm:$0xf]
  %v47 = vld [vmem:[%s0 + $0x20] sm:$0xf]
  %v48 = vld [vmem:[%s0 + $0x24] sm:$0xf]
  %v49 = vld [vmem:[%s0 + $0x28] sm:$0xf]
  %v50 = vld [vmem:[%s0 + $0x2c] sm:$0xf]
  %v51 = vld [vmem:[%s0 + $0x30] sm:$0xf]
  %v52 = vld [vmem:[%s0 + $0x34] sm:$0xf]
  %v53 = vld [vmem:[%s0 + $0x38] sm:$0xf]
  %v54 = vld [vmem:[%s0 + $0x3c] sm:$0xf]
  %v55 = vld [vmem:[%s0 + $0x40] sm:$0xf]
  %v56 = vld [vmem:[%s0 + $0x44] sm:$0xf]
  %v57 = vld [vmem:[%s0 + $0x48] sm:$0xf]
  %v58 = vld [vmem:[%s0 + $0x4c] sm:$0xf]
  %v59 = vld [vmem:[%s0 + $0x50] sm:$0xf]
  %v60 = vld [vmem:[%s0 + $0x54] sm:$0xf]
  %v61 = vld [vmem:[%s0 + $0x58] sm:$0xf]
  %v62 = vld [vmem:[%s0 + $0x5c] sm:$0xf]
  %v63 = vld [vmem:[%s0 + $0x60] sm:$0xf]
  %v64 = vld [vmem:[%s0 + $0x64] sm:$0xf]
  %v65 = vld [vmem:[%s0 + $0x68] sm:$0xf]
  %v66 = vld [vmem:[%s0 + $0x6c] sm:$0xf]
  %v67 = vld [vmem:[%s0 + $0x70] sm:$0xf]
  %v68 = vld [vmem:[%s0 + $0x74] sm:$0xf]
  %v69 = vld [vmem:[%s0 + $0x78] sm:$0xf]
  %v70 = vld [vmem:[%s0 + $0x7c] sm:$0xf]
  %v71 = vld [vmem:[%s0 + $0x80] sm:$0xf]
  %v72 = vld [vmem:[%s0 + $0x84] sm:$0xf]
  %v73 = vld [vmem:[%s0 + $0x88] sm:$0xf]
  %v74 = vld [vmem:[%s0 + $0x8c] sm:$0xf]
  %v75 = vld [vmem:[%s0 + $0x90] sm:$0xf]
  %v76 = vld [vmem:[%s0 + $0x94] sm:$0xf]
  %v77 = vld [vmem:[%s0 + $0x98] sm:$0xf]
  %v78 = vld [vmem:[%s0 + $0x9c] sm:$0xf]
  %v79 = vld [vmem:[%s0 + $0xa0] sm:$0xf]
  %v80 = vld [vmem:[%s0 + $0xa4] sm:$0xf]
  %v81 = vld [vmem:[%s0 + $0xa8] sm:$0xf]
  %v82 = vld [vmem:[%s0 + $0xac] sm:$0xf]
  %v83 = vld [vmem:[%s0 + $0xb0] sm:$0xf]
  %v84 = vld [vmem:[%s0 + $0xb4] sm:$0xf]
  %v85 = vld [vmem:[%s0 + $0xb8] sm:$0xf]
  %v86 = vld [vmem:[%s0 + $0xbc] sm:$0xf]
  %v87 = vld [vmem:[%s0 + $0xc0] sm:$0xf]
  %v88 = vld [vmem:[%s0 + $0xc4] sm:$0xf]
  %v89 = vld [vmem:[%s0 + $0xc8] sm:$0xf]
  %v90 = vld [vmem:[%s0 + $0xcc] sm:$0xf]
  %v91 = vld [vmem:[%s0 + $0xd0] sm:$0xf]
  %v92 = vld [vmem:[%s0 + $0xd4] sm:$0xf]
  %v93 = vld [vmem:[%s0 + $0xd8] sm:$0xf]
  %v94 = vld [vmem:[%s0 + $0xdc] sm:$0xf]
  %v95 = vld [vmem:[%s0 + $0xe0] sm:$0xf]
  %v96 = vld [vmem:[%s0 + $0xe4] sm:$0xf]
  %v97 = vld [vmem:[%s1] sm:$0xff]
  %v98 = vld [vmem:[%s1 + $0x8] sm:$0xff]
  %v99 = vld [vmem:[%s1 + $0x10] sm:$0xff]
  %v100 = vld [vmem:[%s1 + $0x18] sm:$0xff]
  %v101 = vld [vmem:[%s1 + $0x20] sm:$0xff]
  %v102 = vld [vmem:[%s1 + $0x28] sm:$0xff]
  %v103 = vld [vmem:[%s1 + $0x30] sm:$0x33]
  %v104 = vld [vmem:[%s1 + $0x38] sm:$0x33]
  %s105 = scalar_lea.vmem %s1, 64
  %v106 = vld [vmem:[%s105] sm:$0xff]
  %v107 = vld [vmem:[%s105 + $0x8] sm:$0xff]
  %v108 = vld [vmem:[%s105 + $0x10] sm:$0xff]
  %v109 = vld [vmem:[%s105 + $0x18] sm:$0xff]
  %v110 = vld [vmem:[%s105 + $0x20] sm:$0xff]
  %v111 = vld [vmem:[%s105 + $0x28] sm:$0xff]
  %v112 = vld [vmem:[%s105 + $0x30] sm:$0x33]
  %v113 = vld [vmem:[%s105 + $0x38] sm:$0x33]
  %v142 = vunpack.c.l.b16 %v41
  %v143 = vunpack.c.l.b16 %v42
  %v144 = vunpack.c.l.b16 %v45
  %v145 = vunpack.c.l.b16 %v46
  %v146 = vunpack.c.l.b16 %v49
  %v147 = vunpack.c.l.b16 %v50
  %v148 = vunpack.c.l.b16 %v53
  %v149 = vunpack.c.l.b16 %v54
  %v150 = vunpack.c.l.b16 %v57
  %v151 = vunpack.c.l.b16 %v58
  %v152 = vunpack.c.l.b16 %v61
  %v153 = vunpack.c.l.b16 %v62
  %v154 = vunpack.c.l.b16 %v65
  %v155 = vunpack.c.l.b16 %v66
  %v156 = vunpack.c.l.b16 %v69
  %v157 = vunpack.c.l.b16 %v70
  %v158 = vunpack.c.l.b16 %v73
  %v159 = vunpack.c.l.b16 %v74
  %v160 = vunpack.c.l.b16 %v77
  %v161 = vunpack.c.l.b16 %v78
  %v162 = vunpack.c.l.b16 %v81
  %v163 = vunpack.c.l.b16 %v82
  %v164 = vunpack.c.l.b16 %v85
  %v165 = vunpack.c.l.b16 %v86
  %v166 = vunpack.c.l.b16 %v89
  %v167 = vunpack.c.l.b16 %v90
  %v168 = vunpack.c.l.b16 %v93
  %v169 = vunpack.c.l.b16 %v94
  %v170 = vpack.c.b16 %v143, %v142
  %v171 = vpack.c.b16 %v145, %v144
  %v172 = vpack.c.b16 %v147, %v146
  %v173 = vpack.c.b16 %v149, %v148
  %v174 = vpack.c.b16 %v151, %v150
  %v175 = vpack.c.b16 %v153, %v152
  %v176 = vpack.c.b16 %v155, %v154
  %v177 = vpack.c.b16 %v157, %v156
  %v178 = vpack.c.b16 %v159, %v158
  %v179 = vpack.c.b16 %v161, %v160
  %v180 = vpack.c.b16 %v163, %v162
  %v181 = vpack.c.b16 %v165, %v164
  %v182 = vpack.c.b16 %v167, %v166
  %v183 = vpack.c.b16 %v169, %v168
  %v192 = vunpack.c.l.b16 %v106
  %v193 = vunpack.c.h.b16 %v106
  %v194 = vunpack.c.l.b16 %v107
  %v195 = vunpack.c.h.b16 %v107
  %v196 = vunpack.c.l.b16 %v108
  %v197 = vunpack.c.h.b16 %v108
  %v198 = vunpack.c.l.b16 %v109
  %v199 = vunpack.c.h.b16 %v109
  %v200 = vunpack.c.l.b16 %v110
  %v201 = vunpack.c.h.b16 %v110
  %v202 = vunpack.c.l.b16 %v111
  %v203 = vunpack.c.h.b16 %v111
  %v204 = vunpack.c.l.b16 %v112
  %v205 = vunpack.c.h.b16 %v112
  %v206 = vunpack.c.l.b16 %v113
  %v207 = vunpack.c.h.b16 %v113
  %v208 = vpack.c.b16 %v196, %v192
  %v209 = vpack.c.b16 %v197, %v193
  %v210 = vpack.c.b16 %v198, %v194
  %v211 = vpack.c.b16 %v199, %v195
  %v212 = vpack.c.b16 %v204, %v200
  %v213 = vpack.c.b16 %v205, %v201
  %v214 = vpack.c.b16 %v206, %v202
  %v215 = vpack.c.b16 %v207, %v203
  %vm220 = vcmask 228352
  %v222 = vsel %vm220, %v170, 0
  %v225 = vsel %vm220, %v171, 0
  %v228 = vsel %vm220, %v172, 0
  %v231 = vsel %vm220, %v173, 0
  %v234 = vsel %vm220, %v174, 0
  %v237 = vsel %vm220, %v175, 0
  %v240 = vsel %vm220, %v176, 0
  %v243 = vsel %vm220, %v177, 0
  %v246 = vsel %vm220, %v178, 0
  %v249 = vsel %vm220, %v179, 0
  %v252 = vsel %vm220, %v180, 0
  %v255 = vsel %vm220, %v181, 0
  %v258 = vsel %vm220, %v182, 0
  %v261 = vsel %vm220, %v183, 0
  %vm263 = vcmask 1045504
  %v265 = vsel %vm263, %v212, 0
  %v268 = vsel %vm263, %v213, 0
  %v271 = vsel %vm263, %v214, 0
  %v274 = vsel %vm263, %v215, 0
  %276 = vmatpush.bf16.msra.mxu0 0
  %277 = vmatpush.bf16.msra.mxu0 0
  %278 = vmatpush.bf16.msra.mxu0 0
  %279 = vmatpush.bf16.msra.mxu0 0
  %280 = vmatpush.bf16.msra.mxu0 0
  %281 = vmatpush.bf16.msra.mxu0 0
  %282 = vmatpush.bf16.msra.mxu0 %v265
  %283 = vmatpush.bf16.msra.mxu0 %v208
  %284 = vmatmul.bf16.gmra.mxu0 %v222
  %v285 = vpop.f32.mrf.mxu0
  %v286 = vadd.f32 0.0, %v285
  %v287 = vpop.f32.mrf.mxu0
  %v288 = vadd.f32 0.0, %v287
  %289 = vmatmul.bf16.gmra.mxu0 %v225
  %v290 = vpop.f32.mrf.mxu0
  %v291 = vadd.f32 0.0, %v290
  %v292 = vpop.f32.mrf.mxu0
  %v293 = vadd.f32 0.0, %v292
  %294 = vmatmul.bf16.gmra.mxu0 %v228
  %v295 = vpop.f32.mrf.mxu0
  %v296 = vadd.f32 0.0, %v295
  %v297 = vpop.f32.mrf.mxu0
  %v298 = vadd.f32 0.0, %v297
  %299 = vmatmul.bf16.gmra.mxu0 %v231
  %v300 = vpop.f32.mrf.mxu0
  %v301 = vadd.f32 0.0, %v300
  %v302 = vpop.f32.mrf.mxu0
  %v303 = vadd.f32 0.0, %v302
  %304 = vmatmul.bf16.gmra.mxu0 %v234
  %v305 = vpop.f32.mrf.mxu0
  %v306 = vadd.f32 0.0, %v305
  %v307 = vpop.f32.mrf.mxu0
  %v308 = vadd.f32 0.0, %v307
  %309 = vmatmul.bf16.gmra.mxu0 %v237
  %v310 = vpop.f32.mrf.mxu0
  %v311 = vadd.f32 0.0, %v310
  %v312 = vpop.f32.mrf.mxu0
  %v313 = vadd.f32 0.0, %v312
  %314 = vmatmul.bf16.gmra.mxu0 %v240
  %v315 = vpop.f32.mrf.mxu0
  %v316 = vadd.f32 0.0, %v315
  %v317 = vpop.f32.mrf.mxu0
  %v318 = vadd.f32 0.0, %v317
  %319 = vmatmul.bf16.gmra.mxu0 %v243
  %v320 = vpop.f32.mrf.mxu0
  %v321 = vadd.f32 0.0, %v320
  %v322 = vpop.f32.mrf.mxu0
  %v323 = vadd.f32 0.0, %v322
  %324 = vmatmul.bf16.gmra.mxu0 %v246
  %v325 = vpop.f32.mrf.mxu0
  %v326 = vadd.f32 0.0, %v325
  %v327 = vpop.f32.mrf.mxu0
  %v328 = vadd.f32 0.0, %v327
  %329 = vmatmul.bf16.gmra.mxu0 %v249
  %v330 = vpop.f32.mrf.mxu0
  %v331 = vadd.f32 0.0, %v330
  %v332 = vpop.f32.mrf.mxu0
  %v333 = vadd.f32 0.0, %v332
  %334 = vmatmul.bf16.gmra.mxu0 %v252
  %v335 = vpop.f32.mrf.mxu0
  %v336 = vadd.f32 0.0, %v335
  %v337 = vpop.f32.mrf.mxu0
  %v338 = vadd.f32 0.0, %v337
  %339 = vmatmul.bf16.gmra.mxu0 %v255
  %v340 = vpop.f32.mrf.mxu0
  %v341 = vadd.f32 0.0, %v340
  %v342 = vpop.f32.mrf.mxu0
  %v343 = vadd.f32 0.0, %v342
  %344 = vmatmul.bf16.gmra.mxu0 %v258
  %v345 = vpop.f32.mrf.mxu0
  %v346 = vadd.f32 0.0, %v345
  %v347 = vpop.f32.mrf.mxu0
  %v348 = vadd.f32 0.0, %v347
  %349 = vmatmul.bf16.gmra.mxu0 %v261
  %v350 = vpop.f32.mrf.mxu0
  %v351 = vpop.f32.mrf.mxu0
  %352 = vdwg.mxu0
  %353 = vmatpush.bf16.msra.mxu0 0
  %354 = vmatpush.bf16.msra.mxu0 0
  %355 = vmatpush.bf16.msra.mxu0 0
  %356 = vmatpush.bf16.msra.mxu0 0
  %357 = vmatpush.bf16.msra.mxu0 0
  %358 = vmatpush.bf16.msra.mxu0 0
  %359 = vmatpush.bf16.msra.mxu0 %v268
  %360 = vmatpush.bf16.msra.mxu0 %v209
  %361 = vmatmul.bf16.gmra.mxu0 %v222
  %v362 = vpop.f32.mrf.mxu0
  %v363 = vadd.f32 0.0, %v362
  %v364 = vpop.f32.mrf.mxu0
  %v365 = vadd.f32 0.0, %v364
  %366 = vmatmul.bf16.gmra.mxu0 %v225
  %v367 = vpop.f32.mrf.mxu0
  %v368 = vadd.f32 0.0, %v367
  %v369 = vpop.f32.mrf.mxu0
  %v370 = vadd.f32 0.0, %v369
  %371 = vmatmul.bf16.gmra.mxu0 %v228
  %v372 = vpop.f32.mrf.mxu0
  %v373 = vadd.f32 0.0, %v372
  %v374 = vpop.f32.mrf.mxu0
  %v375 = vadd.f32 0.0, %v374
  %376 = vmatmul.bf16.gmra.mxu0 %v231
  %v377 = vpop.f32.mrf.mxu0
  %v378 = vadd.f32 0.0, %v377
  %v379 = vpop.f32.mrf.mxu0
  %v380 = vadd.f32 0.0, %v379
  %381 = vmatmul.bf16.gmra.mxu0 %v234
  %v382 = vpop.f32.mrf.mxu0
  %v383 = vadd.f32 0.0, %v382
  %v384 = vpop.f32.mrf.mxu0
  %v385 = vadd.f32 0.0, %v384
  %386 = vmatmul.bf16.gmra.mxu0 %v237
  %v387 = vpop.f32.mrf.mxu0
  %v388 = vadd.f32 0.0, %v387
  %v389 = vpop.f32.mrf.mxu0
  %v390 = vadd.f32 0.0, %v389
  %391 = vmatmul.bf16.gmra.mxu0 %v240
  %v392 = vpop.f32.mrf.mxu0
  %v393 = vadd.f32 0.0, %v392
  %v394 = vpop.f32.mrf.mxu0
  %v395 = vadd.f32 0.0, %v394
  %396 = vmatmul.bf16.gmra.mxu0 %v243
  %v397 = vpop.f32.mrf.mxu0
  %v398 = vadd.f32 0.0, %v397
  %v399 = vpop.f32.mrf.mxu0
  %v400 = vadd.f32 0.0, %v399
  %401 = vmatmul.bf16.gmra.mxu0 %v246
  %v402 = vpop.f32.mrf.mxu0
  %v403 = vadd.f32 0.0, %v402
  %v404 = vpop.f32.mrf.mxu0
  %v405 = vadd.f32 0.0, %v404
  %406 = vmatmul.bf16.gmra.mxu0 %v249
  %v407 = vpop.f32.mrf.mxu0
  %v408 = vadd.f32 0.0, %v407
  %v409 = vpop.f32.mrf.mxu0
  %v410 = vadd.f32 0.0, %v409
  %411 = vmatmul.bf16.gmra.mxu0 %v252
  %v412 = vpop.f32.mrf.mxu0
  %v413 = vadd.f32 0.0, %v412
  %v414 = vpop.f32.mrf.mxu0
  %v415 = vadd.f32 0.0, %v414
  %416 = vmatmul.bf16.gmra.mxu0 %v255
  %v417 = vpop.f32.mrf.mxu0
  %v418 = vadd.f32 0.0, %v417
  %v419 = vpop.f32.mrf.mxu0
  %v420 = vadd.f32 0.0, %v419
  %421 = vmatmul.bf16.gmra.mxu0 %v258
  %v422 = vpop.f32.mrf.mxu0
  %v423 = vadd.f32 0.0, %v422
  %v424 = vpop.f32.mrf.mxu0
  %v425 = vadd.f32 0.0, %v424
  %426 = vmatmul.bf16.gmra.mxu0 %v261
  %v427 = vpop.f32.mrf.mxu0
  %v428 = vpop.f32.mrf.mxu0
  %429 = vdwg.mxu0
  %430 = vmatpush.bf16.msra.mxu0 0
  %431 = vmatpush.bf16.msra.mxu0 0
  %432 = vmatpush.bf16.msra.mxu0 0
  %433 = vmatpush.bf16.msra.mxu0 0
  %434 = vmatpush.bf16.msra.mxu0 0
  %435 = vmatpush.bf16.msra.mxu0 0
  %436 = vmatpush.bf16.msra.mxu0 %v271
  %437 = vmatpush.bf16.msra.mxu0 %v210
  %438 = vmatmul.bf16.gmra.mxu0 %v222
  %v439 = vpop.f32.mrf.mxu0
  %v440 = vadd.f32 0.0, %v439
  %v441 = vpop.f32.mrf.mxu0
  %v442 = vadd.f32 0.0, %v441
  %443 = vmatmul.bf16.gmra.mxu0 %v225
  %v444 = vpop.f32.mrf.mxu0
  %v445 = vadd.f32 0.0, %v444
  %v446 = vpop.f32.mrf.mxu0
  %v447 = vadd.f32 0.0, %v446
  %448 = vmatmul.bf16.gmra.mxu0 %v228
  %v449 = vpop.f32.mrf.mxu0
  %v450 = vadd.f32 0.0, %v449
  %v451 = vpop.f32.mrf.mxu0
  %v452 = vadd.f32 0.0, %v451
  %453 = vmatmul.bf16.gmra.mxu0 %v231
  %v454 = vpop.f32.mrf.mxu0
  %v455 = vadd.f32 0.0, %v454
  %v456 = vpop.f32.mrf.mxu0
  %v457 = vadd.f32 0.0, %v456
  %458 = vmatmul.bf16.gmra.mxu0 %v234
  %v459 = vpop.f32.mrf.mxu0
  %v460 = vadd.f32 0.0, %v459
  %v461 = vpop.f32.mrf.mxu0
  %v462 = vadd.f32 0.0, %v461
  %463 = vmatmul.bf16.gmra.mxu0 %v237
  %v464 = vpop.f32.mrf.mxu0
  %v465 = vadd.f32 0.0, %v464
  %v466 = vpop.f32.mrf.mxu0
  %v467 = vadd.f32 0.0, %v466
  %468 = vmatmul.bf16.gmra.mxu0 %v240
  %v469 = vpop.f32.mrf.mxu0
  %v470 = vadd.f32 0.0, %v469
  %v471 = vpop.f32.mrf.mxu0
  %v472 = vadd.f32 0.0, %v471
  %473 = vmatmul.bf16.gmra.mxu0 %v243
  %v474 = vpop.f32.mrf.mxu0
  %v475 = vadd.f32 0.0, %v474
  %v476 = vpop.f32.mrf.mxu0
  %v477 = vadd.f32 0.0, %v476
  %478 = vmatmul.bf16.gmra.mxu0 %v246
  %v479 = vpop.f32.mrf.mxu0
  %v480 = vadd.f32 0.0, %v479
  %v481 = vpop.f32.mrf.mxu0
  %v482 = vadd.f32 0.0, %v481
  %483 = vmatmul.bf16.gmra.mxu0 %v249
  %v484 = vpop.f32.mrf.mxu0
  %v485 = vadd.f32 0.0, %v484
  %v486 = vpop.f32.mrf.mxu0
  %v487 = vadd.f32 0.0, %v486
  %488 = vmatmul.bf16.gmra.mxu0 %v252
  %v489 = vpop.f32.mrf.mxu0
  %v490 = vadd.f32 0.0, %v489
  %v491 = vpop.f32.mrf.mxu0
  %v492 = vadd.f32 0.0, %v491
  %493 = vmatmul.bf16.gmra.mxu0 %v255
  %v494 = vpop.f32.mrf.mxu0
  %v495 = vadd.f32 0.0, %v494
  %v496 = vpop.f32.mrf.mxu0
  %v497 = vadd.f32 0.0, %v496
  %498 = vmatmul.bf16.gmra.mxu0 %v258
  %v499 = vpop.f32.mrf.mxu0
  %v500 = vadd.f32 0.0, %v499
  %v501 = vpop.f32.mrf.mxu0
  %v502 = vadd.f32 0.0, %v501
  %503 = vmatmul.bf16.gmra.mxu0 %v261
  %v504 = vpop.f32.mrf.mxu0
  %v505 = vpop.f32.mrf.mxu0
  %506 = vdwg.mxu0
  %507 = vmatpush.bf16.msra.mxu0 0
  %508 = vmatpush.bf16.msra.mxu0 0
  %509 = vmatpush.bf16.msra.mxu0 0
  %510 = vmatpush.bf16.msra.mxu0 0
  %511 = vmatpush.bf16.msra.mxu0 0
  %512 = vmatpush.bf16.msra.mxu0 0
  %513 = vmatpush.bf16.msra.mxu0 %v274
  %514 = vmatpush.bf16.msra.mxu0 %v211
  %515 = vmatmul.bf16.gmra.mxu0 %v222
  %v516 = vpop.f32.mrf.mxu0
  %v517 = vadd.f32 0.0, %v516
  %v518 = vpop.f32.mrf.mxu0
  %v519 = vadd.f32 0.0, %v518
  %520 = vmatmul.bf16.gmra.mxu0 %v225
  %v521 = vpop.f32.mrf.mxu0
  %v522 = vadd.f32 0.0, %v521
  %v523 = vpop.f32.mrf.mxu0
  %v524 = vadd.f32 0.0, %v523
  %525 = vmatmul.bf16.gmra.mxu0 %v228
  %v526 = vpop.f32.mrf.mxu0
  %v527 = vadd.f32 0.0, %v526
  %v528 = vpop.f32.mrf.mxu0
  %v529 = vadd.f32 0.0, %v528
  %530 = vmatmul.bf16.gmra.mxu0 %v231
  %v531 = vpop.f32.mrf.mxu0
  %v532 = vadd.f32 0.0, %v531
  %v533 = vpop.f32.mrf.mxu0
  %v534 = vadd.f32 0.0, %v533
  %535 = vmatmul.bf16.gmra.mxu0 %v234
  %v536 = vpop.f32.mrf.mxu0
  %v537 = vadd.f32 0.0, %v536
  %v538 = vpop.f32.mrf.mxu0
  %v539 = vadd.f32 0.0, %v538
  %540 = vmatmul.bf16.gmra.mxu0 %v237
  %v541 = vpop.f32.mrf.mxu0
  %v542 = vadd.f32 0.0, %v541
  %v543 = vpop.f32.mrf.mxu0
  %v544 = vadd.f32 0.0, %v543
  %545 = vmatmul.bf16.gmra.mxu0 %v240
  %v546 = vpop.f32.mrf.mxu0
  %v547 = vadd.f32 0.0, %v546
  %v548 = vpop.f32.mrf.mxu0
  %v549 = vadd.f32 0.0, %v548
  %550 = vmatmul.bf16.gmra.mxu0 %v243
  %v551 = vpop.f32.mrf.mxu0
  %v552 = vadd.f32 0.0, %v551
  %v553 = vpop.f32.mrf.mxu0
  %v554 = vadd.f32 0.0, %v553
  %555 = vmatmul.bf16.gmra.mxu0 %v246
  %v556 = vpop.f32.mrf.mxu0
  %v557 = vadd.f32 0.0, %v556
  %v558 = vpop.f32.mrf.mxu0
  %v559 = vadd.f32 0.0, %v558
  %560 = vmatmul.bf16.gmra.mxu0 %v249
  %v561 = vpop.f32.mrf.mxu0
  %v562 = vadd.f32 0.0, %v561
  %v563 = vpop.f32.mrf.mxu0
  %v564 = vadd.f32 0.0, %v563
  %565 = vmatmul.bf16.gmra.mxu0 %v252
  %v566 = vpop.f32.mrf.mxu0
  %v567 = vadd.f32 0.0, %v566
  %v568 = vpop.f32.mrf.mxu0
  %v569 = vadd.f32 0.0, %v568
  %570 = vmatmul.bf16.gmra.mxu0 %v255
  %v571 = vpop.f32.mrf.mxu0
  %v572 = vadd.f32 0.0, %v571
  %v573 = vpop.f32.mrf.mxu0
  %v574 = vadd.f32 0.0, %v573
  %575 = vmatmul.bf16.gmra.mxu0 %v258
  %v576 = vpop.f32.mrf.mxu0
  %v577 = vadd.f32 0.0, %v576
  %v578 = vpop.f32.mrf.mxu0
  %v579 = vadd.f32 0.0, %v578
  %580 = vmatmul.bf16.gmra.mxu0 %v261
  %v581 = vpop.f32.mrf.mxu0
  %v582 = vpop.f32.mrf.mxu0
  %583 = vdwg.mxu0
  %v612 = vunpack.c.l.b16 %v39
  %v613 = vunpack.c.l.b16 %v40
  %v614 = vunpack.c.l.b16 %v43
  %v615 = vunpack.c.l.b16 %v44
  %v616 = vunpack.c.l.b16 %v47
  %v617 = vunpack.c.l.b16 %v48
  %v618 = vunpack.c.l.b16 %v51
  %v619 = vunpack.c.l.b16 %v52
  %v620 = vunpack.c.l.b16 %v55
  %v621 = vunpack.c.l.b16 %v56
  %v622 = vunpack.c.l.b16 %v59
  %v623 = vunpack.c.l.b16 %v60
  %v624 = vunpack.c.l.b16 %v63
  %v625 = vunpack.c.l.b16 %v64
  %v626 = vunpack.c.l.b16 %v67
  %v627 = vunpack.c.l.b16 %v68
  %v628 = vunpack.c.l.b16 %v71
  %v629 = vunpack.c.l.b16 %v72
  %v630 = vunpack.c.l.b16 %v75
  %v631 = vunpack.c.l.b16 %v76
  %v632 = vunpack.c.l.b16 %v79
  %v633 = vunpack.c.l.b16 %v80
  %v634 = vunpack.c.l.b16 %v83
  %v635 = vunpack.c.l.b16 %v84
  %v636 = vunpack.c.l.b16 %v87
  %v637 = vunpack.c.l.b16 %v88
  %v638 = vunpack.c.l.b16 %v91
  %v639 = vunpack.c.l.b16 %v92
  %v640 = vpack.c.b16 %v613, %v612
  %v641 = vpack.c.b16 %v615, %v614
  %v642 = vpack.c.b16 %v617, %v616
  %v643 = vpack.c.b16 %v619, %v618
  %v644 = vpack.c.b16 %v621, %v620
  %v645 = vpack.c.b16 %v623, %v622
  %v646 = vpack.c.b16 %v625, %v624
  %v647 = vpack.c.b16 %v627, %v626
  %v648 = vpack.c.b16 %v629, %v628
  %v649 = vpack.c.b16 %v631, %v630
  %v650 = vpack.c.b16 %v633, %v632
  %v651 = vpack.c.b16 %v635, %v634
  %v652 = vpack.c.b16 %v637, %v636
  %v653 = vpack.c.b16 %v639, %v638
  %v662 = vunpack.c.l.b16 %v97
  %v663 = vunpack.c.h.b16 %v97
  %v664 = vunpack.c.l.b16 %v98
  %v665 = vunpack.c.h.b16 %v98
  %v666 = vunpack.c.l.b16 %v99
  %v667 = vunpack.c.h.b16 %v99
  %v668 = vunpack.c.l.b16 %v100
  %v669 = vunpack.c.h.b16 %v100
  %v670 = vunpack.c.l.b16 %v101
  %v671 = vunpack.c.h.b16 %v101
  %v672 = vunpack.c.l.b16 %v102
  %v673 = vunpack.c.h.b16 %v102
  %v674 = vunpack.c.l.b16 %v103
  %v675 = vunpack.c.h.b16 %v103
  %v676 = vunpack.c.l.b16 %v104
  %v677 = vunpack.c.h.b16 %v104
  %v678 = vpack.c.b16 %v666, %v662
  %v679 = vpack.c.b16 %v667, %v663
  %v680 = vpack.c.b16 %v668, %v664
  %v681 = vpack.c.b16 %v669, %v665
  %v682 = vpack.c.b16 %v674, %v670
  %v683 = vpack.c.b16 %v675, %v671
  %v684 = vpack.c.b16 %v676, %v672
  %v685 = vpack.c.b16 %v677, %v673
  %v691 = vsel %vm220, %v640, 0
  %v694 = vsel %vm220, %v641, 0
  %v697 = vsel %vm220, %v642, 0
  %v700 = vsel %vm220, %v643, 0
  %v703 = vsel %vm220, %v644, 0
  %v706 = vsel %vm220, %v645, 0
  %v709 = vsel %vm220, %v646, 0
  %v712 = vsel %vm220, %v647, 0
  %v715 = vsel %vm220, %v648, 0
  %v718 = vsel %vm220, %v649, 0
  %v721 = vsel %vm220, %v650, 0
  %v724 = vsel %vm220, %v651, 0
  %v727 = vsel %vm220, %v652, 0
  %v730 = vsel %vm220, %v653, 0
  %v733 = vsel %vm263, %v682, 0
  %v736 = vsel %vm263, %v683, 0
  %v739 = vsel %vm263, %v684, 0
  %v742 = vsel %vm263, %v685, 0
  %744 = vmatpush.bf16.msra.mxu0 0
  %745 = vmatpush.bf16.msra.mxu0 0
  %746 = vmatpush.bf16.msra.mxu0 0
  %747 = vmatpush.bf16.msra.mxu0 0
  %748 = vmatpush.bf16.msra.mxu0 0
  %749 = vmatpush.bf16.msra.mxu0 0
  %750 = vmatpush.bf16.msra.mxu0 %v733
  %751 = vmatpush.bf16.msra.mxu0 %v678
  %752 = vmatmul.bf16.gmra.mxu0 %v691
  %v753 = vpop.f32.mrf.mxu0
  %v754 = vadd.f32 %v286, %v753
  %v755 = vpop.f32.mrf.mxu0
  %v756 = vadd.f32 %v288, %v755
  %757 = vmatmul.bf16.gmra.mxu0 %v694
  %v758 = vpop.f32.mrf.mxu0
  %v759 = vadd.f32 %v291, %v758
  %v760 = vpop.f32.mrf.mxu0
  %v761 = vadd.f32 %v293, %v760
  %762 = vmatmul.bf16.gmra.mxu0 %v697
  %v763 = vpop.f32.mrf.mxu0
  %v764 = vadd.f32 %v296, %v763
  %v765 = vpop.f32.mrf.mxu0
  %v766 = vadd.f32 %v298, %v765
  %767 = vmatmul.bf16.gmra.mxu0 %v700
  %v768 = vpop.f32.mrf.mxu0
  %v769 = vadd.f32 %v301, %v768
  %v770 = vpop.f32.mrf.mxu0
  %v771 = vadd.f32 %v303, %v770
  %772 = vmatmul.bf16.gmra.mxu0 %v703
  %v773 = vpop.f32.mrf.mxu0
  %v774 = vadd.f32 %v306, %v773
  %v775 = vpop.f32.mrf.mxu0
  %v776 = vadd.f32 %v308, %v775
  %777 = vmatmul.bf16.gmra.mxu0 %v706
  %v778 = vpop.f32.mrf.mxu0
  %v779 = vadd.f32 %v311, %v778
  %v780 = vpop.f32.mrf.mxu0
  %v781 = vadd.f32 %v313, %v780
  %782 = vmatmul.bf16.gmra.mxu0 %v709
  %v783 = vpop.f32.mrf.mxu0
  %v784 = vadd.f32 %v316, %v783
  %v785 = vpop.f32.mrf.mxu0
  %v786 = vadd.f32 %v318, %v785
  %787 = vmatmul.bf16.gmra.mxu0 %v712
  %v788 = vpop.f32.mrf.mxu0
  %v789 = vadd.f32 %v321, %v788
  %v790 = vpop.f32.mrf.mxu0
  %v791 = vadd.f32 %v323, %v790
  %792 = vmatmul.bf16.gmra.mxu0 %v715
  %v793 = vpop.f32.mrf.mxu0
  %v794 = vadd.f32 %v326, %v793
  %v795 = vpop.f32.mrf.mxu0
  %v796 = vadd.f32 %v328, %v795
  %797 = vmatmul.bf16.gmra.mxu0 %v718
  %v798 = vpop.f32.mrf.mxu0
  %v799 = vadd.f32 %v331, %v798
  %v800 = vpop.f32.mrf.mxu0
  %v801 = vadd.f32 %v333, %v800
  %802 = vmatmul.bf16.gmra.mxu0 %v721
  %v803 = vpop.f32.mrf.mxu0
  %v804 = vadd.f32 %v336, %v803
  %v805 = vpop.f32.mrf.mxu0
  %v806 = vadd.f32 %v338, %v805
  %807 = vmatmul.bf16.gmra.mxu0 %v724
  %v808 = vpop.f32.mrf.mxu0
  %v809 = vadd.f32 %v341, %v808
  %v810 = vpop.f32.mrf.mxu0
  %v811 = vadd.f32 %v343, %v810
  %812 = vmatmul.bf16.gmra.mxu0 %v727
  %v813 = vpop.f32.mrf.mxu0
  %v814 = vadd.f32 %v346, %v813
  %v815 = vpop.f32.mrf.mxu0
  %v816 = vadd.f32 %v348, %v815
  %817 = vmatmul.bf16.gmra.mxu0 %v730
  %v818 = vpop.f32.mrf.mxu0
  %v819 = vpop.f32.mrf.mxu0
  %820 = vdwg.mxu0
  %821 = vmatpush.bf16.msra.mxu0 0
  %822 = vmatpush.bf16.msra.mxu0 0
  %823 = vmatpush.bf16.msra.mxu0 0
  %824 = vmatpush.bf16.msra.mxu0 0
  %825 = vmatpush.bf16.msra.mxu0 0
  %826 = vmatpush.bf16.msra.mxu0 0
  %827 = vmatpush.bf16.msra.mxu0 %v736
  %828 = vmatpush.bf16.msra.mxu0 %v679
  %829 = vmatmul.bf16.gmra.mxu0 %v691
  %v830 = vpop.f32.mrf.mxu0
  %v831 = vadd.f32 %v363, %v830
  %v832 = vpop.f32.mrf.mxu0
  %v833 = vadd.f32 %v365, %v832
  %834 = vmatmul.bf16.gmra.mxu0 %v694
  %v835 = vpop.f32.mrf.mxu0
  %v836 = vadd.f32 %v368, %v835
  %v837 = vpop.f32.mrf.mxu0
  %v838 = vadd.f32 %v370, %v837
  %839 = vmatmul.bf16.gmra.mxu0 %v697
  %v840 = vpop.f32.mrf.mxu0
  %v841 = vadd.f32 %v373, %v840
  %v842 = vpop.f32.mrf.mxu0
  %v843 = vadd.f32 %v375, %v842
  %844 = vmatmul.bf16.gmra.mxu0 %v700
  %v845 = vpop.f32.mrf.mxu0
  %v846 = vadd.f32 %v378, %v845
  %v847 = vpop.f32.mrf.mxu0
  %v848 = vadd.f32 %v380, %v847
  %849 = vmatmul.bf16.gmra.mxu0 %v703
  %v850 = vpop.f32.mrf.mxu0
  %v851 = vadd.f32 %v383, %v850
  %v852 = vpop.f32.mrf.mxu0
  %v853 = vadd.f32 %v385, %v852
  %854 = vmatmul.bf16.gmra.mxu0 %v706
  %v855 = vpop.f32.mrf.mxu0
  %v856 = vadd.f32 %v388, %v855
  %v857 = vpop.f32.mrf.mxu0
  %v858 = vadd.f32 %v390, %v857
  %859 = vmatmul.bf16.gmra.mxu0 %v709
  %v860 = vpop.f32.mrf.mxu0
  %v861 = vadd.f32 %v393, %v860
  %v862 = vpop.f32.mrf.mxu0
  %v863 = vadd.f32 %v395, %v862
  %864 = vmatmul.bf16.gmra.mxu0 %v712
  %v865 = vpop.f32.mrf.mxu0
  %v866 = vadd.f32 %v398, %v865
  %v867 = vpop.f32.mrf.mxu0
  %v868 = vadd.f32 %v400, %v867
  %869 = vmatmul.bf16.gmra.mxu0 %v715
  %v870 = vpop.f32.mrf.mxu0
  %v871 = vadd.f32 %v403, %v870
  %v872 = vpop.f32.mrf.mxu0
  %v873 = vadd.f32 %v405, %v872
  %874 = vmatmul.bf16.gmra.mxu0 %v718
  %v875 = vpop.f32.mrf.mxu0
  %v876 = vadd.f32 %v408, %v875
  %v877 = vpop.f32.mrf.mxu0
  %v878 = vadd.f32 %v410, %v877
  %879 = vmatmul.bf16.gmra.mxu0 %v721
  %v880 = vpop.f32.mrf.mxu0
  %v881 = vadd.f32 %v413, %v880
  %v882 = vpop.f32.mrf.mxu0
  %v883 = vadd.f32 %v415, %v882
  %884 = vmatmul.bf16.gmra.mxu0 %v724
  %v885 = vpop.f32.mrf.mxu0
  %v886 = vadd.f32 %v418, %v885
  %v887 = vpop.f32.mrf.mxu0
  %v888 = vadd.f32 %v420, %v887
  %889 = vmatmul.bf16.gmra.mxu0 %v727
  %v890 = vpop.f32.mrf.mxu0
  %v891 = vadd.f32 %v423, %v890
  %v892 = vpop.f32.mrf.mxu0
  %v893 = vadd.f32 %v425, %v892
  %894 = vmatmul.bf16.gmra.mxu0 %v730
  %v895 = vpop.f32.mrf.mxu0
  %v896 = vpop.f32.mrf.mxu0
  %897 = vdwg.mxu0
  %898 = vmatpush.bf16.msra.mxu0 0
  %899 = vmatpush.bf16.msra.mxu0 0
  %900 = vmatpush.bf16.msra.mxu0 0
  %901 = vmatpush.bf16.msra.mxu0 0
  %902 = vmatpush.bf16.msra.mxu0 0
  %903 = vmatpush.bf16.msra.mxu0 0
  %904 = vmatpush.bf16.msra.mxu0 %v739
  %905 = vmatpush.bf16.msra.mxu0 %v680
  %906 = vmatmul.bf16.gmra.mxu0 %v691
  %v907 = vpop.f32.mrf.mxu0
  %v908 = vadd.f32 %v440, %v907
  %v909 = vpop.f32.mrf.mxu0
  %v910 = vadd.f32 %v442, %v909
  %911 = vmatmul.bf16.gmra.mxu0 %v694
  %v912 = vpop.f32.mrf.mxu0
  %v913 = vadd.f32 %v445, %v912
  %v914 = vpop.f32.mrf.mxu0
  %v915 = vadd.f32 %v447, %v914
  %916 = vmatmul.bf16.gmra.mxu0 %v697
  %v917 = vpop.f32.mrf.mxu0
  %v918 = vadd.f32 %v450, %v917
  %v919 = vpop.f32.mrf.mxu0
  %v920 = vadd.f32 %v452, %v919
  %921 = vmatmul.bf16.gmra.mxu0 %v700
  %v922 = vpop.f32.mrf.mxu0
  %v923 = vadd.f32 %v455, %v922
  %v924 = vpop.f32.mrf.mxu0
  %v925 = vadd.f32 %v457, %v924
  %926 = vmatmul.bf16.gmra.mxu0 %v703
  %v927 = vpop.f32.mrf.mxu0
  %v928 = vadd.f32 %v460, %v927
  %v929 = vpop.f32.mrf.mxu0
  %v930 = vadd.f32 %v462, %v929
  %931 = vmatmul.bf16.gmra.mxu0 %v706
  %v932 = vpop.f32.mrf.mxu0
  %v933 = vadd.f32 %v465, %v932
  %v934 = vpop.f32.mrf.mxu0
  %v935 = vadd.f32 %v467, %v934
  %936 = vmatmul.bf16.gmra.mxu0 %v709
  %v937 = vpop.f32.mrf.mxu0
  %v938 = vadd.f32 %v470, %v937
  %v939 = vpop.f32.mrf.mxu0
  %v940 = vadd.f32 %v472, %v939
  %941 = vmatmul.bf16.gmra.mxu0 %v712
  %v942 = vpop.f32.mrf.mxu0
  %v943 = vadd.f32 %v475, %v942
  %v944 = vpop.f32.mrf.mxu0
  %v945 = vadd.f32 %v477, %v944
  %946 = vmatmul.bf16.gmra.mxu0 %v715
  %v947 = vpop.f32.mrf.mxu0
  %v948 = vadd.f32 %v480, %v947
  %v949 = vpop.f32.mrf.mxu0
  %v950 = vadd.f32 %v482, %v949
  %951 = vmatmul.bf16.gmra.mxu0 %v718
  %v952 = vpop.f32.mrf.mxu0
  %v953 = vadd.f32 %v485, %v952
  %v954 = vpop.f32.mrf.mxu0
  %v955 = vadd.f32 %v487, %v954
  %956 = vmatmul.bf16.gmra.mxu0 %v721
  %v957 = vpop.f32.mrf.mxu0
  %v958 = vadd.f32 %v490, %v957
  %v959 = vpop.f32.mrf.mxu0
  %v960 = vadd.f32 %v492, %v959
  %961 = vmatmul.bf16.gmra.mxu0 %v724
  %v962 = vpop.f32.mrf.mxu0
  %v963 = vadd.f32 %v495, %v962
  %v964 = vpop.f32.mrf.mxu0
  %v965 = vadd.f32 %v497, %v964
  %966 = vmatmul.bf16.gmra.mxu0 %v727
  %v967 = vpop.f32.mrf.mxu0
  %v968 = vadd.f32 %v500, %v967
  %v969 = vpop.f32.mrf.mxu0
  %v970 = vadd.f32 %v502, %v969
  %971 = vmatmul.bf16.gmra.mxu0 %v730
  %v972 = vpop.f32.mrf.mxu0
  %v973 = vpop.f32.mrf.mxu0
  %974 = vdwg.mxu0
  %975 = vmatpush.bf16.msra.mxu0 0
  %976 = vmatpush.bf16.msra.mxu0 0
  %977 = vmatpush.bf16.msra.mxu0 0
  %978 = vmatpush.bf16.msra.mxu0 0
  %979 = vmatpush.bf16.msra.mxu0 0
  %980 = vmatpush.bf16.msra.mxu0 0
  %981 = vmatpush.bf16.msra.mxu0 %v742
  %982 = vmatpush.bf16.msra.mxu0 %v681
  %983 = vmatmul.bf16.gmra.mxu0 %v691
  %v984 = vpop.f32.mrf.mxu0
  %v985 = vadd.f32 %v517, %v984
  %v986 = vpop.f32.mrf.mxu0
  %v987 = vadd.f32 %v519, %v986
  %988 = vmatmul.bf16.gmra.mxu0 %v694
  %v989 = vpop.f32.mrf.mxu0
  %v990 = vadd.f32 %v522, %v989
  %v991 = vpop.f32.mrf.mxu0
  %v992 = vadd.f32 %v524, %v991
  %993 = vmatmul.bf16.gmra.mxu0 %v697
  %v994 = vpop.f32.mrf.mxu0
  %v995 = vadd.f32 %v527, %v994
  %v996 = vpop.f32.mrf.mxu0
  %v997 = vadd.f32 %v529, %v996
  %998 = vmatmul.bf16.gmra.mxu0 %v700
  %v999 = vpop.f32.mrf.mxu0
  %v1000 = vadd.f32 %v532, %v999
  %v1001 = vpop.f32.mrf.mxu0
  %v1002 = vadd.f32 %v534, %v1001
  %1003 = vmatmul.bf16.gmra.mxu0 %v703
  %v1004 = vpop.f32.mrf.mxu0
  %v1005 = vadd.f32 %v537, %v1004
  %v1006 = vpop.f32.mrf.mxu0
  %v1007 = vadd.f32 %v539, %v1006
  %1008 = vmatmul.bf16.gmra.mxu0 %v706
  %v1009 = vpop.f32.mrf.mxu0
  %v1010 = vadd.f32 %v542, %v1009
  %v1011 = vpop.f32.mrf.mxu0
  %v1012 = vadd.f32 %v544, %v1011
  %1013 = vmatmul.bf16.gmra.mxu0 %v709
  %v1014 = vpop.f32.mrf.mxu0
  %v1015 = vadd.f32 %v547, %v1014
  %v1016 = vpop.f32.mrf.mxu0
  %v1017 = vadd.f32 %v549, %v1016
  %1018 = vmatmul.bf16.gmra.mxu0 %v712
  %v1019 = vpop.f32.mrf.mxu0
  %v1020 = vadd.f32 %v552, %v1019
  %v1021 = vpop.f32.mrf.mxu0
  %v1022 = vadd.f32 %v554, %v1021
  %1023 = vmatmul.bf16.gmra.mxu0 %v715
  %v1024 = vpop.f32.mrf.mxu0
  %v1025 = vadd.f32 %v557, %v1024
  %v1026 = vpop.f32.mrf.mxu0
  %v1027 = vadd.f32 %v559, %v1026
  %1028 = vmatmul.bf16.gmra.mxu0 %v718
  %v1029 = vpop.f32.mrf.mxu0
  %v1030 = vadd.f32 %v562, %v1029
  %v1031 = vpop.f32.mrf.mxu0
  %v1032 = vadd.f32 %v564, %v1031
  %1033 = vmatmul.bf16.gmra.mxu0 %v721
  %v1034 = vpop.f32.mrf.mxu0
  %v1035 = vadd.f32 %v567, %v1034
  %v1036 = vpop.f32.mrf.mxu0
  %v1037 = vadd.f32 %v569, %v1036
  %1038 = vmatmul.bf16.gmra.mxu0 %v724
  %v1039 = vpop.f32.mrf.mxu0
  %v1040 = vadd.f32 %v572, %v1039
  %v1041 = vpop.f32.mrf.mxu0
  %v1042 = vadd.f32 %v574, %v1041
  %1043 = vmatmul.bf16.gmra.mxu0 %v727
  %v1044 = vpop.f32.mrf.mxu0
  %v1045 = vadd.f32 %v577, %v1044
  %v1046 = vpop.f32.mrf.mxu0
  %v1047 = vadd.f32 %v579, %v1046
  %1048 = vmatmul.bf16.gmra.mxu0 %v730
  %v1049 = vpop.f32.mrf.mxu0
  %v1050 = vpop.f32.mrf.mxu0
  %1051 = vdwg.mxu0
  %s1052 = scalar_lea.vmem %s1, 128
  %v1053 = vld [vmem:[%s1052] sm:$0xff]
  %v1054 = vld [vmem:[%s1052 + $0x8] sm:$0xff]
  %v1055 = vld [vmem:[%s1052 + $0x10] sm:$0xff]
  %v1056 = vld [vmem:[%s1052 + $0x18] sm:$0xff]
  %v1057 = vld [vmem:[%s1052 + $0x20] sm:$0xff]
  %v1058 = vld [vmem:[%s1052 + $0x28] sm:$0xff]
  %v1059 = vld [vmem:[%s1052 + $0x30] sm:$0x33]
  %v1060 = vld [vmem:[%s1052 + $0x38] sm:$0x33]
  %v1063 = vunpack.c.l.b16 %v95
  %v1064 = vunpack.c.l.b16 %v96
  %v1065 = vpack.c.b16 %v1064, %v1063
  %v1074 = vunpack.c.l.b16 %v1053
  %v1075 = vunpack.c.h.b16 %v1053
  %v1076 = vunpack.c.l.b16 %v1054
  %v1077 = vunpack.c.h.b16 %v1054
  %v1078 = vunpack.c.l.b16 %v1055
  %v1079 = vunpack.c.h.b16 %v1055
  %v1080 = vunpack.c.l.b16 %v1056
  %v1081 = vunpack.c.h.b16 %v1056
  %v1082 = vunpack.c.l.b16 %v1057
  %v1083 = vunpack.c.h.b16 %v1057
  %v1084 = vunpack.c.l.b16 %v1058
  %v1085 = vunpack.c.h.b16 %v1058
  %v1086 = vunpack.c.l.b16 %v1059
  %v1087 = vunpack.c.h.b16 %v1059
  %v1088 = vunpack.c.l.b16 %v1060
  %v1089 = vunpack.c.h.b16 %v1060
  %v1090 = vpack.c.b16 %v1078, %v1074
  %v1091 = vpack.c.b16 %v1079, %v1075
  %v1092 = vpack.c.b16 %v1080, %v1076
  %v1093 = vpack.c.b16 %v1081, %v1077
  %v1094 = vpack.c.b16 %v1086, %v1082
  %v1095 = vpack.c.b16 %v1087, %v1083
  %v1096 = vpack.c.b16 %v1088, %v1084
  %v1097 = vpack.c.b16 %v1089, %v1085
  %v1103 = vsel %vm220, %v1065, 0
  %v1106 = vsel %vm263, %v1094, 0
  %v1109 = vsel %vm263, %v1095, 0
  %v1112 = vsel %vm263, %v1096, 0
  %v1115 = vsel %vm263, %v1097, 0
  %1117 = vmatpush.bf16.msra.mxu0 0
  %1118 = vmatpush.bf16.msra.mxu0 0
  %1119 = vmatpush.bf16.msra.mxu0 0
  %1120 = vmatpush.bf16.msra.mxu0 0
  %1121 = vmatpush.bf16.msra.mxu0 0
  %1122 = vmatpush.bf16.msra.mxu0 0
  %1123 = vmatpush.bf16.msra.mxu0 %v1106
  %1124 = vmatpush.bf16.msra.mxu0 %v1090
  %1125 = vmatmul.bf16.gmra.mxu0 %v694
  %v1126 = vpop.f32.mrf.mxu0
  %v1127 = vadd.f32 0.0, %v1126
  %v1128 = vpop.f32.mrf.mxu0
  %v1129 = vadd.f32 0.0, %v1128
  %1130 = vmatmul.bf16.gmra.mxu0 %v697
  %v1131 = vpop.f32.mrf.mxu0
  %v1132 = vadd.f32 0.0, %v1131
  %v1133 = vpop.f32.mrf.mxu0
  %v1134 = vadd.f32 0.0, %v1133
  %1135 = vmatmul.bf16.gmra.mxu0 %v700
  %v1136 = vpop.f32.mrf.mxu0
  %v1137 = vadd.f32 0.0, %v1136
  %v1138 = vpop.f32.mrf.mxu0
  %v1139 = vadd.f32 0.0, %v1138
  %1140 = vmatmul.bf16.gmra.mxu0 %v703
  %v1141 = vpop.f32.mrf.mxu0
  %v1142 = vadd.f32 0.0, %v1141
  %v1143 = vpop.f32.mrf.mxu0
  %v1144 = vadd.f32 0.0, %v1143
  %1145 = vmatmul.bf16.gmra.mxu0 %v706
  %v1146 = vpop.f32.mrf.mxu0
  %v1147 = vadd.f32 0.0, %v1146
  %v1148 = vpop.f32.mrf.mxu0
  %v1149 = vadd.f32 0.0, %v1148
  %1150 = vmatmul.bf16.gmra.mxu0 %v709
  %v1151 = vpop.f32.mrf.mxu0
  %v1152 = vadd.f32 0.0, %v1151
  %v1153 = vpop.f32.mrf.mxu0
  %v1154 = vadd.f32 0.0, %v1153
  %1155 = vmatmul.bf16.gmra.mxu0 %v712
  %v1156 = vpop.f32.mrf.mxu0
  %v1157 = vadd.f32 0.0, %v1156
  %v1158 = vpop.f32.mrf.mxu0
  %v1159 = vadd.f32 0.0, %v1158
  %1160 = vmatmul.bf16.gmra.mxu0 %v715
  %v1161 = vpop.f32.mrf.mxu0
  %v1162 = vadd.f32 0.0, %v1161
  %v1163 = vpop.f32.mrf.mxu0
  %v1164 = vadd.f32 0.0, %v1163
  %1165 = vmatmul.bf16.gmra.mxu0 %v718
  %v1166 = vpop.f32.mrf.mxu0
  %v1167 = vadd.f32 0.0, %v1166
  %v1168 = vpop.f32.mrf.mxu0
  %v1169 = vadd.f32 0.0, %v1168
  %1170 = vmatmul.bf16.gmra.mxu0 %v721
  %v1171 = vpop.f32.mrf.mxu0
  %v1172 = vadd.f32 0.0, %v1171
  %v1173 = vpop.f32.mrf.mxu0
  %v1174 = vadd.f32 0.0, %v1173
  %1175 = vmatmul.bf16.gmra.mxu0 %v724
  %v1176 = vpop.f32.mrf.mxu0
  %v1177 = vadd.f32 0.0, %v1176
  %v1178 = vpop.f32.mrf.mxu0
  %v1179 = vadd.f32 0.0, %v1178
  %1180 = vmatmul.bf16.gmra.mxu0 %v727
  %v1181 = vpop.f32.mrf.mxu0
  %v1182 = vadd.f32 0.0, %v1181
  %v1183 = vpop.f32.mrf.mxu0
  %v1184 = vadd.f32 0.0, %v1183
  %1185 = vmatmul.bf16.gmra.mxu0 %v730
  %v1186 = vpop.f32.mrf.mxu0
  %v1187 = vadd.f32 0.0, %v1186
  %v1188 = vpop.f32.mrf.mxu0
  %v1189 = vadd.f32 0.0, %v1188
  %1190 = vmatmul.bf16.gmra.mxu0 %v1103
  %v1191 = vpop.f32.mrf.mxu0
  %v1192 = vpop.f32.mrf.mxu0
  %1193 = vdwg.mxu0
  %1194 = vmatpush.bf16.msra.mxu0 0
  %1195 = vmatpush.bf16.msra.mxu0 0
  %1196 = vmatpush.bf16.msra.mxu0 0
  %1197 = vmatpush.bf16.msra.mxu0 0
  %1198 = vmatpush.bf16.msra.mxu0 0
  %1199 = vmatpush.bf16.msra.mxu0 0
  %1200 = vmatpush.bf16.msra.mxu0 %v1109
  %1201 = vmatpush.bf16.msra.mxu0 %v1091
  %1202 = vmatmul.bf16.gmra.mxu0 %v694
  %v1203 = vpop.f32.mrf.mxu0
  %v1204 = vadd.f32 0.0, %v1203
  %v1205 = vpop.f32.mrf.mxu0
  %v1206 = vadd.f32 0.0, %v1205
  %1207 = vmatmul.bf16.gmra.mxu0 %v697
  %v1208 = vpop.f32.mrf.mxu0
  %v1209 = vadd.f32 0.0, %v1208
  %v1210 = vpop.f32.mrf.mxu0
  %v1211 = vadd.f32 0.0, %v1210
  %1212 = vmatmul.bf16.gmra.mxu0 %v700
  %v1213 = vpop.f32.mrf.mxu0
  %v1214 = vadd.f32 0.0, %v1213
  %v1215 = vpop.f32.mrf.mxu0
  %v1216 = vadd.f32 0.0, %v1215
  %1217 = vmatmul.bf16.gmra.mxu0 %v703
  %v1218 = vpop.f32.mrf.mxu0
  %v1219 = vadd.f32 0.0, %v1218
  %v1220 = vpop.f32.mrf.mxu0
  %v1221 = vadd.f32 0.0, %v1220
  %1222 = vmatmul.bf16.gmra.mxu0 %v706
  %v1223 = vpop.f32.mrf.mxu0
  %v1224 = vadd.f32 0.0, %v1223
  %v1225 = vpop.f32.mrf.mxu0
  %v1226 = vadd.f32 0.0, %v1225
  %1227 = vmatmul.bf16.gmra.mxu0 %v709
  %v1228 = vpop.f32.mrf.mxu0
  %v1229 = vadd.f32 0.0, %v1228
  %v1230 = vpop.f32.mrf.mxu0
  %v1231 = vadd.f32 0.0, %v1230
  %1232 = vmatmul.bf16.gmra.mxu0 %v712
  %v1233 = vpop.f32.mrf.mxu0
  %v1234 = vadd.f32 0.0, %v1233
  %v1235 = vpop.f32.mrf.mxu0
  %v1236 = vadd.f32 0.0, %v1235
  %1237 = vmatmul.bf16.gmra.mxu0 %v715
  %v1238 = vpop.f32.mrf.mxu0
  %v1239 = vadd.f32 0.0, %v1238
  %v1240 = vpop.f32.mrf.mxu0
  %v1241 = vadd.f32 0.0, %v1240
  %1242 = vmatmul.bf16.gmra.mxu0 %v718
  %v1243 = vpop.f32.mrf.mxu0
  %v1244 = vadd.f32 0.0, %v1243
  %v1245 = vpop.f32.mrf.mxu0
  %v1246 = vadd.f32 0.0, %v1245
  %1247 = vmatmul.bf16.gmra.mxu0 %v721
  %v1248 = vpop.f32.mrf.mxu0
  %v1249 = vadd.f32 0.0, %v1248
  %v1250 = vpop.f32.mrf.mxu0
  %v1251 = vadd.f32 0.0, %v1250
  %1252 = vmatmul.bf16.gmra.mxu0 %v724
  %v1253 = vpop.f32.mrf.mxu0
  %v1254 = vadd.f32 0.0, %v1253
  %v1255 = vpop.f32.mrf.mxu0
  %v1256 = vadd.f32 0.0, %v1255
  %1257 = vmatmul.bf16.gmra.mxu0 %v727
  %v1258 = vpop.f32.mrf.mxu0
  %v1259 = vadd.f32 0.0, %v1258
  %v1260 = vpop.f32.mrf.mxu0
  %v1261 = vadd.f32 0.0, %v1260
  %1262 = vmatmul.bf16.gmra.mxu0 %v730
  %v1263 = vpop.f32.mrf.mxu0
  %v1264 = vadd.f32 0.0, %v1263
  %v1265 = vpop.f32.mrf.mxu0
  %v1266 = vadd.f32 0.0, %v1265
  %1267 = vmatmul.bf16.gmra.mxu0 %v1103
  %v1268 = vpop.f32.mrf.mxu0
  %v1269 = vpop.f32.mrf.mxu0
  %1270 = vdwg.mxu0
  %1271 = vmatpush.bf16.msra.mxu0 0
  %1272 = vmatpush.bf16.msra.mxu0 0
  %1273 = vmatpush.bf16.msra.mxu0 0
  %1274 = vmatpush.bf16.msra.mxu0 0
  %1275 = vmatpush.bf16.msra.mxu0 0
  %1276 = vmatpush.bf16.msra.mxu0 0
  %1277 = vmatpush.bf16.msra.mxu0 %v1112
  %1278 = vmatpush.bf16.msra.mxu0 %v1092
  %1279 = vmatmul.bf16.gmra.mxu0 %v694
  %v1280 = vpop.f32.mrf.mxu0
  %v1281 = vadd.f32 0.0, %v1280
  %v1282 = vpop.f32.mrf.mxu0
  %v1283 = vadd.f32 0.0, %v1282
  %1284 = vmatmul.bf16.gmra.mxu0 %v697
  %v1285 = vpop.f32.mrf.mxu0
  %v1286 = vadd.f32 0.0, %v1285
  %v1287 = vpop.f32.mrf.mxu0
  %v1288 = vadd.f32 0.0, %v1287
  %1289 = vmatmul.bf16.gmra.mxu0 %v700
  %v1290 = vpop.f32.mrf.mxu0
  %v1291 = vadd.f32 0.0, %v1290
  %v1292 = vpop.f32.mrf.mxu0
  %v1293 = vadd.f32 0.0, %v1292
  %1294 = vmatmul.bf16.gmra.mxu0 %v703
  %v1295 = vpop.f32.mrf.mxu0
  %v1296 = vadd.f32 0.0, %v1295
  %v1297 = vpop.f32.mrf.mxu0
  %v1298 = vadd.f32 0.0, %v1297
  %1299 = vmatmul.bf16.gmra.mxu0 %v706
  %v1300 = vpop.f32.mrf.mxu0
  %v1301 = vadd.f32 0.0, %v1300
  %v1302 = vpop.f32.mrf.mxu0
  %v1303 = vadd.f32 0.0, %v1302
  %1304 = vmatmul.bf16.gmra.mxu0 %v709
  %v1305 = vpop.f32.mrf.mxu0
  %v1306 = vadd.f32 0.0, %v1305
  %v1307 = vpop.f32.mrf.mxu0
  %v1308 = vadd.f32 0.0, %v1307
  %1309 = vmatmul.bf16.gmra.mxu0 %v712
  %v1310 = vpop.f32.mrf.mxu0
  %v1311 = vadd.f32 0.0, %v1310
  %v1312 = vpop.f32.mrf.mxu0
  %v1313 = vadd.f32 0.0, %v1312
  %1314 = vmatmul.bf16.gmra.mxu0 %v715
  %v1315 = vpop.f32.mrf.mxu0
  %v1316 = vadd.f32 0.0, %v1315
  %v1317 = vpop.f32.mrf.mxu0
  %v1318 = vadd.f32 0.0, %v1317
  %1319 = vmatmul.bf16.gmra.mxu0 %v718
  %v1320 = vpop.f32.mrf.mxu0
  %v1321 = vadd.f32 0.0, %v1320
  %v1322 = vpop.f32.mrf.mxu0
  %v1323 = vadd.f32 0.0, %v1322
  %1324 = vmatmul.bf16.gmra.mxu0 %v721
  %v1325 = vpop.f32.mrf.mxu0
  %v1326 = vadd.f32 0.0, %v1325
  %v1327 = vpop.f32.mrf.mxu0
  %v1328 = vadd.f32 0.0, %v1327
  %1329 = vmatmul.bf16.gmra.mxu0 %v724
  %v1330 = vpop.f32.mrf.mxu0
  %v1331 = vadd.f32 0.0, %v1330
  %v1332 = vpop.f32.mrf.mxu0
  %v1333 = vadd.f32 0.0, %v1332
  %1334 = vmatmul.bf16.gmra.mxu0 %v727
  %v1335 = vpop.f32.mrf.mxu0
  %v1336 = vadd.f32 0.0, %v1335
  %v1337 = vpop.f32.mrf.mxu0
  %v1338 = vadd.f32 0.0, %v1337
  %1339 = vmatmul.bf16.gmra.mxu0 %v730
  %v1340 = vpop.f32.mrf.mxu0
  %v1341 = vadd.f32 0.0, %v1340
  %v1342 = vpop.f32.mrf.mxu0
  %v1343 = vadd.f32 0.0, %v1342
  %1344 = vmatmul.bf16.gmra.mxu0 %v1103
  %v1345 = vpop.f32.mrf.mxu0
  %v1346 = vpop.f32.mrf.mxu0
  %1347 = vdwg.mxu0
  %1348 = vmatpush.bf16.msra.mxu0 0
  %1349 = vmatpush.bf16.msra.mxu0 0
  %1350 = vmatpush.bf16.msra.mxu0 0
  %1351 = vmatpush.bf16.msra.mxu0 0
  %1352 = vmatpush.bf16.msra.mxu0 0
  %1353 = vmatpush.bf16.msra.mxu0 0
  %1354 = vmatpush.bf16.msra.mxu0 %v1115
  %1355 = vmatpush.bf16.msra.mxu0 %v1093
  %1356 = vmatmul.bf16.gmra.mxu0 %v694
  %v1357 = vpop.f32.mrf.mxu0
  %v1358 = vadd.f32 0.0, %v1357
  %v1359 = vpop.f32.mrf.mxu0
  %v1360 = vadd.f32 0.0, %v1359
  %1361 = vmatmul.bf16.gmra.mxu0 %v697
  %v1362 = vpop.f32.mrf.mxu0
  %v1363 = vadd.f32 0.0, %v1362
  %v1364 = vpop.f32.mrf.mxu0
  %v1365 = vadd.f32 0.0, %v1364
  %1366 = vmatmul.bf16.gmra.mxu0 %v700
  %v1367 = vpop.f32.mrf.mxu0
  %v1368 = vadd.f32 0.0, %v1367
  %v1369 = vpop.f32.mrf.mxu0
  %v1370 = vadd.f32 0.0, %v1369
  %1371 = vmatmul.bf16.gmra.mxu0 %v703
  %v1372 = vpop.f32.mrf.mxu0
  %v1373 = vadd.f32 0.0, %v1372
  %v1374 = vpop.f32.mrf.mxu0
  %v1375 = vadd.f32 0.0, %v1374
  %1376 = vmatmul.bf16.gmra.mxu0 %v706
  %v1377 = vpop.f32.mrf.mxu0
  %v1378 = vadd.f32 0.0, %v1377
  %v1379 = vpop.f32.mrf.mxu0
  %v1380 = vadd.f32 0.0, %v1379
  %1381 = vmatmul.bf16.gmra.mxu0 %v709
  %v1382 = vpop.f32.mrf.mxu0
  %v1383 = vadd.f32 0.0, %v1382
  %v1384 = vpop.f32.mrf.mxu0
  %v1385 = vadd.f32 0.0, %v1384
  %1386 = vmatmul.bf16.gmra.mxu0 %v712
  %v1387 = vpop.f32.mrf.mxu0
  %v1388 = vadd.f32 0.0, %v1387
  %v1389 = vpop.f32.mrf.mxu0
  %v1390 = vadd.f32 0.0, %v1389
  %1391 = vmatmul.bf16.gmra.mxu0 %v715
  %v1392 = vpop.f32.mrf.mxu0
  %v1393 = vadd.f32 0.0, %v1392
  %v1394 = vpop.f32.mrf.mxu0
  %v1395 = vadd.f32 0.0, %v1394
  %1396 = vmatmul.bf16.gmra.mxu0 %v718
  %v1397 = vpop.f32.mrf.mxu0
  %v1398 = vadd.f32 0.0, %v1397
  %v1399 = vpop.f32.mrf.mxu0
  %v1400 = vadd.f32 0.0, %v1399
  %1401 = vmatmul.bf16.gmra.mxu0 %v721
  %v1402 = vpop.f32.mrf.mxu0
  %v1403 = vadd.f32 0.0, %v1402
  %v1404 = vpop.f32.mrf.mxu0
  %v1405 = vadd.f32 0.0, %v1404
  %1406 = vmatmul.bf16.gmra.mxu0 %v724
  %v1407 = vpop.f32.mrf.mxu0
  %v1408 = vadd.f32 0.0, %v1407
  %v1409 = vpop.f32.mrf.mxu0
  %v1410 = vadd.f32 0.0, %v1409
  %1411 = vmatmul.bf16.gmra.mxu0 %v727
  %v1412 = vpop.f32.mrf.mxu0
  %v1413 = vadd.f32 0.0, %v1412
  %v1414 = vpop.f32.mrf.mxu0
  %v1415 = vadd.f32 0.0, %v1414
  %1416 = vmatmul.bf16.gmra.mxu0 %v730
  %v1417 = vpop.f32.mrf.mxu0
  %v1418 = vadd.f32 0.0, %v1417
  %v1419 = vpop.f32.mrf.mxu0
  %v1420 = vadd.f32 0.0, %v1419
  %1421 = vmatmul.bf16.gmra.mxu0 %v1103
  %v1422 = vpop.f32.mrf.mxu0
  %v1423 = vpop.f32.mrf.mxu0
  %1424 = vdwg.mxu0
  %v1425 = vadd.f32 %v754, %v1127
  %v1426 = vadd.f32 %v831, %v1204
  %v1427 = vadd.f32 %v908, %v1281
  %v1428 = vadd.f32 %v985, %v1358
  %v1429 = vadd.f32 %v756, %v1129
  %v1430 = vadd.f32 %v833, %v1206
  %v1431 = vadd.f32 %v910, %v1283
  %v1432 = vadd.f32 %v987, %v1360
  %v1433 = vadd.f32 %v759, %v1132
  %v1434 = vadd.f32 %v836, %v1209
  %v1435 = vadd.f32 %v913, %v1286
  %v1436 = vadd.f32 %v990, %v1363
  %v1437 = vadd.f32 %v761, %v1134
  %v1438 = vadd.f32 %v838, %v1211
  %v1439 = vadd.f32 %v915, %v1288
  %v1440 = vadd.f32 %v992, %v1365
  %v1441 = vadd.f32 %v764, %v1137
  %v1442 = vadd.f32 %v841, %v1214
  %v1443 = vadd.f32 %v918, %v1291
  %v1444 = vadd.f32 %v995, %v1368
  %v1445 = vadd.f32 %v766, %v1139
  %v1446 = vadd.f32 %v843, %v1216
  %v1447 = vadd.f32 %v920, %v1293
  %v1448 = vadd.f32 %v997, %v1370
  %v1449 = vadd.f32 %v769, %v1142
  %v1450 = vadd.f32 %v846, %v1219
  %v1451 = vadd.f32 %v923, %v1296
  %v1452 = vadd.f32 %v1000, %v1373
  %v1453 = vadd.f32 %v771, %v1144
  %v1454 = vadd.f32 %v848, %v1221
  %v1455 = vadd.f32 %v925, %v1298
  %v1456 = vadd.f32 %v1002, %v1375
  %v1457 = vadd.f32 %v774, %v1147
  %v1458 = vadd.f32 %v851, %v1224
  %v1459 = vadd.f32 %v928, %v1301
  %v1460 = vadd.f32 %v1005, %v1378
  %v1461 = vadd.f32 %v776, %v1149
  %v1462 = vadd.f32 %v853, %v1226
  %v1463 = vadd.f32 %v930, %v1303
  %v1464 = vadd.f32 %v1007, %v1380
  %v1465 = vadd.f32 %v779, %v1152
  %v1466 = vadd.f32 %v856, %v1229
  %v1467 = vadd.f32 %v933, %v1306
  %v1468 = vadd.f32 %v1010, %v1383
  %v1469 = vadd.f32 %v781, %v1154
  %v1470 = vadd.f32 %v858, %v1231
  %v1471 = vadd.f32 %v935, %v1308
  %v1472 = vadd.f32 %v1012, %v1385
  %v1473 = vadd.f32 %v784, %v1157
  %v1474 = vadd.f32 %v861, %v1234
  %v1475 = vadd.f32 %v938, %v1311
  %v1476 = vadd.f32 %v1015, %v1388
  %v1477 = vadd.f32 %v786, %v1159
  %v1478 = vadd.f32 %v863, %v1236
  %v1479 = vadd.f32 %v940, %v1313
  %v1480 = vadd.f32 %v1017, %v1390
  %v1481 = vadd.f32 %v789, %v1162
  %v1482 = vadd.f32 %v866, %v1239
  %v1483 = vadd.f32 %v943, %v1316
  %v1484 = vadd.f32 %v1020, %v1393
  %v1485 = vadd.f32 %v791, %v1164
  %v1486 = vadd.f32 %v868, %v1241
  %v1487 = vadd.f32 %v945, %v1318
  %v1488 = vadd.f32 %v1022, %v1395
  %v1489 = vadd.f32 %v794, %v1167
  %v1490 = vadd.f32 %v871, %v1244
  %v1491 = vadd.f32 %v948, %v1321
  %v1492 = vadd.f32 %v1025, %v1398
  %v1493 = vadd.f32 %v796, %v1169
  %v1494 = vadd.f32 %v873, %v1246
  %v1495 = vadd.f32 %v950, %v1323
  %v1496 = vadd.f32 %v1027, %v1400
  %v1497 = vadd.f32 %v799, %v1172
  %v1498 = vadd.f32 %v876, %v1249
  %v1499 = vadd.f32 %v953, %v1326
  %v1500 = vadd.f32 %v1030, %v1403
  %v1501 = vadd.f32 %v801, %v1174
  %v1502 = vadd.f32 %v878, %v1251
  %v1503 = vadd.f32 %v955, %v1328
  %v1504 = vadd.f32 %v1032, %v1405
  %v1505 = vadd.f32 %v804, %v1177
  %v1506 = vadd.f32 %v881, %v1254
  %v1507 = vadd.f32 %v958, %v1331
  %v1508 = vadd.f32 %v1035, %v1408
  %v1509 = vadd.f32 %v806, %v1179
  %v1510 = vadd.f32 %v883, %v1256
  %v1511 = vadd.f32 %v960, %v1333
  %v1512 = vadd.f32 %v1037, %v1410
  %v1513 = vadd.f32 %v809, %v1182
  %v1514 = vadd.f32 %v886, %v1259
  %v1515 = vadd.f32 %v963, %v1336
  %v1516 = vadd.f32 %v1040, %v1413
  %v1517 = vadd.f32 %v811, %v1184
  %v1518 = vadd.f32 %v888, %v1261
  %v1519 = vadd.f32 %v965, %v1338
  %v1520 = vadd.f32 %v1042, %v1415
  %v1521 = vadd.f32 %v814, %v1187
  %v1522 = vadd.f32 %v891, %v1264
  %v1523 = vadd.f32 %v968, %v1341
  %v1524 = vadd.f32 %v1045, %v1418
  %v1525 = vadd.f32 %v816, %v1189
  %v1526 = vadd.f32 %v893, %v1266
  %v1527 = vadd.f32 %v970, %v1343
  %v1528 = vadd.f32 %v1047, %v1420
  %v1529 = vld [vmem:[%s2] sm:$0xf]
  %v1531 = vperm.slane %v1529, 0
  %v1532 = vperm.slane %v1529, 1
  %v1533 = vperm.slane %v1529, 2
  %v1534 = vperm.slane %v1529, 3
  %v1539 = vadd.f32 %v1425, %v1531
  %v1540 = vadd.f32 %v1426, %v1532
  %v1541 = vadd.f32 %v1427, %v1533
  %v1542 = vadd.f32 %v1428, %v1534
  %v1543 = vadd.f32 %v1429, %v1531
  %v1544 = vadd.f32 %v1430, %v1532
  %v1545 = vadd.f32 %v1431, %v1533
  %v1546 = vadd.f32 %v1432, %v1534
  %v1547 = vadd.f32 %v1433, %v1531
  %v1548 = vadd.f32 %v1434, %v1532
  %v1549 = vadd.f32 %v1435, %v1533
  %v1550 = vadd.f32 %v1436, %v1534
  %v1551 = vadd.f32 %v1437, %v1531
  %v1552 = vadd.f32 %v1438, %v1532
  %v1553 = vadd.f32 %v1439, %v1533
  %v1554 = vadd.f32 %v1440, %v1534
  %v1555 = vadd.f32 %v1441, %v1531
  %v1556 = vadd.f32 %v1442, %v1532
  %v1557 = vadd.f32 %v1443, %v1533
  %v1558 = vadd.f32 %v1444, %v1534
  %v1559 = vadd.f32 %v1445, %v1531
  %v1560 = vadd.f32 %v1446, %v1532
  %v1561 = vadd.f32 %v1447, %v1533
  %v1562 = vadd.f32 %v1448, %v1534
  %v1563 = vadd.f32 %v1449, %v1531
  %v1564 = vadd.f32 %v1450, %v1532
  %v1565 = vadd.f32 %v1451, %v1533
  %v1566 = vadd.f32 %v1452, %v1534
  %v1567 = vadd.f32 %v1453, %v1531
  %v1568 = vadd.f32 %v1454, %v1532
  %v1569 = vadd.f32 %v1455, %v1533
  %v1570 = vadd.f32 %v1456, %v1534
  %v1571 = vadd.f32 %v1457, %v1531
  %v1572 = vadd.f32 %v1458, %v1532
  %v1573 = vadd.f32 %v1459, %v1533
  %v1574 = vadd.f32 %v1460, %v1534
  %v1575 = vadd.f32 %v1461, %v1531
  %v1576 = vadd.f32 %v1462, %v1532
  %v1577 = vadd.f32 %v1463, %v1533
  %v1578 = vadd.f32 %v1464, %v1534
  %v1579 = vadd.f32 %v1465, %v1531
  %v1580 = vadd.f32 %v1466, %v1532
  %v1581 = vadd.f32 %v1467, %v1533
  %v1582 = vadd.f32 %v1468, %v1534
  %v1583 = vadd.f32 %v1469, %v1531
  %v1584 = vadd.f32 %v1470, %v1532
  %v1585 = vadd.f32 %v1471, %v1533
  %v1586 = vadd.f32 %v1472, %v1534
  %v1587 = vadd.f32 %v1473, %v1531
  %v1588 = vadd.f32 %v1474, %v1532
  %v1589 = vadd.f32 %v1475, %v1533
  %v1590 = vadd.f32 %v1476, %v1534
  %v1591 = vadd.f32 %v1477, %v1531
  %v1592 = vadd.f32 %v1478, %v1532
  %v1593 = vadd.f32 %v1479, %v1533
  %v1594 = vadd.f32 %v1480, %v1534
  %v1595 = vadd.f32 %v1481, %v1531
  %v1596 = vadd.f32 %v1482, %v1532
  %v1597 = vadd.f32 %v1483, %v1533
  %v1598 = vadd.f32 %v1484, %v1534
  %v1599 = vadd.f32 %v1485, %v1531
  %v1600 = vadd.f32 %v1486, %v1532
  %v1601 = vadd.f32 %v1487, %v1533
  %v1602 = vadd.f32 %v1488, %v1534
  %v1603 = vadd.f32 %v1489, %v1531
  %v1604 = vadd.f32 %v1490, %v1532
  %v1605 = vadd.f32 %v1491, %v1533
  %v1606 = vadd.f32 %v1492, %v1534
  %v1607 = vadd.f32 %v1493, %v1531
  %v1608 = vadd.f32 %v1494, %v1532
  %v1609 = vadd.f32 %v1495, %v1533
  %v1610 = vadd.f32 %v1496, %v1534
  %v1611 = vadd.f32 %v1497, %v1531
  %v1612 = vadd.f32 %v1498, %v1532
  %v1613 = vadd.f32 %v1499, %v1533
  %v1614 = vadd.f32 %v1500, %v1534
  %v1615 = vadd.f32 %v1501, %v1531
  %v1616 = vadd.f32 %v1502, %v1532
  %v1617 = vadd.f32 %v1503, %v1533
  %v1618 = vadd.f32 %v1504, %v1534
  %v1619 = vadd.f32 %v1505, %v1531
  %v1620 = vadd.f32 %v1506, %v1532
  %v1621 = vadd.f32 %v1507, %v1533
  %v1622 = vadd.f32 %v1508, %v1534
  %v1623 = vadd.f32 %v1509, %v1531
  %v1624 = vadd.f32 %v1510, %v1532
  %v1625 = vadd.f32 %v1511, %v1533
  %v1626 = vadd.f32 %v1512, %v1534
  %v1627 = vadd.f32 %v1513, %v1531
  %v1628 = vadd.f32 %v1514, %v1532
  %v1629 = vadd.f32 %v1515, %v1533
  %v1630 = vadd.f32 %v1516, %v1534
  %v1631 = vadd.f32 %v1517, %v1531
  %v1632 = vadd.f32 %v1518, %v1532
  %v1633 = vadd.f32 %v1519, %v1533
  %v1634 = vadd.f32 %v1520, %v1534
  %v1635 = vadd.f32 %v1521, %v1531
  %v1636 = vadd.f32 %v1522, %v1532
  %v1637 = vadd.f32 %v1523, %v1533
  %v1638 = vadd.f32 %v1524, %v1534
  %v1639 = vadd.f32 %v1525, %v1531
  %v1640 = vadd.f32 %v1526, %v1532
  %v1641 = vadd.f32 %v1527, %v1533
  %v1642 = vadd.f32 %v1528, %v1534
  %v1643 = vmax.f32 %v1539, 0.0
  %v1644 = vmax.f32 %v1540, 0.0
  %v1645 = vmax.f32 %v1541, 0.0
  %v1646 = vmax.f32 %v1542, 0.0
  %v1647 = vmax.f32 %v1543, 0.0
  %v1648 = vmax.f32 %v1544, 0.0
  %v1649 = vmax.f32 %v1545, 0.0
  %v1650 = vmax.f32 %v1546, 0.0
  %v1651 = vmax.f32 %v1547, 0.0
  %v1652 = vmax.f32 %v1548, 0.0
  %v1653 = vmax.f32 %v1549, 0.0
  %v1654 = vmax.f32 %v1550, 0.0
  %v1655 = vmax.f32 %v1551, 0.0
  %v1656 = vmax.f32 %v1552, 0.0
  %v1657 = vmax.f32 %v1553, 0.0
  %v1658 = vmax.f32 %v1554, 0.0
  %v1659 = vmax.f32 %v1555, 0.0
  %v1660 = vmax.f32 %v1556, 0.0
  %v1661 = vmax.f32 %v1557, 0.0
  %v1662 = vmax.f32 %v1558, 0.0
  %v1663 = vmax.f32 %v1559, 0.0
  %v1664 = vmax.f32 %v1560, 0.0
  %v1665 = vmax.f32 %v1561, 0.0
  %v1666 = vmax.f32 %v1562, 0.0
  %v1667 = vmax.f32 %v1563, 0.0
  %v1668 = vmax.f32 %v1564, 0.0
  %v1669 = vmax.f32 %v1565, 0.0
  %v1670 = vmax.f32 %v1566, 0.0
  %v1671 = vmax.f32 %v1567, 0.0
  %v1672 = vmax.f32 %v1568, 0.0
  %v1673 = vmax.f32 %v1569, 0.0
  %v1674 = vmax.f32 %v1570, 0.0
  %v1675 = vmax.f32 %v1571, 0.0
  %v1676 = vmax.f32 %v1572, 0.0
  %v1677 = vmax.f32 %v1573, 0.0
  %v1678 = vmax.f32 %v1574, 0.0
  %v1679 = vmax.f32 %v1575, 0.0
  %v1680 = vmax.f32 %v1576, 0.0
  %v1681 = vmax.f32 %v1577, 0.0
  %v1682 = vmax.f32 %v1578, 0.0
  %v1683 = vmax.f32 %v1579, 0.0
  %v1684 = vmax.f32 %v1580, 0.0
  %v1685 = vmax.f32 %v1581, 0.0
  %v1686 = vmax.f32 %v1582, 0.0
  %v1687 = vmax.f32 %v1583, 0.0
  %v1688 = vmax.f32 %v1584, 0.0
  %v1689 = vmax.f32 %v1585, 0.0
  %v1690 = vmax.f32 %v1586, 0.0
  %v1691 = vmax.f32 %v1587, 0.0
  %v1692 = vmax.f32 %v1588, 0.0
  %v1693 = vmax.f32 %v1589, 0.0
  %v1694 = vmax.f32 %v1590, 0.0
  %v1695 = vmax.f32 %v1591, 0.0
  %v1696 = vmax.f32 %v1592, 0.0
  %v1697 = vmax.f32 %v1593, 0.0
  %v1698 = vmax.f32 %v1594, 0.0
  %v1699 = vmax.f32 %v1595, 0.0
  %v1700 = vmax.f32 %v1596, 0.0
  %v1701 = vmax.f32 %v1597, 0.0
  %v1702 = vmax.f32 %v1598, 0.0
  %v1703 = vmax.f32 %v1599, 0.0
  %v1704 = vmax.f32 %v1600, 0.0
  %v1705 = vmax.f32 %v1601, 0.0
  %v1706 = vmax.f32 %v1602, 0.0
  %v1707 = vmax.f32 %v1603, 0.0
  %v1708 = vmax.f32 %v1604, 0.0
  %v1709 = vmax.f32 %v1605, 0.0
  %v1710 = vmax.f32 %v1606, 0.0
  %v1711 = vmax.f32 %v1607, 0.0
  %v1712 = vmax.f32 %v1608, 0.0
  %v1713 = vmax.f32 %v1609, 0.0
  %v1714 = vmax.f32 %v1610, 0.0
  %v1715 = vmax.f32 %v1611, 0.0
  %v1716 = vmax.f32 %v1612, 0.0
  %v1717 = vmax.f32 %v1613, 0.0
  %v1718 = vmax.f32 %v1614, 0.0
  %v1719 = vmax.f32 %v1615, 0.0
  %v1720 = vmax.f32 %v1616, 0.0
  %v1721 = vmax.f32 %v1617, 0.0
  %v1722 = vmax.f32 %v1618, 0.0
  %v1723 = vmax.f32 %v1619, 0.0
  %v1724 = vmax.f32 %v1620, 0.0
  %v1725 = vmax.f32 %v1621, 0.0
  %v1726 = vmax.f32 %v1622, 0.0
  %v1727 = vmax.f32 %v1623, 0.0
  %v1728 = vmax.f32 %v1624, 0.0
  %v1729 = vmax.f32 %v1625, 0.0
  %v1730 = vmax.f32 %v1626, 0.0
  %v1731 = vmax.f32 %v1627, 0.0
  %v1732 = vmax.f32 %v1628, 0.0
  %v1733 = vmax.f32 %v1629, 0.0
  %v1734 = vmax.f32 %v1630, 0.0
  %v1735 = vmax.f32 %v1631, 0.0
  %v1736 = vmax.f32 %v1632, 0.0
  %v1737 = vmax.f32 %v1633, 0.0
  %v1738 = vmax.f32 %v1634, 0.0
  %v1739 = vmax.f32 %v1635, 0.0
  %v1740 = vmax.f32 %v1636, 0.0
  %v1741 = vmax.f32 %v1637, 0.0
  %v1742 = vmax.f32 %v1638, 0.0
  %v1743 = vmax.f32 %v1639, 0.0
  %v1744 = vmax.f32 %v1640, 0.0
  %v1745 = vmax.f32 %v1641, 0.0
  %v1746 = vmax.f32 %v1642, 0.0
  %v1747 = vpack.c.bf16 %v1644, %v1643
  %v1748 = vpack.c.bf16 %v1646, %v1645
  %v1749 = vpack.c.bf16 %v1648, %v1647
  %v1750 = vpack.c.bf16 %v1650, %v1649
  %v1751 = vpack.c.bf16 %v1652, %v1651
  %v1752 = vpack.c.bf16 %v1654, %v1653
  %v1753 = vpack.c.bf16 %v1656, %v1655
  %v1754 = vpack.c.bf16 %v1658, %v1657
  %v1755 = vpack.c.bf16 %v1660, %v1659
  %v1756 = vpack.c.bf16 %v1662, %v1661
  %v1757 = vpack.c.bf16 %v1664, %v1663
  %v1758 = vpack.c.bf16 %v1666, %v1665
  %v1759 = vpack.c.bf16 %v1668, %v1667
  %v1760 = vpack.c.bf16 %v1670, %v1669
  %v1761 = vpack.c.bf16 %v1672, %v1671
  %v1762 = vpack.c.bf16 %v1674, %v1673
  %v1763 = vpack.c.bf16 %v1676, %v1675
  %v1764 = vpack.c.bf16 %v1678, %v1677
  %v1765 = vpack.c.bf16 %v1680, %v1679
  %v1766 = vpack.c.bf16 %v1682, %v1681
  %v1767 = vpack.c.bf16 %v1684, %v1683
  %v1768 = vpack.c.bf16 %v1686, %v1685
  %v1769 = vpack.c.bf16 %v1688, %v1687
  %v1770 = vpack.c.bf16 %v1690, %v1689
  %v1771 = vpack.c.bf16 %v1692, %v1691
  %v1772 = vpack.c.bf16 %v1694, %v1693
  %v1773 = vpack.c.bf16 %v1696, %v1695
  %v1774 = vpack.c.bf16 %v1698, %v1697
  %v1775 = vpack.c.bf16 %v1700, %v1699
  %v1776 = vpack.c.bf16 %v1702, %v1701
  %v1777 = vpack.c.bf16 %v1704, %v1703
  %v1778 = vpack.c.bf16 %v1706, %v1705
  %v1779 = vpack.c.bf16 %v1708, %v1707
  %v1780 = vpack.c.bf16 %v1710, %v1709
  %v1781 = vpack.c.bf16 %v1712, %v1711
  %v1782 = vpack.c.bf16 %v1714, %v1713
  %v1783 = vpack.c.bf16 %v1716, %v1715
  %v1784 = vpack.c.bf16 %v1718, %v1717
  %v1785 = vpack.c.bf16 %v1720, %v1719
  %v1786 = vpack.c.bf16 %v1722, %v1721
  %v1787 = vpack.c.bf16 %v1724, %v1723
  %v1788 = vpack.c.bf16 %v1726, %v1725
  %v1789 = vpack.c.bf16 %v1728, %v1727
  %v1790 = vpack.c.bf16 %v1730, %v1729
  %v1791 = vpack.c.bf16 %v1732, %v1731
  %v1792 = vpack.c.bf16 %v1734, %v1733
  %v1793 = vpack.c.bf16 %v1736, %v1735
  %v1794 = vpack.c.bf16 %v1738, %v1737
  %v1795 = vpack.c.bf16 %v1740, %v1739
  %v1796 = vpack.c.bf16 %v1742, %v1741
  %v1797 = vpack.c.bf16 %v1744, %v1743
  %v1798 = vpack.c.bf16 %v1746, %v1745
  %v1799 = vld [vmem:[%s3] sm:$0xff]
  %v1800 = vld [vmem:[%s3 + $0x8] sm:$0xf]
  %v1801 = vld [vmem:[%s3 + $0xc] sm:$0xff]
  %v1802 = vld [vmem:[%s3 + $0x14] sm:$0xf]
  %v1803 = vld [vmem:[%s3 + $0x18] sm:$0xff]
  %v1804 = vld [vmem:[%s3 + $0x20] sm:$0xf]
  %v1805 = vld [vmem:[%s3 + $0x24] sm:$0xff]
  %v1806 = vld [vmem:[%s3 + $0x2c] sm:$0xf]
  %v1807 = vld [vmem:[%s3 + $0x30] sm:$0xff]
  %v1808 = vld [vmem:[%s3 + $0x38] sm:$0xf]
  %v1809 = vld [vmem:[%s3 + $0x3c] sm:$0xff]
  %v1810 = vld [vmem:[%s3 + $0x44] sm:$0xf]
  %v1811 = vld [vmem:[%s3 + $0x48] sm:$0xff]
  %v1812 = vld [vmem:[%s3 + $0x50] sm:$0xf]
  %v1813 = vld [vmem:[%s3 + $0x54] sm:$0xff]
  %v1814 = vld [vmem:[%s3 + $0x5c] sm:$0xf]
  %v1815 = vld [vmem:[%s3 + $0x60] sm:$0xff]
  %v1816 = vld [vmem:[%s3 + $0x68] sm:$0xf]
  %v1817 = vld [vmem:[%s3 + $0x6c] sm:$0xff]
  %v1818 = vld [vmem:[%s3 + $0x74] sm:$0xf]
  %v1819 = vld [vmem:[%s3 + $0x78] sm:$0xff]
  %v1820 = vld [vmem:[%s3 + $0x80] sm:$0xf]
  %v1821 = vld [vmem:[%s3 + $0x84] sm:$0xff]
  %v1822 = vld [vmem:[%s3 + $0x8c] sm:$0xf]
  %v1823 = vld [vmem:[%s3 + $0x90] sm:$0xff]
  %v1824 = vld [vmem:[%s3 + $0x98] sm:$0xf]
  %v1825 = vld [vmem:[%s3 + $0x9c] sm:$0xff]
  %v1826 = vld [vmem:[%s3 + $0xa4] sm:$0xf]
  %v1827 = vld [vmem:[%s3 + $0xa8] sm:$0xff]
  %v1828 = vld [vmem:[%s3 + $0xb0] sm:$0xf]
  %v1829 = vld [vmem:[%s3 + $0xb4] sm:$0xff]
  %v1830 = vld [vmem:[%s3 + $0xbc] sm:$0xf]
  %v1831 = vld [vmem:[%s3 + $0xc0] sm:$0xff]
  %v1832 = vld [vmem:[%s3 + $0xc8] sm:$0xf]
  %v1833 = vld [vmem:[%s3 + $0xcc] sm:$0xff]
  %v1834 = vld [vmem:[%s3 + $0xd4] sm:$0xf]
  %v1835 = vld [vmem:[%s3 + $0xd8] sm:$0xff]
  %v1836 = vld [vmem:[%s3 + $0xe0] sm:$0xf]
  %v1837 = vld [vmem:[%s3 + $0xe4] sm:$0xff]
  %v1838 = vld [vmem:[%s3 + $0xec] sm:$0xf]
  %v1839 = vld [vmem:[%s3 + $0xf0] sm:$0xff]
  %v1840 = vld [vmem:[%s3 + $0xf8] sm:$0xf]
  %v1841 = vld [vmem:[%s3 + $0xfc] sm:$0xff]
  %v1842 = vld [vmem:[%s3 + $0x104] sm:$0xf]
  %v1843 = vld [vmem:[%s3 + $0x108] sm:$0xff]
  %v1844 = vld [vmem:[%s3 + $0x110] sm:$0xf]
  %v1845 = vld [vmem:[%s3 + $0x114] sm:$0xff]
  %v1846 = vld [vmem:[%s3 + $0x11c] sm:$0xf]
  %v1847 = vld [vmem:[%s3 + $0x120] sm:$0xff]
  %v1848 = vld [vmem:[%s3 + $0x128] sm:$0xf]
  %v1849 = vld [vmem:[%s3 + $0x12c] sm:$0xff]
  %v1850 = vld [vmem:[%s3 + $0x134] sm:$0xf]
  %v1851 = vld [vmem:[%s3 + $0x138] sm:$0xff]
  %v1852 = vld [vmem:[%s3 + $0x140] sm:$0xf]
  %v1853 = vld [vmem:[%s3 + $0x144] sm:$0xff]
  %v1854 = vld [vmem:[%s3 + $0x14c] sm:$0xf]
  %v1855 = vld [vmem:[%s3 + $0x150] sm:$0xff]
  %v1856 = vld [vmem:[%s3 + $0x158] sm:$0xf]
  %v1857 = vld [vmem:[%s3 + $0x15c] sm:$0xff]
  %v1858 = vld [vmem:[%s3 + $0x164] sm:$0xf]
  %v1859 = vld [vmem:[%s3 + $0x168] sm:$0xff]
  %v1860 = vld [vmem:[%s3 + $0x170] sm:$0xf]
  %v1861 = vld [vmem:[%s3 + $0x174] sm:$0xff]
  %v1862 = vld [vmem:[%s3 + $0x17c] sm:$0xf]
  %v1863 = vld [vmem:[%s3 + $0x180] sm:$0xff]
  %v1864 = vld [vmem:[%s3 + $0x188] sm:$0xf]
  %v1865 = vld [vmem:[%s3 + $0x18c] sm:$0xff]
  %v1866 = vld [vmem:[%s3 + $0x194] sm:$0xf]
  %v1867 = vld [vmem:[%s3 + $0x198] sm:$0xff]
  %v1868 = vld [vmem:[%s3 + $0x1a0] sm:$0xf]
  %v1869 = vld [vmem:[%s3 + $0x1a4] sm:$0xff]
  %v1870 = vld [vmem:[%s3 + $0x1ac] sm:$0xf]
  %v1871 = vld [vmem:[%s3 + $0x1b0] sm:$0xff]
  %v1872 = vld [vmem:[%s3 + $0x1b8] sm:$0xf]
  %v1873 = vld [vmem:[%s3 + $0x1bc] sm:$0xff]
  %v1874 = vld [vmem:[%s3 + $0x1c4] sm:$0xf]
  %v1875 = vld [vmem:[%s3 + $0x1c8] sm:$0xff]
  %v1876 = vld [vmem:[%s3 + $0x1d0] sm:$0xf]
  %v1877 = vld [vmem:[%s3 + $0x1d4] sm:$0xff]
  %v1878 = vld [vmem:[%s3 + $0x1dc] sm:$0xf]
  %v1879 = vld [vmem:[%s3 + $0x1e0] sm:$0xff]
  %v1880 = vld [vmem:[%s3 + $0x1e8] sm:$0xf]
  %v1881 = vld [vmem:[%s3 + $0x1ec] sm:$0xff]
  %v1882 = vld [vmem:[%s3 + $0x1f4] sm:$0xf]
  %v1883 = vld [vmem:[%s3 + $0x1f8] sm:$0xff]
  %v1884 = vld [vmem:[%s3 + $0x200] sm:$0xf]
  %v1885 = vld [vmem:[%s3 + $0x204] sm:$0xff]
  %v1886 = vld [vmem:[%s3 + $0x20c] sm:$0xf]
  %v1887 = vld [vmem:[%s3 + $0x210] sm:$0xff]
  %v1888 = vld [vmem:[%s3 + $0x218] sm:$0xf]
  %v1889 = vld [vmem:[%s3 + $0x21c] sm:$0xff]
  %v1890 = vld [vmem:[%s3 + $0x224] sm:$0xf]
  %v1891 = vld [vmem:[%s3 + $0x228] sm:$0xff]
  %v1892 = vld [vmem:[%s3 + $0x230] sm:$0xf]
  %v1893 = vld [vmem:[%s3 + $0x234] sm:$0xff]
  %v1894 = vld [vmem:[%s3 + $0x23c] sm:$0xf]
  %v1895 = vld [vmem:[%s3 + $0x240] sm:$0xff]
  %v1896 = vld [vmem:[%s3 + $0x248] sm:$0xf]
  %v1897 = vld [vmem:[%s3 + $0x24c] sm:$0xff]
  %v1898 = vld [vmem:[%s3 + $0x254] sm:$0xf]
  %v1899 = vld [vmem:[%s3 + $0x258] sm:$0xff]
  %v1900 = vld [vmem:[%s3 + $0x260] sm:$0xf]
  %v1901 = vld [vmem:[%s3 + $0x264] sm:$0xff]
  %v1902 = vld [vmem:[%s3 + $0x26c] sm:$0xf]
  %s1903 = scalar_lea.vmem %s3, 624
  %v1904 = vld [vmem:[%s1903] sm:$0xff]
  %v1905 = vld [vmem:[%s1903 + $0x8] sm:$0xf]
  %v1906 = vld [vmem:[%s1903 + $0xc] sm:$0xff]
  %v1907 = vld [vmem:[%s1903 + $0x14] sm:$0xf]
  %v1908 = vld [vmem:[%s1903 + $0x18] sm:$0xff]
  %v1909 = vld [vmem:[%s1903 + $0x20] sm:$0xf]
  %v1910 = vld [vmem:[%s1903 + $0x24] sm:$0xff]
  %v1911 = vld [vmem:[%s1903 + $0x2c] sm:$0xf]
  %v1912 = vld [vmem:[%s1903 + $0x30] sm:$0xff]
  %v1913 = vld [vmem:[%s1903 + $0x38] sm:$0xf]
  %v1914 = vld [vmem:[%s1903 + $0x3c] sm:$0xff]
  %v1915 = vld [vmem:[%s1903 + $0x44] sm:$0xf]
  %v1916 = vld [vmem:[%s1903 + $0x48] sm:$0xff]
  %v1917 = vld [vmem:[%s1903 + $0x50] sm:$0xf]
  %v1918 = vld [vmem:[%s1903 + $0x54] sm:$0xff]
  %v1919 = vld [vmem:[%s1903 + $0x5c] sm:$0xf]
  %v1920 = vld [vmem:[%s1903 + $0x60] sm:$0xff]
  %v1921 = vld [vmem:[%s1903 + $0x68] sm:$0xf]
  %v1922 = vld [vmem:[%s1903 + $0x6c] sm:$0xff]
  %v1923 = vld [vmem:[%s1903 + $0x74] sm:$0xf]
  %v1924 = vld [vmem:[%s1903 + $0x78] sm:$0xff]
  %v1925 = vld [vmem:[%s1903 + $0x80] sm:$0xf]
  %v1926 = vld [vmem:[%s1903 + $0x84] sm:$0xff]
  %v1927 = vld [vmem:[%s1903 + $0x8c] sm:$0xf]
  %v1928 = vld [vmem:[%s1903 + $0x90] sm:$0xff]
  %v1929 = vld [vmem:[%s1903 + $0x98] sm:$0xf]
  %v1930 = vld [vmem:[%s1903 + $0x9c] sm:$0xff]
  %v1931 = vld [vmem:[%s1903 + $0xa4] sm:$0xf]
  %v1932 = vld [vmem:[%s1903 + $0xa8] sm:$0xff]
  %v1933 = vld [vmem:[%s1903 + $0xb0] sm:$0xf]
  %v1934 = vld [vmem:[%s1903 + $0xb4] sm:$0xff]
  %v1935 = vld [vmem:[%s1903 + $0xbc] sm:$0xf]
  %v1936 = vld [vmem:[%s1903 + $0xc0] sm:$0xff]
  %v1937 = vld [vmem:[%s1903 + $0xc8] sm:$0xf]
  %v1938 = vld [vmem:[%s1903 + $0xcc] sm:$0xff]
  %v1939 = vld [vmem:[%s1903 + $0xd4] sm:$0xf]
  %v1940 = vld [vmem:[%s1903 + $0xd8] sm:$0xff]
  %v1941 = vld [vmem:[%s1903 + $0xe0] sm:$0xf]
  %v1942 = vld [vmem:[%s1903 + $0xe4] sm:$0xff]
  %v1943 = vld [vmem:[%s1903 + $0xec] sm:$0xf]
  %v1944 = vld [vmem:[%s1903 + $0xf0] sm:$0xff]
  %v1945 = vld [vmem:[%s1903 + $0xf8] sm:$0xf]
  %v1946 = vld [vmem:[%s1903 + $0xfc] sm:$0xff]
  %v1947 = vld [vmem:[%s1903 + $0x104] sm:$0xf]
  %v1948 = vld [vmem:[%s1903 + $0x108] sm:$0xff]
  %v1949 = vld [vmem:[%s1903 + $0x110] sm:$0xf]
  %v1950 = vld [vmem:[%s1903 + $0x114] sm:$0xff]
  %v1951 = vld [vmem:[%s1903 + $0x11c] sm:$0xf]
  %v1952 = vld [vmem:[%s1903 + $0x120] sm:$0xff]
  %v1953 = vld [vmem:[%s1903 + $0x128] sm:$0xf]
  %v1954 = vld [vmem:[%s1903 + $0x12c] sm:$0xff]
  %v1955 = vld [vmem:[%s1903 + $0x134] sm:$0xf]
  %v1956 = vld [vmem:[%s1903 + $0x138] sm:$0xff]
  %v1957 = vld [vmem:[%s1903 + $0x140] sm:$0xf]
  %v1958 = vld [vmem:[%s1903 + $0x144] sm:$0xff]
  %v1959 = vld [vmem:[%s1903 + $0x14c] sm:$0xf]
  %v1960 = vld [vmem:[%s1903 + $0x150] sm:$0xff]
  %v1961 = vld [vmem:[%s1903 + $0x158] sm:$0xf]
  %v1962 = vld [vmem:[%s1903 + $0x15c] sm:$0xff]
  %v1963 = vld [vmem:[%s1903 + $0x164] sm:$0xf]
  %v1964 = vld [vmem:[%s1903 + $0x168] sm:$0xff]
  %v1965 = vld [vmem:[%s1903 + $0x170] sm:$0xf]
  %v1966 = vld [vmem:[%s1903 + $0x174] sm:$0xff]
  %v1967 = vld [vmem:[%s1903 + $0x17c] sm:$0xf]
  %v1968 = vld [vmem:[%s1903 + $0x180] sm:$0xff]
  %v1969 = vld [vmem:[%s1903 + $0x188] sm:$0xf]
  %v1970 = vld [vmem:[%s1903 + $0x18c] sm:$0xff]
  %v1971 = vld [vmem:[%s1903 + $0x194] sm:$0xf]
  %v1972 = vld [vmem:[%s1903 + $0x198] sm:$0xff]
  %v1973 = vld [vmem:[%s1903 + $0x1a0] sm:$0xf]
  %v1974 = vld [vmem:[%s1903 + $0x1a4] sm:$0xff]
  %v1975 = vld [vmem:[%s1903 + $0x1ac] sm:$0xf]
  %v1976 = vld [vmem:[%s1903 + $0x1b0] sm:$0xff]
  %v1977 = vld [vmem:[%s1903 + $0x1b8] sm:$0xf]
  %v1978 = vld [vmem:[%s1903 + $0x1bc] sm:$0xff]
  %v1979 = vld [vmem:[%s1903 + $0x1c4] sm:$0xf]
  %v1980 = vld [vmem:[%s1903 + $0x1c8] sm:$0xff]
  %v1981 = vld [vmem:[%s1903 + $0x1d0] sm:$0xf]
  %v1982 = vld [vmem:[%s1903 + $0x1d4] sm:$0xff]
  %v1983 = vld [vmem:[%s1903 + $0x1dc] sm:$0xf]
  %v1984 = vld [vmem:[%s1903 + $0x1e0] sm:$0xff]
  %v1985 = vld [vmem:[%s1903 + $0x1e8] sm:$0xf]
  %v1986 = vld [vmem:[%s1903 + $0x1ec] sm:$0xff]
  %v1987 = vld [vmem:[%s1903 + $0x1f4] sm:$0xf]
  %v1988 = vld [vmem:[%s1903 + $0x1f8] sm:$0xff]
  %v1989 = vld [vmem:[%s1903 + $0x200] sm:$0xf]
  %v1990 = vld [vmem:[%s1903 + $0x204] sm:$0xff]
  %v1991 = vld [vmem:[%s1903 + $0x20c] sm:$0xf]
  %v1992 = vld [vmem:[%s1903 + $0x210] sm:$0xff]
  %v1993 = vld [vmem:[%s1903 + $0x218] sm:$0xf]
  %v1994 = vld [vmem:[%s1903 + $0x21c] sm:$0xff]
  %v1995 = vld [vmem:[%s1903 + $0x224] sm:$0xf]
  %v1996 = vld [vmem:[%s1903 + $0x228] sm:$0xff]
  %v1997 = vld [vmem:[%s1903 + $0x230] sm:$0xf]
  %v1998 = vld [vmem:[%s1903 + $0x234] sm:$0xff]
  %v1999 = vld [vmem:[%s1903 + $0x23c] sm:$0xf]
  %v2000 = vld [vmem:[%s1903 + $0x240] sm:$0xff]
  %v2001 = vld [vmem:[%s1903 + $0x248] sm:$0xf]
  %v2002 = vld [vmem:[%s1903 + $0x24c] sm:$0xff]
  %v2003 = vld [vmem:[%s1903 + $0x254] sm:$0xf]
  %v2004 = vld [vmem:[%s1903 + $0x258] sm:$0xff]
  %v2005 = vld [vmem:[%s1903 + $0x260] sm:$0xf]
  %v2006 = vld [vmem:[%s1903 + $0x264] sm:$0xff]
  %v2007 = vld [vmem:[%s1903 + $0x26c] sm:$0xf]
  %v2032 = vunpack.c.l.b16 %v1751
  %v2033 = vunpack.c.h.b16 %v1751
  %v2034 = vunpack.c.l.b16 %v1752
  %v2035 = vunpack.c.h.b16 %v1752
  %v2036 = vunpack.c.l.b16 %v1753
  %v2037 = vunpack.c.h.b16 %v1753
  %v2038 = vunpack.c.l.b16 %v1754
  %v2039 = vunpack.c.h.b16 %v1754
  %v2040 = vunpack.c.l.b16 %v1759
  %v2041 = vunpack.c.h.b16 %v1759
  %v2042 = vunpack.c.l.b16 %v1760
  %v2043 = vunpack.c.h.b16 %v1760
  %v2044 = vunpack.c.l.b16 %v1761
  %v2045 = vunpack.c.h.b16 %v1761
  %v2046 = vunpack.c.l.b16 %v1762
  %v2047 = vunpack.c.h.b16 %v1762
  %v2048 = vunpack.c.l.b16 %v1767
  %v2049 = vunpack.c.h.b16 %v1767
  %v2050 = vunpack.c.l.b16 %v1768
  %v2051 = vunpack.c.h.b16 %v1768
  %v2052 = vunpack.c.l.b16 %v1769
  %v2053 = vunpack.c.h.b16 %v1769
  %v2054 = vunpack.c.l.b16 %v1770
  %v2055 = vunpack.c.h.b16 %v1770
  %v2056 = vunpack.c.l.b16 %v1775
  %v2057 = vunpack.c.h.b16 %v1775
  %v2058 = vunpack.c.l.b16 %v1776
  %v2059 = vunpack.c.h.b16 %v1776
  %v2060 = vunpack.c.l.b16 %v1777
  %v2061 = vunpack.c.h.b16 %v1777
  %v2062 = vunpack.c.l.b16 %v1778
  %v2063 = vunpack.c.h.b16 %v1778
  %v2064 = vunpack.c.l.b16 %v1783
  %v2065 = vunpack.c.h.b16 %v1783
  %v2066 = vunpack.c.l.b16 %v1784
  %v2067 = vunpack.c.h.b16 %v1784
  %v2068 = vunpack.c.l.b16 %v1785
  %v2069 = vunpack.c.h.b16 %v1785
  %v2070 = vunpack.c.l.b16 %v1786
  %v2071 = vunpack.c.h.b16 %v1786
  %v2072 = vunpack.c.l.b16 %v1791
  %v2073 = vunpack.c.h.b16 %v1791
  %v2074 = vunpack.c.l.b16 %v1792
  %v2075 = vunpack.c.h.b16 %v1792
  %v2076 = vunpack.c.l.b16 %v1793
  %v2077 = vunpack.c.h.b16 %v1793
  %v2078 = vunpack.c.l.b16 %v1794
  %v2079 = vunpack.c.h.b16 %v1794
  %v2080 = vpack.c.b16 %v2036, %v2032
  %v2081 = vpack.c.b16 %v2037, %v2033
  %v2082 = vpack.c.b16 %v2038, %v2034
  %v2083 = vpack.c.b16 %v2039, %v2035
  %v2084 = vpack.c.b16 %v2044, %v2040
  %v2085 = vpack.c.b16 %v2045, %v2041
  %v2086 = vpack.c.b16 %v2046, %v2042
  %v2087 = vpack.c.b16 %v2047, %v2043
  %v2088 = vpack.c.b16 %v2052, %v2048
  %v2089 = vpack.c.b16 %v2053, %v2049
  %v2090 = vpack.c.b16 %v2054, %v2050
  %v2091 = vpack.c.b16 %v2055, %v2051
  %v2092 = vpack.c.b16 %v2060, %v2056
  %v2093 = vpack.c.b16 %v2061, %v2057
  %v2094 = vpack.c.b16 %v2062, %v2058
  %v2095 = vpack.c.b16 %v2063, %v2059
  %v2096 = vpack.c.b16 %v2068, %v2064
  %v2097 = vpack.c.b16 %v2069, %v2065
  %v2098 = vpack.c.b16 %v2070, %v2066
  %v2099 = vpack.c.b16 %v2071, %v2067
  %v2100 = vpack.c.b16 %v2076, %v2072
  %v2101 = vpack.c.b16 %v2077, %v2073
  %v2102 = vpack.c.b16 %v2078, %v2074
  %v2103 = vpack.c.b16 %v2079, %v2075
  %v2226 = vunpack.c.l.b16 %v1904
  %v2227 = vunpack.c.h.b16 %v1904
  %v2228 = vunpack.c.l.b16 %v1905
  %v2229 = vunpack.c.l.b16 %v1906
  %v2230 = vunpack.c.h.b16 %v1906
  %v2231 = vunpack.c.l.b16 %v1907
  %v2232 = vunpack.c.l.b16 %v1908
  %v2233 = vunpack.c.h.b16 %v1908
  %v2234 = vunpack.c.l.b16 %v1909
  %v2235 = vunpack.c.l.b16 %v1910
  %v2236 = vunpack.c.h.b16 %v1910
  %v2237 = vunpack.c.l.b16 %v1911
  %v2238 = vunpack.c.l.b16 %v1912
  %v2239 = vunpack.c.h.b16 %v1912
  %v2240 = vunpack.c.l.b16 %v1913
  %v2241 = vunpack.c.l.b16 %v1914
  %v2242 = vunpack.c.h.b16 %v1914
  %v2243 = vunpack.c.l.b16 %v1915
  %v2244 = vunpack.c.l.b16 %v1916
  %v2245 = vunpack.c.h.b16 %v1916
  %v2246 = vunpack.c.l.b16 %v1917
  %v2247 = vunpack.c.l.b16 %v1918
  %v2248 = vunpack.c.h.b16 %v1918
  %v2249 = vunpack.c.l.b16 %v1919
  %v2250 = vunpack.c.l.b16 %v1920
  %v2251 = vunpack.c.h.b16 %v1920
  %v2252 = vunpack.c.l.b16 %v1921
  %v2253 = vunpack.c.l.b16 %v1922
  %v2254 = vunpack.c.h.b16 %v1922
  %v2255 = vunpack.c.l.b16 %v1923
  %v2256 = vunpack.c.l.b16 %v1924
  %v2257 = vunpack.c.h.b16 %v1924
  %v2258 = vunpack.c.l.b16 %v1925
  %v2259 = vunpack.c.l.b16 %v1926
  %v2260 = vunpack.c.h.b16 %v1926
  %v2261 = vunpack.c.l.b16 %v1927
  %v2262 = vunpack.c.l.b16 %v1928
  %v2263 = vunpack.c.h.b16 %v1928
  %v2264 = vunpack.c.l.b16 %v1929
  %v2265 = vunpack.c.l.b16 %v1930
  %v2266 = vunpack.c.h.b16 %v1930
  %v2267 = vunpack.c.l.b16 %v1931
  %v2268 = vunpack.c.l.b16 %v1932
  %v2269 = vunpack.c.h.b16 %v1932
  %v2270 = vunpack.c.l.b16 %v1933
  %v2271 = vunpack.c.l.b16 %v1934
  %v2272 = vunpack.c.h.b16 %v1934
  %v2273 = vunpack.c.l.b16 %v1935
  %v2274 = vunpack.c.l.b16 %v1936
  %v2275 = vunpack.c.h.b16 %v1936
  %v2276 = vunpack.c.l.b16 %v1937
  %v2277 = vunpack.c.l.b16 %v1938
  %v2278 = vunpack.c.h.b16 %v1938
  %v2279 = vunpack.c.l.b16 %v1939
  %v2280 = vunpack.c.l.b16 %v1940
  %v2281 = vunpack.c.h.b16 %v1940
  %v2282 = vunpack.c.l.b16 %v1941
  %v2283 = vunpack.c.l.b16 %v1942
  %v2284 = vunpack.c.h.b16 %v1942
  %v2285 = vunpack.c.l.b16 %v1943
  %v2286 = vunpack.c.l.b16 %v1944
  %v2287 = vunpack.c.h.b16 %v1944
  %v2288 = vunpack.c.l.b16 %v1945
  %v2289 = vunpack.c.l.b16 %v1946
  %v2290 = vunpack.c.h.b16 %v1946
  %v2291 = vunpack.c.l.b16 %v1947
  %v2292 = vunpack.c.l.b16 %v1948
  %v2293 = vunpack.c.h.b16 %v1948
  %v2294 = vunpack.c.l.b16 %v1949
  %v2295 = vunpack.c.l.b16 %v1950
  %v2296 = vunpack.c.h.b16 %v1950
  %v2297 = vunpack.c.l.b16 %v1951
  %v2298 = vunpack.c.l.b16 %v1952
  %v2299 = vunpack.c.h.b16 %v1952
  %v2300 = vunpack.c.l.b16 %v1953
  %v2301 = vunpack.c.l.b16 %v1954
  %v2302 = vunpack.c.h.b16 %v1954
  %v2303 = vunpack.c.l.b16 %v1955
  %v2304 = vunpack.c.l.b16 %v1956
  %v2305 = vunpack.c.h.b16 %v1956
  %v2306 = vunpack.c.l.b16 %v1957
  %v2307 = vunpack.c.l.b16 %v1958
  %v2308 = vunpack.c.h.b16 %v1958
  %v2309 = vunpack.c.l.b16 %v1959
  %v2310 = vunpack.c.l.b16 %v1960
  %v2311 = vunpack.c.h.b16 %v1960
  %v2312 = vunpack.c.l.b16 %v1961
  %v2313 = vunpack.c.l.b16 %v1962
  %v2314 = vunpack.c.h.b16 %v1962
  %v2315 = vunpack.c.l.b16 %v1963
  %v2316 = vunpack.c.l.b16 %v1964
  %v2317 = vunpack.c.h.b16 %v1964
  %v2318 = vunpack.c.l.b16 %v1965
  %v2319 = vunpack.c.l.b16 %v1966
  %v2320 = vunpack.c.h.b16 %v1966
  %v2321 = vunpack.c.l.b16 %v1967
  %v2322 = vunpack.c.l.b16 %v1968
  %v2323 = vunpack.c.h.b16 %v1968
  %v2324 = vunpack.c.l.b16 %v1969
  %v2325 = vunpack.c.l.b16 %v1970
  %v2326 = vunpack.c.h.b16 %v1970
  %v2327 = vunpack.c.l.b16 %v1971
  %v2328 = vunpack.c.l.b16 %v1972
  %v2329 = vunpack.c.h.b16 %v1972
  %v2330 = vunpack.c.l.b16 %v1973
  %v2331 = vunpack.c.l.b16 %v1974
  %v2332 = vunpack.c.h.b16 %v1974
  %v2333 = vunpack.c.l.b16 %v1975
  %v2334 = vunpack.c.l.b16 %v1976
  %v2335 = vunpack.c.h.b16 %v1976
  %v2336 = vunpack.c.l.b16 %v1977
  %v2337 = vunpack.c.l.b16 %v1978
  %v2338 = vunpack.c.h.b16 %v1978
  %v2339 = vunpack.c.l.b16 %v1979
  %v2340 = vunpack.c.l.b16 %v1980
  %v2341 = vunpack.c.h.b16 %v1980
  %v2342 = vunpack.c.l.b16 %v1981
  %v2343 = vunpack.c.l.b16 %v1982
  %v2344 = vunpack.c.h.b16 %v1982
  %v2345 = vunpack.c.l.b16 %v1983
  %v2346 = vunpack.c.l.b16 %v1984
  %v2347 = vunpack.c.h.b16 %v1984
  %v2348 = vunpack.c.l.b16 %v1985
  %v2349 = vunpack.c.l.b16 %v1986
  %v2350 = vunpack.c.h.b16 %v1986
  %v2351 = vunpack.c.l.b16 %v1987
  %v2352 = vunpack.c.l.b16 %v1988
  %v2353 = vunpack.c.h.b16 %v1988
  %v2354 = vunpack.c.l.b16 %v1989
  %v2355 = vunpack.c.l.b16 %v1990
  %v2356 = vunpack.c.h.b16 %v1990
  %v2357 = vunpack.c.l.b16 %v1991
  %v2358 = vunpack.c.l.b16 %v1992
  %v2359 = vunpack.c.h.b16 %v1992
  %v2360 = vunpack.c.l.b16 %v1993
  %v2361 = vunpack.c.l.b16 %v1994
  %v2362 = vunpack.c.h.b16 %v1994
  %v2363 = vunpack.c.l.b16 %v1995
  %v2364 = vunpack.c.l.b16 %v1996
  %v2365 = vunpack.c.h.b16 %v1996
  %v2366 = vunpack.c.l.b16 %v1997
  %v2367 = vunpack.c.l.b16 %v1998
  %v2368 = vunpack.c.h.b16 %v1998
  %v2369 = vunpack.c.l.b16 %v1999
  %v2370 = vunpack.c.l.b16 %v2000
  %v2371 = vunpack.c.h.b16 %v2000
  %v2372 = vunpack.c.l.b16 %v2001
  %v2373 = vunpack.c.l.b16 %v2002
  %v2374 = vunpack.c.h.b16 %v2002
  %v2375 = vunpack.c.l.b16 %v2003
  %v2376 = vunpack.c.l.b16 %v2004
  %v2377 = vunpack.c.h.b16 %v2004
  %v2378 = vunpack.c.l.b16 %v2005
  %v2379 = vunpack.c.l.b16 %v2006
  %v2380 = vunpack.c.h.b16 %v2006
  %v2381 = vunpack.c.l.b16 %v2007
  %v2382 = vpack.c.b16 %v2229, %v2226
  %v2383 = vpack.c.b16 %v2230, %v2227
  %v2384 = vpack.c.b16 %v2231, %v2228
  %v2385 = vpack.c.b16 %v2235, %v2232
  %v2386 = vpack.c.b16 %v2236, %v2233
  %v2387 = vpack.c.b16 %v2237, %v2234
  %v2388 = vpack.c.b16 %v2241, %v2238
  %v2389 = vpack.c.b16 %v2242, %v2239
  %v2390 = vpack.c.b16 %v2243, %v2240
  %v2391 = vpack.c.b16 %v2247, %v2244
  %v2392 = vpack.c.b16 %v2248, %v2245
  %v2393 = vpack.c.b16 %v2249, %v2246
  %v2394 = vpack.c.b16 %v2253, %v2250
  %v2395 = vpack.c.b16 %v2254, %v2251
  %v2396 = vpack.c.b16 %v2255, %v2252
  %v2397 = vpack.c.b16 %v2259, %v2256
  %v2398 = vpack.c.b16 %v2260, %v2257
  %v2399 = vpack.c.b16 %v2261, %v2258
  %v2400 = vpack.c.b16 %v2265, %v2262
  %v2401 = vpack.c.b16 %v2266, %v2263
  %v2402 = vpack.c.b16 %v2267, %v2264
  %v2403 = vpack.c.b16 %v2271, %v2268
  %v2404 = vpack.c.b16 %v2272, %v2269
  %v2405 = vpack.c.b16 %v2273, %v2270
  %v2406 = vpack.c.b16 %v2277, %v2274
  %v2407 = vpack.c.b16 %v2278, %v2275
  %v2408 = vpack.c.b16 %v2279, %v2276
  %v2409 = vpack.c.b16 %v2283, %v2280
  %v2410 = vpack.c.b16 %v2284, %v2281
  %v2411 = vpack.c.b16 %v2285, %v2282
  %v2412 = vpack.c.b16 %v2289, %v2286
  %v2413 = vpack.c.b16 %v2290, %v2287
  %v2414 = vpack.c.b16 %v2291, %v2288
  %v2415 = vpack.c.b16 %v2295, %v2292
  %v2416 = vpack.c.b16 %v2296, %v2293
  %v2417 = vpack.c.b16 %v2297, %v2294
  %v2418 = vpack.c.b16 %v2301, %v2298
  %v2419 = vpack.c.b16 %v2302, %v2299
  %v2420 = vpack.c.b16 %v2303, %v2300
  %v2421 = vpack.c.b16 %v2307, %v2304
  %v2422 = vpack.c.b16 %v2308, %v2305
  %v2423 = vpack.c.b16 %v2309, %v2306
  %v2424 = vpack.c.b16 %v2313, %v2310
  %v2425 = vpack.c.b16 %v2314, %v2311
  %v2426 = vpack.c.b16 %v2315, %v2312
  %v2427 = vpack.c.b16 %v2319, %v2316
  %v2428 = vpack.c.b16 %v2320, %v2317
  %v2429 = vpack.c.b16 %v2321, %v2318
  %v2430 = vpack.c.b16 %v2325, %v2322
  %v2431 = vpack.c.b16 %v2326, %v2323
  %v2432 = vpack.c.b16 %v2327, %v2324
  %v2433 = vpack.c.b16 %v2331, %v2328
  %v2434 = vpack.c.b16 %v2332, %v2329
  %v2435 = vpack.c.b16 %v2333, %v2330
  %v2436 = vpack.c.b16 %v2337, %v2334
  %v2437 = vpack.c.b16 %v2338, %v2335
  %v2438 = vpack.c.b16 %v2339, %v2336
  %v2439 = vpack.c.b16 %v2343, %v2340
  %v2440 = vpack.c.b16 %v2344, %v2341
  %v2441 = vpack.c.b16 %v2345, %v2342
  %v2442 = vpack.c.b16 %v2349, %v2346
  %v2443 = vpack.c.b16 %v2350, %v2347
  %v2444 = vpack.c.b16 %v2351, %v2348
  %v2445 = vpack.c.b16 %v2355, %v2352
  %v2446 = vpack.c.b16 %v2356, %v2353
  %v2447 = vpack.c.b16 %v2357, %v2354
  %v2448 = vpack.c.b16 %v2361, %v2358
  %v2449 = vpack.c.b16 %v2362, %v2359
  %v2450 = vpack.c.b16 %v2363, %v2360
  %v2451 = vpack.c.b16 %v2367, %v2364
  %v2452 = vpack.c.b16 %v2368, %v2365
  %v2453 = vpack.c.b16 %v2369, %v2366
  %v2454 = vpack.c.b16 %v2373, %v2370
  %v2455 = vpack.c.b16 %v2374, %v2371
  %v2456 = vpack.c.b16 %v2375, %v2372
  %v2457 = vpack.c.b16 %v2379, %v2376
  %v2458 = vpack.c.b16 %v2380, %v2377
  %v2459 = vpack.c.b16 %v2381, %v2378
  %vm2538 = vcmask 261120
  %v2540 = vsel %vm2538, %v2083, 0
  %v2543 = vsel %vm2538, %v2087, 0
  %v2546 = vsel %vm2538, %v2091, 0
  %v2549 = vsel %vm2538, %v2095, 0
  %v2552 = vsel %vm2538, %v2099, 0
  %v2555 = vsel %vm2538, %v2103, 0
  %2557 = vmatpush.bf16.msra.mxu0 %v2403
  %2558 = vmatpush.bf16.msra.mxu0 %v2400
  %2559 = vmatpush.bf16.msra.mxu0 %v2397
  %2560 = vmatpush.bf16.msra.mxu0 %v2394
  %2561 = vmatpush.bf16.msra.mxu0 %v2391
  %2562 = vmatpush.bf16.msra.mxu0 %v2388
  %2563 = vmatpush.bf16.msra.mxu0 %v2385
  %2564 = vmatpush.bf16.msra.mxu0 %v2382
  %2565 = vmatmul.bf16.gmra.mxu0 %v2080
  %v2566 = vpop.f32.mrf.mxu0
  %v2567 = vadd.f32 0.0, %v2566
  %v2568 = vpop.f32.mrf.mxu0
  %v2569 = vadd.f32 0.0, %v2568
  %2570 = vmatmul.bf16.gmra.mxu0 %v2084
  %v2571 = vpop.f32.mrf.mxu0
  %v2572 = vadd.f32 0.0, %v2571
  %v2573 = vpop.f32.mrf.mxu0
  %v2574 = vadd.f32 0.0, %v2573
  %2575 = vmatmul.bf16.gmra.mxu0 %v2088
  %v2576 = vpop.f32.mrf.mxu0
  %v2577 = vadd.f32 0.0, %v2576
  %v2578 = vpop.f32.mrf.mxu0
  %v2579 = vadd.f32 0.0, %v2578
  %2580 = vmatmul.bf16.gmra.mxu0 %v2092
  %v2581 = vpop.f32.mrf.mxu0
  %v2582 = vadd.f32 0.0, %v2581
  %v2583 = vpop.f32.mrf.mxu0
  %v2584 = vadd.f32 0.0, %v2583
  %2585 = vmatmul.bf16.gmra.mxu0 %v2096
  %v2586 = vpop.f32.mrf.mxu0
  %v2587 = vadd.f32 0.0, %v2586
  %v2588 = vpop.f32.mrf.mxu0
  %v2589 = vadd.f32 0.0, %v2588
  %2590 = vmatmul.bf16.gmra.mxu0 %v2100
  %v2591 = vpop.f32.mrf.mxu0
  %v2592 = vpop.f32.mrf.mxu0
  %2593 = vdwg.mxu0
  %2594 = vmatpush.bf16.msra.mxu0 %v2427
  %2595 = vmatpush.bf16.msra.mxu0 %v2424
  %2596 = vmatpush.bf16.msra.mxu0 %v2421
  %2597 = vmatpush.bf16.msra.mxu0 %v2418
  %2598 = vmatpush.bf16.msra.mxu0 %v2415
  %2599 = vmatpush.bf16.msra.mxu0 %v2412
  %2600 = vmatpush.bf16.msra.mxu0 %v2409
  %2601 = vmatpush.bf16.msra.mxu0 %v2406
  %2602 = vmatmul.bf16.gmra.mxu0 %v2081
  %v2603 = vpop.f32.mrf.mxu0
  %v2604 = vadd.f32 %v2567, %v2603
  %v2605 = vpop.f32.mrf.mxu0
  %v2606 = vadd.f32 %v2569, %v2605
  %2607 = vmatmul.bf16.gmra.mxu0 %v2085
  %v2608 = vpop.f32.mrf.mxu0
  %v2609 = vadd.f32 %v2572, %v2608
  %v2610 = vpop.f32.mrf.mxu0
  %v2611 = vadd.f32 %v2574, %v2610
  %2612 = vmatmul.bf16.gmra.mxu0 %v2089
  %v2613 = vpop.f32.mrf.mxu0
  %v2614 = vadd.f32 %v2577, %v2613
  %v2615 = vpop.f32.mrf.mxu0
  %v2616 = vadd.f32 %v2579, %v2615
  %2617 = vmatmul.bf16.gmra.mxu0 %v2093
  %v2618 = vpop.f32.mrf.mxu0
  %v2619 = vadd.f32 %v2582, %v2618
  %v2620 = vpop.f32.mrf.mxu0
  %v2621 = vadd.f32 %v2584, %v2620
  %2622 = vmatmul.bf16.gmra.mxu0 %v2097
  %v2623 = vpop.f32.mrf.mxu0
  %v2624 = vadd.f32 %v2587, %v2623
  %v2625 = vpop.f32.mrf.mxu0
  %v2626 = vadd.f32 %v2589, %v2625
  %2627 = vmatmul.bf16.gmra.mxu0 %v2101
  %v2628 = vpop.f32.mrf.mxu0
  %v2629 = vpop.f32.mrf.mxu0
  %2630 = vdwg.mxu0
  %2631 = vmatpush.bf16.msra.mxu0 %v2451
  %2632 = vmatpush.bf16.msra.mxu0 %v2448
  %2633 = vmatpush.bf16.msra.mxu0 %v2445
  %2634 = vmatpush.bf16.msra.mxu0 %v2442
  %2635 = vmatpush.bf16.msra.mxu0 %v2439
  %2636 = vmatpush.bf16.msra.mxu0 %v2436
  %2637 = vmatpush.bf16.msra.mxu0 %v2433
  %2638 = vmatpush.bf16.msra.mxu0 %v2430
  %2639 = vmatmul.bf16.gmra.mxu0 %v2082
  %v2640 = vpop.f32.mrf.mxu0
  %v2641 = vadd.f32 %v2604, %v2640
  %v2642 = vpop.f32.mrf.mxu0
  %v2643 = vadd.f32 %v2606, %v2642
  %2644 = vmatmul.bf16.gmra.mxu0 %v2086
  %v2645 = vpop.f32.mrf.mxu0
  %v2646 = vadd.f32 %v2609, %v2645
  %v2647 = vpop.f32.mrf.mxu0
  %v2648 = vadd.f32 %v2611, %v2647
  %2649 = vmatmul.bf16.gmra.mxu0 %v2090
  %v2650 = vpop.f32.mrf.mxu0
  %v2651 = vadd.f32 %v2614, %v2650
  %v2652 = vpop.f32.mrf.mxu0
  %v2653 = vadd.f32 %v2616, %v2652
  %2654 = vmatmul.bf16.gmra.mxu0 %v2094
  %v2655 = vpop.f32.mrf.mxu0
  %v2656 = vadd.f32 %v2619, %v2655
  %v2657 = vpop.f32.mrf.mxu0
  %v2658 = vadd.f32 %v2621, %v2657
  %2659 = vmatmul.bf16.gmra.mxu0 %v2098
  %v2660 = vpop.f32.mrf.mxu0
  %v2661 = vadd.f32 %v2624, %v2660
  %v2662 = vpop.f32.mrf.mxu0
  %v2663 = vadd.f32 %v2626, %v2662
  %2664 = vmatmul.bf16.gmra.mxu0 %v2102
  %v2665 = vpop.f32.mrf.mxu0
  %v2666 = vpop.f32.mrf.mxu0
  %2667 = vdwg.mxu0
  %2668 = vmatpush.bf16.msra.mxu0 0
  %2669 = vmatpush.bf16.msra.mxu0 0
  %2670 = vmatpush.bf16.msra.mxu0 0
  %2671 = vmatpush.bf16.msra.mxu0 0
  %2672 = vmatpush.bf16.msra.mxu0 0
  %2673 = vmatpush.bf16.msra.mxu0 0
  %2674 = vmatpush.bf16.msra.mxu0 %v2457
  %2675 = vmatpush.bf16.msra.mxu0 %v2454
  %2676 = vmatmul.bf16.gmra.mxu0 %v2540
  %v2677 = vpop.f32.mrf.mxu0
  %v2678 = vadd.f32 %v2641, %v2677
  %v2679 = vpop.f32.mrf.mxu0
  %v2680 = vadd.f32 %v2643, %v2679
  %2681 = vmatmul.bf16.gmra.mxu0 %v2543
  %v2682 = vpop.f32.mrf.mxu0
  %v2683 = vadd.f32 %v2646, %v2682
  %v2684 = vpop.f32.mrf.mxu0
  %v2685 = vadd.f32 %v2648, %v2684
  %2686 = vmatmul.bf16.gmra.mxu0 %v2546
  %v2687 = vpop.f32.mrf.mxu0
  %v2688 = vadd.f32 %v2651, %v2687
  %v2689 = vpop.f32.mrf.mxu0
  %v2690 = vadd.f32 %v2653, %v2689
  %2691 = vmatmul.bf16.gmra.mxu0 %v2549
  %v2692 = vpop.f32.mrf.mxu0
  %v2693 = vadd.f32 %v2656, %v2692
  %v2694 = vpop.f32.mrf.mxu0
  %v2695 = vadd.f32 %v2658, %v2694
  %2696 = vmatmul.bf16.gmra.mxu0 %v2552
  %v2697 = vpop.f32.mrf.mxu0
  %v2698 = vadd.f32 %v2661, %v2697
  %v2699 = vpop.f32.mrf.mxu0
  %v2700 = vadd.f32 %v2663, %v2699
  %2701 = vmatmul.bf16.gmra.mxu0 %v2555
  %v2702 = vpop.f32.mrf.mxu0
  %v2703 = vpop.f32.mrf.mxu0
  %2704 = vdwg.mxu0
  %2705 = vmatpush.bf16.msra.mxu0 %v2404
  %2706 = vmatpush.bf16.msra.mxu0 %v2401
  %2707 = vmatpush.bf16.msra.mxu0 %v2398
  %2708 = vmatpush.bf16.msra.mxu0 %v2395
  %2709 = vmatpush.bf16.msra.mxu0 %v2392
  %2710 = vmatpush.bf16.msra.mxu0 %v2389
  %2711 = vmatpush.bf16.msra.mxu0 %v2386
  %2712 = vmatpush.bf16.msra.mxu0 %v2383
  %2713 = vmatmul.bf16.gmra.mxu0 %v2080
  %v2714 = vpop.f32.mrf.mxu0
  %v2715 = vadd.f32 0.0, %v2714
  %v2716 = vpop.f32.mrf.mxu0
  %v2717 = vadd.f32 0.0, %v2716
  %2718 = vmatmul.bf16.gmra.mxu0 %v2084
  %v2719 = vpop.f32.mrf.mxu0
  %v2720 = vadd.f32 0.0, %v2719
  %v2721 = vpop.f32.mrf.mxu0
  %v2722 = vadd.f32 0.0, %v2721
  %2723 = vmatmul.bf16.gmra.mxu0 %v2088
  %v2724 = vpop.f32.mrf.mxu0
  %v2725 = vadd.f32 0.0, %v2724
  %v2726 = vpop.f32.mrf.mxu0
  %v2727 = vadd.f32 0.0, %v2726
  %2728 = vmatmul.bf16.gmra.mxu0 %v2092
  %v2729 = vpop.f32.mrf.mxu0
  %v2730 = vadd.f32 0.0, %v2729
  %v2731 = vpop.f32.mrf.mxu0
  %v2732 = vadd.f32 0.0, %v2731
  %2733 = vmatmul.bf16.gmra.mxu0 %v2096
  %v2734 = vpop.f32.mrf.mxu0
  %v2735 = vadd.f32 0.0, %v2734
  %v2736 = vpop.f32.mrf.mxu0
  %v2737 = vadd.f32 0.0, %v2736
  %2738 = vmatmul.bf16.gmra.mxu0 %v2100
  %v2739 = vpop.f32.mrf.mxu0
  %v2740 = vpop.f32.mrf.mxu0
  %2741 = vdwg.mxu0
  %2742 = vmatpush.bf16.msra.mxu0 %v2428
  %2743 = vmatpush.bf16.msra.mxu0 %v2425
  %2744 = vmatpush.bf16.msra.mxu0 %v2422
  %2745 = vmatpush.bf16.msra.mxu0 %v2419
  %2746 = vmatpush.bf16.msra.mxu0 %v2416
  %2747 = vmatpush.bf16.msra.mxu0 %v2413
  %2748 = vmatpush.bf16.msra.mxu0 %v2410
  %2749 = vmatpush.bf16.msra.mxu0 %v2407
  %2750 = vmatmul.bf16.gmra.mxu0 %v2081
  %v2751 = vpop.f32.mrf.mxu0
  %v2752 = vadd.f32 %v2715, %v2751
  %v2753 = vpop.f32.mrf.mxu0
  %v2754 = vadd.f32 %v2717, %v2753
  %2755 = vmatmul.bf16.gmra.mxu0 %v2085
  %v2756 = vpop.f32.mrf.mxu0
  %v2757 = vadd.f32 %v2720, %v2756
  %v2758 = vpop.f32.mrf.mxu0
  %v2759 = vadd.f32 %v2722, %v2758
  %2760 = vmatmul.bf16.gmra.mxu0 %v2089
  %v2761 = vpop.f32.mrf.mxu0
  %v2762 = vadd.f32 %v2725, %v2761
  %v2763 = vpop.f32.mrf.mxu0
  %v2764 = vadd.f32 %v2727, %v2763
  %2765 = vmatmul.bf16.gmra.mxu0 %v2093
  %v2766 = vpop.f32.mrf.mxu0
  %v2767 = vadd.f32 %v2730, %v2766
  %v2768 = vpop.f32.mrf.mxu0
  %v2769 = vadd.f32 %v2732, %v2768
  %2770 = vmatmul.bf16.gmra.mxu0 %v2097
  %v2771 = vpop.f32.mrf.mxu0
  %v2772 = vadd.f32 %v2735, %v2771
  %v2773 = vpop.f32.mrf.mxu0
  %v2774 = vadd.f32 %v2737, %v2773
  %2775 = vmatmul.bf16.gmra.mxu0 %v2101
  %v2776 = vpop.f32.mrf.mxu0
  %v2777 = vpop.f32.mrf.mxu0
  %2778 = vdwg.mxu0
  %2779 = vmatpush.bf16.msra.mxu0 %v2452
  %2780 = vmatpush.bf16.msra.mxu0 %v2449
  %2781 = vmatpush.bf16.msra.mxu0 %v2446
  %2782 = vmatpush.bf16.msra.mxu0 %v2443
  %2783 = vmatpush.bf16.msra.mxu0 %v2440
  %2784 = vmatpush.bf16.msra.mxu0 %v2437
  %2785 = vmatpush.bf16.msra.mxu0 %v2434
  %2786 = vmatpush.bf16.msra.mxu0 %v2431
  %2787 = vmatmul.bf16.gmra.mxu0 %v2082
  %v2788 = vpop.f32.mrf.mxu0
  %v2789 = vadd.f32 %v2752, %v2788
  %v2790 = vpop.f32.mrf.mxu0
  %v2791 = vadd.f32 %v2754, %v2790
  %2792 = vmatmul.bf16.gmra.mxu0 %v2086
  %v2793 = vpop.f32.mrf.mxu0
  %v2794 = vadd.f32 %v2757, %v2793
  %v2795 = vpop.f32.mrf.mxu0
  %v2796 = vadd.f32 %v2759, %v2795
  %2797 = vmatmul.bf16.gmra.mxu0 %v2090
  %v2798 = vpop.f32.mrf.mxu0
  %v2799 = vadd.f32 %v2762, %v2798
  %v2800 = vpop.f32.mrf.mxu0
  %v2801 = vadd.f32 %v2764, %v2800
  %2802 = vmatmul.bf16.gmra.mxu0 %v2094
  %v2803 = vpop.f32.mrf.mxu0
  %v2804 = vadd.f32 %v2767, %v2803
  %v2805 = vpop.f32.mrf.mxu0
  %v2806 = vadd.f32 %v2769, %v2805
  %2807 = vmatmul.bf16.gmra.mxu0 %v2098
  %v2808 = vpop.f32.mrf.mxu0
  %v2809 = vadd.f32 %v2772, %v2808
  %v2810 = vpop.f32.mrf.mxu0
  %v2811 = vadd.f32 %v2774, %v2810
  %2812 = vmatmul.bf16.gmra.mxu0 %v2102
  %v2813 = vpop.f32.mrf.mxu0
  %v2814 = vpop.f32.mrf.mxu0
  %2815 = vdwg.mxu0
  %2816 = vmatpush.bf16.msra.mxu0 0
  %2817 = vmatpush.bf16.msra.mxu0 0
  %2818 = vmatpush.bf16.msra.mxu0 0
  %2819 = vmatpush.bf16.msra.mxu0 0
  %2820 = vmatpush.bf16.msra.mxu0 0
  %2821 = vmatpush.bf16.msra.mxu0 0
  %2822 = vmatpush.bf16.msra.mxu0 %v2458
  %2823 = vmatpush.bf16.msra.mxu0 %v2455
  %2824 = vmatmul.bf16.gmra.mxu0 %v2540
  %v2825 = vpop.f32.mrf.mxu0
  %v2826 = vadd.f32 %v2789, %v2825
  %v2827 = vpop.f32.mrf.mxu0
  %v2828 = vadd.f32 %v2791, %v2827
  %2829 = vmatmul.bf16.gmra.mxu0 %v2543
  %v2830 = vpop.f32.mrf.mxu0
  %v2831 = vadd.f32 %v2794, %v2830
  %v2832 = vpop.f32.mrf.mxu0
  %v2833 = vadd.f32 %v2796, %v2832
  %2834 = vmatmul.bf16.gmra.mxu0 %v2546
  %v2835 = vpop.f32.mrf.mxu0
  %v2836 = vadd.f32 %v2799, %v2835
  %v2837 = vpop.f32.mrf.mxu0
  %v2838 = vadd.f32 %v2801, %v2837
  %2839 = vmatmul.bf16.gmra.mxu0 %v2549
  %v2840 = vpop.f32.mrf.mxu0
  %v2841 = vadd.f32 %v2804, %v2840
  %v2842 = vpop.f32.mrf.mxu0
  %v2843 = vadd.f32 %v2806, %v2842
  %2844 = vmatmul.bf16.gmra.mxu0 %v2552
  %v2845 = vpop.f32.mrf.mxu0
  %v2846 = vadd.f32 %v2809, %v2845
  %v2847 = vpop.f32.mrf.mxu0
  %v2848 = vadd.f32 %v2811, %v2847
  %2849 = vmatmul.bf16.gmra.mxu0 %v2555
  %v2850 = vpop.f32.mrf.mxu0
  %v2851 = vpop.f32.mrf.mxu0
  %2852 = vdwg.mxu0
  %2853 = vmatpush.bf16.msra.mxu0 %v2405
  %2854 = vmatpush.bf16.msra.mxu0 %v2402
  %2855 = vmatpush.bf16.msra.mxu0 %v2399
  %2856 = vmatpush.bf16.msra.mxu0 %v2396
  %2857 = vmatpush.bf16.msra.mxu0 %v2393
  %2858 = vmatpush.bf16.msra.mxu0 %v2390
  %2859 = vmatpush.bf16.msra.mxu0 %v2387
  %2860 = vmatpush.bf16.msra.mxu0 %v2384
  %2861 = vmatmul.bf16.gmra.mxu0 %v2080
  %v2862 = vpop.f32.mrf.mxu0
  %v2863 = vadd.f32 0.0, %v2862
  %v2864 = vpop.f32.mrf.mxu0
  %v2865 = vadd.f32 0.0, %v2864
  %2866 = vmatmul.bf16.gmra.mxu0 %v2084
  %v2867 = vpop.f32.mrf.mxu0
  %v2868 = vadd.f32 0.0, %v2867
  %v2869 = vpop.f32.mrf.mxu0
  %v2870 = vadd.f32 0.0, %v2869
  %2871 = vmatmul.bf16.gmra.mxu0 %v2088
  %v2872 = vpop.f32.mrf.mxu0
  %v2873 = vadd.f32 0.0, %v2872
  %v2874 = vpop.f32.mrf.mxu0
  %v2875 = vadd.f32 0.0, %v2874
  %2876 = vmatmul.bf16.gmra.mxu0 %v2092
  %v2877 = vpop.f32.mrf.mxu0
  %v2878 = vadd.f32 0.0, %v2877
  %v2879 = vpop.f32.mrf.mxu0
  %v2880 = vadd.f32 0.0, %v2879
  %2881 = vmatmul.bf16.gmra.mxu0 %v2096
  %v2882 = vpop.f32.mrf.mxu0
  %v2883 = vadd.f32 0.0, %v2882
  %v2884 = vpop.f32.mrf.mxu0
  %v2885 = vadd.f32 0.0, %v2884
  %2886 = vmatmul.bf16.gmra.mxu0 %v2100
  %v2887 = vpop.f32.mrf.mxu0
  %v2888 = vpop.f32.mrf.mxu0
  %2889 = vdwg.mxu0
  %2890 = vmatpush.bf16.msra.mxu0 %v2429
  %2891 = vmatpush.bf16.msra.mxu0 %v2426
  %2892 = vmatpush.bf16.msra.mxu0 %v2423
  %2893 = vmatpush.bf16.msra.mxu0 %v2420
  %2894 = vmatpush.bf16.msra.mxu0 %v2417
  %2895 = vmatpush.bf16.msra.mxu0 %v2414
  %2896 = vmatpush.bf16.msra.mxu0 %v2411
  %2897 = vmatpush.bf16.msra.mxu0 %v2408
  %2898 = vmatmul.bf16.gmra.mxu0 %v2081
  %v2899 = vpop.f32.mrf.mxu0
  %v2900 = vadd.f32 %v2863, %v2899
  %v2901 = vpop.f32.mrf.mxu0
  %v2902 = vadd.f32 %v2865, %v2901
  %2903 = vmatmul.bf16.gmra.mxu0 %v2085
  %v2904 = vpop.f32.mrf.mxu0
  %v2905 = vadd.f32 %v2868, %v2904
  %v2906 = vpop.f32.mrf.mxu0
  %v2907 = vadd.f32 %v2870, %v2906
  %2908 = vmatmul.bf16.gmra.mxu0 %v2089
  %v2909 = vpop.f32.mrf.mxu0
  %v2910 = vadd.f32 %v2873, %v2909
  %v2911 = vpop.f32.mrf.mxu0
  %v2912 = vadd.f32 %v2875, %v2911
  %2913 = vmatmul.bf16.gmra.mxu0 %v2093
  %v2914 = vpop.f32.mrf.mxu0
  %v2915 = vadd.f32 %v2878, %v2914
  %v2916 = vpop.f32.mrf.mxu0
  %v2917 = vadd.f32 %v2880, %v2916
  %2918 = vmatmul.bf16.gmra.mxu0 %v2097
  %v2919 = vpop.f32.mrf.mxu0
  %v2920 = vadd.f32 %v2883, %v2919
  %v2921 = vpop.f32.mrf.mxu0
  %v2922 = vadd.f32 %v2885, %v2921
  %2923 = vmatmul.bf16.gmra.mxu0 %v2101
  %v2924 = vpop.f32.mrf.mxu0
  %v2925 = vpop.f32.mrf.mxu0
  %2926 = vdwg.mxu0
  %2927 = vmatpush.bf16.msra.mxu0 %v2453
  %2928 = vmatpush.bf16.msra.mxu0 %v2450
  %2929 = vmatpush.bf16.msra.mxu0 %v2447
  %2930 = vmatpush.bf16.msra.mxu0 %v2444
  %2931 = vmatpush.bf16.msra.mxu0 %v2441
  %2932 = vmatpush.bf16.msra.mxu0 %v2438
  %2933 = vmatpush.bf16.msra.mxu0 %v2435
  %2934 = vmatpush.bf16.msra.mxu0 %v2432
  %2935 = vmatmul.bf16.gmra.mxu0 %v2082
  %v2936 = vpop.f32.mrf.mxu0
  %v2937 = vadd.f32 %v2900, %v2936
  %v2938 = vpop.f32.mrf.mxu0
  %v2939 = vadd.f32 %v2902, %v2938
  %2940 = vmatmul.bf16.gmra.mxu0 %v2086
  %v2941 = vpop.f32.mrf.mxu0
  %v2942 = vadd.f32 %v2905, %v2941
  %v2943 = vpop.f32.mrf.mxu0
  %v2944 = vadd.f32 %v2907, %v2943
  %2945 = vmatmul.bf16.gmra.mxu0 %v2090
  %v2946 = vpop.f32.mrf.mxu0
  %v2947 = vadd.f32 %v2910, %v2946
  %v2948 = vpop.f32.mrf.mxu0
  %v2949 = vadd.f32 %v2912, %v2948
  %2950 = vmatmul.bf16.gmra.mxu0 %v2094
  %v2951 = vpop.f32.mrf.mxu0
  %v2952 = vadd.f32 %v2915, %v2951
  %v2953 = vpop.f32.mrf.mxu0
  %v2954 = vadd.f32 %v2917, %v2953
  %2955 = vmatmul.bf16.gmra.mxu0 %v2098
  %v2956 = vpop.f32.mrf.mxu0
  %v2957 = vadd.f32 %v2920, %v2956
  %v2958 = vpop.f32.mrf.mxu0
  %v2959 = vadd.f32 %v2922, %v2958
  %2960 = vmatmul.bf16.gmra.mxu0 %v2102
  %v2961 = vpop.f32.mrf.mxu0
  %v2962 = vpop.f32.mrf.mxu0
  %2963 = vdwg.mxu0
  %2964 = vmatpush.bf16.msra.mxu0 0
  %2965 = vmatpush.bf16.msra.mxu0 0
  %2966 = vmatpush.bf16.msra.mxu0 0
  %2967 = vmatpush.bf16.msra.mxu0 0
  %2968 = vmatpush.bf16.msra.mxu0 0
  %2969 = vmatpush.bf16.msra.mxu0 0
  %2970 = vmatpush.bf16.msra.mxu0 %v2459
  %2971 = vmatpush.bf16.msra.mxu0 %v2456
  %2972 = vmatmul.bf16.gmra.mxu0 %v2540
  %v2973 = vpop.f32.mrf.mxu0
  %v2974 = vadd.f32 %v2937, %v2973
  %v2975 = vpop.f32.mrf.mxu0
  %v2976 = vadd.f32 %v2939, %v2975
  %2977 = vmatmul.bf16.gmra.mxu0 %v2543
  %v2978 = vpop.f32.mrf.mxu0
  %v2979 = vadd.f32 %v2942, %v2978
  %v2980 = vpop.f32.mrf.mxu0
  %v2981 = vadd.f32 %v2944, %v2980
  %2982 = vmatmul.bf16.gmra.mxu0 %v2546
  %v2983 = vpop.f32.mrf.mxu0
  %v2984 = vadd.f32 %v2947, %v2983
  %v2985 = vpop.f32.mrf.mxu0
  %v2986 = vadd.f32 %v2949, %v2985
  %2987 = vmatmul.bf16.gmra.mxu0 %v2549
  %v2988 = vpop.f32.mrf.mxu0
  %v2989 = vadd.f32 %v2952, %v2988
  %v2990 = vpop.f32.mrf.mxu0
  %v2991 = vadd.f32 %v2954, %v2990
  %2992 = vmatmul.bf16.gmra.mxu0 %v2552
  %v2993 = vpop.f32.mrf.mxu0
  %v2994 = vadd.f32 %v2957, %v2993
  %v2995 = vpop.f32.mrf.mxu0
  %v2996 = vadd.f32 %v2959, %v2995
  %2997 = vmatmul.bf16.gmra.mxu0 %v2555
  %v2998 = vpop.f32.mrf.mxu0
  %v2999 = vpop.f32.mrf.mxu0
  %3000 = vdwg.mxu0
  %v3025 = vunpack.c.l.b16 %v1747
  %v3026 = vunpack.c.h.b16 %v1747
  %v3027 = vunpack.c.l.b16 %v1748
  %v3028 = vunpack.c.h.b16 %v1748
  %v3029 = vunpack.c.l.b16 %v1749
  %v3030 = vunpack.c.h.b16 %v1749
  %v3031 = vunpack.c.l.b16 %v1750
  %v3032 = vunpack.c.h.b16 %v1750
  %v3033 = vunpack.c.l.b16 %v1755
  %v3034 = vunpack.c.h.b16 %v1755
  %v3035 = vunpack.c.l.b16 %v1756
  %v3036 = vunpack.c.h.b16 %v1756
  %v3037 = vunpack.c.l.b16 %v1757
  %v3038 = vunpack.c.h.b16 %v1757
  %v3039 = vunpack.c.l.b16 %v1758
  %v3040 = vunpack.c.h.b16 %v1758
  %v3041 = vunpack.c.l.b16 %v1763
  %v3042 = vunpack.c.h.b16 %v1763
  %v3043 = vunpack.c.l.b16 %v1764
  %v3044 = vunpack.c.h.b16 %v1764
  %v3045 = vunpack.c.l.b16 %v1765
  %v3046 = vunpack.c.h.b16 %v1765
  %v3047 = vunpack.c.l.b16 %v1766
  %v3048 = vunpack.c.h.b16 %v1766
  %v3049 = vunpack.c.l.b16 %v1771
  %v3050 = vunpack.c.h.b16 %v1771
  %v3051 = vunpack.c.l.b16 %v1772
  %v3052 = vunpack.c.h.b16 %v1772
  %v3053 = vunpack.c.l.b16 %v1773
  %v3054 = vunpack.c.h.b16 %v1773
  %v3055 = vunpack.c.l.b16 %v1774
  %v3056 = vunpack.c.h.b16 %v1774
  %v3057 = vunpack.c.l.b16 %v1779
  %v3058 = vunpack.c.h.b16 %v1779
  %v3059 = vunpack.c.l.b16 %v1780
  %v3060 = vunpack.c.h.b16 %v1780
  %v3061 = vunpack.c.l.b16 %v1781
  %v3062 = vunpack.c.h.b16 %v1781
  %v3063 = vunpack.c.l.b16 %v1782
  %v3064 = vunpack.c.h.b16 %v1782
  %v3065 = vunpack.c.l.b16 %v1787
  %v3066 = vunpack.c.h.b16 %v1787
  %v3067 = vunpack.c.l.b16 %v1788
  %v3068 = vunpack.c.h.b16 %v1788
  %v3069 = vunpack.c.l.b16 %v1789
  %v3070 = vunpack.c.h.b16 %v1789
  %v3071 = vunpack.c.l.b16 %v1790
  %v3072 = vunpack.c.h.b16 %v1790
  %v3073 = vpack.c.b16 %v3029, %v3025
  %v3074 = vpack.c.b16 %v3030, %v3026
  %v3075 = vpack.c.b16 %v3031, %v3027
  %v3076 = vpack.c.b16 %v3032, %v3028
  %v3077 = vpack.c.b16 %v3037, %v3033
  %v3078 = vpack.c.b16 %v3038, %v3034
  %v3079 = vpack.c.b16 %v3039, %v3035
  %v3080 = vpack.c.b16 %v3040, %v3036
  %v3081 = vpack.c.b16 %v3045, %v3041
  %v3082 = vpack.c.b16 %v3046, %v3042
  %v3083 = vpack.c.b16 %v3047, %v3043
  %v3084 = vpack.c.b16 %v3048, %v3044
  %v3085 = vpack.c.b16 %v3053, %v3049
  %v3086 = vpack.c.b16 %v3054, %v3050
  %v3087 = vpack.c.b16 %v3055, %v3051
  %v3088 = vpack.c.b16 %v3056, %v3052
  %v3089 = vpack.c.b16 %v3061, %v3057
  %v3090 = vpack.c.b16 %v3062, %v3058
  %v3091 = vpack.c.b16 %v3063, %v3059
  %v3092 = vpack.c.b16 %v3064, %v3060
  %v3093 = vpack.c.b16 %v3069, %v3065
  %v3094 = vpack.c.b16 %v3070, %v3066
  %v3095 = vpack.c.b16 %v3071, %v3067
  %v3096 = vpack.c.b16 %v3072, %v3068
  %v3219 = vunpack.c.l.b16 %v1799
  %v3220 = vunpack.c.h.b16 %v1799
  %v3221 = vunpack.c.l.b16 %v1800
  %v3222 = vunpack.c.l.b16 %v1801
  %v3223 = vunpack.c.h.b16 %v1801
  %v3224 = vunpack.c.l.b16 %v1802
  %v3225 = vunpack.c.l.b16 %v1803
  %v3226 = vunpack.c.h.b16 %v1803
  %v3227 = vunpack.c.l.b16 %v1804
  %v3228 = vunpack.c.l.b16 %v1805
  %v3229 = vunpack.c.h.b16 %v1805
  %v3230 = vunpack.c.l.b16 %v1806
  %v3231 = vunpack.c.l.b16 %v1807
  %v3232 = vunpack.c.h.b16 %v1807
  %v3233 = vunpack.c.l.b16 %v1808
  %v3234 = vunpack.c.l.b16 %v1809
  %v3235 = vunpack.c.h.b16 %v1809
  %v3236 = vunpack.c.l.b16 %v1810
  %v3237 = vunpack.c.l.b16 %v1811
  %v3238 = vunpack.c.h.b16 %v1811
  %v3239 = vunpack.c.l.b16 %v1812
  %v3240 = vunpack.c.l.b16 %v1813
  %v3241 = vunpack.c.h.b16 %v1813
  %v3242 = vunpack.c.l.b16 %v1814
  %v3243 = vunpack.c.l.b16 %v1815
  %v3244 = vunpack.c.h.b16 %v1815
  %v3245 = vunpack.c.l.b16 %v1816
  %v3246 = vunpack.c.l.b16 %v1817
  %v3247 = vunpack.c.h.b16 %v1817
  %v3248 = vunpack.c.l.b16 %v1818
  %v3249 = vunpack.c.l.b16 %v1819
  %v3250 = vunpack.c.h.b16 %v1819
  %v3251 = vunpack.c.l.b16 %v1820
  %v3252 = vunpack.c.l.b16 %v1821
  %v3253 = vunpack.c.h.b16 %v1821
  %v3254 = vunpack.c.l.b16 %v1822
  %v3255 = vunpack.c.l.b16 %v1823
  %v3256 = vunpack.c.h.b16 %v1823
  %v3257 = vunpack.c.l.b16 %v1824
  %v3258 = vunpack.c.l.b16 %v1825
  %v3259 = vunpack.c.h.b16 %v1825
  %v3260 = vunpack.c.l.b16 %v1826
  %v3261 = vunpack.c.l.b16 %v1827
  %v3262 = vunpack.c.h.b16 %v1827
  %v3263 = vunpack.c.l.b16 %v1828
  %v3264 = vunpack.c.l.b16 %v1829
  %v3265 = vunpack.c.h.b16 %v1829
  %v3266 = vunpack.c.l.b16 %v1830
  %v3267 = vunpack.c.l.b16 %v1831
  %v3268 = vunpack.c.h.b16 %v1831
  %v3269 = vunpack.c.l.b16 %v1832
  %v3270 = vunpack.c.l.b16 %v1833
  %v3271 = vunpack.c.h.b16 %v1833
  %v3272 = vunpack.c.l.b16 %v1834
  %v3273 = vunpack.c.l.b16 %v1835
  %v3274 = vunpack.c.h.b16 %v1835
  %v3275 = vunpack.c.l.b16 %v1836
  %v3276 = vunpack.c.l.b16 %v1837
  %v3277 = vunpack.c.h.b16 %v1837
  %v3278 = vunpack.c.l.b16 %v1838
  %v3279 = vunpack.c.l.b16 %v1839
  %v3280 = vunpack.c.h.b16 %v1839
  %v3281 = vunpack.c.l.b16 %v1840
  %v3282 = vunpack.c.l.b16 %v1841
  %v3283 = vunpack.c.h.b16 %v1841
  %v3284 = vunpack.c.l.b16 %v1842
  %v3285 = vunpack.c.l.b16 %v1843
  %v3286 = vunpack.c.h.b16 %v1843
  %v3287 = vunpack.c.l.b16 %v1844
  %v3288 = vunpack.c.l.b16 %v1845
  %v3289 = vunpack.c.h.b16 %v1845
  %v3290 = vunpack.c.l.b16 %v1846
  %v3291 = vunpack.c.l.b16 %v1847
  %v3292 = vunpack.c.h.b16 %v1847
  %v3293 = vunpack.c.l.b16 %v1848
  %v3294 = vunpack.c.l.b16 %v1849
  %v3295 = vunpack.c.h.b16 %v1849
  %v3296 = vunpack.c.l.b16 %v1850
  %v3297 = vunpack.c.l.b16 %v1851
  %v3298 = vunpack.c.h.b16 %v1851
  %v3299 = vunpack.c.l.b16 %v1852
  %v3300 = vunpack.c.l.b16 %v1853
  %v3301 = vunpack.c.h.b16 %v1853
  %v3302 = vunpack.c.l.b16 %v1854
  %v3303 = vunpack.c.l.b16 %v1855
  %v3304 = vunpack.c.h.b16 %v1855
  %v3305 = vunpack.c.l.b16 %v1856
  %v3306 = vunpack.c.l.b16 %v1857
  %v3307 = vunpack.c.h.b16 %v1857
  %v3308 = vunpack.c.l.b16 %v1858
  %v3309 = vunpack.c.l.b16 %v1859
  %v3310 = vunpack.c.h.b16 %v1859
  %v3311 = vunpack.c.l.b16 %v1860
  %v3312 = vunpack.c.l.b16 %v1861
  %v3313 = vunpack.c.h.b16 %v1861
  %v3314 = vunpack.c.l.b16 %v1862
  %v3315 = vunpack.c.l.b16 %v1863
  %v3316 = vunpack.c.h.b16 %v1863
  %v3317 = vunpack.c.l.b16 %v1864
  %v3318 = vunpack.c.l.b16 %v1865
  %v3319 = vunpack.c.h.b16 %v1865
  %v3320 = vunpack.c.l.b16 %v1866
  %v3321 = vunpack.c.l.b16 %v1867
  %v3322 = vunpack.c.h.b16 %v1867
  %v3323 = vunpack.c.l.b16 %v1868
  %v3324 = vunpack.c.l.b16 %v1869
  %v3325 = vunpack.c.h.b16 %v1869
  %v3326 = vunpack.c.l.b16 %v1870
  %v3327 = vunpack.c.l.b16 %v1871
  %v3328 = vunpack.c.h.b16 %v1871
  %v3329 = vunpack.c.l.b16 %v1872
  %v3330 = vunpack.c.l.b16 %v1873
  %v3331 = vunpack.c.h.b16 %v1873
  %v3332 = vunpack.c.l.b16 %v1874
  %v3333 = vunpack.c.l.b16 %v1875
  %v3334 = vunpack.c.h.b16 %v1875
  %v3335 = vunpack.c.l.b16 %v1876
  %v3336 = vunpack.c.l.b16 %v1877
  %v3337 = vunpack.c.h.b16 %v1877
  %v3338 = vunpack.c.l.b16 %v1878
  %v3339 = vunpack.c.l.b16 %v1879
  %v3340 = vunpack.c.h.b16 %v1879
  %v3341 = vunpack.c.l.b16 %v1880
  %v3342 = vunpack.c.l.b16 %v1881
  %v3343 = vunpack.c.h.b16 %v1881
  %v3344 = vunpack.c.l.b16 %v1882
  %v3345 = vunpack.c.l.b16 %v1883
  %v3346 = vunpack.c.h.b16 %v1883
  %v3347 = vunpack.c.l.b16 %v1884
  %v3348 = vunpack.c.l.b16 %v1885
  %v3349 = vunpack.c.h.b16 %v1885
  %v3350 = vunpack.c.l.b16 %v1886
  %v3351 = vunpack.c.l.b16 %v1887
  %v3352 = vunpack.c.h.b16 %v1887
  %v3353 = vunpack.c.l.b16 %v1888
  %v3354 = vunpack.c.l.b16 %v1889
  %v3355 = vunpack.c.h.b16 %v1889
  %v3356 = vunpack.c.l.b16 %v1890
  %v3357 = vunpack.c.l.b16 %v1891
  %v3358 = vunpack.c.h.b16 %v1891
  %v3359 = vunpack.c.l.b16 %v1892
  %v3360 = vunpack.c.l.b16 %v1893
  %v3361 = vunpack.c.h.b16 %v1893
  %v3362 = vunpack.c.l.b16 %v1894
  %v3363 = vunpack.c.l.b16 %v1895
  %v3364 = vunpack.c.h.b16 %v1895
  %v3365 = vunpack.c.l.b16 %v1896
  %v3366 = vunpack.c.l.b16 %v1897
  %v3367 = vunpack.c.h.b16 %v1897
  %v3368 = vunpack.c.l.b16 %v1898
  %v3369 = vunpack.c.l.b16 %v1899
  %v3370 = vunpack.c.h.b16 %v1899
  %v3371 = vunpack.c.l.b16 %v1900
  %v3372 = vunpack.c.l.b16 %v1901
  %v3373 = vunpack.c.h.b16 %v1901
  %v3374 = vunpack.c.l.b16 %v1902
  %v3375 = vpack.c.b16 %v3222, %v3219
  %v3376 = vpack.c.b16 %v3223, %v3220
  %v3377 = vpack.c.b16 %v3224, %v3221
  %v3378 = vpack.c.b16 %v3228, %v3225
  %v3379 = vpack.c.b16 %v3229, %v3226
  %v3380 = vpack.c.b16 %v3230, %v3227
  %v3381 = vpack.c.b16 %v3234, %v3231
  %v3382 = vpack.c.b16 %v3235, %v3232
  %v3383 = vpack.c.b16 %v3236, %v3233
  %v3384 = vpack.c.b16 %v3240, %v3237
  %v3385 = vpack.c.b16 %v3241, %v3238
  %v3386 = vpack.c.b16 %v3242, %v3239
  %v3387 = vpack.c.b16 %v3246, %v3243
  %v3388 = vpack.c.b16 %v3247, %v3244
  %v3389 = vpack.c.b16 %v3248, %v3245
  %v3390 = vpack.c.b16 %v3252, %v3249
  %v3391 = vpack.c.b16 %v3253, %v3250
  %v3392 = vpack.c.b16 %v3254, %v3251
  %v3393 = vpack.c.b16 %v3258, %v3255
  %v3394 = vpack.c.b16 %v3259, %v3256
  %v3395 = vpack.c.b16 %v3260, %v3257
  %v3396 = vpack.c.b16 %v3264, %v3261
  %v3397 = vpack.c.b16 %v3265, %v3262
  %v3398 = vpack.c.b16 %v3266, %v3263
  %v3399 = vpack.c.b16 %v3270, %v3267
  %v3400 = vpack.c.b16 %v3271, %v3268
  %v3401 = vpack.c.b16 %v3272, %v3269
  %v3402 = vpack.c.b16 %v3276, %v3273
  %v3403 = vpack.c.b16 %v3277, %v3274
  %v3404 = vpack.c.b16 %v3278, %v3275
  %v3405 = vpack.c.b16 %v3282, %v3279
  %v3406 = vpack.c.b16 %v3283, %v3280
  %v3407 = vpack.c.b16 %v3284, %v3281
  %v3408 = vpack.c.b16 %v3288, %v3285
  %v3409 = vpack.c.b16 %v3289, %v3286
  %v3410 = vpack.c.b16 %v3290, %v3287
  %v3411 = vpack.c.b16 %v3294, %v3291
  %v3412 = vpack.c.b16 %v3295, %v3292
  %v3413 = vpack.c.b16 %v3296, %v3293
  %v3414 = vpack.c.b16 %v3300, %v3297
  %v3415 = vpack.c.b16 %v3301, %v3298
  %v3416 = vpack.c.b16 %v3302, %v3299
  %v3417 = vpack.c.b16 %v3306, %v3303
  %v3418 = vpack.c.b16 %v3307, %v3304
  %v3419 = vpack.c.b16 %v3308, %v3305
  %v3420 = vpack.c.b16 %v3312, %v3309
  %v3421 = vpack.c.b16 %v3313, %v3310
  %v3422 = vpack.c.b16 %v3314, %v3311
  %v3423 = vpack.c.b16 %v3318, %v3315
  %v3424 = vpack.c.b16 %v3319, %v3316
  %v3425 = vpack.c.b16 %v3320, %v3317
  %v3426 = vpack.c.b16 %v3324, %v3321
  %v3427 = vpack.c.b16 %v3325, %v3322
  %v3428 = vpack.c.b16 %v3326, %v3323
  %v3429 = vpack.c.b16 %v3330, %v3327
  %v3430 = vpack.c.b16 %v3331, %v3328
  %v3431 = vpack.c.b16 %v3332, %v3329
  %v3432 = vpack.c.b16 %v3336, %v3333
  %v3433 = vpack.c.b16 %v3337, %v3334
  %v3434 = vpack.c.b16 %v3338, %v3335
  %v3435 = vpack.c.b16 %v3342, %v3339
  %v3436 = vpack.c.b16 %v3343, %v3340
  %v3437 = vpack.c.b16 %v3344, %v3341
  %v3438 = vpack.c.b16 %v3348, %v3345
  %v3439 = vpack.c.b16 %v3349, %v3346
  %v3440 = vpack.c.b16 %v3350, %v3347
  %v3441 = vpack.c.b16 %v3354, %v3351
  %v3442 = vpack.c.b16 %v3355, %v3352
  %v3443 = vpack.c.b16 %v3356, %v3353
  %v3444 = vpack.c.b16 %v3360, %v3357
  %v3445 = vpack.c.b16 %v3361, %v3358
  %v3446 = vpack.c.b16 %v3362, %v3359
  %v3447 = vpack.c.b16 %v3366, %v3363
  %v3448 = vpack.c.b16 %v3367, %v3364
  %v3449 = vpack.c.b16 %v3368, %v3365
  %v3450 = vpack.c.b16 %v3372, %v3369
  %v3451 = vpack.c.b16 %v3373, %v3370
  %v3452 = vpack.c.b16 %v3374, %v3371
  %v3532 = vsel %vm2538, %v3076, 0
  %v3535 = vsel %vm2538, %v3080, 0
  %v3538 = vsel %vm2538, %v3084, 0
  %v3541 = vsel %vm2538, %v3088, 0
  %v3544 = vsel %vm2538, %v3092, 0
  %v3547 = vsel %vm2538, %v3096, 0
  %3549 = vmatpush.bf16.msra.mxu0 %v3396
  %3550 = vmatpush.bf16.msra.mxu0 %v3393
  %3551 = vmatpush.bf16.msra.mxu0 %v3390
  %3552 = vmatpush.bf16.msra.mxu0 %v3387
  %3553 = vmatpush.bf16.msra.mxu0 %v3384
  %3554 = vmatpush.bf16.msra.mxu0 %v3381
  %3555 = vmatpush.bf16.msra.mxu0 %v3378
  %3556 = vmatpush.bf16.msra.mxu0 %v3375
  %3557 = vmatmul.bf16.gmra.mxu0 %v3073
  %v3558 = vpop.f32.mrf.mxu0
  %v3559 = vadd.f32 %v2678, %v3558
  %v3560 = vpop.f32.mrf.mxu0
  %v3561 = vadd.f32 %v2680, %v3560
  %3562 = vmatmul.bf16.gmra.mxu0 %v3077
  %v3563 = vpop.f32.mrf.mxu0
  %v3564 = vadd.f32 %v2683, %v3563
  %v3565 = vpop.f32.mrf.mxu0
  %v3566 = vadd.f32 %v2685, %v3565
  %3567 = vmatmul.bf16.gmra.mxu0 %v3081
  %v3568 = vpop.f32.mrf.mxu0
  %v3569 = vadd.f32 %v2688, %v3568
  %v3570 = vpop.f32.mrf.mxu0
  %v3571 = vadd.f32 %v2690, %v3570
  %3572 = vmatmul.bf16.gmra.mxu0 %v3085
  %v3573 = vpop.f32.mrf.mxu0
  %v3574 = vadd.f32 %v2693, %v3573
  %v3575 = vpop.f32.mrf.mxu0
  %v3576 = vadd.f32 %v2695, %v3575
  %3577 = vmatmul.bf16.gmra.mxu0 %v3089
  %v3578 = vpop.f32.mrf.mxu0
  %v3579 = vadd.f32 %v2698, %v3578
  %v3580 = vpop.f32.mrf.mxu0
  %v3581 = vadd.f32 %v2700, %v3580
  %3582 = vmatmul.bf16.gmra.mxu0 %v3093
  %v3583 = vpop.f32.mrf.mxu0
  %v3584 = vpop.f32.mrf.mxu0
  %3585 = vdwg.mxu0
  %3586 = vmatpush.bf16.msra.mxu0 %v3420
  %3587 = vmatpush.bf16.msra.mxu0 %v3417
  %3588 = vmatpush.bf16.msra.mxu0 %v3414
  %3589 = vmatpush.bf16.msra.mxu0 %v3411
  %3590 = vmatpush.bf16.msra.mxu0 %v3408
  %3591 = vmatpush.bf16.msra.mxu0 %v3405
  %3592 = vmatpush.bf16.msra.mxu0 %v3402
  %3593 = vmatpush.bf16.msra.mxu0 %v3399
  %3594 = vmatmul.bf16.gmra.mxu0 %v3074
  %v3595 = vpop.f32.mrf.mxu0
  %v3596 = vadd.f32 %v3559, %v3595
  %v3597 = vpop.f32.mrf.mxu0
  %v3598 = vadd.f32 %v3561, %v3597
  %3599 = vmatmul.bf16.gmra.mxu0 %v3078
  %v3600 = vpop.f32.mrf.mxu0
  %v3601 = vadd.f32 %v3564, %v3600
  %v3602 = vpop.f32.mrf.mxu0
  %v3603 = vadd.f32 %v3566, %v3602
  %3604 = vmatmul.bf16.gmra.mxu0 %v3082
  %v3605 = vpop.f32.mrf.mxu0
  %v3606 = vadd.f32 %v3569, %v3605
  %v3607 = vpop.f32.mrf.mxu0
  %v3608 = vadd.f32 %v3571, %v3607
  %3609 = vmatmul.bf16.gmra.mxu0 %v3086
  %v3610 = vpop.f32.mrf.mxu0
  %v3611 = vadd.f32 %v3574, %v3610
  %v3612 = vpop.f32.mrf.mxu0
  %v3613 = vadd.f32 %v3576, %v3612
  %3614 = vmatmul.bf16.gmra.mxu0 %v3090
  %v3615 = vpop.f32.mrf.mxu0
  %v3616 = vadd.f32 %v3579, %v3615
  %v3617 = vpop.f32.mrf.mxu0
  %v3618 = vadd.f32 %v3581, %v3617
  %3619 = vmatmul.bf16.gmra.mxu0 %v3094
  %v3620 = vpop.f32.mrf.mxu0
  %v3621 = vpop.f32.mrf.mxu0
  %3622 = vdwg.mxu0
  %3623 = vmatpush.bf16.msra.mxu0 %v3444
  %3624 = vmatpush.bf16.msra.mxu0 %v3441
  %3625 = vmatpush.bf16.msra.mxu0 %v3438
  %3626 = vmatpush.bf16.msra.mxu0 %v3435
  %3627 = vmatpush.bf16.msra.mxu0 %v3432
  %3628 = vmatpush.bf16.msra.mxu0 %v3429
  %3629 = vmatpush.bf16.msra.mxu0 %v3426
  %3630 = vmatpush.bf16.msra.mxu0 %v3423
  %3631 = vmatmul.bf16.gmra.mxu0 %v3075
  %v3632 = vpop.f32.mrf.mxu0
  %v3633 = vadd.f32 %v3596, %v3632
  %v3634 = vpop.f32.mrf.mxu0
  %v3635 = vadd.f32 %v3598, %v3634
  %3636 = vmatmul.bf16.gmra.mxu0 %v3079
  %v3637 = vpop.f32.mrf.mxu0
  %v3638 = vadd.f32 %v3601, %v3637
  %v3639 = vpop.f32.mrf.mxu0
  %v3640 = vadd.f32 %v3603, %v3639
  %3641 = vmatmul.bf16.gmra.mxu0 %v3083
  %v3642 = vpop.f32.mrf.mxu0
  %v3643 = vadd.f32 %v3606, %v3642
  %v3644 = vpop.f32.mrf.mxu0
  %v3645 = vadd.f32 %v3608, %v3644
  %3646 = vmatmul.bf16.gmra.mxu0 %v3087
  %v3647 = vpop.f32.mrf.mxu0
  %v3648 = vadd.f32 %v3611, %v3647
  %v3649 = vpop.f32.mrf.mxu0
  %v3650 = vadd.f32 %v3613, %v3649
  %3651 = vmatmul.bf16.gmra.mxu0 %v3091
  %v3652 = vpop.f32.mrf.mxu0
  %v3653 = vadd.f32 %v3616, %v3652
  %v3654 = vpop.f32.mrf.mxu0
  %v3655 = vadd.f32 %v3618, %v3654
  %3656 = vmatmul.bf16.gmra.mxu0 %v3095
  %v3657 = vpop.f32.mrf.mxu0
  %v3658 = vpop.f32.mrf.mxu0
  %3659 = vdwg.mxu0
  %3660 = vmatpush.bf16.msra.mxu0 0
  %3661 = vmatpush.bf16.msra.mxu0 0
  %3662 = vmatpush.bf16.msra.mxu0 0
  %3663 = vmatpush.bf16.msra.mxu0 0
  %3664 = vmatpush.bf16.msra.mxu0 0
  %3665 = vmatpush.bf16.msra.mxu0 0
  %3666 = vmatpush.bf16.msra.mxu0 %v3450
  %3667 = vmatpush.bf16.msra.mxu0 %v3447
  %3668 = vmatmul.bf16.gmra.mxu0 %v3532
  %v3669 = vpop.f32.mrf.mxu0
  %v3670 = vadd.f32 %v3633, %v3669
  %v3671 = vpop.f32.mrf.mxu0
  %v3672 = vadd.f32 %v3635, %v3671
  %3673 = vmatmul.bf16.gmra.mxu0 %v3535
  %v3674 = vpop.f32.mrf.mxu0
  %v3675 = vadd.f32 %v3638, %v3674
  %v3676 = vpop.f32.mrf.mxu0
  %v3677 = vadd.f32 %v3640, %v3676
  %3678 = vmatmul.bf16.gmra.mxu0 %v3538
  %v3679 = vpop.f32.mrf.mxu0
  %v3680 = vadd.f32 %v3643, %v3679
  %v3681 = vpop.f32.mrf.mxu0
  %v3682 = vadd.f32 %v3645, %v3681
  %3683 = vmatmul.bf16.gmra.mxu0 %v3541
  %v3684 = vpop.f32.mrf.mxu0
  %v3685 = vadd.f32 %v3648, %v3684
  %v3686 = vpop.f32.mrf.mxu0
  %v3687 = vadd.f32 %v3650, %v3686
  %3688 = vmatmul.bf16.gmra.mxu0 %v3544
  %v3689 = vpop.f32.mrf.mxu0
  %v3690 = vadd.f32 %v3653, %v3689
  %v3691 = vpop.f32.mrf.mxu0
  %v3692 = vadd.f32 %v3655, %v3691
  %3693 = vmatmul.bf16.gmra.mxu0 %v3547
  %v3694 = vpop.f32.mrf.mxu0
  %v3695 = vpop.f32.mrf.mxu0
  %3696 = vdwg.mxu0
  %3697 = vmatpush.bf16.msra.mxu0 %v3397
  %3698 = vmatpush.bf16.msra.mxu0 %v3394
  %3699 = vmatpush.bf16.msra.mxu0 %v3391
  %3700 = vmatpush.bf16.msra.mxu0 %v3388
  %3701 = vmatpush.bf16.msra.mxu0 %v3385
  %3702 = vmatpush.bf16.msra.mxu0 %v3382
  %3703 = vmatpush.bf16.msra.mxu0 %v3379
  %3704 = vmatpush.bf16.msra.mxu0 %v3376
  %3705 = vmatmul.bf16.gmra.mxu0 %v3073
  %v3706 = vpop.f32.mrf.mxu0
  %v3707 = vadd.f32 %v2826, %v3706
  %v3708 = vpop.f32.mrf.mxu0
  %v3709 = vadd.f32 %v2828, %v3708
  %3710 = vmatmul.bf16.gmra.mxu0 %v3077
  %v3711 = vpop.f32.mrf.mxu0
  %v3712 = vadd.f32 %v2831, %v3711
  %v3713 = vpop.f32.mrf.mxu0
  %v3714 = vadd.f32 %v2833, %v3713
  %3715 = vmatmul.bf16.gmra.mxu0 %v3081
  %v3716 = vpop.f32.mrf.mxu0
  %v3717 = vadd.f32 %v2836, %v3716
  %v3718 = vpop.f32.mrf.mxu0
  %v3719 = vadd.f32 %v2838, %v3718
  %3720 = vmatmul.bf16.gmra.mxu0 %v3085
  %v3721 = vpop.f32.mrf.mxu0
  %v3722 = vadd.f32 %v2841, %v3721
  %v3723 = vpop.f32.mrf.mxu0
  %v3724 = vadd.f32 %v2843, %v3723
  %3725 = vmatmul.bf16.gmra.mxu0 %v3089
  %v3726 = vpop.f32.mrf.mxu0
  %v3727 = vadd.f32 %v2846, %v3726
  %v3728 = vpop.f32.mrf.mxu0
  %v3729 = vadd.f32 %v2848, %v3728
  %3730 = vmatmul.bf16.gmra.mxu0 %v3093
  %v3731 = vpop.f32.mrf.mxu0
  %v3732 = vpop.f32.mrf.mxu0
  %3733 = vdwg.mxu0
  %3734 = vmatpush.bf16.msra.mxu0 %v3421
  %3735 = vmatpush.bf16.msra.mxu0 %v3418
  %3736 = vmatpush.bf16.msra.mxu0 %v3415
  %3737 = vmatpush.bf16.msra.mxu0 %v3412
  %3738 = vmatpush.bf16.msra.mxu0 %v3409
  %3739 = vmatpush.bf16.msra.mxu0 %v3406
  %3740 = vmatpush.bf16.msra.mxu0 %v3403
  %3741 = vmatpush.bf16.msra.mxu0 %v3400
  %3742 = vmatmul.bf16.gmra.mxu0 %v3074
  %v3743 = vpop.f32.mrf.mxu0
  %v3744 = vadd.f32 %v3707, %v3743
  %v3745 = vpop.f32.mrf.mxu0
  %v3746 = vadd.f32 %v3709, %v3745
  %3747 = vmatmul.bf16.gmra.mxu0 %v3078
  %v3748 = vpop.f32.mrf.mxu0
  %v3749 = vadd.f32 %v3712, %v3748
  %v3750 = vpop.f32.mrf.mxu0
  %v3751 = vadd.f32 %v3714, %v3750
  %3752 = vmatmul.bf16.gmra.mxu0 %v3082
  %v3753 = vpop.f32.mrf.mxu0
  %v3754 = vadd.f32 %v3717, %v3753
  %v3755 = vpop.f32.mrf.mxu0
  %v3756 = vadd.f32 %v3719, %v3755
  %3757 = vmatmul.bf16.gmra.mxu0 %v3086
  %v3758 = vpop.f32.mrf.mxu0
  %v3759 = vadd.f32 %v3722, %v3758
  %v3760 = vpop.f32.mrf.mxu0
  %v3761 = vadd.f32 %v3724, %v3760
  %3762 = vmatmul.bf16.gmra.mxu0 %v3090
  %v3763 = vpop.f32.mrf.mxu0
  %v3764 = vadd.f32 %v3727, %v3763
  %v3765 = vpop.f32.mrf.mxu0
  %v3766 = vadd.f32 %v3729, %v3765
  %3767 = vmatmul.bf16.gmra.mxu0 %v3094
  %v3768 = vpop.f32.mrf.mxu0
  %v3769 = vpop.f32.mrf.mxu0
  %3770 = vdwg.mxu0
  %3771 = vmatpush.bf16.msra.mxu0 %v3445
  %3772 = vmatpush.bf16.msra.mxu0 %v3442
  %3773 = vmatpush.bf16.msra.mxu0 %v3439
  %3774 = vmatpush.bf16.msra.mxu0 %v3436
  %3775 = vmatpush.bf16.msra.mxu0 %v3433
  %3776 = vmatpush.bf16.msra.mxu0 %v3430
  %3777 = vmatpush.bf16.msra.mxu0 %v3427
  %3778 = vmatpush.bf16.msra.mxu0 %v3424
  %3779 = vmatmul.bf16.gmra.mxu0 %v3075
  %v3780 = vpop.f32.mrf.mxu0
  %v3781 = vadd.f32 %v3744, %v3780
  %v3782 = vpop.f32.mrf.mxu0
  %v3783 = vadd.f32 %v3746, %v3782
  %3784 = vmatmul.bf16.gmra.mxu0 %v3079
  %v3785 = vpop.f32.mrf.mxu0
  %v3786 = vadd.f32 %v3749, %v3785
  %v3787 = vpop.f32.mrf.mxu0
  %v3788 = vadd.f32 %v3751, %v3787
  %3789 = vmatmul.bf16.gmra.mxu0 %v3083
  %v3790 = vpop.f32.mrf.mxu0
  %v3791 = vadd.f32 %v3754, %v3790
  %v3792 = vpop.f32.mrf.mxu0
  %v3793 = vadd.f32 %v3756, %v3792
  %3794 = vmatmul.bf16.gmra.mxu0 %v3087
  %v3795 = vpop.f32.mrf.mxu0
  %v3796 = vadd.f32 %v3759, %v3795
  %v3797 = vpop.f32.mrf.mxu0
  %v3798 = vadd.f32 %v3761, %v3797
  %3799 = vmatmul.bf16.gmra.mxu0 %v3091
  %v3800 = vpop.f32.mrf.mxu0
  %v3801 = vadd.f32 %v3764, %v3800
  %v3802 = vpop.f32.mrf.mxu0
  %v3803 = vadd.f32 %v3766, %v3802
  %3804 = vmatmul.bf16.gmra.mxu0 %v3095
  %v3805 = vpop.f32.mrf.mxu0
  %v3806 = vpop.f32.mrf.mxu0
  %3807 = vdwg.mxu0
  %3808 = vmatpush.bf16.msra.mxu0 0
  %3809 = vmatpush.bf16.msra.mxu0 0
  %3810 = vmatpush.bf16.msra.mxu0 0
  %3811 = vmatpush.bf16.msra.mxu0 0
  %3812 = vmatpush.bf16.msra.mxu0 0
  %3813 = vmatpush.bf16.msra.mxu0 0
  %3814 = vmatpush.bf16.msra.mxu0 %v3451
  %3815 = vmatpush.bf16.msra.mxu0 %v3448
  %3816 = vmatmul.bf16.gmra.mxu0 %v3532
  %v3817 = vpop.f32.mrf.mxu0
  %v3818 = vadd.f32 %v3781, %v3817
  %v3819 = vpop.f32.mrf.mxu0
  %v3820 = vadd.f32 %v3783, %v3819
  %3821 = vmatmul.bf16.gmra.mxu0 %v3535
  %v3822 = vpop.f32.mrf.mxu0
  %v3823 = vadd.f32 %v3786, %v3822
  %v3824 = vpop.f32.mrf.mxu0
  %v3825 = vadd.f32 %v3788, %v3824
  %3826 = vmatmul.bf16.gmra.mxu0 %v3538
  %v3827 = vpop.f32.mrf.mxu0
  %v3828 = vadd.f32 %v3791, %v3827
  %v3829 = vpop.f32.mrf.mxu0
  %v3830 = vadd.f32 %v3793, %v3829
  %3831 = vmatmul.bf16.gmra.mxu0 %v3541
  %v3832 = vpop.f32.mrf.mxu0
  %v3833 = vadd.f32 %v3796, %v3832
  %v3834 = vpop.f32.mrf.mxu0
  %v3835 = vadd.f32 %v3798, %v3834
  %3836 = vmatmul.bf16.gmra.mxu0 %v3544
  %v3837 = vpop.f32.mrf.mxu0
  %v3838 = vadd.f32 %v3801, %v3837
  %v3839 = vpop.f32.mrf.mxu0
  %v3840 = vadd.f32 %v3803, %v3839
  %3841 = vmatmul.bf16.gmra.mxu0 %v3547
  %v3842 = vpop.f32.mrf.mxu0
  %v3843 = vpop.f32.mrf.mxu0
  %3844 = vdwg.mxu0
  %3845 = vmatpush.bf16.msra.mxu0 %v3398
  %3846 = vmatpush.bf16.msra.mxu0 %v3395
  %3847 = vmatpush.bf16.msra.mxu0 %v3392
  %3848 = vmatpush.bf16.msra.mxu0 %v3389
  %3849 = vmatpush.bf16.msra.mxu0 %v3386
  %3850 = vmatpush.bf16.msra.mxu0 %v3383
  %3851 = vmatpush.bf16.msra.mxu0 %v3380
  %3852 = vmatpush.bf16.msra.mxu0 %v3377
  %3853 = vmatmul.bf16.gmra.mxu0 %v3073
  %v3854 = vpop.f32.mrf.mxu0
  %v3855 = vadd.f32 %v2974, %v3854
  %v3856 = vpop.f32.mrf.mxu0
  %v3857 = vadd.f32 %v2976, %v3856
  %3858 = vmatmul.bf16.gmra.mxu0 %v3077
  %v3859 = vpop.f32.mrf.mxu0
  %v3860 = vadd.f32 %v2979, %v3859
  %v3861 = vpop.f32.mrf.mxu0
  %v3862 = vadd.f32 %v2981, %v3861
  %3863 = vmatmul.bf16.gmra.mxu0 %v3081
  %v3864 = vpop.f32.mrf.mxu0
  %v3865 = vadd.f32 %v2984, %v3864
  %v3866 = vpop.f32.mrf.mxu0
  %v3867 = vadd.f32 %v2986, %v3866
  %3868 = vmatmul.bf16.gmra.mxu0 %v3085
  %v3869 = vpop.f32.mrf.mxu0
  %v3870 = vadd.f32 %v2989, %v3869
  %v3871 = vpop.f32.mrf.mxu0
  %v3872 = vadd.f32 %v2991, %v3871
  %3873 = vmatmul.bf16.gmra.mxu0 %v3089
  %v3874 = vpop.f32.mrf.mxu0
  %v3875 = vadd.f32 %v2994, %v3874
  %v3876 = vpop.f32.mrf.mxu0
  %v3877 = vadd.f32 %v2996, %v3876
  %3878 = vmatmul.bf16.gmra.mxu0 %v3093
  %v3879 = vpop.f32.mrf.mxu0
  %v3880 = vpop.f32.mrf.mxu0
  %3881 = vdwg.mxu0
  %3882 = vmatpush.bf16.msra.mxu0 %v3422
  %3883 = vmatpush.bf16.msra.mxu0 %v3419
  %3884 = vmatpush.bf16.msra.mxu0 %v3416
  %3885 = vmatpush.bf16.msra.mxu0 %v3413
  %3886 = vmatpush.bf16.msra.mxu0 %v3410
  %3887 = vmatpush.bf16.msra.mxu0 %v3407
  %3888 = vmatpush.bf16.msra.mxu0 %v3404
  %3889 = vmatpush.bf16.msra.mxu0 %v3401
  %3890 = vmatmul.bf16.gmra.mxu0 %v3074
  %v3891 = vpop.f32.mrf.mxu0
  %v3892 = vadd.f32 %v3855, %v3891
  %v3893 = vpop.f32.mrf.mxu0
  %v3894 = vadd.f32 %v3857, %v3893
  %3895 = vmatmul.bf16.gmra.mxu0 %v3078
  %v3896 = vpop.f32.mrf.mxu0
  %v3897 = vadd.f32 %v3860, %v3896
  %v3898 = vpop.f32.mrf.mxu0
  %v3899 = vadd.f32 %v3862, %v3898
  %3900 = vmatmul.bf16.gmra.mxu0 %v3082
  %v3901 = vpop.f32.mrf.mxu0
  %v3902 = vadd.f32 %v3865, %v3901
  %v3903 = vpop.f32.mrf.mxu0
  %v3904 = vadd.f32 %v3867, %v3903
  %3905 = vmatmul.bf16.gmra.mxu0 %v3086
  %v3906 = vpop.f32.mrf.mxu0
  %v3907 = vadd.f32 %v3870, %v3906
  %v3908 = vpop.f32.mrf.mxu0
  %v3909 = vadd.f32 %v3872, %v3908
  %3910 = vmatmul.bf16.gmra.mxu0 %v3090
  %v3911 = vpop.f32.mrf.mxu0
  %v3912 = vadd.f32 %v3875, %v3911
  %v3913 = vpop.f32.mrf.mxu0
  %v3914 = vadd.f32 %v3877, %v3913
  %3915 = vmatmul.bf16.gmra.mxu0 %v3094
  %v3916 = vpop.f32.mrf.mxu0
  %v3917 = vpop.f32.mrf.mxu0
  %3918 = vdwg.mxu0
  %3919 = vmatpush.bf16.msra.mxu0 %v3446
  %3920 = vmatpush.bf16.msra.mxu0 %v3443
  %3921 = vmatpush.bf16.msra.mxu0 %v3440
  %3922 = vmatpush.bf16.msra.mxu0 %v3437
  %3923 = vmatpush.bf16.msra.mxu0 %v3434
  %3924 = vmatpush.bf16.msra.mxu0 %v3431
  %3925 = vmatpush.bf16.msra.mxu0 %v3428
  %3926 = vmatpush.bf16.msra.mxu0 %v3425
  %3927 = vmatmul.bf16.gmra.mxu0 %v3075
  %v3928 = vpop.f32.mrf.mxu0
  %v3929 = vadd.f32 %v3892, %v3928
  %v3930 = vpop.f32.mrf.mxu0
  %v3931 = vadd.f32 %v3894, %v3930
  %3932 = vmatmul.bf16.gmra.mxu0 %v3079
  %v3933 = vpop.f32.mrf.mxu0
  %v3934 = vadd.f32 %v3897, %v3933
  %v3935 = vpop.f32.mrf.mxu0
  %v3936 = vadd.f32 %v3899, %v3935
  %3937 = vmatmul.bf16.gmra.mxu0 %v3083
  %v3938 = vpop.f32.mrf.mxu0
  %v3939 = vadd.f32 %v3902, %v3938
  %v3940 = vpop.f32.mrf.mxu0
  %v3941 = vadd.f32 %v3904, %v3940
  %3942 = vmatmul.bf16.gmra.mxu0 %v3087
  %v3943 = vpop.f32.mrf.mxu0
  %v3944 = vadd.f32 %v3907, %v3943
  %v3945 = vpop.f32.mrf.mxu0
  %v3946 = vadd.f32 %v3909, %v3945
  %3947 = vmatmul.bf16.gmra.mxu0 %v3091
  %v3948 = vpop.f32.mrf.mxu0
  %v3949 = vadd.f32 %v3912, %v3948
  %v3950 = vpop.f32.mrf.mxu0
  %v3951 = vadd.f32 %v3914, %v3950
  %3952 = vmatmul.bf16.gmra.mxu0 %v3095
  %v3953 = vpop.f32.mrf.mxu0
  %v3954 = vpop.f32.mrf.mxu0
  %3955 = vdwg.mxu0
  %3956 = vmatpush.bf16.msra.mxu0 0
  %3957 = vmatpush.bf16.msra.mxu0 0
  %3958 = vmatpush.bf16.msra.mxu0 0
  %3959 = vmatpush.bf16.msra.mxu0 0
  %3960 = vmatpush.bf16.msra.mxu0 0
  %3961 = vmatpush.bf16.msra.mxu0 0
  %3962 = vmatpush.bf16.msra.mxu0 %v3452
  %3963 = vmatpush.bf16.msra.mxu0 %v3449
  %3964 = vmatmul.bf16.gmra.mxu0 %v3532
  %v3965 = vpop.f32.mrf.mxu0
  %v3966 = vadd.f32 %v3929, %v3965
  %v3967 = vpop.f32.mrf.mxu0
  %v3968 = vadd.f32 %v3931, %v3967
  %3969 = vmatmul.bf16.gmra.mxu0 %v3535
  %v3970 = vpop.f32.mrf.mxu0
  %v3971 = vadd.f32 %v3934, %v3970
  %v3972 = vpop.f32.mrf.mxu0
  %v3973 = vadd.f32 %v3936, %v3972
  %3974 = vmatmul.bf16.gmra.mxu0 %v3538
  %v3975 = vpop.f32.mrf.mxu0
  %v3976 = vadd.f32 %v3939, %v3975
  %v3977 = vpop.f32.mrf.mxu0
  %v3978 = vadd.f32 %v3941, %v3977
  %3979 = vmatmul.bf16.gmra.mxu0 %v3541
  %v3980 = vpop.f32.mrf.mxu0
  %v3981 = vadd.f32 %v3944, %v3980
  %v3982 = vpop.f32.mrf.mxu0
  %v3983 = vadd.f32 %v3946, %v3982
  %3984 = vmatmul.bf16.gmra.mxu0 %v3544
  %v3985 = vpop.f32.mrf.mxu0
  %v3986 = vadd.f32 %v3949, %v3985
  %v3987 = vpop.f32.mrf.mxu0
  %v3988 = vadd.f32 %v3951, %v3987
  %3989 = vmatmul.bf16.gmra.mxu0 %v3547
  %v3990 = vpop.f32.mrf.mxu0
  %v3991 = vpop.f32.mrf.mxu0
  %3992 = vdwg.mxu0
  %s3993 = scalar_lea.vmem %s3, 1248
  %v3994 = vld [vmem:[%s3993] sm:$0xff]
  %v3995 = vld [vmem:[%s3993 + $0x8] sm:$0xf]
  %v3996 = vld [vmem:[%s3993 + $0xc] sm:$0xff]
  %v3997 = vld [vmem:[%s3993 + $0x14] sm:$0xf]
  %v3998 = vld [vmem:[%s3993 + $0x18] sm:$0xff]
  %v3999 = vld [vmem:[%s3993 + $0x20] sm:$0xf]
  %v4000 = vld [vmem:[%s3993 + $0x24] sm:$0xff]
  %v4001 = vld [vmem:[%s3993 + $0x2c] sm:$0xf]
  %v4002 = vld [vmem:[%s3993 + $0x30] sm:$0xff]
  %v4003 = vld [vmem:[%s3993 + $0x38] sm:$0xf]
  %v4004 = vld [vmem:[%s3993 + $0x3c] sm:$0xff]
  %v4005 = vld [vmem:[%s3993 + $0x44] sm:$0xf]
  %v4006 = vld [vmem:[%s3993 + $0x48] sm:$0xff]
  %v4007 = vld [vmem:[%s3993 + $0x50] sm:$0xf]
  %v4008 = vld [vmem:[%s3993 + $0x54] sm:$0xff]
  %v4009 = vld [vmem:[%s3993 + $0x5c] sm:$0xf]
  %v4010 = vld [vmem:[%s3993 + $0x60] sm:$0xff]
  %v4011 = vld [vmem:[%s3993 + $0x68] sm:$0xf]
  %v4012 = vld [vmem:[%s3993 + $0x6c] sm:$0xff]
  %v4013 = vld [vmem:[%s3993 + $0x74] sm:$0xf]
  %v4014 = vld [vmem:[%s3993 + $0x78] sm:$0xff]
  %v4015 = vld [vmem:[%s3993 + $0x80] sm:$0xf]
  %v4016 = vld [vmem:[%s3993 + $0x84] sm:$0xff]
  %v4017 = vld [vmem:[%s3993 + $0x8c] sm:$0xf]
  %v4018 = vld [vmem:[%s3993 + $0x90] sm:$0xff]
  %v4019 = vld [vmem:[%s3993 + $0x98] sm:$0xf]
  %v4020 = vld [vmem:[%s3993 + $0x9c] sm:$0xff]
  %v4021 = vld [vmem:[%s3993 + $0xa4] sm:$0xf]
  %v4022 = vld [vmem:[%s3993 + $0xa8] sm:$0xff]
  %v4023 = vld [vmem:[%s3993 + $0xb0] sm:$0xf]
  %v4024 = vld [vmem:[%s3993 + $0xb4] sm:$0xff]
  %v4025 = vld [vmem:[%s3993 + $0xbc] sm:$0xf]
  %v4026 = vld [vmem:[%s3993 + $0xc0] sm:$0xff]
  %v4027 = vld [vmem:[%s3993 + $0xc8] sm:$0xf]
  %v4028 = vld [vmem:[%s3993 + $0xcc] sm:$0xff]
  %v4029 = vld [vmem:[%s3993 + $0xd4] sm:$0xf]
  %v4030 = vld [vmem:[%s3993 + $0xd8] sm:$0xff]
  %v4031 = vld [vmem:[%s3993 + $0xe0] sm:$0xf]
  %v4032 = vld [vmem:[%s3993 + $0xe4] sm:$0xff]
  %v4033 = vld [vmem:[%s3993 + $0xec] sm:$0xf]
  %v4034 = vld [vmem:[%s3993 + $0xf0] sm:$0xff]
  %v4035 = vld [vmem:[%s3993 + $0xf8] sm:$0xf]
  %v4036 = vld [vmem:[%s3993 + $0xfc] sm:$0xff]
  %v4037 = vld [vmem:[%s3993 + $0x104] sm:$0xf]
  %v4038 = vld [vmem:[%s3993 + $0x108] sm:$0xff]
  %v4039 = vld [vmem:[%s3993 + $0x110] sm:$0xf]
  %v4040 = vld [vmem:[%s3993 + $0x114] sm:$0xff]
  %v4041 = vld [vmem:[%s3993 + $0x11c] sm:$0xf]
  %v4042 = vld [vmem:[%s3993 + $0x120] sm:$0xff]
  %v4043 = vld [vmem:[%s3993 + $0x128] sm:$0xf]
  %v4044 = vld [vmem:[%s3993 + $0x12c] sm:$0xff]
  %v4045 = vld [vmem:[%s3993 + $0x134] sm:$0xf]
  %v4046 = vld [vmem:[%s3993 + $0x138] sm:$0xff]
  %v4047 = vld [vmem:[%s3993 + $0x140] sm:$0xf]
  %v4048 = vld [vmem:[%s3993 + $0x144] sm:$0xff]
  %v4049 = vld [vmem:[%s3993 + $0x14c] sm:$0xf]
  %v4050 = vld [vmem:[%s3993 + $0x150] sm:$0xff]
  %v4051 = vld [vmem:[%s3993 + $0x158] sm:$0xf]
  %v4052 = vld [vmem:[%s3993 + $0x15c] sm:$0xff]
  %v4053 = vld [vmem:[%s3993 + $0x164] sm:$0xf]
  %v4054 = vld [vmem:[%s3993 + $0x168] sm:$0xff]
  %v4055 = vld [vmem:[%s3993 + $0x170] sm:$0xf]
  %v4056 = vld [vmem:[%s3993 + $0x174] sm:$0xff]
  %v4057 = vld [vmem:[%s3993 + $0x17c] sm:$0xf]
  %v4058 = vld [vmem:[%s3993 + $0x180] sm:$0xff]
  %v4059 = vld [vmem:[%s3993 + $0x188] sm:$0xf]
  %v4060 = vld [vmem:[%s3993 + $0x18c] sm:$0xff]
  %v4061 = vld [vmem:[%s3993 + $0x194] sm:$0xf]
  %v4062 = vld [vmem:[%s3993 + $0x198] sm:$0xff]
  %v4063 = vld [vmem:[%s3993 + $0x1a0] sm:$0xf]
  %v4064 = vld [vmem:[%s3993 + $0x1a4] sm:$0xff]
  %v4065 = vld [vmem:[%s3993 + $0x1ac] sm:$0xf]
  %v4066 = vld [vmem:[%s3993 + $0x1b0] sm:$0xff]
  %v4067 = vld [vmem:[%s3993 + $0x1b8] sm:$0xf]
  %v4068 = vld [vmem:[%s3993 + $0x1bc] sm:$0xff]
  %v4069 = vld [vmem:[%s3993 + $0x1c4] sm:$0xf]
  %v4070 = vld [vmem:[%s3993 + $0x1c8] sm:$0xff]
  %v4071 = vld [vmem:[%s3993 + $0x1d0] sm:$0xf]
  %v4072 = vld [vmem:[%s3993 + $0x1d4] sm:$0xff]
  %v4073 = vld [vmem:[%s3993 + $0x1dc] sm:$0xf]
  %v4074 = vld [vmem:[%s3993 + $0x1e0] sm:$0xff]
  %v4075 = vld [vmem:[%s3993 + $0x1e8] sm:$0xf]
  %v4076 = vld [vmem:[%s3993 + $0x1ec] sm:$0xff]
  %v4077 = vld [vmem:[%s3993 + $0x1f4] sm:$0xf]
  %v4078 = vld [vmem:[%s3993 + $0x1f8] sm:$0xff]
  %v4079 = vld [vmem:[%s3993 + $0x200] sm:$0xf]
  %v4080 = vld [vmem:[%s3993 + $0x204] sm:$0xff]
  %v4081 = vld [vmem:[%s3993 + $0x20c] sm:$0xf]
  %v4082 = vld [vmem:[%s3993 + $0x210] sm:$0xff]
  %v4083 = vld [vmem:[%s3993 + $0x218] sm:$0xf]
  %v4084 = vld [vmem:[%s3993 + $0x21c] sm:$0xff]
  %v4085 = vld [vmem:[%s3993 + $0x224] sm:$0xf]
  %v4086 = vld [vmem:[%s3993 + $0x228] sm:$0xff]
  %v4087 = vld [vmem:[%s3993 + $0x230] sm:$0xf]
  %v4088 = vld [vmem:[%s3993 + $0x234] sm:$0xff]
  %v4089 = vld [vmem:[%s3993 + $0x23c] sm:$0xf]
  %v4090 = vld [vmem:[%s3993 + $0x240] sm:$0xff]
  %v4091 = vld [vmem:[%s3993 + $0x248] sm:$0xf]
  %v4092 = vld [vmem:[%s3993 + $0x24c] sm:$0xff]
  %v4093 = vld [vmem:[%s3993 + $0x254] sm:$0xf]
  %v4094 = vld [vmem:[%s3993 + $0x258] sm:$0xff]
  %v4095 = vld [vmem:[%s3993 + $0x260] sm:$0xf]
  %v4096 = vld [vmem:[%s3993 + $0x264] sm:$0xff]
  %v4097 = vld [vmem:[%s3993 + $0x26c] sm:$0xf]
  %v4102 = vunpack.c.l.b16 %v1795
  %v4103 = vunpack.c.h.b16 %v1795
  %v4104 = vunpack.c.l.b16 %v1796
  %v4105 = vunpack.c.h.b16 %v1796
  %v4106 = vunpack.c.l.b16 %v1797
  %v4107 = vunpack.c.h.b16 %v1797
  %v4108 = vunpack.c.l.b16 %v1798
  %v4109 = vunpack.c.h.b16 %v1798
  %v4110 = vpack.c.b16 %v4106, %v4102
  %v4111 = vpack.c.b16 %v4107, %v4103
  %v4112 = vpack.c.b16 %v4108, %v4104
  %v4113 = vpack.c.b16 %v4109, %v4105
  %v4221 = vunpack.c.l.b16 %v3994
  %v4222 = vunpack.c.h.b16 %v3994
  %v4223 = vunpack.c.l.b16 %v3995
  %v4224 = vunpack.c.l.b16 %v3996
  %v4225 = vunpack.c.h.b16 %v3996
  %v4226 = vunpack.c.l.b16 %v3997
  %v4227 = vunpack.c.l.b16 %v3998
  %v4228 = vunpack.c.h.b16 %v3998
  %v4229 = vunpack.c.l.b16 %v3999
  %v4230 = vunpack.c.l.b16 %v4000
  %v4231 = vunpack.c.h.b16 %v4000
  %v4232 = vunpack.c.l.b16 %v4001
  %v4233 = vunpack.c.l.b16 %v4002
  %v4234 = vunpack.c.h.b16 %v4002
  %v4235 = vunpack.c.l.b16 %v4003
  %v4236 = vunpack.c.l.b16 %v4004
  %v4237 = vunpack.c.h.b16 %v4004
  %v4238 = vunpack.c.l.b16 %v4005
  %v4239 = vunpack.c.l.b16 %v4006
  %v4240 = vunpack.c.h.b16 %v4006
  %v4241 = vunpack.c.l.b16 %v4007
  %v4242 = vunpack.c.l.b16 %v4008
  %v4243 = vunpack.c.h.b16 %v4008
  %v4244 = vunpack.c.l.b16 %v4009
  %v4245 = vunpack.c.l.b16 %v4010
  %v4246 = vunpack.c.h.b16 %v4010
  %v4247 = vunpack.c.l.b16 %v4011
  %v4248 = vunpack.c.l.b16 %v4012
  %v4249 = vunpack.c.h.b16 %v4012
  %v4250 = vunpack.c.l.b16 %v4013
  %v4251 = vunpack.c.l.b16 %v4014
  %v4252 = vunpack.c.h.b16 %v4014
  %v4253 = vunpack.c.l.b16 %v4015
  %v4254 = vunpack.c.l.b16 %v4016
  %v4255 = vunpack.c.h.b16 %v4016
  %v4256 = vunpack.c.l.b16 %v4017
  %v4257 = vunpack.c.l.b16 %v4018
  %v4258 = vunpack.c.h.b16 %v4018
  %v4259 = vunpack.c.l.b16 %v4019
  %v4260 = vunpack.c.l.b16 %v4020
  %v4261 = vunpack.c.h.b16 %v4020
  %v4262 = vunpack.c.l.b16 %v4021
  %v4263 = vunpack.c.l.b16 %v4022
  %v4264 = vunpack.c.h.b16 %v4022
  %v4265 = vunpack.c.l.b16 %v4023
  %v4266 = vunpack.c.l.b16 %v4024
  %v4267 = vunpack.c.h.b16 %v4024
  %v4268 = vunpack.c.l.b16 %v4025
  %v4269 = vunpack.c.l.b16 %v4026
  %v4270 = vunpack.c.h.b16 %v4026
  %v4271 = vunpack.c.l.b16 %v4027
  %v4272 = vunpack.c.l.b16 %v4028
  %v4273 = vunpack.c.h.b16 %v4028
  %v4274 = vunpack.c.l.b16 %v4029
  %v4275 = vunpack.c.l.b16 %v4030
  %v4276 = vunpack.c.h.b16 %v4030
  %v4277 = vunpack.c.l.b16 %v4031
  %v4278 = vunpack.c.l.b16 %v4032
  %v4279 = vunpack.c.h.b16 %v4032
  %v4280 = vunpack.c.l.b16 %v4033
  %v4281 = vunpack.c.l.b16 %v4034
  %v4282 = vunpack.c.h.b16 %v4034
  %v4283 = vunpack.c.l.b16 %v4035
  %v4284 = vunpack.c.l.b16 %v4036
  %v4285 = vunpack.c.h.b16 %v4036
  %v4286 = vunpack.c.l.b16 %v4037
  %v4287 = vunpack.c.l.b16 %v4038
  %v4288 = vunpack.c.h.b16 %v4038
  %v4289 = vunpack.c.l.b16 %v4039
  %v4290 = vunpack.c.l.b16 %v4040
  %v4291 = vunpack.c.h.b16 %v4040
  %v4292 = vunpack.c.l.b16 %v4041
  %v4293 = vunpack.c.l.b16 %v4042
  %v4294 = vunpack.c.h.b16 %v4042
  %v4295 = vunpack.c.l.b16 %v4043
  %v4296 = vunpack.c.l.b16 %v4044
  %v4297 = vunpack.c.h.b16 %v4044
  %v4298 = vunpack.c.l.b16 %v4045
  %v4299 = vunpack.c.l.b16 %v4046
  %v4300 = vunpack.c.h.b16 %v4046
  %v4301 = vunpack.c.l.b16 %v4047
  %v4302 = vunpack.c.l.b16 %v4048
  %v4303 = vunpack.c.h.b16 %v4048
  %v4304 = vunpack.c.l.b16 %v4049
  %v4305 = vunpack.c.l.b16 %v4050
  %v4306 = vunpack.c.h.b16 %v4050
  %v4307 = vunpack.c.l.b16 %v4051
  %v4308 = vunpack.c.l.b16 %v4052
  %v4309 = vunpack.c.h.b16 %v4052
  %v4310 = vunpack.c.l.b16 %v4053
  %v4311 = vunpack.c.l.b16 %v4054
  %v4312 = vunpack.c.h.b16 %v4054
  %v4313 = vunpack.c.l.b16 %v4055
  %v4314 = vunpack.c.l.b16 %v4056
  %v4315 = vunpack.c.h.b16 %v4056
  %v4316 = vunpack.c.l.b16 %v4057
  %v4317 = vunpack.c.l.b16 %v4058
  %v4318 = vunpack.c.h.b16 %v4058
  %v4319 = vunpack.c.l.b16 %v4059
  %v4320 = vunpack.c.l.b16 %v4060
  %v4321 = vunpack.c.h.b16 %v4060
  %v4322 = vunpack.c.l.b16 %v4061
  %v4323 = vunpack.c.l.b16 %v4062
  %v4324 = vunpack.c.h.b16 %v4062
  %v4325 = vunpack.c.l.b16 %v4063
  %v4326 = vunpack.c.l.b16 %v4064
  %v4327 = vunpack.c.h.b16 %v4064
  %v4328 = vunpack.c.l.b16 %v4065
  %v4329 = vunpack.c.l.b16 %v4066
  %v4330 = vunpack.c.h.b16 %v4066
  %v4331 = vunpack.c.l.b16 %v4067
  %v4332 = vunpack.c.l.b16 %v4068
  %v4333 = vunpack.c.h.b16 %v4068
  %v4334 = vunpack.c.l.b16 %v4069
  %v4335 = vunpack.c.l.b16 %v4070
  %v4336 = vunpack.c.h.b16 %v4070
  %v4337 = vunpack.c.l.b16 %v4071
  %v4338 = vunpack.c.l.b16 %v4072
  %v4339 = vunpack.c.h.b16 %v4072
  %v4340 = vunpack.c.l.b16 %v4073
  %v4341 = vunpack.c.l.b16 %v4074
  %v4342 = vunpack.c.h.b16 %v4074
  %v4343 = vunpack.c.l.b16 %v4075
  %v4344 = vunpack.c.l.b16 %v4076
  %v4345 = vunpack.c.h.b16 %v4076
  %v4346 = vunpack.c.l.b16 %v4077
  %v4347 = vunpack.c.l.b16 %v4078
  %v4348 = vunpack.c.h.b16 %v4078
  %v4349 = vunpack.c.l.b16 %v4079
  %v4350 = vunpack.c.l.b16 %v4080
  %v4351 = vunpack.c.h.b16 %v4080
  %v4352 = vunpack.c.l.b16 %v4081
  %v4353 = vunpack.c.l.b16 %v4082
  %v4354 = vunpack.c.h.b16 %v4082
  %v4355 = vunpack.c.l.b16 %v4083
  %v4356 = vunpack.c.l.b16 %v4084
  %v4357 = vunpack.c.h.b16 %v4084
  %v4358 = vunpack.c.l.b16 %v4085
  %v4359 = vunpack.c.l.b16 %v4086
  %v4360 = vunpack.c.h.b16 %v4086
  %v4361 = vunpack.c.l.b16 %v4087
  %v4362 = vunpack.c.l.b16 %v4088
  %v4363 = vunpack.c.h.b16 %v4088
  %v4364 = vunpack.c.l.b16 %v4089
  %v4365 = vunpack.c.l.b16 %v4090
  %v4366 = vunpack.c.h.b16 %v4090
  %v4367 = vunpack.c.l.b16 %v4091
  %v4368 = vunpack.c.l.b16 %v4092
  %v4369 = vunpack.c.h.b16 %v4092
  %v4370 = vunpack.c.l.b16 %v4093
  %v4371 = vunpack.c.l.b16 %v4094
  %v4372 = vunpack.c.h.b16 %v4094
  %v4373 = vunpack.c.l.b16 %v4095
  %v4374 = vunpack.c.l.b16 %v4096
  %v4375 = vunpack.c.h.b16 %v4096
  %v4376 = vunpack.c.l.b16 %v4097
  %v4377 = vpack.c.b16 %v4224, %v4221
  %v4378 = vpack.c.b16 %v4225, %v4222
  %v4379 = vpack.c.b16 %v4226, %v4223
  %v4380 = vpack.c.b16 %v4230, %v4227
  %v4381 = vpack.c.b16 %v4231, %v4228
  %v4382 = vpack.c.b16 %v4232, %v4229
  %v4383 = vpack.c.b16 %v4236, %v4233
  %v4384 = vpack.c.b16 %v4237, %v4234
  %v4385 = vpack.c.b16 %v4238, %v4235
  %v4386 = vpack.c.b16 %v4242, %v4239
  %v4387 = vpack.c.b16 %v4243, %v4240
  %v4388 = vpack.c.b16 %v4244, %v4241
  %v4389 = vpack.c.b16 %v4248, %v4245
  %v4390 = vpack.c.b16 %v4249, %v4246
  %v4391 = vpack.c.b16 %v4250, %v4247
  %v4392 = vpack.c.b16 %v4254, %v4251
  %v4393 = vpack.c.b16 %v4255, %v4252
  %v4394 = vpack.c.b16 %v4256, %v4253
  %v4395 = vpack.c.b16 %v4260, %v4257
  %v4396 = vpack.c.b16 %v4261, %v4258
  %v4397 = vpack.c.b16 %v4262, %v4259
  %v4398 = vpack.c.b16 %v4266, %v4263
  %v4399 = vpack.c.b16 %v4267, %v4264
  %v4400 = vpack.c.b16 %v4268, %v4265
  %v4401 = vpack.c.b16 %v4272, %v4269
  %v4402 = vpack.c.b16 %v4273, %v4270
  %v4403 = vpack.c.b16 %v4274, %v4271
  %v4404 = vpack.c.b16 %v4278, %v4275
  %v4405 = vpack.c.b16 %v4279, %v4276
  %v4406 = vpack.c.b16 %v4280, %v4277
  %v4407 = vpack.c.b16 %v4284, %v4281
  %v4408 = vpack.c.b16 %v4285, %v4282
  %v4409 = vpack.c.b16 %v4286, %v4283
  %v4410 = vpack.c.b16 %v4290, %v4287
  %v4411 = vpack.c.b16 %v4291, %v4288
  %v4412 = vpack.c.b16 %v4292, %v4289
  %v4413 = vpack.c.b16 %v4296, %v4293
  %v4414 = vpack.c.b16 %v4297, %v4294
  %v4415 = vpack.c.b16 %v4298, %v4295
  %v4416 = vpack.c.b16 %v4302, %v4299
  %v4417 = vpack.c.b16 %v4303, %v4300
  %v4418 = vpack.c.b16 %v4304, %v4301
  %v4419 = vpack.c.b16 %v4308, %v4305
  %v4420 = vpack.c.b16 %v4309, %v4306
  %v4421 = vpack.c.b16 %v4310, %v4307
  %v4422 = vpack.c.b16 %v4314, %v4311
  %v4423 = vpack.c.b16 %v4315, %v4312
  %v4424 = vpack.c.b16 %v4316, %v4313
  %v4425 = vpack.c.b16 %v4320, %v4317
  %v4426 = vpack.c.b16 %v4321, %v4318
  %v4427 = vpack.c.b16 %v4322, %v4319
  %v4428 = vpack.c.b16 %v4326, %v4323
  %v4429 = vpack.c.b16 %v4327, %v4324
  %v4430 = vpack.c.b16 %v4328, %v4325
  %v4431 = vpack.c.b16 %v4332, %v4329
  %v4432 = vpack.c.b16 %v4333, %v4330
  %v4433 = vpack.c.b16 %v4334, %v4331
  %v4434 = vpack.c.b16 %v4338, %v4335
  %v4435 = vpack.c.b16 %v4339, %v4336
  %v4436 = vpack.c.b16 %v4340, %v4337
  %v4437 = vpack.c.b16 %v4344, %v4341
  %v4438 = vpack.c.b16 %v4345, %v4342
  %v4439 = vpack.c.b16 %v4346, %v4343
  %v4440 = vpack.c.b16 %v4350, %v4347
  %v4441 = vpack.c.b16 %v4351, %v4348
  %v4442 = vpack.c.b16 %v4352, %v4349
  %v4443 = vpack.c.b16 %v4356, %v4353
  %v4444 = vpack.c.b16 %v4357, %v4354
  %v4445 = vpack.c.b16 %v4358, %v4355
  %v4446 = vpack.c.b16 %v4362, %v4359
  %v4447 = vpack.c.b16 %v4363, %v4360
  %v4448 = vpack.c.b16 %v4364, %v4361
  %v4449 = vpack.c.b16 %v4368, %v4365
  %v4450 = vpack.c.b16 %v4369, %v4366
  %v4451 = vpack.c.b16 %v4370, %v4367
  %v4452 = vpack.c.b16 %v4374, %v4371
  %v4453 = vpack.c.b16 %v4375, %v4372
  %v4454 = vpack.c.b16 %v4376, %v4373
  %v4534 = vsel %vm2538, %v4113, 0
  %4536 = vmatpush.bf16.msra.mxu0 %v4398
  %4537 = vmatpush.bf16.msra.mxu0 %v4395
  %4538 = vmatpush.bf16.msra.mxu0 %v4392
  %4539 = vmatpush.bf16.msra.mxu0 %v4389
  %4540 = vmatpush.bf16.msra.mxu0 %v4386
  %4541 = vmatpush.bf16.msra.mxu0 %v4383
  %4542 = vmatpush.bf16.msra.mxu0 %v4380
  %4543 = vmatpush.bf16.msra.mxu0 %v4377
  %4544 = vmatmul.bf16.gmra.mxu0 %v3077
  %v4545 = vpop.f32.mrf.mxu0
  %v4546 = vadd.f32 0.0, %v4545
  %v4547 = vpop.f32.mrf.mxu0
  %v4548 = vadd.f32 0.0, %v4547
  %4549 = vmatmul.bf16.gmra.mxu0 %v3081
  %v4550 = vpop.f32.mrf.mxu0
  %v4551 = vadd.f32 0.0, %v4550
  %v4552 = vpop.f32.mrf.mxu0
  %v4553 = vadd.f32 0.0, %v4552
  %4554 = vmatmul.bf16.gmra.mxu0 %v3085
  %v4555 = vpop.f32.mrf.mxu0
  %v4556 = vadd.f32 0.0, %v4555
  %v4557 = vpop.f32.mrf.mxu0
  %v4558 = vadd.f32 0.0, %v4557
  %4559 = vmatmul.bf16.gmra.mxu0 %v3089
  %v4560 = vpop.f32.mrf.mxu0
  %v4561 = vadd.f32 0.0, %v4560
  %v4562 = vpop.f32.mrf.mxu0
  %v4563 = vadd.f32 0.0, %v4562
  %4564 = vmatmul.bf16.gmra.mxu0 %v3093
  %v4565 = vpop.f32.mrf.mxu0
  %v4566 = vadd.f32 0.0, %v4565
  %v4567 = vpop.f32.mrf.mxu0
  %v4568 = vadd.f32 0.0, %v4567
  %4569 = vmatmul.bf16.gmra.mxu0 %v4110
  %v4570 = vpop.f32.mrf.mxu0
  %v4571 = vpop.f32.mrf.mxu0
  %4572 = vdwg.mxu0
  %4573 = vmatpush.bf16.msra.mxu0 %v4422
  %4574 = vmatpush.bf16.msra.mxu0 %v4419
  %4575 = vmatpush.bf16.msra.mxu0 %v4416
  %4576 = vmatpush.bf16.msra.mxu0 %v4413
  %4577 = vmatpush.bf16.msra.mxu0 %v4410
  %4578 = vmatpush.bf16.msra.mxu0 %v4407
  %4579 = vmatpush.bf16.msra.mxu0 %v4404
  %4580 = vmatpush.bf16.msra.mxu0 %v4401
  %4581 = vmatmul.bf16.gmra.mxu0 %v3078
  %v4582 = vpop.f32.mrf.mxu0
  %v4583 = vadd.f32 %v4546, %v4582
  %v4584 = vpop.f32.mrf.mxu0
  %v4585 = vadd.f32 %v4548, %v4584
  %4586 = vmatmul.bf16.gmra.mxu0 %v3082
  %v4587 = vpop.f32.mrf.mxu0
  %v4588 = vadd.f32 %v4551, %v4587
  %v4589 = vpop.f32.mrf.mxu0
  %v4590 = vadd.f32 %v4553, %v4589
  %4591 = vmatmul.bf16.gmra.mxu0 %v3086
  %v4592 = vpop.f32.mrf.mxu0
  %v4593 = vadd.f32 %v4556, %v4592
  %v4594 = vpop.f32.mrf.mxu0
  %v4595 = vadd.f32 %v4558, %v4594
  %4596 = vmatmul.bf16.gmra.mxu0 %v3090
  %v4597 = vpop.f32.mrf.mxu0
  %v4598 = vadd.f32 %v4561, %v4597
  %v4599 = vpop.f32.mrf.mxu0
  %v4600 = vadd.f32 %v4563, %v4599
  %4601 = vmatmul.bf16.gmra.mxu0 %v3094
  %v4602 = vpop.f32.mrf.mxu0
  %v4603 = vadd.f32 %v4566, %v4602
  %v4604 = vpop.f32.mrf.mxu0
  %v4605 = vadd.f32 %v4568, %v4604
  %4606 = vmatmul.bf16.gmra.mxu0 %v4111
  %v4607 = vpop.f32.mrf.mxu0
  %v4608 = vpop.f32.mrf.mxu0
  %4609 = vdwg.mxu0
  %4610 = vmatpush.bf16.msra.mxu0 %v4446
  %4611 = vmatpush.bf16.msra.mxu0 %v4443
  %4612 = vmatpush.bf16.msra.mxu0 %v4440
  %4613 = vmatpush.bf16.msra.mxu0 %v4437
  %4614 = vmatpush.bf16.msra.mxu0 %v4434
  %4615 = vmatpush.bf16.msra.mxu0 %v4431
  %4616 = vmatpush.bf16.msra.mxu0 %v4428
  %4617 = vmatpush.bf16.msra.mxu0 %v4425
  %4618 = vmatmul.bf16.gmra.mxu0 %v3079
  %v4619 = vpop.f32.mrf.mxu0
  %v4620 = vadd.f32 %v4583, %v4619
  %v4621 = vpop.f32.mrf.mxu0
  %v4622 = vadd.f32 %v4585, %v4621
  %4623 = vmatmul.bf16.gmra.mxu0 %v3083
  %v4624 = vpop.f32.mrf.mxu0
  %v4625 = vadd.f32 %v4588, %v4624
  %v4626 = vpop.f32.mrf.mxu0
  %v4627 = vadd.f32 %v4590, %v4626
  %4628 = vmatmul.bf16.gmra.mxu0 %v3087
  %v4629 = vpop.f32.mrf.mxu0
  %v4630 = vadd.f32 %v4593, %v4629
  %v4631 = vpop.f32.mrf.mxu0
  %v4632 = vadd.f32 %v4595, %v4631
  %4633 = vmatmul.bf16.gmra.mxu0 %v3091
  %v4634 = vpop.f32.mrf.mxu0
  %v4635 = vadd.f32 %v4598, %v4634
  %v4636 = vpop.f32.mrf.mxu0
  %v4637 = vadd.f32 %v4600, %v4636
  %4638 = vmatmul.bf16.gmra.mxu0 %v3095
  %v4639 = vpop.f32.mrf.mxu0
  %v4640 = vadd.f32 %v4603, %v4639
  %v4641 = vpop.f32.mrf.mxu0
  %v4642 = vadd.f32 %v4605, %v4641
  %4643 = vmatmul.bf16.gmra.mxu0 %v4112
  %v4644 = vpop.f32.mrf.mxu0
  %v4645 = vpop.f32.mrf.mxu0
  %4646 = vdwg.mxu0
  %4647 = vmatpush.bf16.msra.mxu0 0
  %4648 = vmatpush.bf16.msra.mxu0 0
  %4649 = vmatpush.bf16.msra.mxu0 0
  %4650 = vmatpush.bf16.msra.mxu0 0
  %4651 = vmatpush.bf16.msra.mxu0 0
  %4652 = vmatpush.bf16.msra.mxu0 0
  %4653 = vmatpush.bf16.msra.mxu0 %v4452
  %4654 = vmatpush.bf16.msra.mxu0 %v4449
  %4655 = vmatmul.bf16.gmra.mxu0 %v3535
  %v4656 = vpop.f32.mrf.mxu0
  %v4657 = vadd.f32 %v4620, %v4656
  %v4658 = vpop.f32.mrf.mxu0
  %v4659 = vadd.f32 %v4622, %v4658
  %4660 = vmatmul.bf16.gmra.mxu0 %v3538
  %v4661 = vpop.f32.mrf.mxu0
  %v4662 = vadd.f32 %v4625, %v4661
  %v4663 = vpop.f32.mrf.mxu0
  %v4664 = vadd.f32 %v4627, %v4663
  %4665 = vmatmul.bf16.gmra.mxu0 %v3541
  %v4666 = vpop.f32.mrf.mxu0
  %v4667 = vadd.f32 %v4630, %v4666
  %v4668 = vpop.f32.mrf.mxu0
  %v4669 = vadd.f32 %v4632, %v4668
  %4670 = vmatmul.bf16.gmra.mxu0 %v3544
  %v4671 = vpop.f32.mrf.mxu0
  %v4672 = vadd.f32 %v4635, %v4671
  %v4673 = vpop.f32.mrf.mxu0
  %v4674 = vadd.f32 %v4637, %v4673
  %4675 = vmatmul.bf16.gmra.mxu0 %v3547
  %v4676 = vpop.f32.mrf.mxu0
  %v4677 = vadd.f32 %v4640, %v4676
  %v4678 = vpop.f32.mrf.mxu0
  %v4679 = vadd.f32 %v4642, %v4678
  %4680 = vmatmul.bf16.gmra.mxu0 %v4534
  %v4681 = vpop.f32.mrf.mxu0
  %v4682 = vpop.f32.mrf.mxu0
  %4683 = vdwg.mxu0
  %4684 = vmatpush.bf16.msra.mxu0 %v4399
  %4685 = vmatpush.bf16.msra.mxu0 %v4396
  %4686 = vmatpush.bf16.msra.mxu0 %v4393
  %4687 = vmatpush.bf16.msra.mxu0 %v4390
  %4688 = vmatpush.bf16.msra.mxu0 %v4387
  %4689 = vmatpush.bf16.msra.mxu0 %v4384
  %4690 = vmatpush.bf16.msra.mxu0 %v4381
  %4691 = vmatpush.bf16.msra.mxu0 %v4378
  %4692 = vmatmul.bf16.gmra.mxu0 %v3077
  %v4693 = vpop.f32.mrf.mxu0
  %v4694 = vadd.f32 0.0, %v4693
  %v4695 = vpop.f32.mrf.mxu0
  %v4696 = vadd.f32 0.0, %v4695
  %4697 = vmatmul.bf16.gmra.mxu0 %v3081
  %v4698 = vpop.f32.mrf.mxu0
  %v4699 = vadd.f32 0.0, %v4698
  %v4700 = vpop.f32.mrf.mxu0
  %v4701 = vadd.f32 0.0, %v4700
  %4702 = vmatmul.bf16.gmra.mxu0 %v3085
  %v4703 = vpop.f32.mrf.mxu0
  %v4704 = vadd.f32 0.0, %v4703
  %v4705 = vpop.f32.mrf.mxu0
  %v4706 = vadd.f32 0.0, %v4705
  %4707 = vmatmul.bf16.gmra.mxu0 %v3089
  %v4708 = vpop.f32.mrf.mxu0
  %v4709 = vadd.f32 0.0, %v4708
  %v4710 = vpop.f32.mrf.mxu0
  %v4711 = vadd.f32 0.0, %v4710
  %4712 = vmatmul.bf16.gmra.mxu0 %v3093
  %v4713 = vpop.f32.mrf.mxu0
  %v4714 = vadd.f32 0.0, %v4713
  %v4715 = vpop.f32.mrf.mxu0
  %v4716 = vadd.f32 0.0, %v4715
  %4717 = vmatmul.bf16.gmra.mxu0 %v4110
  %v4718 = vpop.f32.mrf.mxu0
  %v4719 = vpop.f32.mrf.mxu0
  %4720 = vdwg.mxu0
  %4721 = vmatpush.bf16.msra.mxu0 %v4423
  %4722 = vmatpush.bf16.msra.mxu0 %v4420
  %4723 = vmatpush.bf16.msra.mxu0 %v4417
  %4724 = vmatpush.bf16.msra.mxu0 %v4414
  %4725 = vmatpush.bf16.msra.mxu0 %v4411
  %4726 = vmatpush.bf16.msra.mxu0 %v4408
  %4727 = vmatpush.bf16.msra.mxu0 %v4405
  %4728 = vmatpush.bf16.msra.mxu0 %v4402
  %4729 = vmatmul.bf16.gmra.mxu0 %v3078
  %v4730 = vpop.f32.mrf.mxu0
  %v4731 = vadd.f32 %v4694, %v4730
  %v4732 = vpop.f32.mrf.mxu0
  %v4733 = vadd.f32 %v4696, %v4732
  %4734 = vmatmul.bf16.gmra.mxu0 %v3082
  %v4735 = vpop.f32.mrf.mxu0
  %v4736 = vadd.f32 %v4699, %v4735
  %v4737 = vpop.f32.mrf.mxu0
  %v4738 = vadd.f32 %v4701, %v4737
  %4739 = vmatmul.bf16.gmra.mxu0 %v3086
  %v4740 = vpop.f32.mrf.mxu0
  %v4741 = vadd.f32 %v4704, %v4740
  %v4742 = vpop.f32.mrf.mxu0
  %v4743 = vadd.f32 %v4706, %v4742
  %4744 = vmatmul.bf16.gmra.mxu0 %v3090
  %v4745 = vpop.f32.mrf.mxu0
  %v4746 = vadd.f32 %v4709, %v4745
  %v4747 = vpop.f32.mrf.mxu0
  %v4748 = vadd.f32 %v4711, %v4747
  %4749 = vmatmul.bf16.gmra.mxu0 %v3094
  %v4750 = vpop.f32.mrf.mxu0
  %v4751 = vadd.f32 %v4714, %v4750
  %v4752 = vpop.f32.mrf.mxu0
  %v4753 = vadd.f32 %v4716, %v4752
  %4754 = vmatmul.bf16.gmra.mxu0 %v4111
  %v4755 = vpop.f32.mrf.mxu0
  %v4756 = vpop.f32.mrf.mxu0
  %4757 = vdwg.mxu0
  %4758 = vmatpush.bf16.msra.mxu0 %v4447
  %4759 = vmatpush.bf16.msra.mxu0 %v4444
  %4760 = vmatpush.bf16.msra.mxu0 %v4441
  %4761 = vmatpush.bf16.msra.mxu0 %v4438
  %4762 = vmatpush.bf16.msra.mxu0 %v4435
  %4763 = vmatpush.bf16.msra.mxu0 %v4432
  %4764 = vmatpush.bf16.msra.mxu0 %v4429
  %4765 = vmatpush.bf16.msra.mxu0 %v4426
  %4766 = vmatmul.bf16.gmra.mxu0 %v3079
  %v4767 = vpop.f32.mrf.mxu0
  %v4768 = vadd.f32 %v4731, %v4767
  %v4769 = vpop.f32.mrf.mxu0
  %v4770 = vadd.f32 %v4733, %v4769
  %4771 = vmatmul.bf16.gmra.mxu0 %v3083
  %v4772 = vpop.f32.mrf.mxu0
  %v4773 = vadd.f32 %v4736, %v4772
  %v4774 = vpop.f32.mrf.mxu0
  %v4775 = vadd.f32 %v4738, %v4774
  %4776 = vmatmul.bf16.gmra.mxu0 %v3087
  %v4777 = vpop.f32.mrf.mxu0
  %v4778 = vadd.f32 %v4741, %v4777
  %v4779 = vpop.f32.mrf.mxu0
  %v4780 = vadd.f32 %v4743, %v4779
  %4781 = vmatmul.bf16.gmra.mxu0 %v3091
  %v4782 = vpop.f32.mrf.mxu0
  %v4783 = vadd.f32 %v4746, %v4782
  %v4784 = vpop.f32.mrf.mxu0
  %v4785 = vadd.f32 %v4748, %v4784
  %4786 = vmatmul.bf16.gmra.mxu0 %v3095
  %v4787 = vpop.f32.mrf.mxu0
  %v4788 = vadd.f32 %v4751, %v4787
  %v4789 = vpop.f32.mrf.mxu0
  %v4790 = vadd.f32 %v4753, %v4789
  %4791 = vmatmul.bf16.gmra.mxu0 %v4112
  %v4792 = vpop.f32.mrf.mxu0
  %v4793 = vpop.f32.mrf.mxu0
  %4794 = vdwg.mxu0
  %4795 = vmatpush.bf16.msra.mxu0 0
  %4796 = vmatpush.bf16.msra.mxu0 0
  %4797 = vmatpush.bf16.msra.mxu0 0
  %4798 = vmatpush.bf16.msra.mxu0 0
  %4799 = vmatpush.bf16.msra.mxu0 0
  %4800 = vmatpush.bf16.msra.mxu0 0
  %4801 = vmatpush.bf16.msra.mxu0 %v4453
  %4802 = vmatpush.bf16.msra.mxu0 %v4450
  %4803 = vmatmul.bf16.gmra.mxu0 %v3535
  %v4804 = vpop.f32.mrf.mxu0
  %v4805 = vadd.f32 %v4768, %v4804
  %v4806 = vpop.f32.mrf.mxu0
  %v4807 = vadd.f32 %v4770, %v4806
  %4808 = vmatmul.bf16.gmra.mxu0 %v3538
  %v4809 = vpop.f32.mrf.mxu0
  %v4810 = vadd.f32 %v4773, %v4809
  %v4811 = vpop.f32.mrf.mxu0
  %v4812 = vadd.f32 %v4775, %v4811
  %4813 = vmatmul.bf16.gmra.mxu0 %v3541
  %v4814 = vpop.f32.mrf.mxu0
  %v4815 = vadd.f32 %v4778, %v4814
  %v4816 = vpop.f32.mrf.mxu0
  %v4817 = vadd.f32 %v4780, %v4816
  %4818 = vmatmul.bf16.gmra.mxu0 %v3544
  %v4819 = vpop.f32.mrf.mxu0
  %v4820 = vadd.f32 %v4783, %v4819
  %v4821 = vpop.f32.mrf.mxu0
  %v4822 = vadd.f32 %v4785, %v4821
  %4823 = vmatmul.bf16.gmra.mxu0 %v3547
  %v4824 = vpop.f32.mrf.mxu0
  %v4825 = vadd.f32 %v4788, %v4824
  %v4826 = vpop.f32.mrf.mxu0
  %v4827 = vadd.f32 %v4790, %v4826
  %4828 = vmatmul.bf16.gmra.mxu0 %v4534
  %v4829 = vpop.f32.mrf.mxu0
  %v4830 = vpop.f32.mrf.mxu0
  %4831 = vdwg.mxu0
  %4832 = vmatpush.bf16.msra.mxu0 %v4400
  %4833 = vmatpush.bf16.msra.mxu0 %v4397
  %4834 = vmatpush.bf16.msra.mxu0 %v4394
  %4835 = vmatpush.bf16.msra.mxu0 %v4391
  %4836 = vmatpush.bf16.msra.mxu0 %v4388
  %4837 = vmatpush.bf16.msra.mxu0 %v4385
  %4838 = vmatpush.bf16.msra.mxu0 %v4382
  %4839 = vmatpush.bf16.msra.mxu0 %v4379
  %4840 = vmatmul.bf16.gmra.mxu0 %v3077
  %v4841 = vpop.f32.mrf.mxu0
  %v4842 = vadd.f32 0.0, %v4841
  %v4843 = vpop.f32.mrf.mxu0
  %v4844 = vadd.f32 0.0, %v4843
  %4845 = vmatmul.bf16.gmra.mxu0 %v3081
  %v4846 = vpop.f32.mrf.mxu0
  %v4847 = vadd.f32 0.0, %v4846
  %v4848 = vpop.f32.mrf.mxu0
  %v4849 = vadd.f32 0.0, %v4848
  %4850 = vmatmul.bf16.gmra.mxu0 %v3085
  %v4851 = vpop.f32.mrf.mxu0
  %v4852 = vadd.f32 0.0, %v4851
  %v4853 = vpop.f32.mrf.mxu0
  %v4854 = vadd.f32 0.0, %v4853
  %4855 = vmatmul.bf16.gmra.mxu0 %v3089
  %v4856 = vpop.f32.mrf.mxu0
  %v4857 = vadd.f32 0.0, %v4856
  %v4858 = vpop.f32.mrf.mxu0
  %v4859 = vadd.f32 0.0, %v4858
  %4860 = vmatmul.bf16.gmra.mxu0 %v3093
  %v4861 = vpop.f32.mrf.mxu0
  %v4862 = vadd.f32 0.0, %v4861
  %v4863 = vpop.f32.mrf.mxu0
  %v4864 = vadd.f32 0.0, %v4863
  %4865 = vmatmul.bf16.gmra.mxu0 %v4110
  %v4866 = vpop.f32.mrf.mxu0
  %v4867 = vpop.f32.mrf.mxu0
  %4868 = vdwg.mxu0
  %4869 = vmatpush.bf16.msra.mxu0 %v4424
  %4870 = vmatpush.bf16.msra.mxu0 %v4421
  %4871 = vmatpush.bf16.msra.mxu0 %v4418
  %4872 = vmatpush.bf16.msra.mxu0 %v4415
  %4873 = vmatpush.bf16.msra.mxu0 %v4412
  %4874 = vmatpush.bf16.msra.mxu0 %v4409
  %4875 = vmatpush.bf16.msra.mxu0 %v4406
  %4876 = vmatpush.bf16.msra.mxu0 %v4403
  %4877 = vmatmul.bf16.gmra.mxu0 %v3078
  %v4878 = vpop.f32.mrf.mxu0
  %v4879 = vadd.f32 %v4842, %v4878
  %v4880 = vpop.f32.mrf.mxu0
  %v4881 = vadd.f32 %v4844, %v4880
  %4882 = vmatmul.bf16.gmra.mxu0 %v3082
  %v4883 = vpop.f32.mrf.mxu0
  %v4884 = vadd.f32 %v4847, %v4883
  %v4885 = vpop.f32.mrf.mxu0
  %v4886 = vadd.f32 %v4849, %v4885
  %4887 = vmatmul.bf16.gmra.mxu0 %v3086
  %v4888 = vpop.f32.mrf.mxu0
  %v4889 = vadd.f32 %v4852, %v4888
  %v4890 = vpop.f32.mrf.mxu0
  %v4891 = vadd.f32 %v4854, %v4890
  %4892 = vmatmul.bf16.gmra.mxu0 %v3090
  %v4893 = vpop.f32.mrf.mxu0
  %v4894 = vadd.f32 %v4857, %v4893
  %v4895 = vpop.f32.mrf.mxu0
  %v4896 = vadd.f32 %v4859, %v4895
  %4897 = vmatmul.bf16.gmra.mxu0 %v3094
  %v4898 = vpop.f32.mrf.mxu0
  %v4899 = vadd.f32 %v4862, %v4898
  %v4900 = vpop.f32.mrf.mxu0
  %v4901 = vadd.f32 %v4864, %v4900
  %4902 = vmatmul.bf16.gmra.mxu0 %v4111
  %v4903 = vpop.f32.mrf.mxu0
  %v4904 = vpop.f32.mrf.mxu0
  %4905 = vdwg.mxu0
  %4906 = vmatpush.bf16.msra.mxu0 %v4448
  %4907 = vmatpush.bf16.msra.mxu0 %v4445
  %4908 = vmatpush.bf16.msra.mxu0 %v4442
  %4909 = vmatpush.bf16.msra.mxu0 %v4439
  %4910 = vmatpush.bf16.msra.mxu0 %v4436
  %4911 = vmatpush.bf16.msra.mxu0 %v4433
  %4912 = vmatpush.bf16.msra.mxu0 %v4430
  %4913 = vmatpush.bf16.msra.mxu0 %v4427
  %4914 = vmatmul.bf16.gmra.mxu0 %v3079
  %v4915 = vpop.f32.mrf.mxu0
  %v4916 = vadd.f32 %v4879, %v4915
  %v4917 = vpop.f32.mrf.mxu0
  %v4918 = vadd.f32 %v4881, %v4917
  %4919 = vmatmul.bf16.gmra.mxu0 %v3083
  %v4920 = vpop.f32.mrf.mxu0
  %v4921 = vadd.f32 %v4884, %v4920
  %v4922 = vpop.f32.mrf.mxu0
  %v4923 = vadd.f32 %v4886, %v4922
  %4924 = vmatmul.bf16.gmra.mxu0 %v3087
  %v4925 = vpop.f32.mrf.mxu0
  %v4926 = vadd.f32 %v4889, %v4925
  %v4927 = vpop.f32.mrf.mxu0
  %v4928 = vadd.f32 %v4891, %v4927
  %4929 = vmatmul.bf16.gmra.mxu0 %v3091
  %v4930 = vpop.f32.mrf.mxu0
  %v4931 = vadd.f32 %v4894, %v4930
  %v4932 = vpop.f32.mrf.mxu0
  %v4933 = vadd.f32 %v4896, %v4932
  %4934 = vmatmul.bf16.gmra.mxu0 %v3095
  %v4935 = vpop.f32.mrf.mxu0
  %v4936 = vadd.f32 %v4899, %v4935
  %v4937 = vpop.f32.mrf.mxu0
  %v4938 = vadd.f32 %v4901, %v4937
  %4939 = vmatmul.bf16.gmra.mxu0 %v4112
  %v4940 = vpop.f32.mrf.mxu0
  %v4941 = vpop.f32.mrf.mxu0
  %4942 = vdwg.mxu0
  %4943 = vmatpush.bf16.msra.mxu0 0
  %4944 = vmatpush.bf16.msra.mxu0 0
  %4945 = vmatpush.bf16.msra.mxu0 0
  %4946 = vmatpush.bf16.msra.mxu0 0
  %4947 = vmatpush.bf16.msra.mxu0 0
  %4948 = vmatpush.bf16.msra.mxu0 0
  %4949 = vmatpush.bf16.msra.mxu0 %v4454
  %4950 = vmatpush.bf16.msra.mxu0 %v4451
  %4951 = vmatmul.bf16.gmra.mxu0 %v3535
  %v4952 = vpop.f32.mrf.mxu0
  %v4953 = vadd.f32 %v4916, %v4952
  %v4954 = vpop.f32.mrf.mxu0
  %v4955 = vadd.f32 %v4918, %v4954
  %4956 = vmatmul.bf16.gmra.mxu0 %v3538
  %v4957 = vpop.f32.mrf.mxu0
  %v4958 = vadd.f32 %v4921, %v4957
  %v4959 = vpop.f32.mrf.mxu0
  %v4960 = vadd.f32 %v4923, %v4959
  %4961 = vmatmul.bf16.gmra.mxu0 %v3541
  %v4962 = vpop.f32.mrf.mxu0
  %v4963 = vadd.f32 %v4926, %v4962
  %v4964 = vpop.f32.mrf.mxu0
  %v4965 = vadd.f32 %v4928, %v4964
  %4966 = vmatmul.bf16.gmra.mxu0 %v3544
  %v4967 = vpop.f32.mrf.mxu0
  %v4968 = vadd.f32 %v4931, %v4967
  %v4969 = vpop.f32.mrf.mxu0
  %v4970 = vadd.f32 %v4933, %v4969
  %4971 = vmatmul.bf16.gmra.mxu0 %v3547
  %v4972 = vpop.f32.mrf.mxu0
  %v4973 = vadd.f32 %v4936, %v4972
  %v4974 = vpop.f32.mrf.mxu0
  %v4975 = vadd.f32 %v4938, %v4974
  %4976 = vmatmul.bf16.gmra.mxu0 %v4534
  %v4977 = vpop.f32.mrf.mxu0
  %v4978 = vpop.f32.mrf.mxu0
  %4979 = vdwg.mxu0
  %v4980 = vadd.f32 %v3670, %v4657
  %v4981 = vadd.f32 %v3818, %v4805
  %v4982 = vadd.f32 %v3966, %v4953
  %v4983 = vadd.f32 %v3672, %v4659
  %v4984 = vadd.f32 %v3820, %v4807
  %v4985 = vadd.f32 %v3968, %v4955
  %v4986 = vadd.f32 %v3675, %v4662
  %v4987 = vadd.f32 %v3823, %v4810
  %v4988 = vadd.f32 %v3971, %v4958
  %v4989 = vadd.f32 %v3677, %v4664
  %v4990 = vadd.f32 %v3825, %v4812
  %v4991 = vadd.f32 %v3973, %v4960
  %v4992 = vadd.f32 %v3680, %v4667
  %v4993 = vadd.f32 %v3828, %v4815
  %v4994 = vadd.f32 %v3976, %v4963
  %v4995 = vadd.f32 %v3682, %v4669
  %v4996 = vadd.f32 %v3830, %v4817
  %v4997 = vadd.f32 %v3978, %v4965
  %v4998 = vadd.f32 %v3685, %v4672
  %v4999 = vadd.f32 %v3833, %v4820
  %v5000 = vadd.f32 %v3981, %v4968
  %v5001 = vadd.f32 %v3687, %v4674
  %v5002 = vadd.f32 %v3835, %v4822
  %v5003 = vadd.f32 %v3983, %v4970
  %v5004 = vadd.f32 %v3690, %v4677
  %v5005 = vadd.f32 %v3838, %v4825
  %v5006 = vadd.f32 %v3986, %v4973
  %v5007 = vadd.f32 %v3692, %v4679
  %v5008 = vadd.f32 %v3840, %v4827
  %v5009 = vadd.f32 %v3988, %v4975
  %v5010 = vld [vmem:[%s4] sm:$0x7]
  %v5012 = vperm.slane %v5010, 0
  %v5013 = vperm.slane %v5010, 1
  %v5014 = vperm.slane %v5010, 2
  %v5018 = vadd.f32 %v4980, %v5012
  %v5019 = vadd.f32 %v4981, %v5013
  %v5020 = vadd.f32 %v4982, %v5014
  %v5021 = vadd.f32 %v4983, %v5012
  %v5022 = vadd.f32 %v4984, %v5013
  %v5023 = vadd.f32 %v4985, %v5014
  %v5024 = vadd.f32 %v4986, %v5012
  %v5025 = vadd.f32 %v4987, %v5013
  %v5026 = vadd.f32 %v4988, %v5014
  %v5027 = vadd.f32 %v4989, %v5012
  %v5028 = vadd.f32 %v4990, %v5013
  %v5029 = vadd.f32 %v4991, %v5014
  %v5030 = vadd.f32 %v4992, %v5012
  %v5031 = vadd.f32 %v4993, %v5013
  %v5032 = vadd.f32 %v4994, %v5014
  %v5033 = vadd.f32 %v4995, %v5012
  %v5034 = vadd.f32 %v4996, %v5013
  %v5035 = vadd.f32 %v4997, %v5014
  %v5036 = vadd.f32 %v4998, %v5012
  %v5037 = vadd.f32 %v4999, %v5013
  %v5038 = vadd.f32 %v5000, %v5014
  %v5039 = vadd.f32 %v5001, %v5012
  %v5040 = vadd.f32 %v5002, %v5013
  %v5041 = vadd.f32 %v5003, %v5014
  %v5042 = vadd.f32 %v5004, %v5012
  %v5043 = vadd.f32 %v5005, %v5013
  %v5044 = vadd.f32 %v5006, %v5014
  %v5045 = vadd.f32 %v5007, %v5012
  %v5046 = vadd.f32 %v5008, %v5013
  %v5047 = vadd.f32 %v5009, %v5014
  %v5048 = vmax.f32 %v5018, 0.0
  %v5049 = vmax.f32 %v5019, 0.0
  %v5050 = vmax.f32 %v5020, 0.0
  %v5051 = vmax.f32 %v5021, 0.0
  %v5052 = vmax.f32 %v5022, 0.0
  %v5053 = vmax.f32 %v5023, 0.0
  %v5054 = vmax.f32 %v5024, 0.0
  %v5055 = vmax.f32 %v5025, 0.0
  %v5056 = vmax.f32 %v5026, 0.0
  %v5057 = vmax.f32 %v5027, 0.0
  %v5058 = vmax.f32 %v5028, 0.0
  %v5059 = vmax.f32 %v5029, 0.0
  %v5060 = vmax.f32 %v5030, 0.0
  %v5061 = vmax.f32 %v5031, 0.0
  %v5062 = vmax.f32 %v5032, 0.0
  %v5063 = vmax.f32 %v5033, 0.0
  %v5064 = vmax.f32 %v5034, 0.0
  %v5065 = vmax.f32 %v5035, 0.0
  %v5066 = vmax.f32 %v5036, 0.0
  %v5067 = vmax.f32 %v5037, 0.0
  %v5068 = vmax.f32 %v5038, 0.0
  %v5069 = vmax.f32 %v5039, 0.0
  %v5070 = vmax.f32 %v5040, 0.0
  %v5071 = vmax.f32 %v5041, 0.0
  %v5072 = vmax.f32 %v5042, 0.0
  %v5073 = vmax.f32 %v5043, 0.0
  %v5074 = vmax.f32 %v5044, 0.0
  %v5075 = vmax.f32 %v5045, 0.0
  %v5076 = vmax.f32 %v5046, 0.0
  %v5077 = vmax.f32 %v5047, 0.0
  %v5078 = vpack.c.bf16 %v5049, %v5048
  %v5079 = vpack.c.bf16 %v5050, %v5050
  %v5080 = vpack.c.bf16 %v5052, %v5051
  %v5081 = vpack.c.bf16 %v5053, %v5053
  %v5082 = vpack.c.bf16 %v5055, %v5054
  %v5083 = vpack.c.bf16 %v5056, %v5056
  %v5084 = vpack.c.bf16 %v5058, %v5057
  %v5085 = vpack.c.bf16 %v5059, %v5059
  %v5086 = vpack.c.bf16 %v5061, %v5060
  %v5087 = vpack.c.bf16 %v5062, %v5062
  %v5088 = vpack.c.bf16 %v5064, %v5063
  %v5089 = vpack.c.bf16 %v5065, %v5065
  %v5090 = vpack.c.bf16 %v5067, %v5066
  %v5091 = vpack.c.bf16 %v5068, %v5068
  %v5092 = vpack.c.bf16 %v5070, %v5069
  %v5093 = vpack.c.bf16 %v5071, %v5071
  %v5094 = vpack.c.bf16 %v5073, %v5072
  %v5095 = vpack.c.bf16 %v5074, %v5074
  %v5096 = vpack.c.bf16 %v5076, %v5075
  %v5097 = vpack.c.bf16 %v5077, %v5077
  %v5098 = vld [vmem:[%s5] sm:$0xff]
  %v5099 = vld [vmem:[%s5 + $0x8] sm:$0xff]
  %v5100 = vld [vmem:[%s5 + $0x10] sm:$0xff]
  %v5101 = vld [vmem:[%s5 + $0x18] sm:$0xff]
  %v5102 = vld [vmem:[%s5 + $0x20] sm:$0xff]
  %v5103 = vld [vmem:[%s5 + $0x28] sm:$0xff]
  %v5104 = vld [vmem:[%s5 + $0x30] sm:$0xff]
  %v5105 = vld [vmem:[%s5 + $0x38] sm:$0xff]
  %v5106 = vld [vmem:[%s5 + $0x40] sm:$0xff]
  %v5107 = vld [vmem:[%s5 + $0x48] sm:$0xff]
  %v5108 = vld [vmem:[%s5 + $0x50] sm:$0xff]
  %v5109 = vld [vmem:[%s5 + $0x58] sm:$0xff]
  %v5110 = vld [vmem:[%s5 + $0x60] sm:$0xff]
  %v5111 = vld [vmem:[%s5 + $0x68] sm:$0xff]
  %v5112 = vld [vmem:[%s5 + $0x70] sm:$0xff]
  %v5113 = vld [vmem:[%s5 + $0x78] sm:$0xff]
  %v5114 = vld [vmem:[%s5 + $0x80] sm:$0xff]
  %v5115 = vld [vmem:[%s5 + $0x88] sm:$0xff]
  %v5116 = vld [vmem:[%s5 + $0x90] sm:$0xff]
  %v5117 = vld [vmem:[%s5 + $0x98] sm:$0xff]
  %v5118 = vld [vmem:[%s5 + $0xa0] sm:$0xff]
  %v5119 = vld [vmem:[%s5 + $0xa8] sm:$0xff]
  %v5120 = vld [vmem:[%s5 + $0xb0] sm:$0xff]
  %v5121 = vld [vmem:[%s5 + $0xb8] sm:$0xff]
  %v5122 = vld [vmem:[%s5 + $0xc0] sm:$0xff]
  %v5123 = vld [vmem:[%s5 + $0xc8] sm:$0xff]
  %v5124 = vld [vmem:[%s5 + $0xd0] sm:$0xff]
  %v5125 = vld [vmem:[%s5 + $0xd8] sm:$0xff]
  %v5126 = vld [vmem:[%s5 + $0xe0] sm:$0xff]
  %v5127 = vld [vmem:[%s5 + $0xe8] sm:$0xff]
  %v5128 = vld [vmem:[%s5 + $0xf0] sm:$0xff]
  %v5129 = vld [vmem:[%s5 + $0xf8] sm:$0xff]
  %v5130 = vld [vmem:[%s5 + $0x100] sm:$0xff]
  %v5131 = vld [vmem:[%s5 + $0x108] sm:$0xff]
  %v5132 = vld [vmem:[%s5 + $0x110] sm:$0xff]
  %v5133 = vld [vmem:[%s5 + $0x118] sm:$0xff]
  %v5134 = vld [vmem:[%s5 + $0x120] sm:$0xff]
  %v5135 = vld [vmem:[%s5 + $0x128] sm:$0xff]
  %v5136 = vld [vmem:[%s5 + $0x130] sm:$0xff]
  %v5137 = vld [vmem:[%s5 + $0x138] sm:$0xff]
  %v5138 = vld [vmem:[%s5 + $0x140] sm:$0xff]
  %v5139 = vld [vmem:[%s5 + $0x148] sm:$0xff]
  %v5140 = vld [vmem:[%s5 + $0x150] sm:$0xff]
  %v5141 = vld [vmem:[%s5 + $0x158] sm:$0xff]
  %v5142 = vld [vmem:[%s5 + $0x160] sm:$0xff]
  %v5143 = vld [vmem:[%s5 + $0x168] sm:$0xff]
  %v5144 = vld [vmem:[%s5 + $0x170] sm:$0xff]
  %v5145 = vld [vmem:[%s5 + $0x178] sm:$0xff]
  %s5146 = scalar_lea.vmem %s5, 384
  %v5147 = vld [vmem:[%s5146] sm:$0xff]
  %v5148 = vld [vmem:[%s5146 + $0x8] sm:$0xff]
  %v5149 = vld [vmem:[%s5146 + $0x10] sm:$0xff]
  %v5150 = vld [vmem:[%s5146 + $0x18] sm:$0xff]
  %v5151 = vld [vmem:[%s5146 + $0x20] sm:$0xff]
  %v5152 = vld [vmem:[%s5146 + $0x28] sm:$0xff]
  %v5153 = vld [vmem:[%s5146 + $0x30] sm:$0xff]
  %v5154 = vld [vmem:[%s5146 + $0x38] sm:$0xff]
  %v5155 = vld [vmem:[%s5146 + $0x40] sm:$0xff]
  %v5156 = vld [vmem:[%s5146 + $0x48] sm:$0xff]
  %v5157 = vld [vmem:[%s5146 + $0x50] sm:$0xff]
  %v5158 = vld [vmem:[%s5146 + $0x58] sm:$0xff]
  %v5159 = vld [vmem:[%s5146 + $0x60] sm:$0xff]
  %v5160 = vld [vmem:[%s5146 + $0x68] sm:$0xff]
  %v5161 = vld [vmem:[%s5146 + $0x70] sm:$0xff]
  %v5162 = vld [vmem:[%s5146 + $0x78] sm:$0xff]
  %v5163 = vld [vmem:[%s5146 + $0x80] sm:$0xff]
  %v5164 = vld [vmem:[%s5146 + $0x88] sm:$0xff]
  %v5165 = vld [vmem:[%s5146 + $0x90] sm:$0xff]
  %v5166 = vld [vmem:[%s5146 + $0x98] sm:$0xff]
  %v5167 = vld [vmem:[%s5146 + $0xa0] sm:$0xff]
  %v5168 = vld [vmem:[%s5146 + $0xa8] sm:$0xff]
  %v5169 = vld [vmem:[%s5146 + $0xb0] sm:$0xff]
  %v5170 = vld [vmem:[%s5146 + $0xb8] sm:$0xff]
  %v5171 = vld [vmem:[%s5146 + $0xc0] sm:$0xff]
  %v5172 = vld [vmem:[%s5146 + $0xc8] sm:$0xff]
  %v5173 = vld [vmem:[%s5146 + $0xd0] sm:$0xff]
  %v5174 = vld [vmem:[%s5146 + $0xd8] sm:$0xff]
  %v5175 = vld [vmem:[%s5146 + $0xe0] sm:$0xff]
  %v5176 = vld [vmem:[%s5146 + $0xe8] sm:$0xff]
  %v5177 = vld [vmem:[%s5146 + $0xf0] sm:$0xff]
  %v5178 = vld [vmem:[%s5146 + $0xf8] sm:$0xff]
  %v5179 = vld [vmem:[%s5146 + $0x100] sm:$0xff]
  %v5180 = vld [vmem:[%s5146 + $0x108] sm:$0xff]
  %v5181 = vld [vmem:[%s5146 + $0x110] sm:$0xff]
  %v5182 = vld [vmem:[%s5146 + $0x118] sm:$0xff]
  %v5183 = vld [vmem:[%s5146 + $0x120] sm:$0xff]
  %v5184 = vld [vmem:[%s5146 + $0x128] sm:$0xff]
  %v5185 = vld [vmem:[%s5146 + $0x130] sm:$0xff]
  %v5186 = vld [vmem:[%s5146 + $0x138] sm:$0xff]
  %v5187 = vld [vmem:[%s5146 + $0x140] sm:$0xff]
  %v5188 = vld [vmem:[%s5146 + $0x148] sm:$0xff]
  %v5189 = vld [vmem:[%s5146 + $0x150] sm:$0xff]
  %v5190 = vld [vmem:[%s5146 + $0x158] sm:$0xff]
  %v5191 = vld [vmem:[%s5146 + $0x160] sm:$0xff]
  %v5192 = vld [vmem:[%s5146 + $0x168] sm:$0xff]
  %v5193 = vld [vmem:[%s5146 + $0x170] sm:$0xff]
  %v5194 = vld [vmem:[%s5146 + $0x178] sm:$0xff]
  %v5203 = vunpack.c.l.b16 %v5082
  %v5204 = vunpack.c.h.b16 %v5082
  %v5205 = vunpack.c.l.b16 %v5083
  %v5206 = vunpack.c.l.b16 %v5084
  %v5207 = vunpack.c.h.b16 %v5084
  %v5208 = vunpack.c.l.b16 %v5085
  %v5209 = vunpack.c.l.b16 %v5090
  %v5210 = vunpack.c.h.b16 %v5090
  %v5211 = vunpack.c.l.b16 %v5091
  %v5212 = vunpack.c.l.b16 %v5092
  %v5213 = vunpack.c.h.b16 %v5092
  %v5214 = vunpack.c.l.b16 %v5093
  %v5215 = vpack.c.b16 %v5206, %v5203
  %v5216 = vpack.c.b16 %v5207, %v5204
  %v5217 = vpack.c.b16 %v5208, %v5205
  %v5218 = vpack.c.b16 %v5212, %v5209
  %v5219 = vpack.c.b16 %v5213, %v5210
  %v5220 = vpack.c.b16 %v5214, %v5211
  %v5275 = vunpack.c.l.b16 %v5147
  %v5276 = vunpack.c.h.b16 %v5147
  %v5277 = vunpack.c.l.b16 %v5148
  %v5278 = vunpack.c.h.b16 %v5148
  %v5279 = vunpack.c.l.b16 %v5149
  %v5280 = vunpack.c.h.b16 %v5149
  %v5281 = vunpack.c.l.b16 %v5150
  %v5282 = vunpack.c.h.b16 %v5150
  %v5283 = vunpack.c.l.b16 %v5151
  %v5284 = vunpack.c.h.b16 %v5151
  %v5285 = vunpack.c.l.b16 %v5152
  %v5286 = vunpack.c.h.b16 %v5152
  %v5287 = vunpack.c.l.b16 %v5153
  %v5288 = vunpack.c.h.b16 %v5153
  %v5289 = vunpack.c.l.b16 %v5154
  %v5290 = vunpack.c.h.b16 %v5154
  %v5291 = vunpack.c.l.b16 %v5155
  %v5292 = vunpack.c.h.b16 %v5155
  %v5293 = vunpack.c.l.b16 %v5156
  %v5294 = vunpack.c.h.b16 %v5156
  %v5295 = vunpack.c.l.b16 %v5157
  %v5296 = vunpack.c.h.b16 %v5157
  %v5297 = vunpack.c.l.b16 %v5158
  %v5298 = vunpack.c.h.b16 %v5158
  %v5299 = vunpack.c.l.b16 %v5159
  %v5300 = vunpack.c.h.b16 %v5159
  %v5301 = vunpack.c.l.b16 %v5160
  %v5302 = vunpack.c.h.b16 %v5160
  %v5303 = vunpack.c.l.b16 %v5161
  %v5304 = vunpack.c.h.b16 %v5161
  %v5305 = vunpack.c.l.b16 %v5162
  %v5306 = vunpack.c.h.b16 %v5162
  %v5307 = vunpack.c.l.b16 %v5163
  %v5308 = vunpack.c.h.b16 %v5163
  %v5309 = vunpack.c.l.b16 %v5164
  %v5310 = vunpack.c.h.b16 %v5164
  %v5311 = vunpack.c.l.b16 %v5165
  %v5312 = vunpack.c.h.b16 %v5165
  %v5313 = vunpack.c.l.b16 %v5166
  %v5314 = vunpack.c.h.b16 %v5166
  %v5315 = vunpack.c.l.b16 %v5167
  %v5316 = vunpack.c.h.b16 %v5167
  %v5317 = vunpack.c.l.b16 %v5168
  %v5318 = vunpack.c.h.b16 %v5168
  %v5319 = vunpack.c.l.b16 %v5169
  %v5320 = vunpack.c.h.b16 %v5169
  %v5321 = vunpack.c.l.b16 %v5170
  %v5322 = vunpack.c.h.b16 %v5170
  %v5323 = vunpack.c.l.b16 %v5171
  %v5324 = vunpack.c.h.b16 %v5171
  %v5325 = vunpack.c.l.b16 %v5172
  %v5326 = vunpack.c.h.b16 %v5172
  %v5327 = vunpack.c.l.b16 %v5173
  %v5328 = vunpack.c.h.b16 %v5173
  %v5329 = vunpack.c.l.b16 %v5174
  %v5330 = vunpack.c.h.b16 %v5174
  %v5331 = vunpack.c.l.b16 %v5175
  %v5332 = vunpack.c.h.b16 %v5175
  %v5333 = vunpack.c.l.b16 %v5176
  %v5334 = vunpack.c.h.b16 %v5176
  %v5335 = vunpack.c.l.b16 %v5177
  %v5336 = vunpack.c.h.b16 %v5177
  %v5337 = vunpack.c.l.b16 %v5178
  %v5338 = vunpack.c.h.b16 %v5178
  %v5339 = vunpack.c.l.b16 %v5179
  %v5340 = vunpack.c.h.b16 %v5179
  %v5341 = vunpack.c.l.b16 %v5180
  %v5342 = vunpack.c.h.b16 %v5180
  %v5343 = vunpack.c.l.b16 %v5181
  %v5344 = vunpack.c.h.b16 %v5181
  %v5345 = vunpack.c.l.b16 %v5182
  %v5346 = vunpack.c.h.b16 %v5182
  %v5347 = vunpack.c.l.b16 %v5183
  %v5348 = vunpack.c.h.b16 %v5183
  %v5349 = vunpack.c.l.b16 %v5184
  %v5350 = vunpack.c.h.b16 %v5184
  %v5351 = vunpack.c.l.b16 %v5185
  %v5352 = vunpack.c.h.b16 %v5185
  %v5353 = vunpack.c.l.b16 %v5186
  %v5354 = vunpack.c.h.b16 %v5186
  %v5355 = vunpack.c.l.b16 %v5187
  %v5356 = vunpack.c.h.b16 %v5187
  %v5357 = vunpack.c.l.b16 %v5188
  %v5358 = vunpack.c.h.b16 %v5188
  %v5359 = vunpack.c.l.b16 %v5189
  %v5360 = vunpack.c.h.b16 %v5189
  %v5361 = vunpack.c.l.b16 %v5190
  %v5362 = vunpack.c.h.b16 %v5190
  %v5363 = vunpack.c.l.b16 %v5191
  %v5364 = vunpack.c.h.b16 %v5191
  %v5365 = vunpack.c.l.b16 %v5192
  %v5366 = vunpack.c.h.b16 %v5192
  %v5367 = vunpack.c.l.b16 %v5193
  %v5368 = vunpack.c.h.b16 %v5193
  %v5369 = vunpack.c.l.b16 %v5194
  %v5370 = vunpack.c.h.b16 %v5194
  %v5371 = vpack.c.b16 %v5277, %v5275
  %v5372 = vpack.c.b16 %v5278, %v5276
  %v5373 = vpack.c.b16 %v5281, %v5279
  %v5374 = vpack.c.b16 %v5282, %v5280
  %v5375 = vpack.c.b16 %v5285, %v5283
  %v5376 = vpack.c.b16 %v5286, %v5284
  %v5377 = vpack.c.b16 %v5289, %v5287
  %v5378 = vpack.c.b16 %v5290, %v5288
  %v5379 = vpack.c.b16 %v5293, %v5291
  %v5380 = vpack.c.b16 %v5294, %v5292
  %v5381 = vpack.c.b16 %v5297, %v5295
  %v5382 = vpack.c.b16 %v5298, %v5296
  %v5383 = vpack.c.b16 %v5301, %v5299
  %v5384 = vpack.c.b16 %v5302, %v5300
  %v5385 = vpack.c.b16 %v5305, %v5303
  %v5386 = vpack.c.b16 %v5306, %v5304
  %v5387 = vpack.c.b16 %v5309, %v5307
  %v5388 = vpack.c.b16 %v5310, %v5308
  %v5389 = vpack.c.b16 %v5313, %v5311
  %v5390 = vpack.c.b16 %v5314, %v5312
  %v5391 = vpack.c.b16 %v5317, %v5315
  %v5392 = vpack.c.b16 %v5318, %v5316
  %v5393 = vpack.c.b16 %v5321, %v5319
  %v5394 = vpack.c.b16 %v5322, %v5320
  %v5395 = vpack.c.b16 %v5325, %v5323
  %v5396 = vpack.c.b16 %v5326, %v5324
  %v5397 = vpack.c.b16 %v5329, %v5327
  %v5398 = vpack.c.b16 %v5330, %v5328
  %v5399 = vpack.c.b16 %v5333, %v5331
  %v5400 = vpack.c.b16 %v5334, %v5332
  %v5401 = vpack.c.b16 %v5337, %v5335
  %v5402 = vpack.c.b16 %v5338, %v5336
  %v5403 = vpack.c.b16 %v5341, %v5339
  %v5404 = vpack.c.b16 %v5342, %v5340
  %v5405 = vpack.c.b16 %v5345, %v5343
  %v5406 = vpack.c.b16 %v5346, %v5344
  %v5407 = vpack.c.b16 %v5349, %v5347
  %v5408 = vpack.c.b16 %v5350, %v5348
  %v5409 = vpack.c.b16 %v5353, %v5351
  %v5410 = vpack.c.b16 %v5354, %v5352
  %v5411 = vpack.c.b16 %v5357, %v5355
  %v5412 = vpack.c.b16 %v5358, %v5356
  %v5413 = vpack.c.b16 %v5361, %v5359
  %v5414 = vpack.c.b16 %v5362, %v5360
  %v5415 = vpack.c.b16 %v5365, %v5363
  %v5416 = vpack.c.b16 %v5366, %v5364
  %v5417 = vpack.c.b16 %v5369, %v5367
  %v5418 = vpack.c.b16 %v5370, %v5368
  %5467 = vmatpush.bf16.msra.mxu0 %v5385
  %5468 = vmatpush.bf16.msra.mxu0 %v5383
  %5469 = vmatpush.bf16.msra.mxu0 %v5381
  %5470 = vmatpush.bf16.msra.mxu0 %v5379
  %5471 = vmatpush.bf16.msra.mxu0 %v5377
  %5472 = vmatpush.bf16.msra.mxu0 %v5375
  %5473 = vmatpush.bf16.msra.mxu0 %v5373
  %5474 = vmatpush.bf16.msra.mxu0 %v5371
  %5475 = vmatmul.bf16.gmra.mxu0 %v5215
  %v5476 = vpop.f32.mrf.mxu0
  %v5477 = vadd.f32 0.0, %v5476
  %v5478 = vpop.f32.mrf.mxu0
  %v5479 = vadd.f32 0.0, %v5478
  %5480 = vmatmul.bf16.gmra.mxu0 %v5218
  %v5481 = vpop.f32.mrf.mxu0
  %v5482 = vadd.f32 0.0, %v5481
  %v5483 = vpop.f32.mrf.mxu0
  %v5484 = vadd.f32 0.0, %v5483
  %5485 = vdwg.mxu0
  %5486 = vmatpush.bf16.msra.mxu0 %v5401
  %5487 = vmatpush.bf16.msra.mxu0 %v5399
  %5488 = vmatpush.bf16.msra.mxu0 %v5397
  %5489 = vmatpush.bf16.msra.mxu0 %v5395
  %5490 = vmatpush.bf16.msra.mxu0 %v5393
  %5491 = vmatpush.bf16.msra.mxu0 %v5391
  %5492 = vmatpush.bf16.msra.mxu0 %v5389
  %5493 = vmatpush.bf16.msra.mxu0 %v5387
  %5494 = vmatmul.bf16.gmra.mxu0 %v5216
  %v5495 = vpop.f32.mrf.mxu0
  %v5496 = vadd.f32 %v5477, %v5495
  %v5497 = vpop.f32.mrf.mxu0
  %v5498 = vadd.f32 %v5479, %v5497
  %5499 = vmatmul.bf16.gmra.mxu0 %v5219
  %v5500 = vpop.f32.mrf.mxu0
  %v5501 = vadd.f32 %v5482, %v5500
  %v5502 = vpop.f32.mrf.mxu0
  %v5503 = vadd.f32 %v5484, %v5502
  %5504 = vdwg.mxu0
  %5505 = vmatpush.bf16.msra.mxu0 %v5417
  %5506 = vmatpush.bf16.msra.mxu0 %v5415
  %5507 = vmatpush.bf16.msra.mxu0 %v5413
  %5508 = vmatpush.bf16.msra.mxu0 %v5411
  %5509 = vmatpush.bf16.msra.mxu0 %v5409
  %5510 = vmatpush.bf16.msra.mxu0 %v5407
  %5511 = vmatpush.bf16.msra.mxu0 %v5405
  %5512 = vmatpush.bf16.msra.mxu0 %v5403
  %5513 = vmatmul.bf16.gmra.mxu0 %v5217
  %v5514 = vpop.f32.mrf.mxu0
  %v5515 = vadd.f32 %v5496, %v5514
  %v5516 = vpop.f32.mrf.mxu0
  %v5517 = vadd.f32 %v5498, %v5516
  %5518 = vmatmul.bf16.gmra.mxu0 %v5220
  %v5519 = vpop.f32.mrf.mxu0
  %v5520 = vadd.f32 %v5501, %v5519
  %v5521 = vpop.f32.mrf.mxu0
  %v5522 = vadd.f32 %v5503, %v5521
  %5523 = vdwg.mxu0
  %5524 = vmatpush.bf16.msra.mxu0 %v5386
  %5525 = vmatpush.bf16.msra.mxu0 %v5384
  %5526 = vmatpush.bf16.msra.mxu0 %v5382
  %5527 = vmatpush.bf16.msra.mxu0 %v5380
  %5528 = vmatpush.bf16.msra.mxu0 %v5378
  %5529 = vmatpush.bf16.msra.mxu0 %v5376
  %5530 = vmatpush.bf16.msra.mxu0 %v5374
  %5531 = vmatpush.bf16.msra.mxu0 %v5372
  %5532 = vmatmul.bf16.gmra.mxu0 %v5215
  %v5533 = vpop.f32.mrf.mxu0
  %v5534 = vadd.f32 0.0, %v5533
  %v5535 = vpop.f32.mrf.mxu0
  %v5536 = vadd.f32 0.0, %v5535
  %5537 = vmatmul.bf16.gmra.mxu0 %v5218
  %v5538 = vpop.f32.mrf.mxu0
  %v5539 = vadd.f32 0.0, %v5538
  %v5540 = vpop.f32.mrf.mxu0
  %v5541 = vadd.f32 0.0, %v5540
  %5542 = vdwg.mxu0
  %5543 = vmatpush.bf16.msra.mxu0 %v5402
  %5544 = vmatpush.bf16.msra.mxu0 %v5400
  %5545 = vmatpush.bf16.msra.mxu0 %v5398
  %5546 = vmatpush.bf16.msra.mxu0 %v5396
  %5547 = vmatpush.bf16.msra.mxu0 %v5394
  %5548 = vmatpush.bf16.msra.mxu0 %v5392
  %5549 = vmatpush.bf16.msra.mxu0 %v5390
  %5550 = vmatpush.bf16.msra.mxu0 %v5388
  %5551 = vmatmul.bf16.gmra.mxu0 %v5216
  %v5552 = vpop.f32.mrf.mxu0
  %v5553 = vadd.f32 %v5534, %v5552
  %v5554 = vpop.f32.mrf.mxu0
  %v5555 = vadd.f32 %v5536, %v5554
  %5556 = vmatmul.bf16.gmra.mxu0 %v5219
  %v5557 = vpop.f32.mrf.mxu0
  %v5558 = vadd.f32 %v5539, %v5557
  %v5559 = vpop.f32.mrf.mxu0
  %v5560 = vadd.f32 %v5541, %v5559
  %5561 = vdwg.mxu0
  %5562 = vmatpush.bf16.msra.mxu0 %v5418
  %5563 = vmatpush.bf16.msra.mxu0 %v5416
  %5564 = vmatpush.bf16.msra.mxu0 %v5414
  %5565 = vmatpush.bf16.msra.mxu0 %v5412
  %5566 = vmatpush.bf16.msra.mxu0 %v5410
  %5567 = vmatpush.bf16.msra.mxu0 %v5408
  %5568 = vmatpush.bf16.msra.mxu0 %v5406
  %5569 = vmatpush.bf16.msra.mxu0 %v5404
  %5570 = vmatmul.bf16.gmra.mxu0 %v5217
  %v5571 = vpop.f32.mrf.mxu0
  %v5572 = vadd.f32 %v5553, %v5571
  %v5573 = vpop.f32.mrf.mxu0
  %v5574 = vadd.f32 %v5555, %v5573
  %5575 = vmatmul.bf16.gmra.mxu0 %v5220
  %v5576 = vpop.f32.mrf.mxu0
  %v5577 = vadd.f32 %v5558, %v5576
  %v5578 = vpop.f32.mrf.mxu0
  %v5579 = vadd.f32 %v5560, %v5578
  %5580 = vdwg.mxu0
  %v5589 = vunpack.c.l.b16 %v5078
  %v5590 = vunpack.c.h.b16 %v5078
  %v5591 = vunpack.c.l.b16 %v5079
  %v5592 = vunpack.c.l.b16 %v5080
  %v5593 = vunpack.c.h.b16 %v5080
  %v5594 = vunpack.c.l.b16 %v5081
  %v5595 = vunpack.c.l.b16 %v5086
  %v5596 = vunpack.c.h.b16 %v5086
  %v5597 = vunpack.c.l.b16 %v5087
  %v5598 = vunpack.c.l.b16 %v5088
  %v5599 = vunpack.c.h.b16 %v5088
  %v5600 = vunpack.c.l.b16 %v5089
  %v5601 = vpack.c.b16 %v5592, %v5589
  %v5602 = vpack.c.b16 %v5593, %v5590
  %v5603 = vpack.c.b16 %v5594, %v5591
  %v5604 = vpack.c.b16 %v5598, %v5595
  %v5605 = vpack.c.b16 %v5599, %v5596
  %v5606 = vpack.c.b16 %v5600, %v5597
  %v5661 = vunpack.c.l.b16 %v5098
  %v5662 = vunpack.c.h.b16 %v5098
  %v5663 = vunpack.c.l.b16 %v5099
  %v5664 = vunpack.c.h.b16 %v5099
  %v5665 = vunpack.c.l.b16 %v5100
  %v5666 = vunpack.c.h.b16 %v5100
  %v5667 = vunpack.c.l.b16 %v5101
  %v5668 = vunpack.c.h.b16 %v5101
  %v5669 = vunpack.c.l.b16 %v5102
  %v5670 = vunpack.c.h.b16 %v5102
  %v5671 = vunpack.c.l.b16 %v5103
  %v5672 = vunpack.c.h.b16 %v5103
  %v5673 = vunpack.c.l.b16 %v5104
  %v5674 = vunpack.c.h.b16 %v5104
  %v5675 = vunpack.c.l.b16 %v5105
  %v5676 = vunpack.c.h.b16 %v5105
  %v5677 = vunpack.c.l.b16 %v5106
  %v5678 = vunpack.c.h.b16 %v5106
  %v5679 = vunpack.c.l.b16 %v5107
  %v5680 = vunpack.c.h.b16 %v5107
  %v5681 = vunpack.c.l.b16 %v5108
  %v5682 = vunpack.c.h.b16 %v5108
  %v5683 = vunpack.c.l.b16 %v5109
  %v5684 = vunpack.c.h.b16 %v5109
  %v5685 = vunpack.c.l.b16 %v5110
  %v5686 = vunpack.c.h.b16 %v5110
  %v5687 = vunpack.c.l.b16 %v5111
  %v5688 = vunpack.c.h.b16 %v5111
  %v5689 = vunpack.c.l.b16 %v5112
  %v5690 = vunpack.c.h.b16 %v5112
  %v5691 = vunpack.c.l.b16 %v5113
  %v5692 = vunpack.c.h.b16 %v5113
  %v5693 = vunpack.c.l.b16 %v5114
  %v5694 = vunpack.c.h.b16 %v5114
  %v5695 = vunpack.c.l.b16 %v5115
  %v5696 = vunpack.c.h.b16 %v5115
  %v5697 = vunpack.c.l.b16 %v5116
  %v5698 = vunpack.c.h.b16 %v5116
  %v5699 = vunpack.c.l.b16 %v5117
  %v5700 = vunpack.c.h.b16 %v5117
  %v5701 = vunpack.c.l.b16 %v5118
  %v5702 = vunpack.c.h.b16 %v5118
  %v5703 = vunpack.c.l.b16 %v5119
  %v5704 = vunpack.c.h.b16 %v5119
  %v5705 = vunpack.c.l.b16 %v5120
  %v5706 = vunpack.c.h.b16 %v5120
  %v5707 = vunpack.c.l.b16 %v5121
  %v5708 = vunpack.c.h.b16 %v5121
  %v5709 = vunpack.c.l.b16 %v5122
  %v5710 = vunpack.c.h.b16 %v5122
  %v5711 = vunpack.c.l.b16 %v5123
  %v5712 = vunpack.c.h.b16 %v5123
  %v5713 = vunpack.c.l.b16 %v5124
  %v5714 = vunpack.c.h.b16 %v5124
  %v5715 = vunpack.c.l.b16 %v5125
  %v5716 = vunpack.c.h.b16 %v5125
  %v5717 = vunpack.c.l.b16 %v5126
  %v5718 = vunpack.c.h.b16 %v5126
  %v5719 = vunpack.c.l.b16 %v5127
  %v5720 = vunpack.c.h.b16 %v5127
  %v5721 = vunpack.c.l.b16 %v5128
  %v5722 = vunpack.c.h.b16 %v5128
  %v5723 = vunpack.c.l.b16 %v5129
  %v5724 = vunpack.c.h.b16 %v5129
  %v5725 = vunpack.c.l.b16 %v5130
  %v5726 = vunpack.c.h.b16 %v5130
  %v5727 = vunpack.c.l.b16 %v5131
  %v5728 = vunpack.c.h.b16 %v5131
  %v5729 = vunpack.c.l.b16 %v5132
  %v5730 = vunpack.c.h.b16 %v5132
  %v5731 = vunpack.c.l.b16 %v5133
  %v5732 = vunpack.c.h.b16 %v5133
  %v5733 = vunpack.c.l.b16 %v5134
  %v5734 = vunpack.c.h.b16 %v5134
  %v5735 = vunpack.c.l.b16 %v5135
  %v5736 = vunpack.c.h.b16 %v5135
  %v5737 = vunpack.c.l.b16 %v5136
  %v5738 = vunpack.c.h.b16 %v5136
  %v5739 = vunpack.c.l.b16 %v5137
  %v5740 = vunpack.c.h.b16 %v5137
  %v5741 = vunpack.c.l.b16 %v5138
  %v5742 = vunpack.c.h.b16 %v5138
  %v5743 = vunpack.c.l.b16 %v5139
  %v5744 = vunpack.c.h.b16 %v5139
  %v5745 = vunpack.c.l.b16 %v5140
  %v5746 = vunpack.c.h.b16 %v5140
  %v5747 = vunpack.c.l.b16 %v5141
  %v5748 = vunpack.c.h.b16 %v5141
  %v5749 = vunpack.c.l.b16 %v5142
  %v5750 = vunpack.c.h.b16 %v5142
  %v5751 = vunpack.c.l.b16 %v5143
  %v5752 = vunpack.c.h.b16 %v5143
  %v5753 = vunpack.c.l.b16 %v5144
  %v5754 = vunpack.c.h.b16 %v5144
  %v5755 = vunpack.c.l.b16 %v5145
  %v5756 = vunpack.c.h.b16 %v5145
  %v5757 = vpack.c.b16 %v5663, %v5661
  %v5758 = vpack.c.b16 %v5664, %v5662
  %v5759 = vpack.c.b16 %v5667, %v5665
  %v5760 = vpack.c.b16 %v5668, %v5666
  %v5761 = vpack.c.b16 %v5671, %v5669
  %v5762 = vpack.c.b16 %v5672, %v5670
  %v5763 = vpack.c.b16 %v5675, %v5673
  %v5764 = vpack.c.b16 %v5676, %v5674
  %v5765 = vpack.c.b16 %v5679, %v5677
  %v5766 = vpack.c.b16 %v5680, %v5678
  %v5767 = vpack.c.b16 %v5683, %v5681
  %v5768 = vpack.c.b16 %v5684, %v5682
  %v5769 = vpack.c.b16 %v5687, %v5685
  %v5770 = vpack.c.b16 %v5688, %v5686
  %v5771 = vpack.c.b16 %v5691, %v5689
  %v5772 = vpack.c.b16 %v5692, %v5690
  %v5773 = vpack.c.b16 %v5695, %v5693
  %v5774 = vpack.c.b16 %v5696, %v5694
  %v5775 = vpack.c.b16 %v5699, %v5697
  %v5776 = vpack.c.b16 %v5700, %v5698
  %v5777 = vpack.c.b16 %v5703, %v5701
  %v5778 = vpack.c.b16 %v5704, %v5702
  %v5779 = vpack.c.b16 %v5707, %v5705
  %v5780 = vpack.c.b16 %v5708, %v5706
  %v5781 = vpack.c.b16 %v5711, %v5709
  %v5782 = vpack.c.b16 %v5712, %v5710
  %v5783 = vpack.c.b16 %v5715, %v5713
  %v5784 = vpack.c.b16 %v5716, %v5714
  %v5785 = vpack.c.b16 %v5719, %v5717
  %v5786 = vpack.c.b16 %v5720, %v5718
  %v5787 = vpack.c.b16 %v5723, %v5721
  %v5788 = vpack.c.b16 %v5724, %v5722
  %v5789 = vpack.c.b16 %v5727, %v5725
  %v5790 = vpack.c.b16 %v5728, %v5726
  %v5791 = vpack.c.b16 %v5731, %v5729
  %v5792 = vpack.c.b16 %v5732, %v5730
  %v5793 = vpack.c.b16 %v5735, %v5733
  %v5794 = vpack.c.b16 %v5736, %v5734
  %v5795 = vpack.c.b16 %v5739, %v5737
  %v5796 = vpack.c.b16 %v5740, %v5738
  %v5797 = vpack.c.b16 %v5743, %v5741
  %v5798 = vpack.c.b16 %v5744, %v5742
  %v5799 = vpack.c.b16 %v5747, %v5745
  %v5800 = vpack.c.b16 %v5748, %v5746
  %v5801 = vpack.c.b16 %v5751, %v5749
  %v5802 = vpack.c.b16 %v5752, %v5750
  %v5803 = vpack.c.b16 %v5755, %v5753
  %v5804 = vpack.c.b16 %v5756, %v5754
  %5853 = vmatpush.bf16.msra.mxu0 %v5771
  %5854 = vmatpush.bf16.msra.mxu0 %v5769
  %5855 = vmatpush.bf16.msra.mxu0 %v5767
  %5856 = vmatpush.bf16.msra.mxu0 %v5765
  %5857 = vmatpush.bf16.msra.mxu0 %v5763
  %5858 = vmatpush.bf16.msra.mxu0 %v5761
  %5859 = vmatpush.bf16.msra.mxu0 %v5759
  %5860 = vmatpush.bf16.msra.mxu0 %v5757
  %5861 = vmatmul.bf16.gmra.mxu0 %v5601
  %v5862 = vpop.f32.mrf.mxu0
  %v5863 = vadd.f32 %v5515, %v5862
  %v5864 = vpop.f32.mrf.mxu0
  %v5865 = vadd.f32 %v5517, %v5864
  %5866 = vmatmul.bf16.gmra.mxu0 %v5604
  %v5867 = vpop.f32.mrf.mxu0
  %v5868 = vadd.f32 %v5520, %v5867
  %v5869 = vpop.f32.mrf.mxu0
  %v5870 = vadd.f32 %v5522, %v5869
  %5871 = vdwg.mxu0
  %5872 = vmatpush.bf16.msra.mxu0 %v5787
  %5873 = vmatpush.bf16.msra.mxu0 %v5785
  %5874 = vmatpush.bf16.msra.mxu0 %v5783
  %5875 = vmatpush.bf16.msra.mxu0 %v5781
  %5876 = vmatpush.bf16.msra.mxu0 %v5779
  %5877 = vmatpush.bf16.msra.mxu0 %v5777
  %5878 = vmatpush.bf16.msra.mxu0 %v5775
  %5879 = vmatpush.bf16.msra.mxu0 %v5773
  %5880 = vmatmul.bf16.gmra.mxu0 %v5602
  %v5881 = vpop.f32.mrf.mxu0
  %v5882 = vadd.f32 %v5863, %v5881
  %v5883 = vpop.f32.mrf.mxu0
  %v5884 = vadd.f32 %v5865, %v5883
  %5885 = vmatmul.bf16.gmra.mxu0 %v5605
  %v5886 = vpop.f32.mrf.mxu0
  %v5887 = vadd.f32 %v5868, %v5886
  %v5888 = vpop.f32.mrf.mxu0
  %v5889 = vadd.f32 %v5870, %v5888
  %5890 = vdwg.mxu0
  %5891 = vmatpush.bf16.msra.mxu0 %v5803
  %5892 = vmatpush.bf16.msra.mxu0 %v5801
  %5893 = vmatpush.bf16.msra.mxu0 %v5799
  %5894 = vmatpush.bf16.msra.mxu0 %v5797
  %5895 = vmatpush.bf16.msra.mxu0 %v5795
  %5896 = vmatpush.bf16.msra.mxu0 %v5793
  %5897 = vmatpush.bf16.msra.mxu0 %v5791
  %5898 = vmatpush.bf16.msra.mxu0 %v5789
  %5899 = vmatmul.bf16.gmra.mxu0 %v5603
  %v5900 = vpop.f32.mrf.mxu0
  %v5901 = vadd.f32 %v5882, %v5900
  %v5902 = vpop.f32.mrf.mxu0
  %v5903 = vadd.f32 %v5884, %v5902
  %5904 = vmatmul.bf16.gmra.mxu0 %v5606
  %v5905 = vpop.f32.mrf.mxu0
  %v5906 = vadd.f32 %v5887, %v5905
  %v5907 = vpop.f32.mrf.mxu0
  %v5908 = vadd.f32 %v5889, %v5907
  %5909 = vdwg.mxu0
  %5910 = vmatpush.bf16.msra.mxu0 %v5772
  %5911 = vmatpush.bf16.msra.mxu0 %v5770
  %5912 = vmatpush.bf16.msra.mxu0 %v5768
  %5913 = vmatpush.bf16.msra.mxu0 %v5766
  %5914 = vmatpush.bf16.msra.mxu0 %v5764
  %5915 = vmatpush.bf16.msra.mxu0 %v5762
  %5916 = vmatpush.bf16.msra.mxu0 %v5760
  %5917 = vmatpush.bf16.msra.mxu0 %v5758
  %5918 = vmatmul.bf16.gmra.mxu0 %v5601
  %v5919 = vpop.f32.mrf.mxu0
  %v5920 = vadd.f32 %v5572, %v5919
  %v5921 = vpop.f32.mrf.mxu0
  %v5922 = vadd.f32 %v5574, %v5921
  %5923 = vmatmul.bf16.gmra.mxu0 %v5604
  %v5924 = vpop.f32.mrf.mxu0
  %v5925 = vadd.f32 %v5577, %v5924
  %v5926 = vpop.f32.mrf.mxu0
  %v5927 = vadd.f32 %v5579, %v5926
  %5928 = vdwg.mxu0
  %5929 = vmatpush.bf16.msra.mxu0 %v5788
  %5930 = vmatpush.bf16.msra.mxu0 %v5786
  %5931 = vmatpush.bf16.msra.mxu0 %v5784
  %5932 = vmatpush.bf16.msra.mxu0 %v5782
  %5933 = vmatpush.bf16.msra.mxu0 %v5780
  %5934 = vmatpush.bf16.msra.mxu0 %v5778
  %5935 = vmatpush.bf16.msra.mxu0 %v5776
  %5936 = vmatpush.bf16.msra.mxu0 %v5774
  %5937 = vmatmul.bf16.gmra.mxu0 %v5602
  %v5938 = vpop.f32.mrf.mxu0
  %v5939 = vadd.f32 %v5920, %v5938
  %v5940 = vpop.f32.mrf.mxu0
  %v5941 = vadd.f32 %v5922, %v5940
  %5942 = vmatmul.bf16.gmra.mxu0 %v5605
  %v5943 = vpop.f32.mrf.mxu0
  %v5944 = vadd.f32 %v5925, %v5943
  %v5945 = vpop.f32.mrf.mxu0
  %v5946 = vadd.f32 %v5927, %v5945
  %5947 = vdwg.mxu0
  %5948 = vmatpush.bf16.msra.mxu0 %v5804
  %5949 = vmatpush.bf16.msra.mxu0 %v5802
  %5950 = vmatpush.bf16.msra.mxu0 %v5800
  %5951 = vmatpush.bf16.msra.mxu0 %v5798
  %5952 = vmatpush.bf16.msra.mxu0 %v5796
  %5953 = vmatpush.bf16.msra.mxu0 %v5794
  %5954 = vmatpush.bf16.msra.mxu0 %v5792
  %5955 = vmatpush.bf16.msra.mxu0 %v5790
  %5956 = vmatmul.bf16.gmra.mxu0 %v5603
  %v5957 = vpop.f32.mrf.mxu0
  %v5958 = vadd.f32 %v5939, %v5957
  %v5959 = vpop.f32.mrf.mxu0
  %v5960 = vadd.f32 %v5941, %v5959
  %5961 = vmatmul.bf16.gmra.mxu0 %v5606
  %v5962 = vpop.f32.mrf.mxu0
  %v5963 = vadd.f32 %v5944, %v5962
  %v5964 = vpop.f32.mrf.mxu0
  %v5965 = vadd.f32 %v5946, %v5964
  %5966 = vdwg.mxu0
  %s5967 = scalar_lea.vmem %s5, 768
  %v5968 = vld [vmem:[%s5967] sm:$0xff]
  %v5969 = vld [vmem:[%s5967 + $0x8] sm:$0xff]
  %v5970 = vld [vmem:[%s5967 + $0x10] sm:$0xff]
  %v5971 = vld [vmem:[%s5967 + $0x18] sm:$0xff]
  %v5972 = vld [vmem:[%s5967 + $0x20] sm:$0xff]
  %v5973 = vld [vmem:[%s5967 + $0x28] sm:$0xff]
  %v5974 = vld [vmem:[%s5967 + $0x30] sm:$0xff]
  %v5975 = vld [vmem:[%s5967 + $0x38] sm:$0xff]
  %v5976 = vld [vmem:[%s5967 + $0x40] sm:$0xff]
  %v5977 = vld [vmem:[%s5967 + $0x48] sm:$0xff]
  %v5978 = vld [vmem:[%s5967 + $0x50] sm:$0xff]
  %v5979 = vld [vmem:[%s5967 + $0x58] sm:$0xff]
  %v5980 = vld [vmem:[%s5967 + $0x60] sm:$0xff]
  %v5981 = vld [vmem:[%s5967 + $0x68] sm:$0xff]
  %v5982 = vld [vmem:[%s5967 + $0x70] sm:$0xff]
  %v5983 = vld [vmem:[%s5967 + $0x78] sm:$0xff]
  %v5984 = vld [vmem:[%s5967 + $0x80] sm:$0xff]
  %v5985 = vld [vmem:[%s5967 + $0x88] sm:$0xff]
  %v5986 = vld [vmem:[%s5967 + $0x90] sm:$0xff]
  %v5987 = vld [vmem:[%s5967 + $0x98] sm:$0xff]
  %v5988 = vld [vmem:[%s5967 + $0xa0] sm:$0xff]
  %v5989 = vld [vmem:[%s5967 + $0xa8] sm:$0xff]
  %v5990 = vld [vmem:[%s5967 + $0xb0] sm:$0xff]
  %v5991 = vld [vmem:[%s5967 + $0xb8] sm:$0xff]
  %v5992 = vld [vmem:[%s5967 + $0xc0] sm:$0xff]
  %v5993 = vld [vmem:[%s5967 + $0xc8] sm:$0xff]
  %v5994 = vld [vmem:[%s5967 + $0xd0] sm:$0xff]
  %v5995 = vld [vmem:[%s5967 + $0xd8] sm:$0xff]
  %v5996 = vld [vmem:[%s5967 + $0xe0] sm:$0xff]
  %v5997 = vld [vmem:[%s5967 + $0xe8] sm:$0xff]
  %v5998 = vld [vmem:[%s5967 + $0xf0] sm:$0xff]
  %v5999 = vld [vmem:[%s5967 + $0xf8] sm:$0xff]
  %v6000 = vld [vmem:[%s5967 + $0x100] sm:$0xff]
  %v6001 = vld [vmem:[%s5967 + $0x108] sm:$0xff]
  %v6002 = vld [vmem:[%s5967 + $0x110] sm:$0xff]
  %v6003 = vld [vmem:[%s5967 + $0x118] sm:$0xff]
  %v6004 = vld [vmem:[%s5967 + $0x120] sm:$0xff]
  %v6005 = vld [vmem:[%s5967 + $0x128] sm:$0xff]
  %v6006 = vld [vmem:[%s5967 + $0x130] sm:$0xff]
  %v6007 = vld [vmem:[%s5967 + $0x138] sm:$0xff]
  %v6008 = vld [vmem:[%s5967 + $0x140] sm:$0xff]
  %v6009 = vld [vmem:[%s5967 + $0x148] sm:$0xff]
  %v6010 = vld [vmem:[%s5967 + $0x150] sm:$0xff]
  %v6011 = vld [vmem:[%s5967 + $0x158] sm:$0xff]
  %v6012 = vld [vmem:[%s5967 + $0x160] sm:$0xff]
  %v6013 = vld [vmem:[%s5967 + $0x168] sm:$0xff]
  %v6014 = vld [vmem:[%s5967 + $0x170] sm:$0xff]
  %v6015 = vld [vmem:[%s5967 + $0x178] sm:$0xff]
  %v6020 = vunpack.c.l.b16 %v5094
  %v6021 = vunpack.c.h.b16 %v5094
  %v6022 = vunpack.c.l.b16 %v5095
  %v6023 = vunpack.c.l.b16 %v5096
  %v6024 = vunpack.c.h.b16 %v5096
  %v6025 = vunpack.c.l.b16 %v5097
  %v6026 = vpack.c.b16 %v6023, %v6020
  %v6027 = vpack.c.b16 %v6024, %v6021
  %v6028 = vpack.c.b16 %v6025, %v6022
  %v6080 = vunpack.c.l.b16 %v5968
  %v6081 = vunpack.c.h.b16 %v5968
  %v6082 = vunpack.c.l.b16 %v5969
  %v6083 = vunpack.c.h.b16 %v5969
  %v6084 = vunpack.c.l.b16 %v5970
  %v6085 = vunpack.c.h.b16 %v5970
  %v6086 = vunpack.c.l.b16 %v5971
  %v6087 = vunpack.c.h.b16 %v5971
  %v6088 = vunpack.c.l.b16 %v5972
  %v6089 = vunpack.c.h.b16 %v5972
  %v6090 = vunpack.c.l.b16 %v5973
  %v6091 = vunpack.c.h.b16 %v5973
  %v6092 = vunpack.c.l.b16 %v5974
  %v6093 = vunpack.c.h.b16 %v5974
  %v6094 = vunpack.c.l.b16 %v5975
  %v6095 = vunpack.c.h.b16 %v5975
  %v6096 = vunpack.c.l.b16 %v5976
  %v6097 = vunpack.c.h.b16 %v5976
  %v6098 = vunpack.c.l.b16 %v5977
  %v6099 = vunpack.c.h.b16 %v5977
  %v6100 = vunpack.c.l.b16 %v5978
  %v6101 = vunpack.c.h.b16 %v5978
  %v6102 = vunpack.c.l.b16 %v5979
  %v6103 = vunpack.c.h.b16 %v5979
  %v6104 = vunpack.c.l.b16 %v5980
  %v6105 = vunpack.c.h.b16 %v5980
  %v6106 = vunpack.c.l.b16 %v5981
  %v6107 = vunpack.c.h.b16 %v5981
  %v6108 = vunpack.c.l.b16 %v5982
  %v6109 = vunpack.c.h.b16 %v5982
  %v6110 = vunpack.c.l.b16 %v5983
  %v6111 = vunpack.c.h.b16 %v5983
  %v6112 = vunpack.c.l.b16 %v5984
  %v6113 = vunpack.c.h.b16 %v5984
  %v6114 = vunpack.c.l.b16 %v5985
  %v6115 = vunpack.c.h.b16 %v5985
  %v6116 = vunpack.c.l.b16 %v5986
  %v6117 = vunpack.c.h.b16 %v5986
  %v6118 = vunpack.c.l.b16 %v5987
  %v6119 = vunpack.c.h.b16 %v5987
  %v6120 = vunpack.c.l.b16 %v5988
  %v6121 = vunpack.c.h.b16 %v5988
  %v6122 = vunpack.c.l.b16 %v5989
  %v6123 = vunpack.c.h.b16 %v5989
  %v6124 = vunpack.c.l.b16 %v5990
  %v6125 = vunpack.c.h.b16 %v5990
  %v6126 = vunpack.c.l.b16 %v5991
  %v6127 = vunpack.c.h.b16 %v5991
  %v6128 = vunpack.c.l.b16 %v5992
  %v6129 = vunpack.c.h.b16 %v5992
  %v6130 = vunpack.c.l.b16 %v5993
  %v6131 = vunpack.c.h.b16 %v5993
  %v6132 = vunpack.c.l.b16 %v5994
  %v6133 = vunpack.c.h.b16 %v5994
  %v6134 = vunpack.c.l.b16 %v5995
  %v6135 = vunpack.c.h.b16 %v5995
  %v6136 = vunpack.c.l.b16 %v5996
  %v6137 = vunpack.c.h.b16 %v5996
  %v6138 = vunpack.c.l.b16 %v5997
  %v6139 = vunpack.c.h.b16 %v5997
  %v6140 = vunpack.c.l.b16 %v5998
  %v6141 = vunpack.c.h.b16 %v5998
  %v6142 = vunpack.c.l.b16 %v5999
  %v6143 = vunpack.c.h.b16 %v5999
  %v6144 = vunpack.c.l.b16 %v6000
  %v6145 = vunpack.c.h.b16 %v6000
  %v6146 = vunpack.c.l.b16 %v6001
  %v6147 = vunpack.c.h.b16 %v6001
  %v6148 = vunpack.c.l.b16 %v6002
  %v6149 = vunpack.c.h.b16 %v6002
  %v6150 = vunpack.c.l.b16 %v6003
  %v6151 = vunpack.c.h.b16 %v6003
  %v6152 = vunpack.c.l.b16 %v6004
  %v6153 = vunpack.c.h.b16 %v6004
  %v6154 = vunpack.c.l.b16 %v6005
  %v6155 = vunpack.c.h.b16 %v6005
  %v6156 = vunpack.c.l.b16 %v6006
  %v6157 = vunpack.c.h.b16 %v6006
  %v6158 = vunpack.c.l.b16 %v6007
  %v6159 = vunpack.c.h.b16 %v6007
  %v6160 = vunpack.c.l.b16 %v6008
  %v6161 = vunpack.c.h.b16 %v6008
  %v6162 = vunpack.c.l.b16 %v6009
  %v6163 = vunpack.c.h.b16 %v6009
  %v6164 = vunpack.c.l.b16 %v6010
  %v6165 = vunpack.c.h.b16 %v6010
  %v6166 = vunpack.c.l.b16 %v6011
  %v6167 = vunpack.c.h.b16 %v6011
  %v6168 = vunpack.c.l.b16 %v6012
  %v6169 = vunpack.c.h.b16 %v6012
  %v6170 = vunpack.c.l.b16 %v6013
  %v6171 = vunpack.c.h.b16 %v6013
  %v6172 = vunpack.c.l.b16 %v6014
  %v6173 = vunpack.c.h.b16 %v6014
  %v6174 = vunpack.c.l.b16 %v6015
  %v6175 = vunpack.c.h.b16 %v6015
  %v6176 = vpack.c.b16 %v6082, %v6080
  %v6177 = vpack.c.b16 %v6083, %v6081
  %v6178 = vpack.c.b16 %v6086, %v6084
  %v6179 = vpack.c.b16 %v6087, %v6085
  %v6180 = vpack.c.b16 %v6090, %v6088
  %v6181 = vpack.c.b16 %v6091, %v6089
  %v6182 = vpack.c.b16 %v6094, %v6092
  %v6183 = vpack.c.b16 %v6095, %v6093
  %v6184 = vpack.c.b16 %v6098, %v6096
  %v6185 = vpack.c.b16 %v6099, %v6097
  %v6186 = vpack.c.b16 %v6102, %v6100
  %v6187 = vpack.c.b16 %v6103, %v6101
  %v6188 = vpack.c.b16 %v6106, %v6104
  %v6189 = vpack.c.b16 %v6107, %v6105
  %v6190 = vpack.c.b16 %v6110, %v6108
  %v6191 = vpack.c.b16 %v6111, %v6109
  %v6192 = vpack.c.b16 %v6114, %v6112
  %v6193 = vpack.c.b16 %v6115, %v6113
  %v6194 = vpack.c.b16 %v6118, %v6116
  %v6195 = vpack.c.b16 %v6119, %v6117
  %v6196 = vpack.c.b16 %v6122, %v6120
  %v6197 = vpack.c.b16 %v6123, %v6121
  %v6198 = vpack.c.b16 %v6126, %v6124
  %v6199 = vpack.c.b16 %v6127, %v6125
  %v6200 = vpack.c.b16 %v6130, %v6128
  %v6201 = vpack.c.b16 %v6131, %v6129
  %v6202 = vpack.c.b16 %v6134, %v6132
  %v6203 = vpack.c.b16 %v6135, %v6133
  %v6204 = vpack.c.b16 %v6138, %v6136
  %v6205 = vpack.c.b16 %v6139, %v6137
  %v6206 = vpack.c.b16 %v6142, %v6140
  %v6207 = vpack.c.b16 %v6143, %v6141
  %v6208 = vpack.c.b16 %v6146, %v6144
  %v6209 = vpack.c.b16 %v6147, %v6145
  %v6210 = vpack.c.b16 %v6150, %v6148
  %v6211 = vpack.c.b16 %v6151, %v6149
  %v6212 = vpack.c.b16 %v6154, %v6152
  %v6213 = vpack.c.b16 %v6155, %v6153
  %v6214 = vpack.c.b16 %v6158, %v6156
  %v6215 = vpack.c.b16 %v6159, %v6157
  %v6216 = vpack.c.b16 %v6162, %v6160
  %v6217 = vpack.c.b16 %v6163, %v6161
  %v6218 = vpack.c.b16 %v6166, %v6164
  %v6219 = vpack.c.b16 %v6167, %v6165
  %v6220 = vpack.c.b16 %v6170, %v6168
  %v6221 = vpack.c.b16 %v6171, %v6169
  %v6222 = vpack.c.b16 %v6174, %v6172
  %v6223 = vpack.c.b16 %v6175, %v6173
  %6272 = vmatpush.bf16.msra.mxu0 %v6190
  %6273 = vmatpush.bf16.msra.mxu0 %v6188
  %6274 = vmatpush.bf16.msra.mxu0 %v6186
  %6275 = vmatpush.bf16.msra.mxu0 %v6184
  %6276 = vmatpush.bf16.msra.mxu0 %v6182
  %6277 = vmatpush.bf16.msra.mxu0 %v6180
  %6278 = vmatpush.bf16.msra.mxu0 %v6178
  %6279 = vmatpush.bf16.msra.mxu0 %v6176
  %6280 = vmatmul.bf16.gmra.mxu0 %v5604
  %v6281 = vpop.f32.mrf.mxu0
  %v6282 = vadd.f32 0.0, %v6281
  %v6283 = vpop.f32.mrf.mxu0
  %v6284 = vadd.f32 0.0, %v6283
  %6285 = vmatmul.bf16.gmra.mxu0 %v6026
  %v6286 = vpop.f32.mrf.mxu0
  %v6287 = vadd.f32 0.0, %v6286
  %v6288 = vpop.f32.mrf.mxu0
  %v6289 = vadd.f32 0.0, %v6288
  %6290 = vdwg.mxu0
  %6291 = vmatpush.bf16.msra.mxu0 %v6206
  %6292 = vmatpush.bf16.msra.mxu0 %v6204
  %6293 = vmatpush.bf16.msra.mxu0 %v6202
  %6294 = vmatpush.bf16.msra.mxu0 %v6200
  %6295 = vmatpush.bf16.msra.mxu0 %v6198
  %6296 = vmatpush.bf16.msra.mxu0 %v6196
  %6297 = vmatpush.bf16.msra.mxu0 %v6194
  %6298 = vmatpush.bf16.msra.mxu0 %v6192
  %6299 = vmatmul.bf16.gmra.mxu0 %v5605
  %v6300 = vpop.f32.mrf.mxu0
  %v6301 = vadd.f32 %v6282, %v6300
  %v6302 = vpop.f32.mrf.mxu0
  %v6303 = vadd.f32 %v6284, %v6302
  %6304 = vmatmul.bf16.gmra.mxu0 %v6027
  %v6305 = vpop.f32.mrf.mxu0
  %v6306 = vadd.f32 %v6287, %v6305
  %v6307 = vpop.f32.mrf.mxu0
  %v6308 = vadd.f32 %v6289, %v6307
  %6309 = vdwg.mxu0
  %6310 = vmatpush.bf16.msra.mxu0 %v6222
  %6311 = vmatpush.bf16.msra.mxu0 %v6220
  %6312 = vmatpush.bf16.msra.mxu0 %v6218
  %6313 = vmatpush.bf16.msra.mxu0 %v6216
  %6314 = vmatpush.bf16.msra.mxu0 %v6214
  %6315 = vmatpush.bf16.msra.mxu0 %v6212
  %6316 = vmatpush.bf16.msra.mxu0 %v6210
  %6317 = vmatpush.bf16.msra.mxu0 %v6208
  %6318 = vmatmul.bf16.gmra.mxu0 %v5606
  %v6319 = vpop.f32.mrf.mxu0
  %v6320 = vadd.f32 %v6301, %v6319
  %v6321 = vpop.f32.mrf.mxu0
  %v6322 = vadd.f32 %v6303, %v6321
  %6323 = vmatmul.bf16.gmra.mxu0 %v6028
  %v6324 = vpop.f32.mrf.mxu0
  %v6325 = vadd.f32 %v6306, %v6324
  %v6326 = vpop.f32.mrf.mxu0
  %v6327 = vadd.f32 %v6308, %v6326
  %6328 = vdwg.mxu0
  %6329 = vmatpush.bf16.msra.mxu0 %v6191
  %6330 = vmatpush.bf16.msra.mxu0 %v6189
  %6331 = vmatpush.bf16.msra.mxu0 %v6187
  %6332 = vmatpush.bf16.msra.mxu0 %v6185
  %6333 = vmatpush.bf16.msra.mxu0 %v6183
  %6334 = vmatpush.bf16.msra.mxu0 %v6181
  %6335 = vmatpush.bf16.msra.mxu0 %v6179
  %6336 = vmatpush.bf16.msra.mxu0 %v6177
  %6337 = vmatmul.bf16.gmra.mxu0 %v5604
  %v6338 = vpop.f32.mrf.mxu0
  %v6339 = vadd.f32 0.0, %v6338
  %v6340 = vpop.f32.mrf.mxu0
  %v6341 = vadd.f32 0.0, %v6340
  %6342 = vmatmul.bf16.gmra.mxu0 %v6026
  %v6343 = vpop.f32.mrf.mxu0
  %v6344 = vadd.f32 0.0, %v6343
  %v6345 = vpop.f32.mrf.mxu0
  %v6346 = vadd.f32 0.0, %v6345
  %6347 = vdwg.mxu0
  %6348 = vmatpush.bf16.msra.mxu0 %v6207
  %6349 = vmatpush.bf16.msra.mxu0 %v6205
  %6350 = vmatpush.bf16.msra.mxu0 %v6203
  %6351 = vmatpush.bf16.msra.mxu0 %v6201
  %6352 = vmatpush.bf16.msra.mxu0 %v6199
  %6353 = vmatpush.bf16.msra.mxu0 %v6197
  %6354 = vmatpush.bf16.msra.mxu0 %v6195
  %6355 = vmatpush.bf16.msra.mxu0 %v6193
  %6356 = vmatmul.bf16.gmra.mxu0 %v5605
  %v6357 = vpop.f32.mrf.mxu0
  %v6358 = vadd.f32 %v6339, %v6357
  %v6359 = vpop.f32.mrf.mxu0
  %v6360 = vadd.f32 %v6341, %v6359
  %6361 = vmatmul.bf16.gmra.mxu0 %v6027
  %v6362 = vpop.f32.mrf.mxu0
  %v6363 = vadd.f32 %v6344, %v6362
  %v6364 = vpop.f32.mrf.mxu0
  %v6365 = vadd.f32 %v6346, %v6364
  %6366 = vdwg.mxu0
  %6367 = vmatpush.bf16.msra.mxu0 %v6223
  %6368 = vmatpush.bf16.msra.mxu0 %v6221
  %6369 = vmatpush.bf16.msra.mxu0 %v6219
  %6370 = vmatpush.bf16.msra.mxu0 %v6217
  %6371 = vmatpush.bf16.msra.mxu0 %v6215
  %6372 = vmatpush.bf16.msra.mxu0 %v6213
  %6373 = vmatpush.bf16.msra.mxu0 %v6211
  %6374 = vmatpush.bf16.msra.mxu0 %v6209
  %6375 = vmatmul.bf16.gmra.mxu0 %v5606
  %v6376 = vpop.f32.mrf.mxu0
  %v6377 = vadd.f32 %v6358, %v6376
  %v6378 = vpop.f32.mrf.mxu0
  %v6379 = vadd.f32 %v6360, %v6378
  %6380 = vmatmul.bf16.gmra.mxu0 %v6028
  %v6381 = vpop.f32.mrf.mxu0
  %v6382 = vadd.f32 %v6363, %v6381
  %v6383 = vpop.f32.mrf.mxu0
  %v6384 = vadd.f32 %v6365, %v6383
  %6385 = vdwg.mxu0
  %v6386 = vadd.f32 %v5901, %v6320
  %v6387 = vadd.f32 %v5958, %v6377
  %v6388 = vadd.f32 %v5903, %v6322
  %v6389 = vadd.f32 %v5960, %v6379
  %v6390 = vadd.f32 %v5906, %v6325
  %v6391 = vadd.f32 %v5963, %v6382
  %v6392 = vadd.f32 %v5908, %v6327
  %v6393 = vadd.f32 %v5965, %v6384
  %v6394 = vld [vmem:[%s6] sm:$0x3]
  %v6396 = vperm.slane %v6394, 0
  %v6397 = vperm.slane %v6394, 1
  %v6400 = vadd.f32 %v6386, %v6396
  %v6401 = vadd.f32 %v6387, %v6397
  %v6402 = vadd.f32 %v6388, %v6396
  %v6403 = vadd.f32 %v6389, %v6397
  %v6404 = vadd.f32 %v6390, %v6396
  %v6405 = vadd.f32 %v6391, %v6397
  %v6406 = vadd.f32 %v6392, %v6396
  %v6407 = vadd.f32 %v6393, %v6397
  %v6408 = vmax.f32 %v6400, 0.0
  %v6409 = vmax.f32 %v6401, 0.0
  %v6410 = vmax.f32 %v6402, 0.0
  %v6411 = vmax.f32 %v6403, 0.0
  %v6412 = vmax.f32 %v6404, 0.0
  %v6413 = vmax.f32 %v6405, 0.0
  %v6414 = vmax.f32 %v6406, 0.0
  %v6415 = vmax.f32 %v6407, 0.0
  %v6416 = vpack.c.bf16 %v6409, %v6408
  %v6417 = vpack.c.bf16 %v6411, %v6410
  %v6418 = vpack.c.bf16 %v6413, %v6412
  %v6419 = vpack.c.bf16 %v6415, %v6414
  %v6422 = vunpack.c.l.b16 %v6416
  %v6423 = vunpack.c.h.b16 %v6416
  %v6424 = vunpack.c.l.b16 %v6417
  %v6425 = vunpack.c.h.b16 %v6417
  %v6426 = vpack.c.b16 %v6424, %v6422
  %v6427 = vpack.c.b16 %v6425, %v6423
  %v6432 = vunpack.c.l.b16 %v6418
  %v6433 = vunpack.c.h.b16 %v6418
  %v6434 = vunpack.c.l.b16 %v6419
  %v6435 = vunpack.c.h.b16 %v6419
  %v6436 = vpack.c.b16 %v6434, %v6432
  %v6437 = vpack.c.b16 %v6435, %v6433
  %v6440 = vld [vmem:[%s7] sm:$0xff]
  %v6441 = vld [vmem:[%s7 + $0x8] sm:$0xff]
  %v6442 = vld [vmem:[%s7 + $0x10] sm:$0xff]
  %v6443 = vld [vmem:[%s7 + $0x18] sm:$0xff]
  %v6444 = vld [vmem:[%s7 + $0x20] sm:$0xff]
  %v6445 = vld [vmem:[%s7 + $0x28] sm:$0xff]
  %v6446 = vld [vmem:[%s7 + $0x30] sm:$0xff]
  %v6447 = vld [vmem:[%s7 + $0x38] sm:$0xff]
  %v6448 = vld [vmem:[%s7 + $0x40] sm:$0xff]
  %v6449 = vld [vmem:[%s7 + $0x48] sm:$0xff]
  %v6450 = vld [vmem:[%s7 + $0x50] sm:$0xff]
  %v6451 = vld [vmem:[%s7 + $0x58] sm:$0xff]
  %v6452 = vld [vmem:[%s7 + $0x60] sm:$0xff]
  %v6453 = vld [vmem:[%s7 + $0x68] sm:$0xff]
  %v6454 = vld [vmem:[%s7 + $0x70] sm:$0xff]
  %v6455 = vld [vmem:[%s7 + $0x78] sm:$0xff]
  %v6456 = vld [vmem:[%s7 + $0x80] sm:$0xff]
  %v6457 = vld [vmem:[%s7 + $0x88] sm:$0xff]
  %v6458 = vld [vmem:[%s7 + $0x90] sm:$0xff]
  %v6459 = vld [vmem:[%s7 + $0x98] sm:$0xff]
  %v6460 = vld [vmem:[%s7 + $0xa0] sm:$0xff]
  %v6461 = vld [vmem:[%s7 + $0xa8] sm:$0xff]
  %v6462 = vld [vmem:[%s7 + $0xb0] sm:$0xff]
  %v6463 = vld [vmem:[%s7 + $0xb8] sm:$0xff]
  %v6464 = vld [vmem:[%s7 + $0xc0] sm:$0xff]
  %v6465 = vld [vmem:[%s7 + $0xc8] sm:$0xff]
  %v6466 = vld [vmem:[%s7 + $0xd0] sm:$0xff]
  %v6467 = vld [vmem:[%s7 + $0xd8] sm:$0xff]
  %v6468 = vld [vmem:[%s7 + $0xe0] sm:$0xff]
  %v6469 = vld [vmem:[%s7 + $0xe8] sm:$0xff]
  %v6470 = vld [vmem:[%s7 + $0xf0] sm:$0xff]
  %v6471 = vld [vmem:[%s7 + $0xf8] sm:$0xff]
  %v6472 = vld [vmem:[%s7 + $0x100] sm:$0xff]
  %v6473 = vld [vmem:[%s7 + $0x108] sm:$0xff]
  %v6474 = vld [vmem:[%s7 + $0x110] sm:$0xff]
  %v6475 = vld [vmem:[%s7 + $0x118] sm:$0xff]
  %v6476 = vld [vmem:[%s7 + $0x120] sm:$0xff]
  %v6477 = vld [vmem:[%s7 + $0x128] sm:$0xff]
  %v6478 = vld [vmem:[%s7 + $0x130] sm:$0xff]
  %v6479 = vld [vmem:[%s7 + $0x138] sm:$0xff]
  %v6480 = vld [vmem:[%s7 + $0x140] sm:$0xff]
  %v6481 = vld [vmem:[%s7 + $0x148] sm:$0xff]
  %v6482 = vld [vmem:[%s7 + $0x150] sm:$0xff]
  %v6483 = vld [vmem:[%s7 + $0x158] sm:$0xff]
  %v6484 = vld [vmem:[%s7 + $0x160] sm:$0xff]
  %v6485 = vld [vmem:[%s7 + $0x168] sm:$0xff]
  %v6486 = vld [vmem:[%s7 + $0x170] sm:$0xff]
  %v6487 = vld [vmem:[%s7 + $0x178] sm:$0xff]
  %v6488 = vld [vmem:[%s7 + $0x180] sm:$0xff]
  %v6489 = vld [vmem:[%s7 + $0x188] sm:$0xff]
  %v6490 = vld [vmem:[%s7 + $0x190] sm:$0xff]
  %v6491 = vld [vmem:[%s7 + $0x198] sm:$0xff]
  %v6492 = vld [vmem:[%s7 + $0x1a0] sm:$0xff]
  %v6493 = vld [vmem:[%s7 + $0x1a8] sm:$0xff]
  %v6494 = vld [vmem:[%s7 + $0x1b0] sm:$0xff]
  %v6495 = vld [vmem:[%s7 + $0x1b8] sm:$0xff]
  %v6496 = vld [vmem:[%s7 + $0x1c0] sm:$0xff]
  %v6497 = vld [vmem:[%s7 + $0x1c8] sm:$0xff]
  %v6498 = vld [vmem:[%s7 + $0x1d0] sm:$0xff]
  %v6499 = vld [vmem:[%s7 + $0x1d8] sm:$0xff]
  %v6500 = vld [vmem:[%s7 + $0x1e0] sm:$0xff]
  %v6501 = vld [vmem:[%s7 + $0x1e8] sm:$0xff]
  %v6502 = vld [vmem:[%s7 + $0x1f0] sm:$0xff]
  %v6503 = vld [vmem:[%s7 + $0x1f8] sm:$0xff]
  %v6504 = vld [vmem:[%s7 + $0x200] sm:$0xff]
  %v6505 = vld [vmem:[%s7 + $0x208] sm:$0xff]
  %v6506 = vld [vmem:[%s7 + $0x210] sm:$0xff]
  %v6507 = vld [vmem:[%s7 + $0x218] sm:$0xff]
  %v6508 = vld [vmem:[%s7 + $0x220] sm:$0xff]
  %v6509 = vld [vmem:[%s7 + $0x228] sm:$0xff]
  %v6510 = vld [vmem:[%s7 + $0x230] sm:$0xff]
  %v6511 = vld [vmem:[%s7 + $0x238] sm:$0xff]
  %v6512 = vld [vmem:[%s7 + $0x240] sm:$0xff]
  %v6513 = vld [vmem:[%s7 + $0x248] sm:$0xff]
  %v6514 = vld [vmem:[%s7 + $0x250] sm:$0xff]
  %v6515 = vld [vmem:[%s7 + $0x258] sm:$0xff]
  %v6516 = vld [vmem:[%s7 + $0x260] sm:$0xff]
  %v6517 = vld [vmem:[%s7 + $0x268] sm:$0xff]
  %v6518 = vld [vmem:[%s7 + $0x270] sm:$0xff]
  %v6519 = vld [vmem:[%s7 + $0x278] sm:$0xff]
  %v6520 = vld [vmem:[%s7 + $0x280] sm:$0xff]
  %v6521 = vld [vmem:[%s7 + $0x288] sm:$0xff]
  %v6522 = vld [vmem:[%s7 + $0x290] sm:$0xff]
  %v6523 = vld [vmem:[%s7 + $0x298] sm:$0xff]
  %v6524 = vld [vmem:[%s7 + $0x2a0] sm:$0xff]
  %v6525 = vld [vmem:[%s7 + $0x2a8] sm:$0xff]
  %v6526 = vld [vmem:[%s7 + $0x2b0] sm:$0xff]
  %v6527 = vld [vmem:[%s7 + $0x2b8] sm:$0xff]
  %v6528 = vld [vmem:[%s7 + $0x2c0] sm:$0xff]
  %v6529 = vld [vmem:[%s7 + $0x2c8] sm:$0xff]
  %v6530 = vld [vmem:[%s7 + $0x2d0] sm:$0xff]
  %v6531 = vld [vmem:[%s7 + $0x2d8] sm:$0xff]
  %v6532 = vld [vmem:[%s7 + $0x2e0] sm:$0xff]
  %v6533 = vld [vmem:[%s7 + $0x2e8] sm:$0xff]
  %v6534 = vld [vmem:[%s7 + $0x2f0] sm:$0xff]
  %v6535 = vld [vmem:[%s7 + $0x2f8] sm:$0xff]
  %v6536 = vld [vmem:[%s7 + $0x300] sm:$0xff]
  %v6537 = vld [vmem:[%s7 + $0x308] sm:$0xff]
  %v6538 = vld [vmem:[%s7 + $0x310] sm:$0xff]
  %v6539 = vld [vmem:[%s7 + $0x318] sm:$0xff]
  %v6540 = vld [vmem:[%s7 + $0x320] sm:$0xff]
  %v6541 = vld [vmem:[%s7 + $0x328] sm:$0xff]
  %v6542 = vld [vmem:[%s7 + $0x330] sm:$0xff]
  %v6543 = vld [vmem:[%s7 + $0x338] sm:$0xff]
  %v6544 = vld [vmem:[%s7 + $0x340] sm:$0xff]
  %v6545 = vld [vmem:[%s7 + $0x348] sm:$0xff]
  %v6546 = vld [vmem:[%s7 + $0x350] sm:$0xff]
  %v6547 = vld [vmem:[%s7 + $0x358] sm:$0xff]
  %v6548 = vld [vmem:[%s7 + $0x360] sm:$0xff]
  %v6549 = vld [vmem:[%s7 + $0x368] sm:$0xff]
  %v6550 = vld [vmem:[%s7 + $0x370] sm:$0xff]
  %v6551 = vld [vmem:[%s7 + $0x378] sm:$0xff]
  %v6552 = vld [vmem:[%s7 + $0x380] sm:$0xff]
  %v6553 = vld [vmem:[%s7 + $0x388] sm:$0xff]
  %v6554 = vld [vmem:[%s7 + $0x390] sm:$0xff]
  %v6555 = vld [vmem:[%s7 + $0x398] sm:$0xff]
  %v6556 = vld [vmem:[%s7 + $0x3a0] sm:$0xff]
  %v6557 = vld [vmem:[%s7 + $0x3a8] sm:$0xff]
  %v6558 = vld [vmem:[%s7 + $0x3b0] sm:$0xff]
  %v6559 = vld [vmem:[%s7 + $0x3b8] sm:$0xff]
  %v6560 = vld [vmem:[%s7 + $0x3c0] sm:$0xff]
  %v6561 = vld [vmem:[%s7 + $0x3c8] sm:$0xff]
  %v6562 = vld [vmem:[%s7 + $0x3d0] sm:$0xff]
  %v6563 = vld [vmem:[%s7 + $0x3d8] sm:$0xff]
  %v6564 = vld [vmem:[%s7 + $0x3e0] sm:$0xff]
  %v6565 = vld [vmem:[%s7 + $0x3e8] sm:$0xff]
  %v6566 = vld [vmem:[%s7 + $0x3f0] sm:$0xff]
  %v6567 = vld [vmem:[%s7 + $0x3f8] sm:$0xff]
  %v6568 = vld [vmem:[%s8] sm:$0xf]
  %v6570 = vperm.slane %v6568, 0
  %v6571 = vperm.slane %v6568, 1
  %v6572 = vperm.slane %v6568, 2
  %v6573 = vperm.slane %v6568, 3
  %v6706 = vunpack.c.l.b16 %v6440
  %v6707 = vunpack.c.h.b16 %v6440
  %v6708 = vunpack.c.l.b16 %v6441
  %v6709 = vunpack.c.h.b16 %v6441
  %v6710 = vunpack.c.l.b16 %v6442
  %v6711 = vunpack.c.h.b16 %v6442
  %v6712 = vunpack.c.l.b16 %v6443
  %v6713 = vunpack.c.h.b16 %v6443
  %v6714 = vunpack.c.l.b16 %v6444
  %v6715 = vunpack.c.h.b16 %v6444
  %v6716 = vunpack.c.l.b16 %v6445
  %v6717 = vunpack.c.h.b16 %v6445
  %v6718 = vunpack.c.l.b16 %v6446
  %v6719 = vunpack.c.h.b16 %v6446
  %v6720 = vunpack.c.l.b16 %v6447
  %v6721 = vunpack.c.h.b16 %v6447
  %v6722 = vunpack.c.l.b16 %v6448
  %v6723 = vunpack.c.h.b16 %v6448
  %v6724 = vunpack.c.l.b16 %v6449
  %v6725 = vunpack.c.h.b16 %v6449
  %v6726 = vunpack.c.l.b16 %v6450
  %v6727 = vunpack.c.h.b16 %v6450
  %v6728 = vunpack.c.l.b16 %v6451
  %v6729 = vunpack.c.h.b16 %v6451
  %v6730 = vunpack.c.l.b16 %v6452
  %v6731 = vunpack.c.h.b16 %v6452
  %v6732 = vunpack.c.l.b16 %v6453
  %v6733 = vunpack.c.h.b16 %v6453
  %v6734 = vunpack.c.l.b16 %v6454
  %v6735 = vunpack.c.h.b16 %v6454
  %v6736 = vunpack.c.l.b16 %v6455
  %v6737 = vunpack.c.h.b16 %v6455
  %v6738 = vunpack.c.l.b16 %v6456
  %v6739 = vunpack.c.h.b16 %v6456
  %v6740 = vunpack.c.l.b16 %v6457
  %v6741 = vunpack.c.h.b16 %v6457
  %v6742 = vunpack.c.l.b16 %v6458
  %v6743 = vunpack.c.h.b16 %v6458
  %v6744 = vunpack.c.l.b16 %v6459
  %v6745 = vunpack.c.h.b16 %v6459
  %v6746 = vunpack.c.l.b16 %v6460
  %v6747 = vunpack.c.h.b16 %v6460
  %v6748 = vunpack.c.l.b16 %v6461
  %v6749 = vunpack.c.h.b16 %v6461
  %v6750 = vunpack.c.l.b16 %v6462
  %v6751 = vunpack.c.h.b16 %v6462
  %v6752 = vunpack.c.l.b16 %v6463
  %v6753 = vunpack.c.h.b16 %v6463
  %v6754 = vunpack.c.l.b16 %v6464
  %v6755 = vunpack.c.h.b16 %v6464
  %v6756 = vunpack.c.l.b16 %v6465
  %v6757 = vunpack.c.h.b16 %v6465
  %v6758 = vunpack.c.l.b16 %v6466
  %v6759 = vunpack.c.h.b16 %v6466
  %v6760 = vunpack.c.l.b16 %v6467
  %v6761 = vunpack.c.h.b16 %v6467
  %v6762 = vunpack.c.l.b16 %v6468
  %v6763 = vunpack.c.h.b16 %v6468
  %v6764 = vunpack.c.l.b16 %v6469
  %v6765 = vunpack.c.h.b16 %v6469
  %v6766 = vunpack.c.l.b16 %v6470
  %v6767 = vunpack.c.h.b16 %v6470
  %v6768 = vunpack.c.l.b16 %v6471
  %v6769 = vunpack.c.h.b16 %v6471
  %v6770 = vunpack.c.l.b16 %v6472
  %v6771 = vunpack.c.h.b16 %v6472
  %v6772 = vunpack.c.l.b16 %v6473
  %v6773 = vunpack.c.h.b16 %v6473
  %v6774 = vunpack.c.l.b16 %v6474
  %v6775 = vunpack.c.h.b16 %v6474
  %v6776 = vunpack.c.l.b16 %v6475
  %v6777 = vunpack.c.h.b16 %v6475
  %v6778 = vunpack.c.l.b16 %v6476
  %v6779 = vunpack.c.h.b16 %v6476
  %v6780 = vunpack.c.l.b16 %v6477
  %v6781 = vunpack.c.h.b16 %v6477
  %v6782 = vunpack.c.l.b16 %v6478
  %v6783 = vunpack.c.h.b16 %v6478
  %v6784 = vunpack.c.l.b16 %v6479
  %v6785 = vunpack.c.h.b16 %v6479
  %v6786 = vunpack.c.l.b16 %v6480
  %v6787 = vunpack.c.h.b16 %v6480
  %v6788 = vunpack.c.l.b16 %v6481
  %v6789 = vunpack.c.h.b16 %v6481
  %v6790 = vunpack.c.l.b16 %v6482
  %v6791 = vunpack.c.h.b16 %v6482
  %v6792 = vunpack.c.l.b16 %v6483
  %v6793 = vunpack.c.h.b16 %v6483
  %v6794 = vunpack.c.l.b16 %v6484
  %v6795 = vunpack.c.h.b16 %v6484
  %v6796 = vunpack.c.l.b16 %v6485
  %v6797 = vunpack.c.h.b16 %v6485
  %v6798 = vunpack.c.l.b16 %v6486
  %v6799 = vunpack.c.h.b16 %v6486
  %v6800 = vunpack.c.l.b16 %v6487
  %v6801 = vunpack.c.h.b16 %v6487
  %v6802 = vunpack.c.l.b16 %v6488
  %v6803 = vunpack.c.h.b16 %v6488
  %v6804 = vunpack.c.l.b16 %v6489
  %v6805 = vunpack.c.h.b16 %v6489
  %v6806 = vunpack.c.l.b16 %v6490
  %v6807 = vunpack.c.h.b16 %v6490
  %v6808 = vunpack.c.l.b16 %v6491
  %v6809 = vunpack.c.h.b16 %v6491
  %v6810 = vunpack.c.l.b16 %v6492
  %v6811 = vunpack.c.h.b16 %v6492
  %v6812 = vunpack.c.l.b16 %v6493
  %v6813 = vunpack.c.h.b16 %v6493
  %v6814 = vunpack.c.l.b16 %v6494
  %v6815 = vunpack.c.h.b16 %v6494
  %v6816 = vunpack.c.l.b16 %v6495
  %v6817 = vunpack.c.h.b16 %v6495
  %v6818 = vunpack.c.l.b16 %v6496
  %v6819 = vunpack.c.h.b16 %v6496
  %v6820 = vunpack.c.l.b16 %v6497
  %v6821 = vunpack.c.h.b16 %v6497
  %v6822 = vunpack.c.l.b16 %v6498
  %v6823 = vunpack.c.h.b16 %v6498
  %v6824 = vunpack.c.l.b16 %v6499
  %v6825 = vunpack.c.h.b16 %v6499
  %v6826 = vunpack.c.l.b16 %v6500
  %v6827 = vunpack.c.h.b16 %v6500
  %v6828 = vunpack.c.l.b16 %v6501
  %v6829 = vunpack.c.h.b16 %v6501
  %v6830 = vunpack.c.l.b16 %v6502
  %v6831 = vunpack.c.h.b16 %v6502
  %v6832 = vunpack.c.l.b16 %v6503
  %v6833 = vunpack.c.h.b16 %v6503
  %v6834 = vunpack.c.l.b16 %v6504
  %v6835 = vunpack.c.h.b16 %v6504
  %v6836 = vunpack.c.l.b16 %v6505
  %v6837 = vunpack.c.h.b16 %v6505
  %v6838 = vunpack.c.l.b16 %v6506
  %v6839 = vunpack.c.h.b16 %v6506
  %v6840 = vunpack.c.l.b16 %v6507
  %v6841 = vunpack.c.h.b16 %v6507
  %v6842 = vunpack.c.l.b16 %v6508
  %v6843 = vunpack.c.h.b16 %v6508
  %v6844 = vunpack.c.l.b16 %v6509
  %v6845 = vunpack.c.h.b16 %v6509
  %v6846 = vunpack.c.l.b16 %v6510
  %v6847 = vunpack.c.h.b16 %v6510
  %v6848 = vunpack.c.l.b16 %v6511
  %v6849 = vunpack.c.h.b16 %v6511
  %v6850 = vunpack.c.l.b16 %v6512
  %v6851 = vunpack.c.h.b16 %v6512
  %v6852 = vunpack.c.l.b16 %v6513
  %v6853 = vunpack.c.h.b16 %v6513
  %v6854 = vunpack.c.l.b16 %v6514
  %v6855 = vunpack.c.h.b16 %v6514
  %v6856 = vunpack.c.l.b16 %v6515
  %v6857 = vunpack.c.h.b16 %v6515
  %v6858 = vunpack.c.l.b16 %v6516
  %v6859 = vunpack.c.h.b16 %v6516
  %v6860 = vunpack.c.l.b16 %v6517
  %v6861 = vunpack.c.h.b16 %v6517
  %v6862 = vunpack.c.l.b16 %v6518
  %v6863 = vunpack.c.h.b16 %v6518
  %v6864 = vunpack.c.l.b16 %v6519
  %v6865 = vunpack.c.h.b16 %v6519
  %v6866 = vunpack.c.l.b16 %v6520
  %v6867 = vunpack.c.h.b16 %v6520
  %v6868 = vunpack.c.l.b16 %v6521
  %v6869 = vunpack.c.h.b16 %v6521
  %v6870 = vunpack.c.l.b16 %v6522
  %v6871 = vunpack.c.h.b16 %v6522
  %v6872 = vunpack.c.l.b16 %v6523
  %v6873 = vunpack.c.h.b16 %v6523
  %v6874 = vunpack.c.l.b16 %v6524
  %v6875 = vunpack.c.h.b16 %v6524
  %v6876 = vunpack.c.l.b16 %v6525
  %v6877 = vunpack.c.h.b16 %v6525
  %v6878 = vunpack.c.l.b16 %v6526
  %v6879 = vunpack.c.h.b16 %v6526
  %v6880 = vunpack.c.l.b16 %v6527
  %v6881 = vunpack.c.h.b16 %v6527
  %v6882 = vunpack.c.l.b16 %v6528
  %v6883 = vunpack.c.h.b16 %v6528
  %v6884 = vunpack.c.l.b16 %v6529
  %v6885 = vunpack.c.h.b16 %v6529
  %v6886 = vunpack.c.l.b16 %v6530
  %v6887 = vunpack.c.h.b16 %v6530
  %v6888 = vunpack.c.l.b16 %v6531
  %v6889 = vunpack.c.h.b16 %v6531
  %v6890 = vunpack.c.l.b16 %v6532
  %v6891 = vunpack.c.h.b16 %v6532
  %v6892 = vunpack.c.l.b16 %v6533
  %v6893 = vunpack.c.h.b16 %v6533
  %v6894 = vunpack.c.l.b16 %v6534
  %v6895 = vunpack.c.h.b16 %v6534
  %v6896 = vunpack.c.l.b16 %v6535
  %v6897 = vunpack.c.h.b16 %v6535
  %v6898 = vunpack.c.l.b16 %v6536
  %v6899 = vunpack.c.h.b16 %v6536
  %v6900 = vunpack.c.l.b16 %v6537
  %v6901 = vunpack.c.h.b16 %v6537
  %v6902 = vunpack.c.l.b16 %v6538
  %v6903 = vunpack.c.h.b16 %v6538
  %v6904 = vunpack.c.l.b16 %v6539
  %v6905 = vunpack.c.h.b16 %v6539
  %v6906 = vunpack.c.l.b16 %v6540
  %v6907 = vunpack.c.h.b16 %v6540
  %v6908 = vunpack.c.l.b16 %v6541
  %v6909 = vunpack.c.h.b16 %v6541
  %v6910 = vunpack.c.l.b16 %v6542
  %v6911 = vunpack.c.h.b16 %v6542
  %v6912 = vunpack.c.l.b16 %v6543
  %v6913 = vunpack.c.h.b16 %v6543
  %v6914 = vunpack.c.l.b16 %v6544
  %v6915 = vunpack.c.h.b16 %v6544
  %v6916 = vunpack.c.l.b16 %v6545
  %v6917 = vunpack.c.h.b16 %v6545
  %v6918 = vunpack.c.l.b16 %v6546
  %v6919 = vunpack.c.h.b16 %v6546
  %v6920 = vunpack.c.l.b16 %v6547
  %v6921 = vunpack.c.h.b16 %v6547
  %v6922 = vunpack.c.l.b16 %v6548
  %v6923 = vunpack.c.h.b16 %v6548
  %v6924 = vunpack.c.l.b16 %v6549
  %v6925 = vunpack.c.h.b16 %v6549
  %v6926 = vunpack.c.l.b16 %v6550
  %v6927 = vunpack.c.h.b16 %v6550
  %v6928 = vunpack.c.l.b16 %v6551
  %v6929 = vunpack.c.h.b16 %v6551
  %v6930 = vunpack.c.l.b16 %v6552
  %v6931 = vunpack.c.h.b16 %v6552
  %v6932 = vunpack.c.l.b16 %v6553
  %v6933 = vunpack.c.h.b16 %v6553
  %v6934 = vunpack.c.l.b16 %v6554
  %v6935 = vunpack.c.h.b16 %v6554
  %v6936 = vunpack.c.l.b16 %v6555
  %v6937 = vunpack.c.h.b16 %v6555
  %v6938 = vunpack.c.l.b16 %v6556
  %v6939 = vunpack.c.h.b16 %v6556
  %v6940 = vunpack.c.l.b16 %v6557
  %v6941 = vunpack.c.h.b16 %v6557
  %v6942 = vunpack.c.l.b16 %v6558
  %v6943 = vunpack.c.h.b16 %v6558
  %v6944 = vunpack.c.l.b16 %v6559
  %v6945 = vunpack.c.h.b16 %v6559
  %v6946 = vunpack.c.l.b16 %v6560
  %v6947 = vunpack.c.h.b16 %v6560
  %v6948 = vunpack.c.l.b16 %v6561
  %v6949 = vunpack.c.h.b16 %v6561
  %v6950 = vunpack.c.l.b16 %v6562
  %v6951 = vunpack.c.h.b16 %v6562
  %v6952 = vunpack.c.l.b16 %v6563
  %v6953 = vunpack.c.h.b16 %v6563
  %v6954 = vunpack.c.l.b16 %v6564
  %v6955 = vunpack.c.h.b16 %v6564
  %v6956 = vunpack.c.l.b16 %v6565
  %v6957 = vunpack.c.h.b16 %v6565
  %v6958 = vunpack.c.l.b16 %v6566
  %v6959 = vunpack.c.h.b16 %v6566
  %v6960 = vunpack.c.l.b16 %v6567
  %v6961 = vunpack.c.h.b16 %v6567
  %v6962 = vpack.c.b16 %v6710, %v6706
  %v6963 = vpack.c.b16 %v6711, %v6707
  %v6964 = vpack.c.b16 %v6712, %v6708
  %v6965 = vpack.c.b16 %v6713, %v6709
  %v6966 = vpack.c.b16 %v6718, %v6714
  %v6967 = vpack.c.b16 %v6719, %v6715
  %v6968 = vpack.c.b16 %v6720, %v6716
  %v6969 = vpack.c.b16 %v6721, %v6717
  %v6970 = vpack.c.b16 %v6726, %v6722
  %v6971 = vpack.c.b16 %v6727, %v6723
  %v6972 = vpack.c.b16 %v6728, %v6724
  %v6973 = vpack.c.b16 %v6729, %v6725
  %v6974 = vpack.c.b16 %v6734, %v6730
  %v6975 = vpack.c.b16 %v6735, %v6731
  %v6976 = vpack.c.b16 %v6736, %v6732
  %v6977 = vpack.c.b16 %v6737, %v6733
  %v6978 = vpack.c.b16 %v6742, %v6738
  %v6979 = vpack.c.b16 %v6743, %v6739
  %v6980 = vpack.c.b16 %v6744, %v6740
  %v6981 = vpack.c.b16 %v6745, %v6741
  %v6982 = vpack.c.b16 %v6750, %v6746
  %v6983 = vpack.c.b16 %v6751, %v6747
  %v6984 = vpack.c.b16 %v6752, %v6748
  %v6985 = vpack.c.b16 %v6753, %v6749
  %v6986 = vpack.c.b16 %v6758, %v6754
  %v6987 = vpack.c.b16 %v6759, %v6755
  %v6988 = vpack.c.b16 %v6760, %v6756
  %v6989 = vpack.c.b16 %v6761, %v6757
  %v6990 = vpack.c.b16 %v6766, %v6762
  %v6991 = vpack.c.b16 %v6767, %v6763
  %v6992 = vpack.c.b16 %v6768, %v6764
  %v6993 = vpack.c.b16 %v6769, %v6765
  %v6994 = vpack.c.b16 %v6774, %v6770
  %v6995 = vpack.c.b16 %v6775, %v6771
  %v6996 = vpack.c.b16 %v6776, %v6772
  %v6997 = vpack.c.b16 %v6777, %v6773
  %v6998 = vpack.c.b16 %v6782, %v6778
  %v6999 = vpack.c.b16 %v6783, %v6779
  %v7000 = vpack.c.b16 %v6784, %v6780
  %v7001 = vpack.c.b16 %v6785, %v6781
  %v7002 = vpack.c.b16 %v6790, %v6786
  %v7003 = vpack.c.b16 %v6791, %v6787
  %v7004 = vpack.c.b16 %v6792, %v6788
  %v7005 = vpack.c.b16 %v6793, %v6789
  %v7006 = vpack.c.b16 %v6798, %v6794
  %v7007 = vpack.c.b16 %v6799, %v6795
  %v7008 = vpack.c.b16 %v6800, %v6796
  %v7009 = vpack.c.b16 %v6801, %v6797
  %v7010 = vpack.c.b16 %v6806, %v6802
  %v7011 = vpack.c.b16 %v6807, %v6803
  %v7012 = vpack.c.b16 %v6808, %v6804
  %v7013 = vpack.c.b16 %v6809, %v6805
  %v7014 = vpack.c.b16 %v6814, %v6810
  %v7015 = vpack.c.b16 %v6815, %v6811
  %v7016 = vpack.c.b16 %v6816, %v6812
  %v7017 = vpack.c.b16 %v6817, %v6813
  %v7018 = vpack.c.b16 %v6822, %v6818
  %v7019 = vpack.c.b16 %v6823, %v6819
  %v7020 = vpack.c.b16 %v6824, %v6820
  %v7021 = vpack.c.b16 %v6825, %v6821
  %v7022 = vpack.c.b16 %v6830, %v6826
  %v7023 = vpack.c.b16 %v6831, %v6827
  %v7024 = vpack.c.b16 %v6832, %v6828
  %v7025 = vpack.c.b16 %v6833, %v6829
  %v7026 = vpack.c.b16 %v6838, %v6834
  %v7027 = vpack.c.b16 %v6839, %v6835
  %v7028 = vpack.c.b16 %v6840, %v6836
  %v7029 = vpack.c.b16 %v6841, %v6837
  %v7030 = vpack.c.b16 %v6846, %v6842
  %v7031 = vpack.c.b16 %v6847, %v6843
  %v7032 = vpack.c.b16 %v6848, %v6844
  %v7033 = vpack.c.b16 %v6849, %v6845
  %v7034 = vpack.c.b16 %v6854, %v6850
  %v7035 = vpack.c.b16 %v6855, %v6851
  %v7036 = vpack.c.b16 %v6856, %v6852
  %v7037 = vpack.c.b16 %v6857, %v6853
  %v7038 = vpack.c.b16 %v6862, %v6858
  %v7039 = vpack.c.b16 %v6863, %v6859
  %v7040 = vpack.c.b16 %v6864, %v6860
  %v7041 = vpack.c.b16 %v6865, %v6861
  %v7042 = vpack.c.b16 %v6870, %v6866
  %v7043 = vpack.c.b16 %v6871, %v6867
  %v7044 = vpack.c.b16 %v6872, %v6868
  %v7045 = vpack.c.b16 %v6873, %v6869
  %v7046 = vpack.c.b16 %v6878, %v6874
  %v7047 = vpack.c.b16 %v6879, %v6875
  %v7048 = vpack.c.b16 %v6880, %v6876
  %v7049 = vpack.c.b16 %v6881, %v6877
  %v7050 = vpack.c.b16 %v6886, %v6882
  %v7051 = vpack.c.b16 %v6887, %v6883
  %v7052 = vpack.c.b16 %v6888, %v6884
  %v7053 = vpack.c.b16 %v6889, %v6885
  %v7054 = vpack.c.b16 %v6894, %v6890
  %v7055 = vpack.c.b16 %v6895, %v6891
  %v7056 = vpack.c.b16 %v6896, %v6892
  %v7057 = vpack.c.b16 %v6897, %v6893
  %v7058 = vpack.c.b16 %v6902, %v6898
  %v7059 = vpack.c.b16 %v6903, %v6899
  %v7060 = vpack.c.b16 %v6904, %v6900
  %v7061 = vpack.c.b16 %v6905, %v6901
  %v7062 = vpack.c.b16 %v6910, %v6906
  %v7063 = vpack.c.b16 %v6911, %v6907
  %v7064 = vpack.c.b16 %v6912, %v6908
  %v7065 = vpack.c.b16 %v6913, %v6909
  %v7066 = vpack.c.b16 %v6918, %v6914
  %v7067 = vpack.c.b16 %v6919, %v6915
  %v7068 = vpack.c.b16 %v6920, %v6916
  %v7069 = vpack.c.b16 %v6921, %v6917
  %v7070 = vpack.c.b16 %v6926, %v6922
  %v7071 = vpack.c.b16 %v6927, %v6923
  %v7072 = vpack.c.b16 %v6928, %v6924
  %v7073 = vpack.c.b16 %v6929, %v6925
  %v7074 = vpack.c.b16 %v6934, %v6930
  %v7075 = vpack.c.b16 %v6935, %v6931
  %v7076 = vpack.c.b16 %v6936, %v6932
  %v7077 = vpack.c.b16 %v6937, %v6933
  %v7078 = vpack.c.b16 %v6942, %v6938
  %v7079 = vpack.c.b16 %v6943, %v6939
  %v7080 = vpack.c.b16 %v6944, %v6940
  %v7081 = vpack.c.b16 %v6945, %v6941
  %v7082 = vpack.c.b16 %v6950, %v6946
  %v7083 = vpack.c.b16 %v6951, %v6947
  %v7084 = vpack.c.b16 %v6952, %v6948
  %v7085 = vpack.c.b16 %v6953, %v6949
  %v7086 = vpack.c.b16 %v6958, %v6954
  %v7087 = vpack.c.b16 %v6959, %v6955
  %v7088 = vpack.c.b16 %v6960, %v6956
  %v7089 = vpack.c.b16 %v6961, %v6957
  %7218 = vmatpush.bf16.msra.mxu0 %v6990
  %7219 = vmatpush.bf16.msra.mxu0 %v6986
  %7220 = vmatpush.bf16.msra.mxu0 %v6982
  %7221 = vmatpush.bf16.msra.mxu0 %v6978
  %7222 = vmatpush.bf16.msra.mxu0 %v6974
  %7223 = vmatpush.bf16.msra.mxu0 %v6970
  %7224 = vmatpush.bf16.msra.mxu0 %v6966
  %7225 = vmatpush.bf16.msra.mxu0 %v6962
  %7226 = vmatmul.bf16.gmra.mxu0 %v6426
  %v7227 = vpop.f32.mrf.mxu0
  %v7228 = vadd.f32 %v6570, %v7227
  %v7229 = vpop.f32.mrf.mxu0
  %v7230 = vadd.f32 %v6570, %v7229
  %7231 = vdwg.mxu0
  %7232 = vmatpush.bf16.msra.mxu0 %v7022
  %7233 = vmatpush.bf16.msra.mxu0 %v7018
  %7234 = vmatpush.bf16.msra.mxu0 %v7014
  %7235 = vmatpush.bf16.msra.mxu0 %v7010
  %7236 = vmatpush.bf16.msra.mxu0 %v7006
  %7237 = vmatpush.bf16.msra.mxu0 %v7002
  %7238 = vmatpush.bf16.msra.mxu0 %v6998
  %7239 = vmatpush.bf16.msra.mxu0 %v6994
  %7240 = vmatmul.bf16.gmra.mxu0 %v6427
  %v7241 = vpop.f32.mrf.mxu0
  %v7242 = vadd.f32 %v7228, %v7241
  %v7243 = vpop.f32.mrf.mxu0
  %v7244 = vadd.f32 %v7230, %v7243
  %7245 = vdwg.mxu0
  %7246 = vmatpush.bf16.msra.mxu0 %v7054
  %7247 = vmatpush.bf16.msra.mxu0 %v7050
  %7248 = vmatpush.bf16.msra.mxu0 %v7046
  %7249 = vmatpush.bf16.msra.mxu0 %v7042
  %7250 = vmatpush.bf16.msra.mxu0 %v7038
  %7251 = vmatpush.bf16.msra.mxu0 %v7034
  %7252 = vmatpush.bf16.msra.mxu0 %v7030
  %7253 = vmatpush.bf16.msra.mxu0 %v7026
  %7254 = vmatmul.bf16.gmra.mxu0 %v6436
  %v7255 = vpop.f32.mrf.mxu0
  %v7256 = vadd.f32 %v7242, %v7255
  %v7257 = vpop.f32.mrf.mxu0
  %v7258 = vadd.f32 %v7244, %v7257
  %7259 = vdwg.mxu0
  %7260 = vmatpush.bf16.msra.mxu0 %v7086
  %7261 = vmatpush.bf16.msra.mxu0 %v7082
  %7262 = vmatpush.bf16.msra.mxu0 %v7078
  %7263 = vmatpush.bf16.msra.mxu0 %v7074
  %7264 = vmatpush.bf16.msra.mxu0 %v7070
  %7265 = vmatpush.bf16.msra.mxu0 %v7066
  %7266 = vmatpush.bf16.msra.mxu0 %v7062
  %7267 = vmatpush.bf16.msra.mxu0 %v7058
  %7268 = vmatmul.bf16.gmra.mxu0 %v6437
  %v7269 = vpop.f32.mrf.mxu0
  %v7270 = vadd.f32 %v7256, %v7269
  %v7271 = vpop.f32.mrf.mxu0
  %v7272 = vadd.f32 %v7258, %v7271
  %7273 = vdwg.mxu0
  %7274 = vmatpush.bf16.msra.mxu0 %v6991
  %7275 = vmatpush.bf16.msra.mxu0 %v6987
  %7276 = vmatpush.bf16.msra.mxu0 %v6983
  %7277 = vmatpush.bf16.msra.mxu0 %v6979
  %7278 = vmatpush.bf16.msra.mxu0 %v6975
  %7279 = vmatpush.bf16.msra.mxu0 %v6971
  %7280 = vmatpush.bf16.msra.mxu0 %v6967
  %7281 = vmatpush.bf16.msra.mxu0 %v6963
  %7282 = vmatmul.bf16.gmra.mxu0 %v6426
  %v7283 = vpop.f32.mrf.mxu0
  %v7284 = vadd.f32 %v6571, %v7283
  %v7285 = vpop.f32.mrf.mxu0
  %v7286 = vadd.f32 %v6571, %v7285
  %7287 = vdwg.mxu0
  %7288 = vmatpush.bf16.msra.mxu0 %v7023
  %7289 = vmatpush.bf16.msra.mxu0 %v7019
  %7290 = vmatpush.bf16.msra.mxu0 %v7015
  %7291 = vmatpush.bf16.msra.mxu0 %v7011
  %7292 = vmatpush.bf16.msra.mxu0 %v7007
  %7293 = vmatpush.bf16.msra.mxu0 %v7003
  %7294 = vmatpush.bf16.msra.mxu0 %v6999
  %7295 = vmatpush.bf16.msra.mxu0 %v6995
  %7296 = vmatmul.bf16.gmra.mxu0 %v6427
  %v7297 = vpop.f32.mrf.mxu0
  %v7298 = vadd.f32 %v7284, %v7297
  %v7299 = vpop.f32.mrf.mxu0
  %v7300 = vadd.f32 %v7286, %v7299
  %7301 = vdwg.mxu0
  %7302 = vmatpush.bf16.msra.mxu0 %v7055
  %7303 = vmatpush.bf16.msra.mxu0 %v7051
  %7304 = vmatpush.bf16.msra.mxu0 %v7047
  %7305 = vmatpush.bf16.msra.mxu0 %v7043
  %7306 = vmatpush.bf16.msra.mxu0 %v7039
  %7307 = vmatpush.bf16.msra.mxu0 %v7035
  %7308 = vmatpush.bf16.msra.mxu0 %v7031
  %7309 = vmatpush.bf16.msra.mxu0 %v7027
  %7310 = vmatmul.bf16.gmra.mxu0 %v6436
  %v7311 = vpop.f32.mrf.mxu0
  %v7312 = vadd.f32 %v7298, %v7311
  %v7313 = vpop.f32.mrf.mxu0
  %v7314 = vadd.f32 %v7300, %v7313
  %7315 = vdwg.mxu0
  %7316 = vmatpush.bf16.msra.mxu0 %v7087
  %7317 = vmatpush.bf16.msra.mxu0 %v7083
  %7318 = vmatpush.bf16.msra.mxu0 %v7079
  %7319 = vmatpush.bf16.msra.mxu0 %v7075
  %7320 = vmatpush.bf16.msra.mxu0 %v7071
  %7321 = vmatpush.bf16.msra.mxu0 %v7067
  %7322 = vmatpush.bf16.msra.mxu0 %v7063
  %7323 = vmatpush.bf16.msra.mxu0 %v7059
  %7324 = vmatmul.bf16.gmra.mxu0 %v6437
  %v7325 = vpop.f32.mrf.mxu0
  %v7326 = vadd.f32 %v7312, %v7325
  %v7327 = vpop.f32.mrf.mxu0
  %v7328 = vadd.f32 %v7314, %v7327
  %7329 = vdwg.mxu0
  %7330 = vmatpush.bf16.msra.mxu0 %v6992
  %7331 = vmatpush.bf16.msra.mxu0 %v6988
  %7332 = vmatpush.bf16.msra.mxu0 %v6984
  %7333 = vmatpush.bf16.msra.mxu0 %v6980
  %7334 = vmatpush.bf16.msra.mxu0 %v6976
  %7335 = vmatpush.bf16.msra.mxu0 %v6972
  %7336 = vmatpush.bf16.msra.mxu0 %v6968
  %7337 = vmatpush.bf16.msra.mxu0 %v6964
  %7338 = vmatmul.bf16.gmra.mxu0 %v6426
  %v7339 = vpop.f32.mrf.mxu0
  %v7340 = vadd.f32 %v6572, %v7339
  %v7341 = vpop.f32.mrf.mxu0
  %v7342 = vadd.f32 %v6572, %v7341
  %7343 = vdwg.mxu0
  %7344 = vmatpush.bf16.msra.mxu0 %v7024
  %7345 = vmatpush.bf16.msra.mxu0 %v7020
  %7346 = vmatpush.bf16.msra.mxu0 %v7016
  %7347 = vmatpush.bf16.msra.mxu0 %v7012
  %7348 = vmatpush.bf16.msra.mxu0 %v7008
  %7349 = vmatpush.bf16.msra.mxu0 %v7004
  %7350 = vmatpush.bf16.msra.mxu0 %v7000
  %7351 = vmatpush.bf16.msra.mxu0 %v6996
  %7352 = vmatmul.bf16.gmra.mxu0 %v6427
  %v7353 = vpop.f32.mrf.mxu0
  %v7354 = vadd.f32 %v7340, %v7353
  %v7355 = vpop.f32.mrf.mxu0
  %v7356 = vadd.f32 %v7342, %v7355
  %7357 = vdwg.mxu0
  %7358 = vmatpush.bf16.msra.mxu0 %v7056
  %7359 = vmatpush.bf16.msra.mxu0 %v7052
  %7360 = vmatpush.bf16.msra.mxu0 %v7048
  %7361 = vmatpush.bf16.msra.mxu0 %v7044
  %7362 = vmatpush.bf16.msra.mxu0 %v7040
  %7363 = vmatpush.bf16.msra.mxu0 %v7036
  %7364 = vmatpush.bf16.msra.mxu0 %v7032
  %7365 = vmatpush.bf16.msra.mxu0 %v7028
  %7366 = vmatmul.bf16.gmra.mxu0 %v6436
  %v7367 = vpop.f32.mrf.mxu0
  %v7368 = vadd.f32 %v7354, %v7367
  %v7369 = vpop.f32.mrf.mxu0
  %v7370 = vadd.f32 %v7356, %v7369
  %7371 = vdwg.mxu0
  %7372 = vmatpush.bf16.msra.mxu0 %v7088
  %7373 = vmatpush.bf16.msra.mxu0 %v7084
  %7374 = vmatpush.bf16.msra.mxu0 %v7080
  %7375 = vmatpush.bf16.msra.mxu0 %v7076
  %7376 = vmatpush.bf16.msra.mxu0 %v7072
  %7377 = vmatpush.bf16.msra.mxu0 %v7068
  %7378 = vmatpush.bf16.msra.mxu0 %v7064
  %7379 = vmatpush.bf16.msra.mxu0 %v7060
  %7380 = vmatmul.bf16.gmra.mxu0 %v6437
  %v7381 = vpop.f32.mrf.mxu0
  %v7382 = vadd.f32 %v7368, %v7381
  %v7383 = vpop.f32.mrf.mxu0
  %v7384 = vadd.f32 %v7370, %v7383
  %7385 = vdwg.mxu0
  %7386 = vmatpush.bf16.msra.mxu0 %v6993
  %7387 = vmatpush.bf16.msra.mxu0 %v6989
  %7388 = vmatpush.bf16.msra.mxu0 %v6985
  %7389 = vmatpush.bf16.msra.mxu0 %v6981
  %7390 = vmatpush.bf16.msra.mxu0 %v6977
  %7391 = vmatpush.bf16.msra.mxu0 %v6973
  %7392 = vmatpush.bf16.msra.mxu0 %v6969
  %7393 = vmatpush.bf16.msra.mxu0 %v6965
  %7394 = vmatmul.bf16.gmra.mxu0 %v6426
  %v7395 = vpop.f32.mrf.mxu0
  %v7396 = vadd.f32 %v6573, %v7395
  %v7397 = vpop.f32.mrf.mxu0
  %v7398 = vadd.f32 %v6573, %v7397
  %7399 = vdwg.mxu0
  %7400 = vmatpush.bf16.msra.mxu0 %v7025
  %7401 = vmatpush.bf16.msra.mxu0 %v7021
  %7402 = vmatpush.bf16.msra.mxu0 %v7017
  %7403 = vmatpush.bf16.msra.mxu0 %v7013
  %7404 = vmatpush.bf16.msra.mxu0 %v7009
  %7405 = vmatpush.bf16.msra.mxu0 %v7005
  %7406 = vmatpush.bf16.msra.mxu0 %v7001
  %7407 = vmatpush.bf16.msra.mxu0 %v6997
  %7408 = vmatmul.bf16.gmra.mxu0 %v6427
  %v7409 = vpop.f32.mrf.mxu0
  %v7410 = vadd.f32 %v7396, %v7409
  %v7411 = vpop.f32.mrf.mxu0
  %v7412 = vadd.f32 %v7398, %v7411
  %7413 = vdwg.mxu0
  %7414 = vmatpush.bf16.msra.mxu0 %v7057
  %7415 = vmatpush.bf16.msra.mxu0 %v7053
  %7416 = vmatpush.bf16.msra.mxu0 %v7049
  %7417 = vmatpush.bf16.msra.mxu0 %v7045
  %7418 = vmatpush.bf16.msra.mxu0 %v7041
  %7419 = vmatpush.bf16.msra.mxu0 %v7037
  %7420 = vmatpush.bf16.msra.mxu0 %v7033
  %7421 = vmatpush.bf16.msra.mxu0 %v7029
  %7422 = vmatmul.bf16.gmra.mxu0 %v6436
  %v7423 = vpop.f32.mrf.mxu0
  %v7424 = vadd.f32 %v7410, %v7423
  %v7425 = vpop.f32.mrf.mxu0
  %v7426 = vadd.f32 %v7412, %v7425
  %7427 = vdwg.mxu0
  %7428 = vmatpush.bf16.msra.mxu0 %v7089
  %7429 = vmatpush.bf16.msra.mxu0 %v7085
  %7430 = vmatpush.bf16.msra.mxu0 %v7081
  %7431 = vmatpush.bf16.msra.mxu0 %v7077
  %7432 = vmatpush.bf16.msra.mxu0 %v7073
  %7433 = vmatpush.bf16.msra.mxu0 %v7069
  %7434 = vmatpush.bf16.msra.mxu0 %v7065
  %7435 = vmatpush.bf16.msra.mxu0 %v7061
  %7436 = vmatmul.bf16.gmra.mxu0 %v6437
  %v7437 = vpop.f32.mrf.mxu0
  %v7438 = vadd.f32 %v7424, %v7437
  %v7439 = vpop.f32.mrf.mxu0
  %v7440 = vadd.f32 %v7426, %v7439
  %7441 = vdwg.mxu0
  %v7442 = vmax.f32 %v7270, 0.0
  %v7443 = vmax.f32 %v7326, 0.0
  %v7444 = vmax.f32 %v7382, 0.0
  %v7445 = vmax.f32 %v7438, 0.0
  %v7446 = vmax.f32 %v7272, 0.0
  %v7447 = vmax.f32 %v7328, 0.0
  %v7448 = vmax.f32 %v7384, 0.0
  %v7449 = vmax.f32 %v7440, 0.0
  %v7450 = vpack.c.bf16 %v7446, %v7442
  %v7451 = vpack.c.bf16 %v7447, %v7443
  %v7452 = vpack.c.bf16 %v7448, %v7444
  %v7453 = vpack.c.bf16 %v7449, %v7445
  %v7454 = vld [vmem:[%s9] sm:$0xf]
  %v7455 = vld [vmem:[%s9 + $0x4] sm:$0xf]
  %v7456 = vld [vmem:[%s9 + $0x8] sm:$0xf]
  %v7457 = vld [vmem:[%s9 + $0xc] sm:$0xf]
  %v7458 = vld [vmem:[%s9 + $0x10] sm:$0xf]
  %v7459 = vld [vmem:[%s9 + $0x14] sm:$0xf]
  %v7460 = vld [vmem:[%s9 + $0x18] sm:$0xf]
  %v7461 = vld [vmem:[%s9 + $0x1c] sm:$0xf]
  %v7462 = vld [vmem:[%s9 + $0x20] sm:$0xf]
  %v7463 = vld [vmem:[%s9 + $0x24] sm:$0xf]
  %v7464 = vld [vmem:[%s9 + $0x28] sm:$0xf]
  %v7465 = vld [vmem:[%s9 + $0x2c] sm:$0xf]
  %v7466 = vld [vmem:[%s9 + $0x30] sm:$0xf]
  %v7467 = vld [vmem:[%s9 + $0x34] sm:$0xf]
  %v7468 = vld [vmem:[%s9 + $0x38] sm:$0xf]
  %v7469 = vld [vmem:[%s9 + $0x3c] sm:$0xf]
  %v7470 = vld [vmem:[%s9 + $0x40] sm:$0xf]
  %v7471 = vld [vmem:[%s9 + $0x44] sm:$0xf]
  %v7472 = vld [vmem:[%s9 + $0x48] sm:$0xf]
  %v7473 = vld [vmem:[%s9 + $0x4c] sm:$0xf]
  %v7474 = vld [vmem:[%s9 + $0x50] sm:$0xf]
  %v7475 = vld [vmem:[%s9 + $0x54] sm:$0xf]
  %v7476 = vld [vmem:[%s9 + $0x58] sm:$0xf]
  %v7477 = vld [vmem:[%s9 + $0x5c] sm:$0xf]
  %v7478 = vld [vmem:[%s9 + $0x60] sm:$0xf]
  %v7479 = vld [vmem:[%s9 + $0x64] sm:$0xf]
  %v7480 = vld [vmem:[%s9 + $0x68] sm:$0xf]
  %v7481 = vld [vmem:[%s9 + $0x6c] sm:$0xf]
  %v7482 = vld [vmem:[%s9 + $0x70] sm:$0xf]
  %v7483 = vld [vmem:[%s9 + $0x74] sm:$0xf]
  %v7484 = vld [vmem:[%s9 + $0x78] sm:$0xf]
  %v7485 = vld [vmem:[%s9 + $0x7c] sm:$0xf]
  %v7486 = vld [vmem:[%s9 + $0x80] sm:$0xf]
  %v7487 = vld [vmem:[%s9 + $0x84] sm:$0xf]
  %v7488 = vld [vmem:[%s9 + $0x88] sm:$0xf]
  %v7489 = vld [vmem:[%s9 + $0x8c] sm:$0xf]
  %v7490 = vld [vmem:[%s9 + $0x90] sm:$0xf]
  %v7491 = vld [vmem:[%s9 + $0x94] sm:$0xf]
  %v7492 = vld [vmem:[%s9 + $0x98] sm:$0xf]
  %v7493 = vld [vmem:[%s9 + $0x9c] sm:$0xf]
  %v7494 = vld [vmem:[%s9 + $0xa0] sm:$0xf]
  %v7495 = vld [vmem:[%s9 + $0xa4] sm:$0xf]
  %v7496 = vld [vmem:[%s9 + $0xa8] sm:$0xf]
  %v7497 = vld [vmem:[%s9 + $0xac] sm:$0xf]
  %v7498 = vld [vmem:[%s9 + $0xb0] sm:$0xf]
  %v7499 = vld [vmem:[%s9 + $0xb4] sm:$0xf]
  %v7500 = vld [vmem:[%s9 + $0xb8] sm:$0xf]
  %v7501 = vld [vmem:[%s9 + $0xbc] sm:$0xf]
  %v7502 = vld [vmem:[%s9 + $0xc0] sm:$0xf]
  %v7503 = vld [vmem:[%s9 + $0xc4] sm:$0xf]
  %v7504 = vld [vmem:[%s9 + $0xc8] sm:$0xf]
  %v7505 = vld [vmem:[%s9 + $0xcc] sm:$0xf]
  %v7506 = vld [vmem:[%s9 + $0xd0] sm:$0xf]
  %v7507 = vld [vmem:[%s9 + $0xd4] sm:$0xf]
  %v7508 = vld [vmem:[%s9 + $0xd8] sm:$0xf]
  %v7509 = vld [vmem:[%s9 + $0xdc] sm:$0xf]
  %v7510 = vld [vmem:[%s9 + $0xe0] sm:$0xf]
  %v7511 = vld [vmem:[%s9 + $0xe4] sm:$0xf]
  %v7512 = vld [vmem:[%s9 + $0xe8] sm:$0xf]
  %v7513 = vld [vmem:[%s9 + $0xec] sm:$0xf]
  %v7514 = vld [vmem:[%s9 + $0xf0] sm:$0xf]
  %v7515 = vld [vmem:[%s9 + $0xf4] sm:$0xf]
  %v7516 = vld [vmem:[%s9 + $0xf8] sm:$0xf]
  %v7517 = vld [vmem:[%s9 + $0xfc] sm:$0xf]
  %v7518 = vld [vmem:[%s10] sm:$0x1]
  %v7520 = vperm.slane %v7518, 0
  %v7586 = vunpack.c.l.b16 %v7454
  %v7587 = vunpack.c.l.b16 %v7455
  %v7588 = vunpack.c.l.b16 %v7456
  %v7589 = vunpack.c.l.b16 %v7457
  %v7590 = vunpack.c.l.b16 %v7458
  %v7591 = vunpack.c.l.b16 %v7459
  %v7592 = vunpack.c.l.b16 %v7460
  %v7593 = vunpack.c.l.b16 %v7461
  %v7594 = vunpack.c.l.b16 %v7462
  %v7595 = vunpack.c.l.b16 %v7463
  %v7596 = vunpack.c.l.b16 %v7464
  %v7597 = vunpack.c.l.b16 %v7465
  %v7598 = vunpack.c.l.b16 %v7466
  %v7599 = vunpack.c.l.b16 %v7467
  %v7600 = vunpack.c.l.b16 %v7468
  %v7601 = vunpack.c.l.b16 %v7469
  %v7602 = vunpack.c.l.b16 %v7470
  %v7603 = vunpack.c.l.b16 %v7471
  %v7604 = vunpack.c.l.b16 %v7472
  %v7605 = vunpack.c.l.b16 %v7473
  %v7606 = vunpack.c.l.b16 %v7474
  %v7607 = vunpack.c.l.b16 %v7475
  %v7608 = vunpack.c.l.b16 %v7476
  %v7609 = vunpack.c.l.b16 %v7477
  %v7610 = vunpack.c.l.b16 %v7478
  %v7611 = vunpack.c.l.b16 %v7479
  %v7612 = vunpack.c.l.b16 %v7480
  %v7613 = vunpack.c.l.b16 %v7481
  %v7614 = vunpack.c.l.b16 %v7482
  %v7615 = vunpack.c.l.b16 %v7483
  %v7616 = vunpack.c.l.b16 %v7484
  %v7617 = vunpack.c.l.b16 %v7485
  %v7618 = vunpack.c.l.b16 %v7486
  %v7619 = vunpack.c.l.b16 %v7487
  %v7620 = vunpack.c.l.b16 %v7488
  %v7621 = vunpack.c.l.b16 %v7489
  %v7622 = vunpack.c.l.b16 %v7490
  %v7623 = vunpack.c.l.b16 %v7491
  %v7624 = vunpack.c.l.b16 %v7492
  %v7625 = vunpack.c.l.b16 %v7493
  %v7626 = vunpack.c.l.b16 %v7494
  %v7627 = vunpack.c.l.b16 %v7495
  %v7628 = vunpack.c.l.b16 %v7496
  %v7629 = vunpack.c.l.b16 %v7497
  %v7630 = vunpack.c.l.b16 %v7498
  %v7631 = vunpack.c.l.b16 %v7499
  %v7632 = vunpack.c.l.b16 %v7500
  %v7633 = vunpack.c.l.b16 %v7501
  %v7634 = vunpack.c.l.b16 %v7502
  %v7635 = vunpack.c.l.b16 %v7503
  %v7636 = vunpack.c.l.b16 %v7504
  %v7637 = vunpack.c.l.b16 %v7505
  %v7638 = vunpack.c.l.b16 %v7506
  %v7639 = vunpack.c.l.b16 %v7507
  %v7640 = vunpack.c.l.b16 %v7508
  %v7641 = vunpack.c.l.b16 %v7509
  %v7642 = vunpack.c.l.b16 %v7510
  %v7643 = vunpack.c.l.b16 %v7511
  %v7644 = vunpack.c.l.b16 %v7512
  %v7645 = vunpack.c.l.b16 %v7513
  %v7646 = vunpack.c.l.b16 %v7514
  %v7647 = vunpack.c.l.b16 %v7515
  %v7648 = vunpack.c.l.b16 %v7516
  %v7649 = vunpack.c.l.b16 %v7517
  %v7650 = vpack.c.b16 %v7587, %v7586
  %v7651 = vpack.c.b16 %v7589, %v7588
  %v7652 = vpack.c.b16 %v7591, %v7590
  %v7653 = vpack.c.b16 %v7593, %v7592
  %v7654 = vpack.c.b16 %v7595, %v7594
  %v7655 = vpack.c.b16 %v7597, %v7596
  %v7656 = vpack.c.b16 %v7599, %v7598
  %v7657 = vpack.c.b16 %v7601, %v7600
  %v7658 = vpack.c.b16 %v7603, %v7602
  %v7659 = vpack.c.b16 %v7605, %v7604
  %v7660 = vpack.c.b16 %v7607, %v7606
  %v7661 = vpack.c.b16 %v7609, %v7608
  %v7662 = vpack.c.b16 %v7611, %v7610
  %v7663 = vpack.c.b16 %v7613, %v7612
  %v7664 = vpack.c.b16 %v7615, %v7614
  %v7665 = vpack.c.b16 %v7617, %v7616
  %v7666 = vpack.c.b16 %v7619, %v7618
  %v7667 = vpack.c.b16 %v7621, %v7620
  %v7668 = vpack.c.b16 %v7623, %v7622
  %v7669 = vpack.c.b16 %v7625, %v7624
  %v7670 = vpack.c.b16 %v7627, %v7626
  %v7671 = vpack.c.b16 %v7629, %v7628
  %v7672 = vpack.c.b16 %v7631, %v7630
  %v7673 = vpack.c.b16 %v7633, %v7632
  %v7674 = vpack.c.b16 %v7635, %v7634
  %v7675 = vpack.c.b16 %v7637, %v7636
  %v7676 = vpack.c.b16 %v7639, %v7638
  %v7677 = vpack.c.b16 %v7641, %v7640
  %v7678 = vpack.c.b16 %v7643, %v7642
  %v7679 = vpack.c.b16 %v7645, %v7644
  %v7680 = vpack.c.b16 %v7647, %v7646
  %v7681 = vpack.c.b16 %v7649, %v7648
  %7714 = vmatpush.bf16.msra.mxu0 %v7657
  %7715 = vmatpush.bf16.msra.mxu0 %v7656
  %7716 = vmatpush.bf16.msra.mxu0 %v7655
  %7717 = vmatpush.bf16.msra.mxu0 %v7654
  %7718 = vmatpush.bf16.msra.mxu0 %v7653
  %7719 = vmatpush.bf16.msra.mxu0 %v7652
  %7720 = vmatpush.bf16.msra.mxu0 %v7651
  %7721 = vmatpush.bf16.msra.mxu0 %v7650
  %7722 = vmatmul.bf16.gmra.mxu0 %v7450
  %v7723 = vpop.f32.mrf.mxu0
  %v7724 = vadd.f32 %v7520, %v7723
  %v7725 = vpop.f32.mrf.mxu0
  %v7726 = vadd.f32 %v7520, %v7725
  %7727 = vdwg.mxu0
  %7728 = vmatpush.bf16.msra.mxu0 %v7665
  %7729 = vmatpush.bf16.msra.mxu0 %v7664
  %7730 = vmatpush.bf16.msra.mxu0 %v7663
  %7731 = vmatpush.bf16.msra.mxu0 %v7662
  %7732 = vmatpush.bf16.msra.mxu0 %v7661
  %7733 = vmatpush.bf16.msra.mxu0 %v7660
  %7734 = vmatpush.bf16.msra.mxu0 %v7659
  %7735 = vmatpush.bf16.msra.mxu0 %v7658
  %7736 = vmatmul.bf16.gmra.mxu0 %v7451
  %v7737 = vpop.f32.mrf.mxu0
  %v7738 = vadd.f32 %v7724, %v7737
  %v7739 = vpop.f32.mrf.mxu0
  %v7740 = vadd.f32 %v7726, %v7739
  %7741 = vdwg.mxu0
  %7742 = vmatpush.bf16.msra.mxu0 %v7673
  %7743 = vmatpush.bf16.msra.mxu0 %v7672
  %7744 = vmatpush.bf16.msra.mxu0 %v7671
  %7745 = vmatpush.bf16.msra.mxu0 %v7670
  %7746 = vmatpush.bf16.msra.mxu0 %v7669
  %7747 = vmatpush.bf16.msra.mxu0 %v7668
  %7748 = vmatpush.bf16.msra.mxu0 %v7667
  %7749 = vmatpush.bf16.msra.mxu0 %v7666
  %7750 = vmatmul.bf16.gmra.mxu0 %v7452
  %v7751 = vpop.f32.mrf.mxu0
  %v7752 = vadd.f32 %v7738, %v7751
  %v7753 = vpop.f32.mrf.mxu0
  %v7754 = vadd.f32 %v7740, %v7753
  %7755 = vdwg.mxu0
  %7756 = vmatpush.bf16.msra.mxu0 %v7681
  %7757 = vmatpush.bf16.msra.mxu0 %v7680
  %7758 = vmatpush.bf16.msra.mxu0 %v7679
  %7759 = vmatpush.bf16.msra.mxu0 %v7678
  %7760 = vmatpush.bf16.msra.mxu0 %v7677
  %7761 = vmatpush.bf16.msra.mxu0 %v7676
  %7762 = vmatpush.bf16.msra.mxu0 %v7675
  %7763 = vmatpush.bf16.msra.mxu0 %v7674
  %7764 = vmatmul.bf16.gmra.mxu0 %v7453
  %v7765 = vpop.f32.mrf.mxu0
  %v7766 = vadd.f32 %v7752, %v7765
  %v7767 = vpop.f32.mrf.mxu0
  %v7768 = vadd.f32 %v7754, %v7767
  %7769 = vdwg.mxu0
  %7770 = vst [vmem:[%s11] sm:$0xff] %v7766
  %7771 = vst [vmem:[%s11 + $0x8] sm:$0xff] %v7768
  // Predicated region
  $region46: #{cnn_forward.1} parent=0 // pred_check
    _
  $region47: #{cnn_forward.1} parent=0 // pred_check_branch
    %7773 = sbr.rel (0) target = $region49
  $region48: #{cnn_forward.1} parent=0 // pred_region
    _
  $region49: #{cnn_forward.1} parent=0 // pred_fallthru
    _
  // Predicated region
  $region50: #{cnn_forward.1} parent=0 // pred_check
    _
  $region51: #{cnn_forward.1} parent=0 // pred_check_branch
    %7775 = sbr.rel (0) target = $region53
  $region52: #{cnn_forward.1} parent=0 // pred_region
    _
  $region53: #{cnn_forward.1} parent=0 // pred_fallthru
    _

</llo_original>
